<compile_context>
chip_gen: v7x
topology: tpu7x:2x2x1
jax: 0.10.0
libtpu: 0.0.40
codegen_flags: <defaults>
</compile_context>

<pallas_src>
import functools

import jax
import jax.numpy as jnp
from jax.experimental import pallas as pl
from jax.experimental.pallas import tpu as pltpu


# ----------------------------------------------------------------------------
# Static conv configuration (Python ints — never enter the jitted pytree)
# ----------------------------------------------------------------------------
def conv_config(img_stack):
    # (in_ch, out_ch, kernel, stride) — mirrors the PyTorch cnn_base
    return ((img_stack, 8, 4, 2), (8, 16, 3, 2), (16, 32, 3, 2),
            (32, 64, 3, 2), (64, 128, 3, 1), (128, 256, 3, 1))


# ----------------------------------------------------------------------------
# Pallas kernel 1: tiled matmul + bias + ReLU  (im2col conv layers)
# ----------------------------------------------------------------------------
def _mm_bias_relu_kernel(a_ref, w_ref, b_ref, o_ref):
    acc = jnp.dot(a_ref[...], w_ref[...], preferred_element_type=jnp.float32)
    acc = jnp.maximum(acc + b_ref[...], 0.0)       # (1, N) bias broadcasts
    o_ref[...] = acc.astype(o_ref.dtype)


def matmul_bias_relu(a, w, b, *, tm=512, tn=128):
    """relu(a @ w + b); a:[M,K] bf16, w:[K,N] bf16, b:[1,N] f32 -> [M,N] bf16."""
    M, K = a.shape
    K2, N = w.shape
    assert K == K2
    tm = M if M < tm else tm          # full-extent block for small layers
    tn = N if N < tn else tn
    grid = (pl.cdiv(M, tm), pl.cdiv(N, tn))
    return pl.pallas_call(
        _mm_bias_relu_kernel,
        out_shape=jax.ShapeDtypeStruct((M, N), jnp.bfloat16),
        grid=grid,
        in_specs=[
            pl.BlockSpec((tm, K), lambda i, j: (i, 0)),
            pl.BlockSpec((K, tn), lambda i, j: (0, j)),
            pl.BlockSpec((1, tn), lambda i, j: (0, j)),
        ],
        out_specs=pl.BlockSpec((tm, tn), lambda i, j: (i, j)),
        compiler_params=pltpu.CompilerParams(
            dimension_semantics=("parallel", "parallel")),
    )(a, w, b)


# ----------------------------------------------------------------------------
# Pallas kernel 2: all five head linears fused in one VMEM-resident call
# ----------------------------------------------------------------------------
def _heads_kernel(feat_ref, v1w_ref, v1b_ref, fcw_ref, fcb_ref,
                  aw_ref, ab_ref, bw_ref, bb_ref, v2w_ref, v2b_ref,
                  alpha_ref, beta_ref, v_ref):
    feat = feat_ref[...]                                   # [B, 256] bf16

    def dense(x, w_ref, b_ref):
        return jnp.dot(x, w_ref[...],
                       preferred_element_type=jnp.float32) + b_ref[...]

    def softplus1(z):  # torch.nn.Softplus (beta=1, threshold=20) followed by +1
        return jnp.where(z > 20.0, z,
                         jnp.log1p(jnp.exp(jnp.minimum(z, 20.0)))) + 1.0

    # value head: Linear(256,100) + ReLU, then Linear(100,1) as lane reduction
    h_v = jnp.maximum(dense(feat, v1w_ref, v1b_ref), 0.0)  # [B, 128] f32
    v_ref[...] = (jnp.sum(h_v * v2w_ref[...], axis=-1, keepdims=True)
                  + v2b_ref[...])

    # policy trunk: Linear(256,100) + ReLU, then alpha / beta heads
    h = jnp.maximum(dense(feat, fcw_ref, fcb_ref), 0.0)    # [B, 128] f32
    h = h.astype(aw_ref.dtype)
    alpha_ref[...] = softplus1(dense(h, aw_ref, ab_ref))
    beta_ref[...] = softplus1(dense(h, bw_ref, bb_ref))


def heads_fused(feat, hp):
    B = feat.shape[0]
    args = (feat, hp["v1_w"], hp["v1_b"], hp["fc_w"], hp["fc_b"],
            hp["a_w"], hp["a_b"], hp["b_w"], hp["b_b"],
            hp["v2_w"], hp["v2_b"])
    in_specs = [pl.BlockSpec(a.shape, lambda i: (0, 0)) for a in args]
    out_shape = (jax.ShapeDtypeStruct((B, 128), jnp.float32),   # alpha (padded)
                 jax.ShapeDtypeStruct((B, 128), jnp.float32),   # beta  (padded)
                 jax.ShapeDtypeStruct((B, 1), jnp.float32))     # v
    out_specs = (pl.BlockSpec((B, 128), lambda i: (0, 0)),
                 pl.BlockSpec((B, 128), lambda i: (0, 0)),
                 pl.BlockSpec((B, 1), lambda i: (0, 0)))
    alpha_p, beta_p, v = pl.pallas_call(
        _heads_kernel, out_shape=out_shape, grid=(1,),
        in_specs=in_specs, out_specs=out_specs,
    )(*args)
    # softplus1 is nonzero (log 2 + 1) in the zero-padded lanes -> keep slice.
    return alpha_p[:, :3], beta_p[:, :3], v


# ----------------------------------------------------------------------------
# im2col (XLA glue): NHWC -> patch matrix [B*OH*OW, k*k*C]
# ----------------------------------------------------------------------------
def im2col(x, k, stride):
    B, H, W, C = x.shape
    OH = (H - k) // stride + 1
    OW = (W - k) // stride + 1
    cols = []
    for i in range(k):
        for j in range(k):
            cols.append(x[:, i:i + stride * OH:stride,
                          j:j + stride * OW:stride, :])   # [B, OH, OW, C]
    patches = jnp.concatenate(cols, axis=-1)               # [B, OH, OW, k*k*C]
    return patches.reshape(B * OH * OW, k * k * C), (B, OH, OW)


# ----------------------------------------------------------------------------
# Deterministic "Bayesian" parameter sampling + full pre-transform at init
# ----------------------------------------------------------------------------
def _sample_param(key, shape, rho=-6.0):
    k_mu, k_eps = jax.random.split(key)
    mu = 0.1 * jax.random.normal(k_mu, shape, jnp.float32)
    sigma = jnp.log1p(jnp.exp(jnp.float32(rho)))
    eps = jax.random.normal(k_eps, shape, jnp.float32)
    return mu + sigma * eps


def _pad2(a, rows, cols, dtype):
    out = jnp.zeros((rows, cols), dtype)
    return out.at[:a.shape[0], :a.shape[1]].set(a.astype(dtype))


def init_params(key, img_stack):
    cfg = conv_config(img_stack)
    params = {"conv": []}
    for (cin, cout, k, _s) in cfg:
        key, kw_, kb_ = jax.random.split(key, 3)
        w = _sample_param(kw_, (cout, cin, k, k))     # PyTorch [O, C, kh, kw]
        b = _sample_param(kb_, (cout,))
        # [O,C,kh,kw] -> [kh,kw,C,O] -> [kh*kw*C, O]   (matches im2col order)
        wm = jnp.transpose(w, (2, 3, 1, 0)).reshape(k * k * cin, cout)
        params["conv"].append((wm.astype(jnp.bfloat16),
                               b.reshape(1, cout).astype(jnp.float32)))

    def lin(key, fin, fout):
        kw_, kb_ = jax.random.split(key)
        return _sample_param(kw_, (fin, fout)), _sample_param(kb_, (fout,))

    key, k1, k2, k3, k4, k5 = jax.random.split(key, 6)
    v1_w, v1_b = lin(k1, 256, 100)     # v:  Linear(256,100) + ReLU
    v2_w, v2_b = lin(k2, 100, 1)       #     Linear(100,1)
    fc_w, fc_b = lin(k3, 256, 100)     # fc: Linear(256,100) + ReLU
    a_w, a_b = lin(k4, 100, 3)         # alpha_head
    b_w, b_b = lin(k5, 100, 3)         # beta_head

    # Pad head matrices to 128 lanes ONCE at init (zero rows/cols => exact).
    params["v1_w"] = _pad2(v1_w, 256, 128, jnp.bfloat16)
    params["v1_b"] = _pad2(v1_b.reshape(1, 100), 1, 128, jnp.float32)
    params["fc_w"] = _pad2(fc_w, 256, 128, jnp.bfloat16)
    params["fc_b"] = _pad2(fc_b.reshape(1, 100), 1, 128, jnp.float32)
    params["a_w"] = _pad2(a_w, 128, 128, jnp.bfloat16)
    params["a_b"] = _pad2(a_b.reshape(1, 3), 1, 128, jnp.float32)
    params["b_w"] = _pad2(b_w, 128, 128, jnp.bfloat16)
    params["b_b"] = _pad2(b_b.reshape(1, 3), 1, 128, jnp.float32)
    # Linear(100,1) applied as a lane reduction -> store weight as [1,128] row.
    params["v2_w"] = _pad2(v2_w.reshape(1, 100), 1, 128, jnp.float32)
    params["v2_b"] = v2_b.reshape(1, 1).astype(jnp.float32)
    return params


# ----------------------------------------------------------------------------
# Forward pass (matches BayesianModel.forward)
# ----------------------------------------------------------------------------
def forward(params, x_nchw, *, cfg):
    # NCHW (PyTorch) -> NHWC (lane dim = channels), bf16 operands for the MXU.
    x = jnp.transpose(x_nchw, (0, 2, 3, 1)).astype(jnp.bfloat16)

    for (wm, bm), (_cin, cout, k, s) in zip(params["conv"], cfg):
        patches, (B, OH, OW) = im2col(x, k, s)
        y = matmul_bias_relu(patches, wm, bm)          # [B*OH*OW, cout] bf16
        x = y.reshape(B, OH, OW, cout)

    # spatial is 1x1 here, so NHWC reshape == PyTorch x.view(-1, 256)
    feat = x.reshape(x.shape[0], 256)

    alpha, beta, v = heads_fused(feat, params)
    return (alpha, beta), v


if __name__ == "__main__":
    key = jax.random.PRNGKey(0)
    k_param, k_x = jax.random.split(key)

    img_stack = 4
    batch = 2
    # 96x96 spatial is what the conv stack implies: the final feature map is
    # 1x1x256, matching x.view(-1, 256) in the PyTorch module.
    x = jax.random.normal(k_x, (batch, img_stack, 96, 96), jnp.float32)

    cfg = conv_config(img_stack)
    params = init_params(k_param, img_stack)

    fwd = jax.jit(functools.partial(forward, cfg=cfg))   # cfg is static (closure)
    (alpha, beta), v = fwd(params, x)
    jax.block_until_ready((alpha, beta, v))

    assert alpha.shape == (batch, 3) and beta.shape == (batch, 3)
    assert v.shape == (batch, 1)
    assert bool(jnp.all(alpha >= 1.0)) and bool(jnp.all(beta >= 1.0))
    print("KERNEL_OK")
</pallas_src>

<mosaic_0001>
module attributes {stable_mosaic.version = 11 : i64} {
  func.func @_mm_bias_relu_kernel(%arg0: i32, %arg1: i32, %arg2: memref<512x64xbf16, #tpu.memory_space<vmem>>, %arg3: memref<64x8xbf16, #tpu.memory_space<vmem>>, %arg4: memref<1x8xf32, #tpu.memory_space<vmem>>, %arg5: memref<512x8xbf16, #tpu.memory_space<vmem>>) attributes {dimension_semantics = [#tpu.dimension_semantics<parallel>, #tpu.dimension_semantics<parallel>], iteration_bounds = array<i64: 9, 1>, scalar_prefetch = 0 : i64, scratch_operands = 0 : i64, tpu.core_type = #tpu.core_type<tc>, window_params = [{transform_indices = @transform_0, window_bounds = array<i64: 512, 64>}, {transform_indices = @transform_1, window_bounds = array<i64: 64, 8>}, {transform_indices = @transform_2, window_bounds = array<i64: 1, 8>}, {transform_indices = @transform_3, window_bounds = array<i64: 512, 8>}]} {
    %c0 = arith.constant 0 : index
    %c0_0 = arith.constant 0 : index
    %0 = vector.load %arg2[%c0, %c0_0] : memref<512x64xbf16, #tpu.memory_space<vmem>>, vector<512x64xbf16>
    %c0_1 = arith.constant 0 : index
    %c0_2 = arith.constant 0 : index
    %1 = vector.load %arg3[%c0_1, %c0_2] : memref<64x8xbf16, #tpu.memory_space<vmem>>, vector<64x8xbf16>
    %cst = arith.constant dense<0.000000e+00> : vector<512x8xf32>
    %2 = tpu.matmul %0, %1, %cst {dimension_numbers = #tpu.dot_dimension_numbers<[1], [0], [0], [1], [0, 0, 1, 1], [], []>} : vector<512x64xbf16>, vector<64x8xbf16>, vector<512x8xf32> -> vector<512x8xf32>
    %c0_3 = arith.constant 0 : index
    %c0_4 = arith.constant 0 : index
    %3 = vector.load %arg4[%c0_3, %c0_4] : memref<1x8xf32, #tpu.memory_space<vmem>>, vector<1x8xf32>
    %4 = vector.broadcast %3 : vector<1x8xf32> to vector<512x8xf32>
    %5 = arith.addf %2, %4 : vector<512x8xf32>
    %cst_5 = arith.constant 0.000000e+00 : f32
    %6 = vector.broadcast %cst_5 : f32 to vector<512x8xf32>
    %7 = arith.maximumf %5, %6 : vector<512x8xf32>
    %8 = arith.truncf %7 : vector<512x8xf32> to vector<512x8xbf16>
    %c0_6 = arith.constant 0 : index
    %c0_7 = arith.constant 0 : index
    %9 = vector.load %arg5[%c0_6, %c0_7] : memref<512x8xbf16, #tpu.memory_space<vmem>>, vector<512x8xbf16>
    tpu.vector_store %arg5[%c0_6, %c0_7], %8 {strides = array<i32>} : memref<512x8xbf16, #tpu.memory_space<vmem>>, vector<512x8xbf16>,
    return
  }
  func.func @transform_0(%arg0: i32, %arg1: i32) -> (i32, i32) {
    %c0_i32 = arith.constant 0 : i32
    %c0_i32_0 = arith.constant 0 : i32
    return %arg0, %c0_i32 : i32, i32
  }
  func.func @transform_1(%arg0: i32, %arg1: i32) -> (i32, i32) {
    %c0_i32 = arith.constant 0 : i32
    %c0_i32_0 = arith.constant 0 : i32
    return %c0_i32, %arg1 : i32, i32
  }
  func.func @transform_2(%arg0: i32, %arg1: i32) -> (i32, i32) {
    %c0_i32 = arith.constant 0 : i32
    %c0_i32_0 = arith.constant 0 : i32
    return %c0_i32, %arg1 : i32, i32
  }
  func.func @transform_3(%arg0: i32, %arg1: i32) -> (i32, i32) {
    %c0_i32 = arith.constant 0 : i32
    return %arg0, %arg1 : i32, i32
  }
}

module attributes {stable_mosaic.version = 11 : i64} {
  func.func @_mm_bias_relu_kernel(%arg0: i32, %arg1: i32, %arg2: memref<512x72xbf16, #tpu.memory_space<vmem>>, %arg3: memref<72x16xbf16, #tpu.memory_space<vmem>>, %arg4: memref<1x16xf32, #tpu.memory_space<vmem>>, %arg5: memref<512x16xbf16, #tpu.memory_space<vmem>>) attributes {dimension_semantics = [#tpu.dimension_semantics<parallel>, #tpu.dimension_semantics<parallel>], iteration_bounds = array<i64: 3, 1>, scalar_prefetch = 0 : i64, scratch_operands = 0 : i64, tpu.core_type = #tpu.core_type<tc>, window_params = [{transform_indices = @transform_0, window_bounds = array<i64: 512, 72>}, {transform_indices = @transform_1, window_bounds = array<i64: 72, 16>}, {transform_indices = @transform_2, window_bounds = array<i64: 1, 16>}, {transform_indices = @transform_3, window_bounds = array<i64: 512, 16>}]} {
    %c0 = arith.constant 0 : index
    %c0_0 = arith.constant 0 : index
    %0 = vector.load %arg2[%c0, %c0_0] : memref<512x72xbf16, #tpu.memory_space<vmem>>, vector<512x72xbf16>
    %c0_1 = arith.constant 0 : index
    %c0_2 = arith.constant 0 : index
    %1 = vector.load %arg3[%c0_1, %c0_2] : memref<72x16xbf16, #tpu.memory_space<vmem>>, vector<72x16xbf16>
    %cst = arith.constant dense<0.000000e+00> : vector<512x16xf32>
    %2 = tpu.matmul %0, %1, %cst {dimension_numbers = #tpu.dot_dimension_numbers<[1], [0], [0], [1], [0, 0, 1, 1], [], []>} : vector<512x72xbf16>, vector<72x16xbf16>, vector<512x16xf32> -> vector<512x16xf32>
    %c0_3 = arith.constant 0 : index
    %c0_4 = arith.constant 0 : index
    %3 = vector.load %arg4[%c0_3, %c0_4] : memref<1x16xf32, #tpu.memory_space<vmem>>, vector<1x16xf32>
    %4 = vector.broadcast %3 : vector<1x16xf32> to vector<512x16xf32>
    %5 = arith.addf %2, %4 : vector<512x16xf32>
    %cst_5 = arith.constant 0.000000e+00 : f32
    %6 = vector.broadcast %cst_5 : f32 to vector<512x16xf32>
    %7 = arith.maximumf %5, %6 : vector<512x16xf32>
    %8 = arith.truncf %7 : vector<512x16xf32> to vector<512x16xbf16>
    %c0_6 = arith.constant 0 : index
    %c0_7 = arith.constant 0 : index
    %9 = vector.load %arg5[%c0_6, %c0_7] : memref<512x16xbf16, #tpu.memory_space<vmem>>, vector<512x16xbf16>
    tpu.vector_store %arg5[%c0_6, %c0_7], %8 {strides = array<i32>} : memref<512x16xbf16, #tpu.memory_space<vmem>>, vector<512x16xbf16>,
    return
  }
  func.func @transform_0(%arg0: i32, %arg1: i32) -> (i32, i32) {
    %c0_i32 = arith.constant 0 : i32
    %c0_i32_0 = arith.constant 0 : i32
    return %arg0, %c0_i32 : i32, i32
  }
  func.func @transform_1(%arg0: i32, %arg1: i32) -> (i32, i32) {
    %c0_i32 = arith.constant 0 : i32
    %c0_i32_0 = arith.constant 0 : i32
    return %c0_i32, %arg1 : i32, i32
  }
  func.func @transform_2(%arg0: i32, %arg1: i32) -> (i32, i32) {
    %c0_i32 = arith.constant 0 : i32
    %c0_i32_0 = arith.constant 0 : i32
    return %c0_i32, %arg1 : i32, i32
  }
  func.func @transform_3(%arg0: i32, %arg1: i32) -> (i32, i32) {
    %c0_i32 = arith.constant 0 : i32
    return %arg0, %arg1 : i32, i32
  }
}

module attributes {stable_mosaic.version = 11 : i64} {
  func.func @_mm_bias_relu_kernel(%arg0: i32, %arg1: i32, %arg2: memref<242x144xbf16, #tpu.memory_space<vmem>>, %arg3: memref<144x32xbf16, #tpu.memory_space<vmem>>, %arg4: memref<1x32xf32, #tpu.memory_space<vmem>>, %arg5: memref<242x32xbf16, #tpu.memory_space<vmem>>) attributes {dimension_semantics = [#tpu.dimension_semantics<parallel>, #tpu.dimension_semantics<parallel>], iteration_bounds = array<i64: 1, 1>, scalar_prefetch = 0 : i64, scratch_operands = 0 : i64, tpu.core_type = #tpu.core_type<tc>, window_params = [{transform_indices = @transform_0, window_bounds = array<i64: 242, 144>}, {transform_indices = @transform_1, window_bounds = array<i64: 144, 32>}, {transform_indices = @transform_2, window_bounds = array<i64: 1, 32>}, {transform_indices = @transform_3, window_bounds = array<i64: 242, 32>}]} {
    %c0 = arith.constant 0 : index
    %c0_0 = arith.constant 0 : index
    %0 = vector.load %arg2[%c0, %c0_0] : memref<242x144xbf16, #tpu.memory_space<vmem>>, vector<242x144xbf16>
    %c0_1 = arith.constant 0 : index
    %c0_2 = arith.constant 0 : index
    %1 = vector.load %arg3[%c0_1, %c0_2] : memref<144x32xbf16, #tpu.memory_space<vmem>>, vector<144x32xbf16>
    %cst = arith.constant dense<0.000000e+00> : vector<242x32xf32>
    %2 = tpu.matmul %0, %1, %cst {dimension_numbers = #tpu.dot_dimension_numbers<[1], [0], [0], [1], [0, 0, 1, 1], [], []>} : vector<242x144xbf16>, vector<144x32xbf16>, vector<242x32xf32> -> vector<242x32xf32>
    %c0_3 = arith.constant 0 : index
    %c0_4 = arith.constant 0 : index
    %3 = vector.load %arg4[%c0_3, %c0_4] : memref<1x32xf32, #tpu.memory_space<vmem>>, vector<1x32xf32>
    %4 = vector.broadcast %3 : vector<1x32xf32> to vector<242x32xf32>
    %5 = arith.addf %2, %4 : vector<242x32xf32>
    %cst_5 = arith.constant 0.000000e+00 : f32
    %6 = vector.broadcast %cst_5 : f32 to vector<242x32xf32>
    %7 = arith.maximumf %5, %6 : vector<242x32xf32>
    %8 = arith.truncf %7 : vector<242x32xf32> to vector<242x32xbf16>
    %c0_6 = arith.constant 0 : index
    %c0_7 = arith.constant 0 : index
    %9 = vector.load %arg5[%c0_6, %c0_7] : memref<242x32xbf16, #tpu.memory_space<vmem>>, vector<242x32xbf16>
    tpu.vector_store %arg5[%c0_6, %c0_7], %8 {strides = array<i32>} : memref<242x32xbf16, #tpu.memory_space<vmem>>, vector<242x32xbf16>,
    return
  }
  func.func @transform_0(%arg0: i32, %arg1: i32) -> (i32, i32) {
    %c0_i32 = arith.constant 0 : i32
    %c0_i32_0 = arith.constant 0 : i32
    return %arg0, %c0_i32 : i32, i32
  }
  func.func @transform_1(%arg0: i32, %arg1: i32) -> (i32, i32) {
    %c0_i32 = arith.constant 0 : i32
    %c0_i32_0 = arith.constant 0 : i32
    return %c0_i32, %arg1 : i32, i32
  }
  func.func @transform_2(%arg0: i32, %arg1: i32) -> (i32, i32) {
    %c0_i32 = arith.constant 0 : i32
    %c0_i32_0 = arith.constant 0 : i32
    return %c0_i32, %arg1 : i32, i32
  }
  func.func @transform_3(%arg0: i32, %arg1: i32) -> (i32, i32) {
    %c0_i32 = arith.constant 0 : i32
    return %arg0, %arg1 : i32, i32
  }
}

module attributes {stable_mosaic.version = 11 : i64} {
  func.func @_mm_bias_relu_kernel(%arg0: i32, %arg1: i32, %arg2: memref<50x288xbf16, #tpu.memory_space<vmem>>, %arg3: memref<288x64xbf16, #tpu.memory_space<vmem>>, %arg4: memref<1x64xf32, #tpu.memory_space<vmem>>, %arg5: memref<50x64xbf16, #tpu.memory_space<vmem>>) attributes {dimension_semantics = [#tpu.dimension_semantics<parallel>, #tpu.dimension_semantics<parallel>], iteration_bounds = array<i64: 1, 1>, scalar_prefetch = 0 : i64, scratch_operands = 0 : i64, tpu.core_type = #tpu.core_type<tc>, window_params = [{transform_indices = @transform_0, window_bounds = array<i64: 50, 288>}, {transform_indices = @transform_1, window_bounds = array<i64: 288, 64>}, {transform_indices = @transform_2, window_bounds = array<i64: 1, 64>}, {transform_indices = @transform_3, window_bounds = array<i64: 50, 64>}]} {
    %c0 = arith.constant 0 : index
    %c0_0 = arith.constant 0 : index
    %0 = vector.load %arg2[%c0, %c0_0] : memref<50x288xbf16, #tpu.memory_space<vmem>>, vector<50x288xbf16>
    %c0_1 = arith.constant 0 : index
    %c0_2 = arith.constant 0 : index
    %1 = vector.load %arg3[%c0_1, %c0_2] : memref<288x64xbf16, #tpu.memory_space<vmem>>, vector<288x64xbf16>
    %cst = arith.constant dense<0.000000e+00> : vector<50x64xf32>
    %2 = tpu.matmul %0, %1, %cst {dimension_numbers = #tpu.dot_dimension_numbers<[1], [0], [0], [1], [0, 0, 1, 1], [], []>} : vector<50x288xbf16>, vector<288x64xbf16>, vector<50x64xf32> -> vector<50x64xf32>
    %c0_3 = arith.constant 0 : index
    %c0_4 = arith.constant 0 : index
    %3 = vector.load %arg4[%c0_3, %c0_4] : memref<1x64xf32, #tpu.memory_space<vmem>>, vector<1x64xf32>
    %4 = vector.broadcast %3 : vector<1x64xf32> to vector<50x64xf32>
    %5 = arith.addf %2, %4 : vector<50x64xf32>
    %cst_5 = arith.constant 0.000000e+00 : f32
    %6 = vector.broadcast %cst_5 : f32 to vector<50x64xf32>
    %7 = arith.maximumf %5, %6 : vector<50x64xf32>
    %8 = arith.truncf %7 : vector<50x64xf32> to vector<50x64xbf16>
    %c0_6 = arith.constant 0 : index
    %c0_7 = arith.constant 0 : index
    %9 = vector.load %arg5[%c0_6, %c0_7] : memref<50x64xbf16, #tpu.memory_space<vmem>>, vector<50x64xbf16>
    tpu.vector_store %arg5[%c0_6, %c0_7], %8 {strides = array<i32>} : memref<50x64xbf16, #tpu.memory_space<vmem>>, vector<50x64xbf16>,
    return
  }
  func.func @transform_0(%arg0: i32, %arg1: i32) -> (i32, i32) {
    %c0_i32 = arith.constant 0 : i32
    %c0_i32_0 = arith.constant 0 : i32
    return %arg0, %c0_i32 : i32, i32
  }
  func.func @transform_1(%arg0: i32, %arg1: i32) -> (i32, i32) {
    %c0_i32 = arith.constant 0 : i32
    %c0_i32_0 = arith.constant 0 : i32
    return %c0_i32, %arg1 : i32, i32
  }
  func.func @transform_2(%arg0: i32, %arg1: i32) -> (i32, i32) {
    %c0_i32 = arith.constant 0 : i32
    %c0_i32_0 = arith.constant 0 : i32
    return %c0_i32, %arg1 : i32, i32
  }
  func.func @transform_3(%arg0: i32, %arg1: i32) -> (i32, i32) {
    %c0_i32 = arith.constant 0 : i32
    return %arg0, %arg1 : i32, i32
  }
}

module attributes {stable_mosaic.version = 11 : i64} {
  func.func @_mm_bias_relu_kernel(%arg0: i32, %arg1: i32, %arg2: memref<18x576xbf16, #tpu.memory_space<vmem>>, %arg3: memref<576x128xbf16, #tpu.memory_space<vmem>>, %arg4: memref<1x128xf32, #tpu.memory_space<vmem>>, %arg5: memref<18x128xbf16, #tpu.memory_space<vmem>>) attributes {dimension_semantics = [#tpu.dimension_semantics<parallel>, #tpu.dimension_semantics<parallel>], iteration_bounds = array<i64: 1, 1>, scalar_prefetch = 0 : i64, scratch_operands = 0 : i64, tpu.core_type = #tpu.core_type<tc>, window_params = [{transform_indices = @transform_0, window_bounds = array<i64: 18, 576>}, {transform_indices = @transform_1, window_bounds = array<i64: 576, 128>}, {transform_indices = @transform_2, window_bounds = array<i64: 1, 128>}, {transform_indices = @transform_3, window_bounds = array<i64: 18, 128>}]} {
    %c0 = arith.constant 0 : index
    %c0_0 = arith.constant 0 : index
    %0 = vector.load %arg2[%c0, %c0_0] : memref<18x576xbf16, #tpu.memory_space<vmem>>, vector<18x576xbf16>
    %c0_1 = arith.constant 0 : index
    %c0_2 = arith.constant 0 : index
    %1 = vector.load %arg3[%c0_1, %c0_2] : memref<576x128xbf16, #tpu.memory_space<vmem>>, vector<576x128xbf16>
    %cst = arith.constant dense<0.000000e+00> : vector<18x128xf32>
    %2 = tpu.matmul %0, %1, %cst {dimension_numbers = #tpu.dot_dimension_numbers<[1], [0], [0], [1], [0, 0, 1, 1], [], []>} : vector<18x576xbf16>, vector<576x128xbf16>, vector<18x128xf32> -> vector<18x128xf32>
    %c0_3 = arith.constant 0 : index
    %c0_4 = arith.constant 0 : index
    %3 = vector.load %arg4[%c0_3, %c0_4] : memref<1x128xf32, #tpu.memory_space<vmem>>, vector<1x128xf32>
    %4 = vector.broadcast %3 : vector<1x128xf32> to vector<18x128xf32>
    %5 = arith.addf %2, %4 : vector<18x128xf32>
    %cst_5 = arith.constant 0.000000e+00 : f32
    %6 = vector.broadcast %cst_5 : f32 to vector<18x128xf32>
    %7 = arith.maximumf %5, %6 : vector<18x128xf32>
    %8 = arith.truncf %7 : vector<18x128xf32> to vector<18x128xbf16>
    %c0_6 = arith.constant 0 : index
    %c0_7 = arith.constant 0 : index
    %9 = vector.load %arg5[%c0_6, %c0_7] : memref<18x128xbf16, #tpu.memory_space<vmem>>, vector<18x128xbf16>
    tpu.vector_store %arg5[%c0_6, %c0_7], %8 {strides = array<i32>} : memref<18x128xbf16, #tpu.memory_space<vmem>>, vector<18x128xbf16>,
    return
  }
  func.func @transform_0(%arg0: i32, %arg1: i32) -> (i32, i32) {
    %c0_i32 = arith.constant 0 : i32
    %c0_i32_0 = arith.constant 0 : i32
    return %arg0, %c0_i32 : i32, i32
  }
  func.func @transform_1(%arg0: i32, %arg1: i32) -> (i32, i32) {
    %c0_i32 = arith.constant 0 : i32
    %c0_i32_0 = arith.constant 0 : i32
    return %c0_i32, %arg1 : i32, i32
  }
  func.func @transform_2(%arg0: i32, %arg1: i32) -> (i32, i32) {
    %c0_i32 = arith.constant 0 : i32
    %c0_i32_0 = arith.constant 0 : i32
    return %c0_i32, %arg1 : i32, i32
  }
  func.func @transform_3(%arg0: i32, %arg1: i32) -> (i32, i32) {
    %c0_i32 = arith.constant 0 : i32
    return %arg0, %arg1 : i32, i32
  }
}

module attributes {stable_mosaic.version = 11 : i64} {
  func.func @_mm_bias_relu_kernel(%arg0: i32, %arg1: i32, %arg2: memref<2x1152xbf16, #tpu.memory_space<vmem>>, %arg3: memref<1152x128xbf16, #tpu.memory_space<vmem>>, %arg4: memref<1x128xf32, #tpu.memory_space<vmem>>, %arg5: memref<2x128xbf16, #tpu.memory_space<vmem>>) attributes {dimension_semantics = [#tpu.dimension_semantics<parallel>, #tpu.dimension_semantics<parallel>], iteration_bounds = array<i64: 1, 2>, scalar_prefetch = 0 : i64, scratch_operands = 0 : i64, tpu.core_type = #tpu.core_type<tc>, window_params = [{transform_indices = @transform_0, window_bounds = array<i64: 2, 1152>}, {transform_indices = @transform_1, window_bounds = array<i64: 1152, 128>}, {transform_indices = @transform_2, window_bounds = array<i64: 1, 128>}, {transform_indices = @transform_3, window_bounds = array<i64: 2, 128>}]} {
    %c0 = arith.constant 0 : index
    %c0_0 = arith.constant 0 : index
    %0 = vector.load %arg2[%c0, %c0_0] : memref<2x1152xbf16, #tpu.memory_space<vmem>>, vector<2x1152xbf16>
    %c0_1 = arith.constant 0 : index
    %c0_2 = arith.constant 0 : index
    %1 = vector.load %arg3[%c0_1, %c0_2] : memref<1152x128xbf16, #tpu.memory_space<vmem>>, vector<1152x128xbf16>
    %cst = arith.constant dense<0.000000e+00> : vector<2x128xf32>
    %2 = tpu.matmul %0, %1, %cst {dimension_numbers = #tpu.dot_dimension_numbers<[1], [0], [0], [1], [0, 0, 1, 1], [], []>} : vector<2x1152xbf16>, vector<1152x128xbf16>, vector<2x128xf32> -> vector<2x128xf32>
    %c0_3 = arith.constant 0 : index
    %c0_4 = arith.constant 0 : index
    %3 = vector.load %arg4[%c0_3, %c0_4] : memref<1x128xf32, #tpu.memory_space<vmem>>, vector<1x128xf32>
    %4 = vector.broadcast %3 : vector<1x128xf32> to vector<2x128xf32>
    %5 = arith.addf %2, %4 : vector<2x128xf32>
    %cst_5 = arith.constant 0.000000e+00 : f32
    %6 = vector.broadcast %cst_5 : f32 to vector<2x128xf32>
    %7 = arith.maximumf %5, %6 : vector<2x128xf32>
    %8 = arith.truncf %7 : vector<2x128xf32> to vector<2x128xbf16>
    %c0_6 = arith.constant 0 : index
    %c0_7 = arith.constant 0 : index
    %9 = vector.load %arg5[%c0_6, %c0_7] : memref<2x128xbf16, #tpu.memory_space<vmem>>, vector<2x128xbf16>
    tpu.vector_store %arg5[%c0_6, %c0_7], %8 {strides = array<i32>} : memref<2x128xbf16, #tpu.memory_space<vmem>>, vector<2x128xbf16>,
    return
  }
  func.func @transform_0(%arg0: i32, %arg1: i32) -> (i32, i32) {
    %c0_i32 = arith.constant 0 : i32
    %c0_i32_0 = arith.constant 0 : i32
    return %arg0, %c0_i32 : i32, i32
  }
  func.func @transform_1(%arg0: i32, %arg1: i32) -> (i32, i32) {
    %c0_i32 = arith.constant 0 : i32
    %c0_i32_0 = arith.constant 0 : i32
    return %c0_i32, %arg1 : i32, i32
  }
  func.func @transform_2(%arg0: i32, %arg1: i32) -> (i32, i32) {
    %c0_i32 = arith.constant 0 : i32
    %c0_i32_0 = arith.constant 0 : i32
    return %c0_i32, %arg1 : i32, i32
  }
  func.func @transform_3(%arg0: i32, %arg1: i32) -> (i32, i32) {
    %c0_i32 = arith.constant 0 : i32
    return %arg0, %arg1 : i32, i32
  }
}

module attributes {stable_mosaic.version = 11 : i64} {
  func.func @_heads_kernel(%arg0: i32, %arg1: memref<2x256xbf16, #tpu.memory_space<vmem>>, %arg2: memref<256x128xbf16, #tpu.memory_space<vmem>>, %arg3: memref<1x128xf32, #tpu.memory_space<vmem>>, %arg4: memref<256x128xbf16, #tpu.memory_space<vmem>>, %arg5: memref<1x128xf32, #tpu.memory_space<vmem>>, %arg6: memref<128x128xbf16, #tpu.memory_space<vmem>>, %arg7: memref<1x128xf32, #tpu.memory_space<vmem>>, %arg8: memref<128x128xbf16, #tpu.memory_space<vmem>>, %arg9: memref<1x128xf32, #tpu.memory_space<vmem>>, %arg10: memref<1x128xf32, #tpu.memory_space<vmem>>, %arg11: memref<1x1xf32, #tpu.memory_space<vmem>>, %arg12: memref<2x128xf32, #tpu.memory_space<vmem>>, %arg13: memref<2x128xf32, #tpu.memory_space<vmem>>, %arg14: memref<2x1xf32, #tpu.memory_space<vmem>>) attributes {dimension_semantics = [#tpu.dimension_semantics<arbitrary>], iteration_bounds = array<i64: 1>, scalar_prefetch = 0 : i64, scratch_operands = 0 : i64, tpu.core_type = #tpu.core_type<tc>, window_params = [{pipeline_mode = #tpu.pipeline_mode<synchronous>, transform_indices = @transform_0, window_bounds = array<i64: 2, 256>}, {pipeline_mode = #tpu.pipeline_mode<synchronous>, transform_indices = @transform_1, window_bounds = array<i64: 256, 128>}, {pipeline_mode = #tpu.pipeline_mode<synchronous>, transform_indices = @transform_2, window_bounds = array<i64: 1, 128>}, {pipeline_mode = #tpu.pipeline_mode<synchronous>, transform_indices = @transform_3, window_bounds = array<i64: 256, 128>}, {pipeline_mode = #tpu.pipeline_mode<synchronous>, transform_indices = @transform_4, window_bounds = array<i64: 1, 128>}, {pipeline_mode = #tpu.pipeline_mode<synchronous>, transform_indices = @transform_5, window_bounds = array<i64: 128, 128>}, {pipeline_mode = #tpu.pipeline_mode<synchronous>, transform_indices = @transform_6, window_bounds = array<i64: 1, 128>}, {pipeline_mode = #tpu.pipeline_mode<synchronous>, transform_indices = @transform_7, window_bounds = array<i64: 128, 128>}, {pipeline_mode = #tpu.pipeline_mode<synchronous>, transform_indices = @transform_8, window_bounds = array<i64: 1, 128>}, {pipeline_mode = #tpu.pipeline_mode<synchronous>, transform_indices = @transform_9, window_bounds = array<i64: 1, 128>}, {pipeline_mode = #tpu.pipeline_mode<synchronous>, transform_indices = @transform_10, window_bounds = array<i64: 1, 1>}, {pipeline_mode = #tpu.pipeline_mode<synchronous>, transform_indices = @transform_11, window_bounds = array<i64: 2, 128>}, {pipeline_mode = #tpu.pipeline_mode<synchronous>, transform_indices = @transform_12, window_bounds = array<i64: 2, 128>}, {pipeline_mode = #tpu.pipeline_mode<synchronous>, transform_indices = @transform_13, window_bounds = array<i64: 2, 1>}]} {
    %c0 = arith.constant 0 : index
    %c0_0 = arith.constant 0 : index
    %0 = vector.load %arg1[%c0, %c0_0] : memref<2x256xbf16, #tpu.memory_space<vmem>>, vector<2x256xbf16>
    %c0_1 = arith.constant 0 : index
    %c0_2 = arith.constant 0 : index
    %1 = vector.load %arg2[%c0_1, %c0_2] : memref<256x128xbf16, #tpu.memory_space<vmem>>, vector<256x128xbf16>
    %cst = arith.constant dense<0.000000e+00> : vector<2x128xf32>
    %2 = tpu.matmul %0, %1, %cst {dimension_numbers = #tpu.dot_dimension_numbers<[1], [0], [0], [1], [0, 0, 1, 1], [], []>} : vector<2x256xbf16>, vector<256x128xbf16>, vector<2x128xf32> -> vector<2x128xf32>
    %c0_3 = arith.constant 0 : index
    %c0_4 = arith.constant 0 : index
    %3 = vector.load %arg3[%c0_3, %c0_4] : memref<1x128xf32, #tpu.memory_space<vmem>>, vector<1x128xf32>
    %4 = vector.broadcast %3 : vector<1x128xf32> to vector<2x128xf32>
    %5 = arith.addf %2, %4 : vector<2x128xf32>
    %cst_5 = arith.constant 0.000000e+00 : f32
    %6 = vector.broadcast %cst_5 : f32 to vector<2x128xf32>
    %7 = arith.maximumf %5, %6 : vector<2x128xf32>
    %c0_6 = arith.constant 0 : index
    %c0_7 = arith.constant 0 : index
    %8 = vector.load %arg10[%c0_6, %c0_7] : memref<1x128xf32, #tpu.memory_space<vmem>>, vector<1x128xf32>
    %9 = vector.broadcast %8 : vector<1x128xf32> to vector<2x128xf32>
    %10 = arith.mulf %7, %9 : vector<2x128xf32>
    %cst_8 = arith.constant dense<0.000000e+00> : vector<2xf32>
    %11 = vector.multi_reduction <add>, %10, %cst_8 [1] : vector<2x128xf32> to vector<2xf32>
    %12 = vector.shape_cast %11 : vector<2xf32> to vector<2x1xf32>
    %c0_9 = arith.constant 0 : index
    %c0_10 = arith.constant 0 : index
    %13 = vector.load %arg11[%c0_9, %c0_10] : memref<1x1xf32, #tpu.memory_space<vmem>>, vector<1x1xf32>
    %14 = vector.broadcast %13 : vector<1x1xf32> to vector<2x1xf32>
    %15 = arith.addf %12, %14 : vector<2x1xf32>
    %c0_11 = arith.constant 0 : index
    %c0_12 = arith.constant 0 : index
    %16 = vector.load %arg14[%c0_11, %c0_12] : memref<2x1xf32, #tpu.memory_space<vmem>>, vector<2x1xf32>
    tpu.vector_store %arg14[%c0_11, %c0_12], %15 {strides = array<i32>} : memref<2x1xf32, #tpu.memory_space<vmem>>, vector<2x1xf32>,
    %c0_13 = arith.constant 0 : index
    %c0_14 = arith.constant 0 : index
    %17 = vector.load %arg4[%c0_13, %c0_14] : memref<256x128xbf16, #tpu.memory_space<vmem>>, vector<256x128xbf16>
    %cst_15 = arith.constant dense<0.000000e+00> : vector<2x128xf32>
    %18 = tpu.matmul %0, %17, %cst_15 {dimension_numbers = #tpu.dot_dimension_numbers<[1], [0], [0], [1], [0, 0, 1, 1], [], []>} : vector<2x256xbf16>, vector<256x128xbf16>, vector<2x128xf32> -> vector<2x128xf32>
    %c0_16 = arith.constant 0 : index
    %c0_17 = arith.constant 0 : index
    %19 = vector.load %arg5[%c0_16, %c0_17] : memref<1x128xf32, #tpu.memory_space<vmem>>, vector<1x128xf32>
    %20 = vector.broadcast %19 : vector<1x128xf32> to vector<2x128xf32>
    %21 = arith.addf %18, %20 : vector<2x128xf32>
    %cst_18 = arith.constant 0.000000e+00 : f32
    %22 = vector.broadcast %cst_18 : f32 to vector<2x128xf32>
    %23 = arith.maximumf %21, %22 : vector<2x128xf32>
    %24 = arith.truncf %23 : vector<2x128xf32> to vector<2x128xbf16>
    %c0_19 = arith.constant 0 : index
    %c0_20 = arith.constant 0 : index
    %25 = vector.load %arg6[%c0_19, %c0_20] : memref<128x128xbf16, #tpu.memory_space<vmem>>, vector<128x128xbf16>
    %cst_21 = arith.constant dense<0.000000e+00> : vector<2x128xf32>
    %26 = tpu.matmul %24, %25, %cst_21 {dimension_numbers = #tpu.dot_dimension_numbers<[1], [0], [0], [1], [0, 0, 1, 1], [], []>} : vector<2x128xbf16>, vector<128x128xbf16>, vector<2x128xf32> -> vector<2x128xf32>
    %c0_22 = arith.constant 0 : index
    %c0_23 = arith.constant 0 : index
    %27 = vector.load %arg7[%c0_22, %c0_23] : memref<1x128xf32, #tpu.memory_space<vmem>>, vector<1x128xf32>
    %28 = vector.broadcast %27 : vector<1x128xf32> to vector<2x128xf32>
    %29 = arith.addf %26, %28 : vector<2x128xf32>
    %cst_24 = arith.constant 2.000000e+01 : f32
    %30 = vector.broadcast %cst_24 : f32 to vector<2x128xf32>
    %31 = arith.cmpf ogt, %29, %30 : vector<2x128xf32>
    %cst_25 = arith.constant 2.000000e+01 : f32
    %32 = vector.broadcast %cst_25 : f32 to vector<2x128xf32>
    %33 = arith.minimumf %29, %32 : vector<2x128xf32>
    %34 = math.exp %33 : vector<2x128xf32>
    %35 = math.log1p %34 : vector<2x128xf32>
    %36 = arith.select %31, %29, %35 : vector<2x128xi1>, vector<2x128xf32>
    %cst_26 = arith.constant 1.000000e+00 : f32
    %37 = vector.broadcast %cst_26 : f32 to vector<2x128xf32>
    %38 = arith.addf %36, %37 : vector<2x128xf32>
    %c0_27 = arith.constant 0 : index
    %c0_28 = arith.constant 0 : index
    %39 = vector.load %arg12[%c0_27, %c0_28] : memref<2x128xf32, #tpu.memory_space<vmem>>, vector<2x128xf32>
    tpu.vector_store %arg12[%c0_27, %c0_28], %38 {strides = array<i32>} : memref<2x128xf32, #tpu.memory_space<vmem>>, vector<2x128xf32>,
    %c0_29 = arith.constant 0 : index
    %c0_30 = arith.constant 0 : index
    %40 = vector.load %arg8[%c0_29, %c0_30] : memref<128x128xbf16, #tpu.memory_space<vmem>>, vector<128x128xbf16>
    %cst_31 = arith.constant dense<0.000000e+00> : vector<2x128xf32>
    %41 = tpu.matmul %24, %40, %cst_31 {dimension_numbers = #tpu.dot_dimension_numbers<[1], [0], [0], [1], [0, 0, 1, 1], [], []>} : vector<2x128xbf16>, vector<128x128xbf16>, vector<2x128xf32> -> vector<2x128xf32>
    %c0_32 = arith.constant 0 : index
    %c0_33 = arith.constant 0 : index
    %42 = vector.load %arg9[%c0_32, %c0_33] : memref<1x128xf32, #tpu.memory_space<vmem>>, vector<1x128xf32>
    %43 = vector.broadcast %42 : vector<1x128xf32> to vector<2x128xf32>
    %44 = arith.addf %41, %43 : vector<2x128xf32>
    %cst_34 = arith.constant 2.000000e+01 : f32
    %45 = vector.broadcast %cst_34 : f32 to vector<2x128xf32>
    %46 = arith.cmpf ogt, %44, %45 : vector<2x128xf32>
    %cst_35 = arith.constant 2.000000e+01 : f32
    %47 = vector.broadcast %cst_35 : f32 to vector<2x128xf32>
    %48 = arith.minimumf %44, %47 : vector<2x128xf32>
    %49 = math.exp %48 : vector<2x128xf32>
    %50 = math.log1p %49 : vector<2x128xf32>
    %51 = arith.select %46, %44, %50 : vector<2x128xi1>, vector<2x128xf32>
    %cst_36 = arith.constant 1.000000e+00 : f32
    %52 = vector.broadcast %cst_36 : f32 to vector<2x128xf32>
    %53 = arith.addf %51, %52 : vector<2x128xf32>
    %c0_37 = arith.constant 0 : index
    %c0_38 = arith.constant 0 : index
    %54 = vector.load %arg13[%c0_37, %c0_38] : memref<2x128xf32, #tpu.memory_space<vmem>>, vector<2x128xf32>
    tpu.vector_store %arg13[%c0_37, %c0_38], %53 {strides = array<i32>} : memref<2x128xf32, #tpu.memory_space<vmem>>, vector<2x128xf32>,
    return
  }
  func.func @transform_0(%arg0: i32) -> (i32, i32) {
    %c0_i32 = arith.constant 0 : i32
    %c0_i32_0 = arith.constant 0 : i32
    %c0_i32_1 = arith.constant 0 : i32
    return %c0_i32, %c0_i32_0 : i32, i32
  }
  func.func @transform_1(%arg0: i32) -> (i32, i32) {
    %c0_i32 = arith.constant 0 : i32
    %c0_i32_0 = arith.constant 0 : i32
    %c0_i32_1 = arith.constant 0 : i32
    return %c0_i32, %c0_i32_0 : i32, i32
  }
  func.func @transform_2(%arg0: i32) -> (i32, i32) {
    %c0_i32 = arith.constant 0 : i32
    %c0_i32_0 = arith.constant 0 : i32
    %c0_i32_1 = arith.constant 0 : i32
    return %c0_i32, %c0_i32_0 : i32, i32
  }
  func.func @transform_3(%arg0: i32) -> (i32, i32) {
    %c0_i32 = arith.constant 0 : i32
    %c0_i32_0 = arith.constant 0 : i32
    %c0_i32_1 = arith.constant 0 : i32
    return %c0_i32, %c0_i32_0 : i32, i32
  }
  func.func @transform_4(%arg0: i32) -> (i32, i32) {
    %c0_i32 = arith.constant 0 : i32
    %c0_i32_0 = arith.constant 0 : i32
    %c0_i32_1 = arith.constant 0 : i32
    return %c0_i32, %c0_i32_0 : i32, i32
  }
  func.func @transform_5(%arg0: i32) -> (i32, i32) {
    %c0_i32 = arith.constant 0 : i32
    %c0_i32_0 = arith.constant 0 : i32
    %c0_i32_1 = arith.constant 0 : i32
    return %c0_i32, %c0_i32_0 : i32, i32
  }
  func.func @transform_6(%arg0: i32) -> (i32, i32) {
    %c0_i32 = arith.constant 0 : i32
    %c0_i32_0 = arith.constant 0 : i32
    %c0_i32_1 = arith.constant 0 : i32
    return %c0_i32, %c0_i32_0 : i32, i32
  }
  func.func @transform_7(%arg0: i32) -> (i32, i32) {
    %c0_i32 = arith.constant 0 : i32
    %c0_i32_0 = arith.constant 0 : i32
    %c0_i32_1 = arith.constant 0 : i32
    return %c0_i32, %c0_i32_0 : i32, i32
  }
  func.func @transform_8(%arg0: i32) -> (i32, i32) {
    %c0_i32 = arith.constant 0 : i32
    %c0_i32_0 = arith.constant 0 : i32
    %c0_i32_1 = arith.constant 0 : i32
    return %c0_i32, %c0_i32_0 : i32, i32
  }
  func.func @transform_9(%arg0: i32) -> (i32, i32) {
    %c0_i32 = arith.constant 0 : i32
    %c0_i32_0 = arith.constant 0 : i32
    %c0_i32_1 = arith.constant 0 : i32
    return %c0_i32, %c0_i32_0 : i32, i32
  }
  func.func @transform_10(%arg0: i32) -> (i32, i32) {
    %c0_i32 = arith.constant 0 : i32
    %c0_i32_0 = arith.constant 0 : i32
    %c0_i32_1 = arith.constant 0 : i32
    return %c0_i32, %c0_i32_0 : i32, i32
  }
  func.func @transform_11(%arg0: i32) -> (i32, i32) {
    %c0_i32 = arith.constant 0 : i32
    %c0_i32_0 = arith.constant 0 : i32
    %c0_i32_1 = arith.constant 0 : i32
    return %c0_i32, %c0_i32_0 : i32, i32
  }
  func.func @transform_12(%arg0: i32) -> (i32, i32) {
    %c0_i32 = arith.constant 0 : i32
    %c0_i32_0 = arith.constant 0 : i32
    %c0_i32_1 = arith.constant 0 : i32
    return %c0_i32, %c0_i32_0 : i32, i32
  }
  func.func @transform_13(%arg0: i32) -> (i32, i32) {
    %c0_i32 = arith.constant 0 : i32
    %c0_i32_0 = arith.constant 0 : i32
    %c0_i32_1 = arith.constant 0 : i32
    return %c0_i32, %c0_i32_0 : i32, i32
  }
}

</mosaic_0001>

<llo_original>
// kernel: forward.7
$region0: #{forward.7}
  #allocation0 [shape = 'u32[]', space=smem, size = 0x4, offset = 0x4, fixed_abs, tag = 'smem constant byte address 0x4 - core index']
  #allocation1 [shape = 'u32[144,128]{1,0:T(1,128)}', space=vmem, size = 0x12000, scoped, tag = 'internal scratch']
  %s0 = inlined_call_operand.vmem [shape: bf16[4418,64], index: 0, kind: input, shape index: {}]
  %s1 = inlined_call_operand.vmem [shape: bf16[64,8], index: 1, kind: input, shape index: {}]
  %s2 = inlined_call_operand.vmem [shape: f32[1,8], index: 2, kind: input, shape index: {}]
  %s3 = inlined_call_operand.vmem [shape: bf16[4418,8], index: 3, kind: output, shape index: {}]
  %s4 = sld [smem:[#allocation0]]
  $region89: #{forward.7} parent=0
    _
  %s6 = ssub.s32 1, %s4
  %s7 = scalar_select 0, %s6, %s4
  $region1: #{forward.7} parent=0
    #allocation2 [shape = 'u8[262144]{0}', space=vmem, size = 0x40000, scoped, tag = 'output window, operand 0']
    loop: start=0, step=1, limit=11
    $region2: #{forward.7} parent=1 // loop_pre_header
      _
    $region3: #{forward.7} parent=1 // loop_header
      %s9 = sphi 0, %s13
      %p10 = scmp.ge.s32.totalorder %s9, 11
      %s16 = sphi 0, %s28
      %s17 = sphi 0, %s24
      %s18 = sphi 0, %s16
      %s19 = sphi 0, %s17
      %s20 = sphi 0, %s18
      %s21 = sphi 0, %s19
      %s31 = sphi 0, %s33
      %s34 = sphi 0, %s31
      %s35 = sphi 0, %s34
      %s51 = sphi 0, %s35
      %s57 = sphi 0, %s59
      %s60 = sphi 0, %s57
      %s61 = sphi 0, %s60
      %s77 = sphi 0, %s61
      %s83 = sphi 0, %s85
      %s86 = sphi 0, %s83
      %s87 = sphi 0, %s86
      %s103 = sphi 0, %s87
      %s111 = sphi 0, %s113
      %s114 = sphi 0, %s111
      %s115 = sphi 0, %s114
      %s131 = sphi 0, %s115
    $region4: #{forward.7} parent=1 // loop_header_branch
      %12 = sbr.rel (%p10) target = $region8
    $region5: #{forward.7} parent=1 // loop_body
      %s14 = ssub.s32 %s9, 1
      %s15 = ssub.s32 %s9, 2
      %s22 = sadd.s32 1, %s17
      %p23 = scmp.ge.s32.totalorder %s22, 1
      %s24 = scalar_select %p23, 0, %s22
      %s25 = sadd.s32 1, %s16
      %s26 = scalar_select %p23, %s25, %s16
      %p27 = scmp.ge.s32.totalorder %s26, 9
      %s28 = scalar_select %p27, 0, %s26
      %s29 = ssub.s32 %s16, %s28
      %p30 = scmp.eq.s32.totalorder %s29, 0
      %s32 = sadd.s32 %s31, 1
      %s33 = scalar_select %p30, %s31, %s32
      %p36 = pneg %p30
      %p37 = scmp.eq.s32.totalorder %s9, 8
      %p38 = por %p36, %p37
      %p39 = scmp.ne.s32.totalorder %s31, %s34
      %p40 = scmp.eq.s32.totalorder %s9, 0
      %p41 = por %p39, %p40
      %p42 = scmp.ne.s32.totalorder %s31, %s34
      %p43 = scmp.eq.s32.totalorder %s14, 8
      %p44 = por %p42, %p43
      %p45 = scmp.ne.s32.totalorder %s34, %s35
      %p46 = scmp.eq.s32.totalorder %s14, 0
      %p47 = por %p45, %p46
      %p48 = scmp.ne.s32.totalorder %s34, %s35
      %p49 = scmp.eq.s32.totalorder %s15, 8
      %p50 = por %p48, %p49
      %p52 = scmp.ne.s32.totalorder %s35, %s51
      %p53 = scmp.eq.s32.totalorder %s15, 0
      %p54 = por %p52, %p53
      %s55 = ssub.s32 %s17, %s24
      %p56 = scmp.eq.s32.totalorder %s55, 0
      %s58 = sadd.s32 %s57, 1
      %s59 = scalar_select %p56, %s57, %s58
      %p62 = pneg %p56
      %p63 = scmp.eq.s32.totalorder %s9, 8
      %p64 = por %p62, %p63
      %p65 = scmp.ne.s32.totalorder %s57, %s60
      %p66 = scmp.eq.s32.totalorder %s9, 0
      %p67 = por %p65, %p66
      %p68 = scmp.ne.s32.totalorder %s57, %s60
      %p69 = scmp.eq.s32.totalorder %s14, 8
      %p70 = por %p68, %p69
      %p71 = scmp.ne.s32.totalorder %s60, %s61
      %p72 = scmp.eq.s32.totalorder %s14, 0
      %p73 = por %p71, %p72
      %p74 = scmp.ne.s32.totalorder %s60, %s61
      %p75 = scmp.eq.s32.totalorder %s15, 8
      %p76 = por %p74, %p75
      %p78 = scmp.ne.s32.totalorder %s61, %s77
      %p79 = scmp.eq.s32.totalorder %s15, 0
      %p80 = por %p78, %p79
      %s81 = ssub.s32 %s17, %s24
      %p82 = scmp.eq.s32.totalorder %s81, 0
      %s84 = sadd.s32 %s83, 1
      %s85 = scalar_select %p82, %s83, %s84
      %p88 = pneg %p82
      %p89 = scmp.eq.s32.totalorder %s9, 8
      %p90 = por %p88, %p89
      %p91 = scmp.ne.s32.totalorder %s83, %s86
      %p92 = scmp.eq.s32.totalorder %s9, 0
      %p93 = por %p91, %p92
      %p94 = scmp.ne.s32.totalorder %s83, %s86
      %p95 = scmp.eq.s32.totalorder %s14, 8
      %p96 = por %p94, %p95
      %p97 = scmp.ne.s32.totalorder %s86, %s87
      %p98 = scmp.eq.s32.totalorder %s14, 0
      %p99 = por %p97, %p98
      %p100 = scmp.ne.s32.totalorder %s86, %s87
      %p101 = scmp.eq.s32.totalorder %s15, 8
      %p102 = por %p100, %p101
      %p104 = scmp.ne.s32.totalorder %s87, %s103
      %p105 = scmp.eq.s32.totalorder %s15, 0
      %p106 = por %p104, %p105
      %s107 = ssub.s32 %s16, %s28
      %s108 = ssub.s32 %s17, %s24
      %s109 = sor.u32 %s107, %s108
      %p110 = scmp.eq.s32.totalorder %s109, 0
      %s112 = sadd.s32 %s111, 1
      %s113 = scalar_select %p110, %s111, %s112
      %p116 = pneg %p110
      %p117 = scmp.eq.s32.totalorder %s9, 8
      %p118 = por %p116, %p117
      %p119 = scmp.ne.s32.totalorder %s111, %s114
      %p120 = scmp.eq.s32.totalorder %s9, 0
      %p121 = por %p119, %p120
      %p122 = scmp.ne.s32.totalorder %s111, %s114
      %p123 = scmp.eq.s32.totalorder %s14, 8
      %p124 = por %p122, %p123
      %p125 = scmp.ne.s32.totalorder %s114, %s115
      %p126 = scmp.eq.s32.totalorder %s14, 0
      %p127 = por %p125, %p126
      %p128 = scmp.ne.s32.totalorder %s114, %s115
      %p129 = scmp.eq.s32.totalorder %s15, 8
      %p130 = por %p128, %p129
      %p132 = scmp.ne.s32.totalorder %s115, %s131
      %p133 = scmp.eq.s32.totalorder %s15, 0
      %p134 = por %p132, %p133
      %p135 = scmp.le.s32.totalorder 1, %s9
      %p136 = scmp.lt.s32.totalorder %s9, 10
      %p137 = pnand %p135, %p136
      %p138 = pneg %p137
      // Predicated region
      $region9: #{forward.7} parent=5 // pred_check
        _
      $region10: #{forward.7} parent=5 // pred_check_branch
        %140 = sbr.rel (%p137) target = $region12
      $region11: #{forward.7} parent=5 // pred_region
        %s141 = ssub.s32 %s9, 1
        // Predicated region
        $region13: #{forward.7} parent=11 // pred_check
          %p142 = pneg %p73
        $region14: #{forward.7} parent=11 // pred_check_branch
          %144 = sbr.rel (%p142) target = $region16
        $region15: #{forward.7} parent=11 // pred_region
          %p145 = scmp.lt.s32.totalorder %s19, 0
          %s146 = scalar_select %p145, %s19, 0
          %s147 = smul.addr %s146, 4
          %s148 = scalar_lea.vmem %s1, %s147
        $region16: #{forward.7} parent=11 // pred_fallthru
          _
        // Predicated region
        $region17: #{forward.7} parent=11 // pred_check
          %p149 = pneg %p99
        $region18: #{forward.7} parent=11 // pred_check_branch
          %151 = sbr.rel (%p149) target = $region20
        $region19: #{forward.7} parent=11 // pred_region
          %p152 = scmp.lt.s32.totalorder %s19, 0
          %s153 = scalar_select %p152, %s19, 0
          %s154 = scalar_lea.vmem %s2, %s153
        $region20: #{forward.7} parent=11 // pred_fallthru
          _
      $region12: #{forward.7} parent=5 // pred_fallthru
        _
      %p155 = scmp.lt.s32.totalorder %s9, 9
      // Predicated region
      $region21: #{forward.7} parent=5 // pred_check
        %p156 = pneg %p155
      $region22: #{forward.7} parent=5 // pred_check_branch
        %158 = sbr.rel (%p156) target = $region24
      $region23: #{forward.7} parent=5 // pred_region
        // Predicated region
        $region25: #{forward.7} parent=23 // pred_check
          %p159 = pneg %p41
        $region26: #{forward.7} parent=23 // pred_check_branch
          %161 = sbr.rel (%p159) target = $region28
        $region27: #{forward.7} parent=23 // pred_region
          %s162 = smul.u32 64, %s16
          %s163 = ssub.s32 553, %s162
          %p164 = scmp.lt.s32.totalorder %s163, 64
          %s165 = scalar_select %p164, %s163, 64
          %s166 = smul.u32 64, %s165
          %p167 = scmp.lt.s32.totalorder %s162, 552
          %s168 = scalar_select %p167, %s162, 552
          %s169 = smul.addr %s168, 4
          %s170 = scalar_lea.vmem %s0, %s169
          %s171 = smul.u32 64, %s16
          %s172 = ssub.s32 553, %s171
          %p173 = scmp.lt.s32.totalorder %s172, 64
          %s174 = scalar_select %p173, %s172, 64
          %s175 = smul.u32 64, %s174
        $region28: #{forward.7} parent=23 // pred_fallthru
          _
      $region24: #{forward.7} parent=5 // pred_fallthru
        _
      %p176 = scmp.le.s32.totalorder 1, %s9
      %p177 = scmp.lt.s32.totalorder %s9, 10
      %p178 = pnand %p176, %p177
      %p179 = pneg %p178
      // Predicated region
      $region29: #{forward.7} parent=5 // pred_check
        _
      $region30: #{forward.7} parent=5 // pred_check_branch
        %181 = sbr.rel (%p178) target = $region32
      $region31: #{forward.7} parent=5 // pred_region
        %s182 = ssub.s32 %s9, 1
        %s183 = smul.u32 64, %s18
        %s184 = ssub.s32 553, %s183
        %p185 = scmp.lt.s32.totalorder %s184, 64
        %s186 = scalar_select %p185, %s184, 64
        %s187 = smul.u32 64, %s186
        %p188 = scmp.lt.s32.totalorder %s183, 552
        %s189 = scalar_select %p188, %s183, 552
        %s190 = smul.addr %s189, 4
        %s191 = scalar_lea.vmem %s0, %s190
        %p192 = pneg %p47
        %p193 = pneg %p44
        %p194 = scmp.lt.s32.totalorder %s19, 0
        %s195 = scalar_select %p194, %s19, 0
        %s196 = smul.addr %s195, 4
        %s197 = scalar_lea.vmem %s1, %s196
        %p198 = pneg %p73
        %p199 = pneg %p70
        %p200 = scmp.lt.s32.totalorder %s19, 0
        %s201 = scalar_select %p200, %s19, 0
        %s202 = scalar_lea.vmem %s2, %s201
        %p203 = pneg %p99
        %p204 = pneg %p96
        %p205 = pneg %p127
        %p206 = pneg %p124
        %s207 = sand.u32 %s114, 1
        %s208 = sand.u32 %s114, 1
        %s209 = smul.addr %s208, 256
        %s210 = scalar_lea.vmem [#allocation2], %s209
        %s211 = smul.u32 64, %s18
        %s212 = ssub.s32 553, %s211
        %p213 = scmp.lt.s32.totalorder %s212, 64
        %s214 = scalar_select %p213, %s212, 64
        %s215 = smul.u32 64, %s214
        %p216 = scmp.lt.s32.totalorder %s211, 552
        %s217 = scalar_select %p216, %s211, 552
        %s218 = smul.addr %s217, 4
        %s219 = scalar_lea.vmem %s0, %s218
        %s220 = smul.u32 64, %s18
        %s221 = ssub.s32 553, %s220
        %p222 = scmp.lt.s32.totalorder %s221, 64
        %s223 = scalar_select %p222, %s221, 64
        %s224 = smul.u32 64, %s223
        %p225 = scmp.lt.s32.totalorder %s19, 0
        %s226 = scalar_select %p225, %s19, 0
        %s227 = smul.addr %s226, 4
        %s228 = scalar_lea.vmem %s1, %s227
        %p229 = scmp.lt.s32.totalorder %s19, 0
        %s230 = scalar_select %p229, %s19, 0
        %s231 = scalar_lea.vmem %s2, %s230
        %s232 = smul.u32 64, %s18
        %s233 = ssub.s32 553, %s232
        %p234 = scmp.lt.s32.totalorder %s233, 64
        %s235 = scalar_select %p234, %s233, 64
        %s236 = smul.u32 64, %s235
        %v238 = vld [vmem:[%s219] sm:$0xf]
        %v239 = vld [vmem:[%s219 + $0x4] sm:$0xf]
        %v240 = vld [vmem:[%s219 + $0x8] sm:$0xf]
        %v241 = vld [vmem:[%s219 + $0xc] sm:$0xf]
        %v242 = vld [vmem:[%s219 + $0x10] sm:$0xf]
        %v243 = vld [vmem:[%s219 + $0x14] sm:$0xf]
        %v244 = vld [vmem:[%s219 + $0x18] sm:$0xf]
        %v245 = vld [vmem:[%s219 + $0x1c] sm:$0xf]
        %v246 = vld [vmem:[%s219 + $0x20] sm:$0xf]
        %v247 = vld [vmem:[%s219 + $0x24] sm:$0xf]
        %v248 = vld [vmem:[%s219 + $0x28] sm:$0xf]
        %v249 = vld [vmem:[%s219 + $0x2c] sm:$0xf]
        %v250 = vld [vmem:[%s219 + $0x30] sm:$0xf]
        %v251 = vld [vmem:[%s219 + $0x34] sm:$0xf]
        %v252 = vld [vmem:[%s219 + $0x38] sm:$0xf]
        %v253 = vld [vmem:[%s219 + $0x3c] sm:$0xf]
        %v254 = vld [vmem:[%s219 + $0x40] sm:$0xf]
        %v255 = vld [vmem:[%s219 + $0x44] sm:$0xf]
        %v256 = vld [vmem:[%s219 + $0x48] sm:$0xf]
        %v257 = vld [vmem:[%s219 + $0x4c] sm:$0xf]
        %v258 = vld [vmem:[%s219 + $0x50] sm:$0xf]
        %v259 = vld [vmem:[%s219 + $0x54] sm:$0xf]
        %v260 = vld [vmem:[%s219 + $0x58] sm:$0xf]
        %v261 = vld [vmem:[%s219 + $0x5c] sm:$0xf]
        %v262 = vld [vmem:[%s219 + $0x60] sm:$0xf]
        %v263 = vld [vmem:[%s219 + $0x64] sm:$0xf]
        %v264 = vld [vmem:[%s219 + $0x68] sm:$0xf]
        %v265 = vld [vmem:[%s219 + $0x6c] sm:$0xf]
        %v266 = vld [vmem:[%s219 + $0x70] sm:$0xf]
        %v267 = vld [vmem:[%s219 + $0x74] sm:$0xf]
        %v268 = vld [vmem:[%s219 + $0x78] sm:$0xf]
        %v269 = vld [vmem:[%s219 + $0x7c] sm:$0xf]
        %v270 = vld [vmem:[%s219 + $0x80] sm:$0xf]
        %v271 = vld [vmem:[%s219 + $0x84] sm:$0xf]
        %v272 = vld [vmem:[%s219 + $0x88] sm:$0xf]
        %v273 = vld [vmem:[%s219 + $0x8c] sm:$0xf]
        %v274 = vld [vmem:[%s219 + $0x90] sm:$0xf]
        %v275 = vld [vmem:[%s219 + $0x94] sm:$0xf]
        %v276 = vld [vmem:[%s219 + $0x98] sm:$0xf]
        %v277 = vld [vmem:[%s219 + $0x9c] sm:$0xf]
        %v278 = vld [vmem:[%s219 + $0xa0] sm:$0xf]
        %v279 = vld [vmem:[%s219 + $0xa4] sm:$0xf]
        %v280 = vld [vmem:[%s219 + $0xa8] sm:$0xf]
        %v281 = vld [vmem:[%s219 + $0xac] sm:$0xf]
        %v282 = vld [vmem:[%s219 + $0xb0] sm:$0xf]
        %v283 = vld [vmem:[%s219 + $0xb4] sm:$0xf]
        %v284 = vld [vmem:[%s219 + $0xb8] sm:$0xf]
        %v285 = vld [vmem:[%s219 + $0xbc] sm:$0xf]
        %v286 = vld [vmem:[%s219 + $0xc0] sm:$0xf]
        %v287 = vld [vmem:[%s219 + $0xc4] sm:$0xf]
        %v288 = vld [vmem:[%s219 + $0xc8] sm:$0xf]
        %v289 = vld [vmem:[%s219 + $0xcc] sm:$0xf]
        %v290 = vld [vmem:[%s219 + $0xd0] sm:$0xf]
        %v291 = vld [vmem:[%s219 + $0xd4] sm:$0xf]
        %v292 = vld [vmem:[%s219 + $0xd8] sm:$0xf]
        %v293 = vld [vmem:[%s219 + $0xdc] sm:$0xf]
        %v294 = vld [vmem:[%s219 + $0xe0] sm:$0xf]
        %v295 = vld [vmem:[%s219 + $0xe4] sm:$0xf]
        %v296 = vld [vmem:[%s219 + $0xe8] sm:$0xf]
        %v297 = vld [vmem:[%s219 + $0xec] sm:$0xf]
        %v298 = vld [vmem:[%s219 + $0xf0] sm:$0xf]
        %v299 = vld [vmem:[%s219 + $0xf4] sm:$0xf]
        %v300 = vld [vmem:[%s219 + $0xf8] sm:$0xf]
        %v301 = vld [vmem:[%s219 + $0xfc] sm:$0xf]
        %v302 = vld [vmem:[%s228] sm:$0xf]
        %v303 = vld [vmem:[%s228 + $0x4] sm:$0xf]
        %v304 = vld [vmem:[%s228 + $0x8] sm:$0xf]
        %v305 = vld [vmem:[%s228 + $0xc] sm:$0xf]
        %v306 = vld [vmem:[%s228 + $0x10] sm:$0xf]
        %v307 = vld [vmem:[%s228 + $0x14] sm:$0xf]
        %v308 = vld [vmem:[%s228 + $0x18] sm:$0xf]
        %v309 = vld [vmem:[%s228 + $0x1c] sm:$0xf]
        %v310 = vld [vmem:[%s231] sm:$0x1]
        %v312 = vlaneseq
        %v313 = vshrl.u32 %v312, 7
        %v314 = vsub.s32 0, %v313
        %v315 = vrot.slane %v310, %v314
        %v381 = vunpack.c.l.b16 %v238
        %v382 = vunpack.c.l.b16 %v239
        %v383 = vunpack.c.l.b16 %v240
        %v384 = vunpack.c.l.b16 %v241
        %v385 = vunpack.c.l.b16 %v242
        %v386 = vunpack.c.l.b16 %v243
        %v387 = vunpack.c.l.b16 %v244
        %v388 = vunpack.c.l.b16 %v245
        %v389 = vunpack.c.l.b16 %v246
        %v390 = vunpack.c.l.b16 %v247
        %v391 = vunpack.c.l.b16 %v248
        %v392 = vunpack.c.l.b16 %v249
        %v393 = vunpack.c.l.b16 %v250
        %v394 = vunpack.c.l.b16 %v251
        %v395 = vunpack.c.l.b16 %v252
        %v396 = vunpack.c.l.b16 %v253
        %v397 = vunpack.c.l.b16 %v254
        %v398 = vunpack.c.l.b16 %v255
        %v399 = vunpack.c.l.b16 %v256
        %v400 = vunpack.c.l.b16 %v257
        %v401 = vunpack.c.l.b16 %v258
        %v402 = vunpack.c.l.b16 %v259
        %v403 = vunpack.c.l.b16 %v260
        %v404 = vunpack.c.l.b16 %v261
        %v405 = vunpack.c.l.b16 %v262
        %v406 = vunpack.c.l.b16 %v263
        %v407 = vunpack.c.l.b16 %v264
        %v408 = vunpack.c.l.b16 %v265
        %v409 = vunpack.c.l.b16 %v266
        %v410 = vunpack.c.l.b16 %v267
        %v411 = vunpack.c.l.b16 %v268
        %v412 = vunpack.c.l.b16 %v269
        %v413 = vunpack.c.l.b16 %v270
        %v414 = vunpack.c.l.b16 %v271
        %v415 = vunpack.c.l.b16 %v272
        %v416 = vunpack.c.l.b16 %v273
        %v417 = vunpack.c.l.b16 %v274
        %v418 = vunpack.c.l.b16 %v275
        %v419 = vunpack.c.l.b16 %v276
        %v420 = vunpack.c.l.b16 %v277
        %v421 = vunpack.c.l.b16 %v278
        %v422 = vunpack.c.l.b16 %v279
        %v423 = vunpack.c.l.b16 %v280
        %v424 = vunpack.c.l.b16 %v281
        %v425 = vunpack.c.l.b16 %v282
        %v426 = vunpack.c.l.b16 %v283
        %v427 = vunpack.c.l.b16 %v284
        %v428 = vunpack.c.l.b16 %v285
        %v429 = vunpack.c.l.b16 %v286
        %v430 = vunpack.c.l.b16 %v287
        %v431 = vunpack.c.l.b16 %v288
        %v432 = vunpack.c.l.b16 %v289
        %v433 = vunpack.c.l.b16 %v290
        %v434 = vunpack.c.l.b16 %v291
        %v435 = vunpack.c.l.b16 %v292
        %v436 = vunpack.c.l.b16 %v293
        %v437 = vunpack.c.l.b16 %v294
        %v438 = vunpack.c.l.b16 %v295
        %v439 = vunpack.c.l.b16 %v296
        %v440 = vunpack.c.l.b16 %v297
        %v441 = vunpack.c.l.b16 %v298
        %v442 = vunpack.c.l.b16 %v299
        %v443 = vunpack.c.l.b16 %v300
        %v444 = vunpack.c.l.b16 %v301
        %v445 = vpack.c.b16 %v382, %v381
        %v446 = vpack.c.b16 %v384, %v383
        %v447 = vpack.c.b16 %v386, %v385
        %v448 = vpack.c.b16 %v388, %v387
        %v449 = vpack.c.b16 %v390, %v389
        %v450 = vpack.c.b16 %v392, %v391
        %v451 = vpack.c.b16 %v394, %v393
        %v452 = vpack.c.b16 %v396, %v395
        %v453 = vpack.c.b16 %v398, %v397
        %v454 = vpack.c.b16 %v400, %v399
        %v455 = vpack.c.b16 %v402, %v401
        %v456 = vpack.c.b16 %v404, %v403
        %v457 = vpack.c.b16 %v406, %v405
        %v458 = vpack.c.b16 %v408, %v407
        %v459 = vpack.c.b16 %v410, %v409
        %v460 = vpack.c.b16 %v412, %v411
        %v461 = vpack.c.b16 %v414, %v413
        %v462 = vpack.c.b16 %v416, %v415
        %v463 = vpack.c.b16 %v418, %v417
        %v464 = vpack.c.b16 %v420, %v419
        %v465 = vpack.c.b16 %v422, %v421
        %v466 = vpack.c.b16 %v424, %v423
        %v467 = vpack.c.b16 %v426, %v425
        %v468 = vpack.c.b16 %v428, %v427
        %v469 = vpack.c.b16 %v430, %v429
        %v470 = vpack.c.b16 %v432, %v431
        %v471 = vpack.c.b16 %v434, %v433
        %v472 = vpack.c.b16 %v436, %v435
        %v473 = vpack.c.b16 %v438, %v437
        %v474 = vpack.c.b16 %v440, %v439
        %v475 = vpack.c.b16 %v442, %v441
        %v476 = vpack.c.b16 %v444, %v443
        %v485 = vunpack.c.l.b16 %v302
        %v486 = vunpack.c.l.b16 %v303
        %v487 = vunpack.c.l.b16 %v304
        %v488 = vunpack.c.l.b16 %v305
        %v489 = vunpack.c.l.b16 %v306
        %v490 = vunpack.c.l.b16 %v307
        %v491 = vunpack.c.l.b16 %v308
        %v492 = vunpack.c.l.b16 %v309
        %v493 = vpack.c.b16 %v486, %v485
        %v494 = vpack.c.b16 %v488, %v487
        %v495 = vpack.c.b16 %v490, %v489
        %v496 = vpack.c.b16 %v492, %v491
        %vm501 = vcmask 523264
        %v503 = vsel %vm501, %v445, 0
        %v506 = vsel %vm501, %v446, 0
        %v509 = vsel %vm501, %v447, 0
        %v512 = vsel %vm501, %v448, 0
        %v515 = vsel %vm501, %v449, 0
        %v518 = vsel %vm501, %v450, 0
        %v521 = vsel %vm501, %v451, 0
        %v524 = vsel %vm501, %v452, 0
        %v527 = vsel %vm501, %v453, 0
        %v530 = vsel %vm501, %v454, 0
        %v533 = vsel %vm501, %v455, 0
        %v536 = vsel %vm501, %v456, 0
        %v539 = vsel %vm501, %v457, 0
        %v542 = vsel %vm501, %v458, 0
        %v545 = vsel %vm501, %v459, 0
        %v548 = vsel %vm501, %v460, 0
        %v551 = vsel %vm501, %v461, 0
        %v554 = vsel %vm501, %v462, 0
        %v557 = vsel %vm501, %v463, 0
        %v560 = vsel %vm501, %v464, 0
        %v563 = vsel %vm501, %v465, 0
        %v566 = vsel %vm501, %v466, 0
        %v569 = vsel %vm501, %v467, 0
        %v572 = vsel %vm501, %v468, 0
        %v575 = vsel %vm501, %v469, 0
        %v578 = vsel %vm501, %v470, 0
        %v581 = vsel %vm501, %v471, 0
        %v584 = vsel %vm501, %v472, 0
        %v587 = vsel %vm501, %v473, 0
        %v590 = vsel %vm501, %v474, 0
        %v593 = vsel %vm501, %v475, 0
        %v596 = vsel %vm501, %v476, 0
        %598 = vmatprep.subr.bf16.mxu0 0
        %599 = vmatpush1.bf16.msra.mxu0 %v493
        %600 = vmatprep.subr.bf16.mxu0 0
        %601 = vmatpush1.bf16.msra.mxu0 %v494
        %602 = vmatprep.subr.bf16.mxu0 0
        %603 = vmatpush1.bf16.msra.mxu0 %v495
        %604 = vmatprep.subr.bf16.mxu0 0
        %605 = vmatpush1.bf16.msra.mxu0 %v496
        %606 = vmatprep.subr.bf16.mxu0 0
        %607 = vmatpush1.bf16.msra.mxu0 0
        %608 = vmatprep.subr.bf16.mxu0 0
        %609 = vmatpush1.bf16.msra.mxu0 0
        %610 = vmatprep.subr.bf16.mxu0 0
        %611 = vmatpush1.bf16.msra.mxu0 0
        %612 = vmatprep.subr.bf16.mxu0 0
        %613 = vmatpush1.bf16.msra.mxu0 0
        %614 = vmatprep.subr.bf16.mxu0 0
        %615 = vmatpush1.bf16.msra.mxu0 0
        %616 = vmatprep.subr.bf16.mxu0 0
        %617 = vmatpush1.bf16.msra.mxu0 0
        %618 = vmatprep.subr.bf16.mxu0 0
        %619 = vmatpush1.bf16.msra.mxu0 0
        %620 = vmatprep.subr.bf16.mxu0 0
        %621 = vmatpush1.bf16.msra.mxu0 0
        %622 = vmatprep.subr.bf16.mxu0 0
        %623 = vmatpush1.bf16.msra.mxu0 0
        %624 = vmatprep.subr.bf16.mxu0 0
        %625 = vmatpush1.bf16.msra.mxu0 0
        %626 = vmatprep.subr.bf16.mxu0 0
        %627 = vmatpush1.bf16.msra.mxu0 0
        %628 = vmatprep.subr.bf16.mxu0 0
        %629 = vmatpush1.bf16.msra.mxu0 0
        %630 = vmatprep.mubr.bf16.mxu0 0
        %631 = vmatmul.mubr.bf16.gmra.mrb[0].mxu0 %v503
        %v632 = vpop.f32.mrb[0].mxu0
        %v633 = vadd.f32 %v315, %v632
        %v634 = vpop.f32.mrb[0].mxu0
        %v635 = vpop.f32.mrb[0].mxu0
        %v636 = vadd.f32 %v315, %v635
        %v637 = vpop.f32.mrb[0].mxu0
        %638 = vmatprep.mubr.bf16.mxu0 0
        %639 = vmatmul.mubr.bf16.gmra.mrb[0].mxu0 %v506
        %v640 = vpop.f32.mrb[0].mxu0
        %v641 = vadd.f32 %v315, %v640
        %v642 = vpop.f32.mrb[0].mxu0
        %v643 = vpop.f32.mrb[0].mxu0
        %v644 = vadd.f32 %v315, %v643
        %v645 = vpop.f32.mrb[0].mxu0
        %646 = vmatprep.mubr.bf16.mxu0 0
        %647 = vmatmul.mubr.bf16.gmra.mrb[0].mxu0 %v509
        %v648 = vpop.f32.mrb[0].mxu0
        %v649 = vadd.f32 %v315, %v648
        %v650 = vpop.f32.mrb[0].mxu0
        %v651 = vpop.f32.mrb[0].mxu0
        %v652 = vadd.f32 %v315, %v651
        %v653 = vpop.f32.mrb[0].mxu0
        %654 = vmatprep.mubr.bf16.mxu0 0
        %655 = vmatmul.mubr.bf16.gmra.mrb[0].mxu0 %v512
        %v656 = vpop.f32.mrb[0].mxu0
        %v657 = vadd.f32 %v315, %v656
        %v658 = vpop.f32.mrb[0].mxu0
        %v659 = vpop.f32.mrb[0].mxu0
        %v660 = vadd.f32 %v315, %v659
        %v661 = vpop.f32.mrb[0].mxu0
        %662 = vmatprep.mubr.bf16.mxu0 0
        %663 = vmatmul.mubr.bf16.gmra.mrb[0].mxu0 %v515
        %v664 = vpop.f32.mrb[0].mxu0
        %v665 = vadd.f32 %v315, %v664
        %v666 = vpop.f32.mrb[0].mxu0
        %v667 = vpop.f32.mrb[0].mxu0
        %v668 = vadd.f32 %v315, %v667
        %v669 = vpop.f32.mrb[0].mxu0
        %670 = vmatprep.mubr.bf16.mxu0 0
        %671 = vmatmul.mubr.bf16.gmra.mrb[0].mxu0 %v518
        %v672 = vpop.f32.mrb[0].mxu0
        %v673 = vadd.f32 %v315, %v672
        %v674 = vpop.f32.mrb[0].mxu0
        %v675 = vpop.f32.mrb[0].mxu0
        %v676 = vadd.f32 %v315, %v675
        %v677 = vpop.f32.mrb[0].mxu0
        %678 = vmatprep.mubr.bf16.mxu0 0
        %679 = vmatmul.mubr.bf16.gmra.mrb[0].mxu0 %v521
        %v680 = vpop.f32.mrb[0].mxu0
        %v681 = vadd.f32 %v315, %v680
        %v682 = vpop.f32.mrb[0].mxu0
        %v683 = vpop.f32.mrb[0].mxu0
        %v684 = vadd.f32 %v315, %v683
        %v685 = vpop.f32.mrb[0].mxu0
        %686 = vmatprep.mubr.bf16.mxu0 0
        %687 = vmatmul.mubr.bf16.gmra.mrb[0].mxu0 %v524
        %v688 = vpop.f32.mrb[0].mxu0
        %v689 = vadd.f32 %v315, %v688
        %v690 = vpop.f32.mrb[0].mxu0
        %v691 = vpop.f32.mrb[0].mxu0
        %v692 = vadd.f32 %v315, %v691
        %v693 = vpop.f32.mrb[0].mxu0
        %694 = vmatprep.mubr.bf16.mxu0 0
        %695 = vmatmul.mubr.bf16.gmra.mrb[0].mxu0 %v527
        %v696 = vpop.f32.mrb[0].mxu0
        %v697 = vadd.f32 %v315, %v696
        %v698 = vpop.f32.mrb[0].mxu0
        %v699 = vpop.f32.mrb[0].mxu0
        %v700 = vadd.f32 %v315, %v699
        %v701 = vpop.f32.mrb[0].mxu0
        %702 = vmatprep.mubr.bf16.mxu0 0
        %703 = vmatmul.mubr.bf16.gmra.mrb[0].mxu0 %v530
        %v704 = vpop.f32.mrb[0].mxu0
        %v705 = vadd.f32 %v315, %v704
        %v706 = vpop.f32.mrb[0].mxu0
        %v707 = vpop.f32.mrb[0].mxu0
        %v708 = vadd.f32 %v315, %v707
        %v709 = vpop.f32.mrb[0].mxu0
        %710 = vmatprep.mubr.bf16.mxu0 0
        %711 = vmatmul.mubr.bf16.gmra.mrb[0].mxu0 %v533
        %v712 = vpop.f32.mrb[0].mxu0
        %v713 = vadd.f32 %v315, %v712
        %v714 = vpop.f32.mrb[0].mxu0
        %v715 = vpop.f32.mrb[0].mxu0
        %v716 = vadd.f32 %v315, %v715
        %v717 = vpop.f32.mrb[0].mxu0
        %718 = vmatprep.mubr.bf16.mxu0 0
        %719 = vmatmul.mubr.bf16.gmra.mrb[0].mxu0 %v536
        %v720 = vpop.f32.mrb[0].mxu0
        %v721 = vadd.f32 %v315, %v720
        %v722 = vpop.f32.mrb[0].mxu0
        %v723 = vpop.f32.mrb[0].mxu0
        %v724 = vadd.f32 %v315, %v723
        %v725 = vpop.f32.mrb[0].mxu0
        %726 = vmatprep.mubr.bf16.mxu0 0
        %727 = vmatmul.mubr.bf16.gmra.mrb[0].mxu0 %v539
        %v728 = vpop.f32.mrb[0].mxu0
        %v729 = vadd.f32 %v315, %v728
        %v730 = vpop.f32.mrb[0].mxu0
        %v731 = vpop.f32.mrb[0].mxu0
        %v732 = vadd.f32 %v315, %v731
        %v733 = vpop.f32.mrb[0].mxu0
        %734 = vmatprep.mubr.bf16.mxu0 0
        %735 = vmatmul.mubr.bf16.gmra.mrb[0].mxu0 %v542
        %v736 = vpop.f32.mrb[0].mxu0
        %v737 = vadd.f32 %v315, %v736
        %v738 = vpop.f32.mrb[0].mxu0
        %v739 = vpop.f32.mrb[0].mxu0
        %v740 = vadd.f32 %v315, %v739
        %v741 = vpop.f32.mrb[0].mxu0
        %742 = vmatprep.mubr.bf16.mxu0 0
        %743 = vmatmul.mubr.bf16.gmra.mrb[0].mxu0 %v545
        %v744 = vpop.f32.mrb[0].mxu0
        %v745 = vadd.f32 %v315, %v744
        %v746 = vpop.f32.mrb[0].mxu0
        %v747 = vpop.f32.mrb[0].mxu0
        %v748 = vadd.f32 %v315, %v747
        %v749 = vpop.f32.mrb[0].mxu0
        %750 = vmatprep.mubr.bf16.mxu0 0
        %751 = vmatmul.mubr.bf16.gmra.mrb[0].mxu0 %v548
        %v752 = vpop.f32.mrb[0].mxu0
        %v753 = vadd.f32 %v315, %v752
        %v754 = vpop.f32.mrb[0].mxu0
        %v755 = vpop.f32.mrb[0].mxu0
        %v756 = vadd.f32 %v315, %v755
        %v757 = vpop.f32.mrb[0].mxu0
        %758 = vmatprep.mubr.bf16.mxu0 0
        %759 = vmatmul.mubr.bf16.gmra.mrb[0].mxu0 %v551
        %v760 = vpop.f32.mrb[0].mxu0
        %v761 = vadd.f32 %v315, %v760
        %v762 = vpop.f32.mrb[0].mxu0
        %v763 = vpop.f32.mrb[0].mxu0
        %v764 = vadd.f32 %v315, %v763
        %v765 = vpop.f32.mrb[0].mxu0
        %766 = vmatprep.mubr.bf16.mxu0 0
        %767 = vmatmul.mubr.bf16.gmra.mrb[0].mxu0 %v554
        %v768 = vpop.f32.mrb[0].mxu0
        %v769 = vadd.f32 %v315, %v768
        %v770 = vpop.f32.mrb[0].mxu0
        %v771 = vpop.f32.mrb[0].mxu0
        %v772 = vadd.f32 %v315, %v771
        %v773 = vpop.f32.mrb[0].mxu0
        %774 = vmatprep.mubr.bf16.mxu0 0
        %775 = vmatmul.mubr.bf16.gmra.mrb[0].mxu0 %v557
        %v776 = vpop.f32.mrb[0].mxu0
        %v777 = vadd.f32 %v315, %v776
        %v778 = vpop.f32.mrb[0].mxu0
        %v779 = vpop.f32.mrb[0].mxu0
        %v780 = vadd.f32 %v315, %v779
        %v781 = vpop.f32.mrb[0].mxu0
        %782 = vmatprep.mubr.bf16.mxu0 0
        %783 = vmatmul.mubr.bf16.gmra.mrb[0].mxu0 %v560
        %v784 = vpop.f32.mrb[0].mxu0
        %v785 = vadd.f32 %v315, %v784
        %v786 = vpop.f32.mrb[0].mxu0
        %v787 = vpop.f32.mrb[0].mxu0
        %v788 = vadd.f32 %v315, %v787
        %v789 = vpop.f32.mrb[0].mxu0
        %790 = vmatprep.mubr.bf16.mxu0 0
        %791 = vmatmul.mubr.bf16.gmra.mrb[0].mxu0 %v563
        %v792 = vpop.f32.mrb[0].mxu0
        %v793 = vadd.f32 %v315, %v792
        %v794 = vpop.f32.mrb[0].mxu0
        %v795 = vpop.f32.mrb[0].mxu0
        %v796 = vadd.f32 %v315, %v795
        %v797 = vpop.f32.mrb[0].mxu0
        %798 = vmatprep.mubr.bf16.mxu0 0
        %799 = vmatmul.mubr.bf16.gmra.mrb[0].mxu0 %v566
        %v800 = vpop.f32.mrb[0].mxu0
        %v801 = vadd.f32 %v315, %v800
        %v802 = vpop.f32.mrb[0].mxu0
        %v803 = vpop.f32.mrb[0].mxu0
        %v804 = vadd.f32 %v315, %v803
        %v805 = vpop.f32.mrb[0].mxu0
        %806 = vmatprep.mubr.bf16.mxu0 0
        %807 = vmatmul.mubr.bf16.gmra.mrb[0].mxu0 %v569
        %v808 = vpop.f32.mrb[0].mxu0
        %v809 = vadd.f32 %v315, %v808
        %v810 = vpop.f32.mrb[0].mxu0
        %v811 = vpop.f32.mrb[0].mxu0
        %v812 = vadd.f32 %v315, %v811
        %v813 = vpop.f32.mrb[0].mxu0
        %814 = vmatprep.mubr.bf16.mxu0 0
        %815 = vmatmul.mubr.bf16.gmra.mrb[0].mxu0 %v572
        %v816 = vpop.f32.mrb[0].mxu0
        %v817 = vadd.f32 %v315, %v816
        %v818 = vpop.f32.mrb[0].mxu0
        %v819 = vpop.f32.mrb[0].mxu0
        %v820 = vadd.f32 %v315, %v819
        %v821 = vpop.f32.mrb[0].mxu0
        %822 = vmatprep.mubr.bf16.mxu0 0
        %823 = vmatmul.mubr.bf16.gmra.mrb[0].mxu0 %v575
        %v824 = vpop.f32.mrb[0].mxu0
        %v825 = vadd.f32 %v315, %v824
        %v826 = vpop.f32.mrb[0].mxu0
        %v827 = vpop.f32.mrb[0].mxu0
        %v828 = vadd.f32 %v315, %v827
        %v829 = vpop.f32.mrb[0].mxu0
        %830 = vmatprep.mubr.bf16.mxu0 0
        %831 = vmatmul.mubr.bf16.gmra.mrb[0].mxu0 %v578
        %v832 = vpop.f32.mrb[0].mxu0
        %v833 = vadd.f32 %v315, %v832
        %v834 = vpop.f32.mrb[0].mxu0
        %v835 = vpop.f32.mrb[0].mxu0
        %v836 = vadd.f32 %v315, %v835
        %v837 = vpop.f32.mrb[0].mxu0
        %838 = vmatprep.mubr.bf16.mxu0 0
        %839 = vmatmul.mubr.bf16.gmra.mrb[0].mxu0 %v581
        %v840 = vpop.f32.mrb[0].mxu0
        %v841 = vadd.f32 %v315, %v840
        %v842 = vpop.f32.mrb[0].mxu0
        %v843 = vpop.f32.mrb[0].mxu0
        %v844 = vadd.f32 %v315, %v843
        %v845 = vpop.f32.mrb[0].mxu0
        %846 = vmatprep.mubr.bf16.mxu0 0
        %847 = vmatmul.mubr.bf16.gmra.mrb[0].mxu0 %v584
        %v848 = vpop.f32.mrb[0].mxu0
        %v849 = vadd.f32 %v315, %v848
        %v850 = vpop.f32.mrb[0].mxu0
        %v851 = vpop.f32.mrb[0].mxu0
        %v852 = vadd.f32 %v315, %v851
        %v853 = vpop.f32.mrb[0].mxu0
        %854 = vmatprep.mubr.bf16.mxu0 0
        %855 = vmatmul.mubr.bf16.gmra.mrb[0].mxu0 %v587
        %v856 = vpop.f32.mrb[0].mxu0
        %v857 = vadd.f32 %v315, %v856
        %v858 = vpop.f32.mrb[0].mxu0
        %v859 = vpop.f32.mrb[0].mxu0
        %v860 = vadd.f32 %v315, %v859
        %v861 = vpop.f32.mrb[0].mxu0
        %862 = vmatprep.mubr.bf16.mxu0 0
        %863 = vmatmul.mubr.bf16.gmra.mrb[0].mxu0 %v590
        %v864 = vpop.f32.mrb[0].mxu0
        %v865 = vadd.f32 %v315, %v864
        %v866 = vpop.f32.mrb[0].mxu0
        %v867 = vpop.f32.mrb[0].mxu0
        %v868 = vadd.f32 %v315, %v867
        %v869 = vpop.f32.mrb[0].mxu0
        %870 = vmatprep.mubr.bf16.mxu0 0
        %871 = vmatmul.mubr.bf16.gmra.mrb[0].mxu0 %v593
        %v872 = vpop.f32.mrb[0].mxu0
        %v873 = vadd.f32 %v315, %v872
        %v874 = vpop.f32.mrb[0].mxu0
        %v875 = vpop.f32.mrb[0].mxu0
        %v876 = vadd.f32 %v315, %v875
        %v877 = vpop.f32.mrb[0].mxu0
        %878 = vmatprep.mubr.bf16.mxu0 0
        %879 = vmatmul.mubr.bf16.gmra.mrb[0].mxu0 %v596
        %v880 = vpop.f32.mrb[0].mxu0
        %v881 = vadd.f32 %v315, %v880
        %v882 = vpop.f32.mrb[0].mxu0
        %v883 = vpop.f32.mrb[0].mxu0
        %v884 = vadd.f32 %v315, %v883
        %v885 = vpop.f32.mrb[0].mxu0
        %886 = vdwg.mxu0
        %v887 = vmax.f32 %v633, 0.0
        %v888 = vmax.f32 %v636, 0.0
        %v889 = vmax.f32 %v641, 0.0
        %v890 = vmax.f32 %v644, 0.0
        %v891 = vmax.f32 %v649, 0.0
        %v892 = vmax.f32 %v652, 0.0
        %v893 = vmax.f32 %v657, 0.0
        %v894 = vmax.f32 %v660, 0.0
        %v895 = vmax.f32 %v665, 0.0
        %v896 = vmax.f32 %v668, 0.0
        %v897 = vmax.f32 %v673, 0.0
        %v898 = vmax.f32 %v676, 0.0
        %v899 = vmax.f32 %v681, 0.0
        %v900 = vmax.f32 %v684, 0.0
        %v901 = vmax.f32 %v689, 0.0
        %v902 = vmax.f32 %v692, 0.0
        %v903 = vmax.f32 %v697, 0.0
        %v904 = vmax.f32 %v700, 0.0
        %v905 = vmax.f32 %v705, 0.0
        %v906 = vmax.f32 %v708, 0.0
        %v907 = vmax.f32 %v713, 0.0
        %v908 = vmax.f32 %v716, 0.0
        %v909 = vmax.f32 %v721, 0.0
        %v910 = vmax.f32 %v724, 0.0
        %v911 = vmax.f32 %v729, 0.0
        %v912 = vmax.f32 %v732, 0.0
        %v913 = vmax.f32 %v737, 0.0
        %v914 = vmax.f32 %v740, 0.0
        %v915 = vmax.f32 %v745, 0.0
        %v916 = vmax.f32 %v748, 0.0
        %v917 = vmax.f32 %v753, 0.0
        %v918 = vmax.f32 %v756, 0.0
        %v919 = vmax.f32 %v761, 0.0
        %v920 = vmax.f32 %v764, 0.0
        %v921 = vmax.f32 %v769, 0.0
        %v922 = vmax.f32 %v772, 0.0
        %v923 = vmax.f32 %v777, 0.0
        %v924 = vmax.f32 %v780, 0.0
        %v925 = vmax.f32 %v785, 0.0
        %v926 = vmax.f32 %v788, 0.0
        %v927 = vmax.f32 %v793, 0.0
        %v928 = vmax.f32 %v796, 0.0
        %v929 = vmax.f32 %v801, 0.0
        %v930 = vmax.f32 %v804, 0.0
        %v931 = vmax.f32 %v809, 0.0
        %v932 = vmax.f32 %v812, 0.0
        %v933 = vmax.f32 %v817, 0.0
        %v934 = vmax.f32 %v820, 0.0
        %v935 = vmax.f32 %v825, 0.0
        %v936 = vmax.f32 %v828, 0.0
        %v937 = vmax.f32 %v833, 0.0
        %v938 = vmax.f32 %v836, 0.0
        %v939 = vmax.f32 %v841, 0.0
        %v940 = vmax.f32 %v844, 0.0
        %v941 = vmax.f32 %v849, 0.0
        %v942 = vmax.f32 %v852, 0.0
        %v943 = vmax.f32 %v857, 0.0
        %v944 = vmax.f32 %v860, 0.0
        %v945 = vmax.f32 %v865, 0.0
        %v946 = vmax.f32 %v868, 0.0
        %v947 = vmax.f32 %v873, 0.0
        %v948 = vmax.f32 %v876, 0.0
        %v949 = vmax.f32 %v881, 0.0
        %v950 = vmax.f32 %v884, 0.0
        %v951 = vpack.c.bf16 %v888, %v887
        %v952 = vpack.c.bf16 %v890, %v889
        %v953 = vpack.c.bf16 %v892, %v891
        %v954 = vpack.c.bf16 %v894, %v893
        %v955 = vpack.c.bf16 %v896, %v895
        %v956 = vpack.c.bf16 %v898, %v897
        %v957 = vpack.c.bf16 %v900, %v899
        %v958 = vpack.c.bf16 %v902, %v901
        %v959 = vpack.c.bf16 %v904, %v903
        %v960 = vpack.c.bf16 %v906, %v905
        %v961 = vpack.c.bf16 %v908, %v907
        %v962 = vpack.c.bf16 %v910, %v909
        %v963 = vpack.c.bf16 %v912, %v911
        %v964 = vpack.c.bf16 %v914, %v913
        %v965 = vpack.c.bf16 %v916, %v915
        %v966 = vpack.c.bf16 %v918, %v917
        %v967 = vpack.c.bf16 %v920, %v919
        %v968 = vpack.c.bf16 %v922, %v921
        %v969 = vpack.c.bf16 %v924, %v923
        %v970 = vpack.c.bf16 %v926, %v925
        %v971 = vpack.c.bf16 %v928, %v927
        %v972 = vpack.c.bf16 %v930, %v929
        %v973 = vpack.c.bf16 %v932, %v931
        %v974 = vpack.c.bf16 %v934, %v933
        %v975 = vpack.c.bf16 %v936, %v935
        %v976 = vpack.c.bf16 %v938, %v937
        %v977 = vpack.c.bf16 %v940, %v939
        %v978 = vpack.c.bf16 %v942, %v941
        %v979 = vpack.c.bf16 %v944, %v943
        %v980 = vpack.c.bf16 %v946, %v945
        %v981 = vpack.c.bf16 %v948, %v947
        %v982 = vpack.c.bf16 %v950, %v949
        %v1015 = vunpack.c.l.b16 %v951
        %v1016 = vunpack.c.h.b16 %v951
        %v1017 = vunpack.c.l.b16 %v952
        %v1018 = vunpack.c.h.b16 %v952
        %v1019 = vunpack.c.l.b16 %v953
        %v1020 = vunpack.c.h.b16 %v953
        %v1021 = vunpack.c.l.b16 %v954
        %v1022 = vunpack.c.h.b16 %v954
        %v1023 = vunpack.c.l.b16 %v955
        %v1024 = vunpack.c.h.b16 %v955
        %v1025 = vunpack.c.l.b16 %v956
        %v1026 = vunpack.c.h.b16 %v956
        %v1027 = vunpack.c.l.b16 %v957
        %v1028 = vunpack.c.h.b16 %v957
        %v1029 = vunpack.c.l.b16 %v958
        %v1030 = vunpack.c.h.b16 %v958
        %v1031 = vunpack.c.l.b16 %v959
        %v1032 = vunpack.c.h.b16 %v959
        %v1033 = vunpack.c.l.b16 %v960
        %v1034 = vunpack.c.h.b16 %v960
        %v1035 = vunpack.c.l.b16 %v961
        %v1036 = vunpack.c.h.b16 %v961
        %v1037 = vunpack.c.l.b16 %v962
        %v1038 = vunpack.c.h.b16 %v962
        %v1039 = vunpack.c.l.b16 %v963
        %v1040 = vunpack.c.h.b16 %v963
        %v1041 = vunpack.c.l.b16 %v964
        %v1042 = vunpack.c.h.b16 %v964
        %v1043 = vunpack.c.l.b16 %v965
        %v1044 = vunpack.c.h.b16 %v965
        %v1045 = vunpack.c.l.b16 %v966
        %v1046 = vunpack.c.h.b16 %v966
        %v1047 = vunpack.c.l.b16 %v967
        %v1048 = vunpack.c.h.b16 %v967
        %v1049 = vunpack.c.l.b16 %v968
        %v1050 = vunpack.c.h.b16 %v968
        %v1051 = vunpack.c.l.b16 %v969
        %v1052 = vunpack.c.h.b16 %v969
        %v1053 = vunpack.c.l.b16 %v970
        %v1054 = vunpack.c.h.b16 %v970
        %v1055 = vunpack.c.l.b16 %v971
        %v1056 = vunpack.c.h.b16 %v971
        %v1057 = vunpack.c.l.b16 %v972
        %v1058 = vunpack.c.h.b16 %v972
        %v1059 = vunpack.c.l.b16 %v973
        %v1060 = vunpack.c.h.b16 %v973
        %v1061 = vunpack.c.l.b16 %v974
        %v1062 = vunpack.c.h.b16 %v974
        %v1063 = vunpack.c.l.b16 %v975
        %v1064 = vunpack.c.h.b16 %v975
        %v1065 = vunpack.c.l.b16 %v976
        %v1066 = vunpack.c.h.b16 %v976
        %v1067 = vunpack.c.l.b16 %v977
        %v1068 = vunpack.c.h.b16 %v977
        %v1069 = vunpack.c.l.b16 %v978
        %v1070 = vunpack.c.h.b16 %v978
        %v1071 = vunpack.c.l.b16 %v979
        %v1072 = vunpack.c.h.b16 %v979
        %v1073 = vunpack.c.l.b16 %v980
        %v1074 = vunpack.c.h.b16 %v980
        %v1075 = vunpack.c.l.b16 %v981
        %v1076 = vunpack.c.h.b16 %v981
        %v1077 = vunpack.c.l.b16 %v982
        %v1078 = vunpack.c.h.b16 %v982
        %v1079 = vpack.c.b16 %v1015, %v1015
        %v1080 = vpack.c.b16 %v1016, %v1016
        %v1081 = vpack.c.b16 %v1017, %v1017
        %v1082 = vpack.c.b16 %v1018, %v1018
        %v1083 = vpack.c.b16 %v1019, %v1019
        %v1084 = vpack.c.b16 %v1020, %v1020
        %v1085 = vpack.c.b16 %v1021, %v1021
        %v1086 = vpack.c.b16 %v1022, %v1022
        %v1087 = vpack.c.b16 %v1023, %v1023
        %v1088 = vpack.c.b16 %v1024, %v1024
        %v1089 = vpack.c.b16 %v1025, %v1025
        %v1090 = vpack.c.b16 %v1026, %v1026
        %v1091 = vpack.c.b16 %v1027, %v1027
        %v1092 = vpack.c.b16 %v1028, %v1028
        %v1093 = vpack.c.b16 %v1029, %v1029
        %v1094 = vpack.c.b16 %v1030, %v1030
        %v1095 = vpack.c.b16 %v1031, %v1031
        %v1096 = vpack.c.b16 %v1032, %v1032
        %v1097 = vpack.c.b16 %v1033, %v1033
        %v1098 = vpack.c.b16 %v1034, %v1034
        %v1099 = vpack.c.b16 %v1035, %v1035
        %v1100 = vpack.c.b16 %v1036, %v1036
        %v1101 = vpack.c.b16 %v1037, %v1037
        %v1102 = vpack.c.b16 %v1038, %v1038
        %v1103 = vpack.c.b16 %v1039, %v1039
        %v1104 = vpack.c.b16 %v1040, %v1040
        %v1105 = vpack.c.b16 %v1041, %v1041
        %v1106 = vpack.c.b16 %v1042, %v1042
        %v1107 = vpack.c.b16 %v1043, %v1043
        %v1108 = vpack.c.b16 %v1044, %v1044
        %v1109 = vpack.c.b16 %v1045, %v1045
        %v1110 = vpack.c.b16 %v1046, %v1046
        %v1111 = vpack.c.b16 %v1047, %v1047
        %v1112 = vpack.c.b16 %v1048, %v1048
        %v1113 = vpack.c.b16 %v1049, %v1049
        %v1114 = vpack.c.b16 %v1050, %v1050
        %v1115 = vpack.c.b16 %v1051, %v1051
        %v1116 = vpack.c.b16 %v1052, %v1052
        %v1117 = vpack.c.b16 %v1053, %v1053
        %v1118 = vpack.c.b16 %v1054, %v1054
        %v1119 = vpack.c.b16 %v1055, %v1055
        %v1120 = vpack.c.b16 %v1056, %v1056
        %v1121 = vpack.c.b16 %v1057, %v1057
        %v1122 = vpack.c.b16 %v1058, %v1058
        %v1123 = vpack.c.b16 %v1059, %v1059
        %v1124 = vpack.c.b16 %v1060, %v1060
        %v1125 = vpack.c.b16 %v1061, %v1061
        %v1126 = vpack.c.b16 %v1062, %v1062
        %v1127 = vpack.c.b16 %v1063, %v1063
        %v1128 = vpack.c.b16 %v1064, %v1064
        %v1129 = vpack.c.b16 %v1065, %v1065
        %v1130 = vpack.c.b16 %v1066, %v1066
        %v1131 = vpack.c.b16 %v1067, %v1067
        %v1132 = vpack.c.b16 %v1068, %v1068
        %v1133 = vpack.c.b16 %v1069, %v1069
        %v1134 = vpack.c.b16 %v1070, %v1070
        %v1135 = vpack.c.b16 %v1071, %v1071
        %v1136 = vpack.c.b16 %v1072, %v1072
        %v1137 = vpack.c.b16 %v1073, %v1073
        %v1138 = vpack.c.b16 %v1074, %v1074
        %v1139 = vpack.c.b16 %v1075, %v1075
        %v1140 = vpack.c.b16 %v1076, %v1076
        %v1141 = vpack.c.b16 %v1077, %v1077
        %v1142 = vpack.c.b16 %v1078, %v1078
        %vm1207 = vcmask 60416
        %1208 = vst.msk [vmem:[%s210] sm:$0xf] %vm1207, %v1079
        %1209 = vst.msk [vmem:[%s210 + $0x4] sm:$0xf] %vm1207, %v1080
        %1210 = vst.msk [vmem:[%s210 + $0x8] sm:$0xf] %vm1207, %v1081
        %1211 = vst.msk [vmem:[%s210 + $0xc] sm:$0xf] %vm1207, %v1082
        %1212 = vst.msk [vmem:[%s210 + $0x10] sm:$0xf] %vm1207, %v1083
        %1213 = vst.msk [vmem:[%s210 + $0x14] sm:$0xf] %vm1207, %v1084
        %1214 = vst.msk [vmem:[%s210 + $0x18] sm:$0xf] %vm1207, %v1085
        %1215 = vst.msk [vmem:[%s210 + $0x1c] sm:$0xf] %vm1207, %v1086
        %1216 = vst.msk [vmem:[%s210 + $0x20] sm:$0xf] %vm1207, %v1087
        %1217 = vst.msk [vmem:[%s210 + $0x24] sm:$0xf] %vm1207, %v1088
        %1218 = vst.msk [vmem:[%s210 + $0x28] sm:$0xf] %vm1207, %v1089
        %1219 = vst.msk [vmem:[%s210 + $0x2c] sm:$0xf] %vm1207, %v1090
        %1220 = vst.msk [vmem:[%s210 + $0x30] sm:$0xf] %vm1207, %v1091
        %1221 = vst.msk [vmem:[%s210 + $0x34] sm:$0xf] %vm1207, %v1092
        %1222 = vst.msk [vmem:[%s210 + $0x38] sm:$0xf] %vm1207, %v1093
        %1223 = vst.msk [vmem:[%s210 + $0x3c] sm:$0xf] %vm1207, %v1094
        %1224 = vst.msk [vmem:[%s210 + $0x40] sm:$0xf] %vm1207, %v1095
        %1225 = vst.msk [vmem:[%s210 + $0x44] sm:$0xf] %vm1207, %v1096
        %1226 = vst.msk [vmem:[%s210 + $0x48] sm:$0xf] %vm1207, %v1097
        %1227 = vst.msk [vmem:[%s210 + $0x4c] sm:$0xf] %vm1207, %v1098
        %1228 = vst.msk [vmem:[%s210 + $0x50] sm:$0xf] %vm1207, %v1099
        %1229 = vst.msk [vmem:[%s210 + $0x54] sm:$0xf] %vm1207, %v1100
        %1230 = vst.msk [vmem:[%s210 + $0x58] sm:$0xf] %vm1207, %v1101
        %1231 = vst.msk [vmem:[%s210 + $0x5c] sm:$0xf] %vm1207, %v1102
        %1232 = vst.msk [vmem:[%s210 + $0x60] sm:$0xf] %vm1207, %v1103
        %1233 = vst.msk [vmem:[%s210 + $0x64] sm:$0xf] %vm1207, %v1104
        %1234 = vst.msk [vmem:[%s210 + $0x68] sm:$0xf] %vm1207, %v1105
        %1235 = vst.msk [vmem:[%s210 + $0x6c] sm:$0xf] %vm1207, %v1106
        %1236 = vst.msk [vmem:[%s210 + $0x70] sm:$0xf] %vm1207, %v1107
        %1237 = vst.msk [vmem:[%s210 + $0x74] sm:$0xf] %vm1207, %v1108
        %1238 = vst.msk [vmem:[%s210 + $0x78] sm:$0xf] %vm1207, %v1109
        %1239 = vst.msk [vmem:[%s210 + $0x7c] sm:$0xf] %vm1207, %v1110
        %1240 = vst.msk [vmem:[%s210 + $0x80] sm:$0xf] %vm1207, %v1111
        %1241 = vst.msk [vmem:[%s210 + $0x84] sm:$0xf] %vm1207, %v1112
        %1242 = vst.msk [vmem:[%s210 + $0x88] sm:$0xf] %vm1207, %v1113
        %1243 = vst.msk [vmem:[%s210 + $0x8c] sm:$0xf] %vm1207, %v1114
        %1244 = vst.msk [vmem:[%s210 + $0x90] sm:$0xf] %vm1207, %v1115
        %1245 = vst.msk [vmem:[%s210 + $0x94] sm:$0xf] %vm1207, %v1116
        %1246 = vst.msk [vmem:[%s210 + $0x98] sm:$0xf] %vm1207, %v1117
        %1247 = vst.msk [vmem:[%s210 + $0x9c] sm:$0xf] %vm1207, %v1118
        %1248 = vst.msk [vmem:[%s210 + $0xa0] sm:$0xf] %vm1207, %v1119
        %1249 = vst.msk [vmem:[%s210 + $0xa4] sm:$0xf] %vm1207, %v1120
        %1250 = vst.msk [vmem:[%s210 + $0xa8] sm:$0xf] %vm1207, %v1121
        %1251 = vst.msk [vmem:[%s210 + $0xac] sm:$0xf] %vm1207, %v1122
        %1252 = vst.msk [vmem:[%s210 + $0xb0] sm:$0xf] %vm1207, %v1123
        %1253 = vst.msk [vmem:[%s210 + $0xb4] sm:$0xf] %vm1207, %v1124
        %1254 = vst.msk [vmem:[%s210 + $0xb8] sm:$0xf] %vm1207, %v1125
        %1255 = vst.msk [vmem:[%s210 + $0xbc] sm:$0xf] %vm1207, %v1126
        %1256 = vst.msk [vmem:[%s210 + $0xc0] sm:$0xf] %vm1207, %v1127
        %1257 = vst.msk [vmem:[%s210 + $0xc4] sm:$0xf] %vm1207, %v1128
        %1258 = vst.msk [vmem:[%s210 + $0xc8] sm:$0xf] %vm1207, %v1129
        %1259 = vst.msk [vmem:[%s210 + $0xcc] sm:$0xf] %vm1207, %v1130
        %1260 = vst.msk [vmem:[%s210 + $0xd0] sm:$0xf] %vm1207, %v1131
        %1261 = vst.msk [vmem:[%s210 + $0xd4] sm:$0xf] %vm1207, %v1132
        %1262 = vst.msk [vmem:[%s210 + $0xd8] sm:$0xf] %vm1207, %v1133
        %1263 = vst.msk [vmem:[%s210 + $0xdc] sm:$0xf] %vm1207, %v1134
        %1264 = vst.msk [vmem:[%s210 + $0xe0] sm:$0xf] %vm1207, %v1135
        %1265 = vst.msk [vmem:[%s210 + $0xe4] sm:$0xf] %vm1207, %v1136
        %1266 = vst.msk [vmem:[%s210 + $0xe8] sm:$0xf] %vm1207, %v1137
        %1267 = vst.msk [vmem:[%s210 + $0xec] sm:$0xf] %vm1207, %v1138
        %1268 = vst.msk [vmem:[%s210 + $0xf0] sm:$0xf] %vm1207, %v1139
        %1269 = vst.msk [vmem:[%s210 + $0xf4] sm:$0xf] %vm1207, %v1140
        %1270 = vst.msk [vmem:[%s210 + $0xf8] sm:$0xf] %vm1207, %v1141
        %1271 = vst.msk [vmem:[%s210 + $0xfc] sm:$0xf] %vm1207, %v1142
        %s1272 = sand.u32 %s114, 1
        %s1273 = sand.u32 %s114, 1
        %s1274 = smul.addr %s1273, 256
        %s1275 = scalar_lea.vmem [#allocation2], %s1274
        // Predicated region
        $region33: #{forward.7} parent=31 // pred_check
          %p1276 = pneg %p124
        $region34: #{forward.7} parent=31 // pred_check_branch
          %1278 = sbr.rel (%p1276) target = $region36
        $region35: #{forward.7} parent=31 // pred_region
          %s1279 = smul.u32 64, %s18
          %s1280 = ssub.s32 553, %s1279
          %p1281 = scmp.lt.s32.totalorder %s1280, 64
          %s1282 = scalar_select %p1281, %s1280, 64
          %s1283 = smul.u32 64, %s1282
          %p1284 = scmp.ne.s32.totalorder 0, %s1283
          %s1285 = sadd.s32 %s19, %s1279
          %s1286 = smul.addr %s1285, 4
          %s1287 = scalar_lea.vmem %s3, %s1286
          // Predicated region
          $region37: #{forward.7} parent=35 // pred_check
            %p1288 = pneg %p1284
          $region38: #{forward.7} parent=35 // pred_check_branch
            %1290 = sbr.rel (%p1288) target = $region40
          $region39: #{forward.7} parent=35 // pred_region
            // Predicated region
            $region41: #{forward.7} parent=39 // pred_check
              _
            $region42: #{forward.7} parent=39 // pred_check_branch
              %1292 = sbr.rel target = $region44
            $region43: #{forward.7} parent=39 // pred_region
              // Predicated region
              $region63: #{forward.7} parent=43 // pred_check
                _
              $region64: #{forward.7} parent=43 // pred_check_branch
                %1467 = sbr.rel (0) target = $region66
              $region65: #{forward.7} parent=43 // pred_region
                %s1469 = sshrl.u32 %s1282, 6
                // While loop
                $region67: #{forward.7} parent=65 // loop_pre_header
                  _
                $region68: #{forward.7} parent=65 // loop_header
                  %s1471 = sphi 0, %s1473
                  %p1472 = scmp.ge.s32.totalorder %s1471, %s1469
                  %s1476 = sphi 0, %s1609
                  %s1477 = sphi %s1275, %s1612
                  %s1478 = sphi %s1287, %s1613
                $region69: #{forward.7} parent=65 // loop_header_branch
                  %1475 = sbr.rel (%p1472) target = $region73
                $region70: #{forward.7} parent=65 // loop_body
                  %v1479 = vld [vmem:[%s1477] sm:$0xf]
                  %1480 = vst [vmem:[%s1478] sm:$0xf] %v1479
                  %v1481 = vld [vmem:[%s1477 + $0x4] sm:$0xf]
                  %1482 = vst [vmem:[%s1478 + $0x4] sm:$0xf] %v1481
                  %v1483 = vld [vmem:[%s1477 + $0x8] sm:$0xf]
                  %1484 = vst [vmem:[%s1478 + $0x8] sm:$0xf] %v1483
                  %v1485 = vld [vmem:[%s1477 + $0xc] sm:$0xf]
                  %1486 = vst [vmem:[%s1478 + $0xc] sm:$0xf] %v1485
                  %v1487 = vld [vmem:[%s1477 + $0x10] sm:$0xf]
                  %1488 = vst [vmem:[%s1478 + $0x10] sm:$0xf] %v1487
                  %v1489 = vld [vmem:[%s1477 + $0x14] sm:$0xf]
                  %1490 = vst [vmem:[%s1478 + $0x14] sm:$0xf] %v1489
                  %v1491 = vld [vmem:[%s1477 + $0x18] sm:$0xf]
                  %1492 = vst [vmem:[%s1478 + $0x18] sm:$0xf] %v1491
                  %v1493 = vld [vmem:[%s1477 + $0x1c] sm:$0xf]
                  %1494 = vst [vmem:[%s1478 + $0x1c] sm:$0xf] %v1493
                  %v1495 = vld [vmem:[%s1477 + $0x20] sm:$0xf]
                  %1496 = vst [vmem:[%s1478 + $0x20] sm:$0xf] %v1495
                  %v1497 = vld [vmem:[%s1477 + $0x24] sm:$0xf]
                  %1498 = vst [vmem:[%s1478 + $0x24] sm:$0xf] %v1497
                  %v1499 = vld [vmem:[%s1477 + $0x28] sm:$0xf]
                  %1500 = vst [vmem:[%s1478 + $0x28] sm:$0xf] %v1499
                  %v1501 = vld [vmem:[%s1477 + $0x2c] sm:$0xf]
                  %1502 = vst [vmem:[%s1478 + $0x2c] sm:$0xf] %v1501
                  %v1503 = vld [vmem:[%s1477 + $0x30] sm:$0xf]
                  %1504 = vst [vmem:[%s1478 + $0x30] sm:$0xf] %v1503
                  %v1505 = vld [vmem:[%s1477 + $0x34] sm:$0xf]
                  %1506 = vst [vmem:[%s1478 + $0x34] sm:$0xf] %v1505
                  %v1507 = vld [vmem:[%s1477 + $0x38] sm:$0xf]
                  %1508 = vst [vmem:[%s1478 + $0x38] sm:$0xf] %v1507
                  %v1509 = vld [vmem:[%s1477 + $0x3c] sm:$0xf]
                  %1510 = vst [vmem:[%s1478 + $0x3c] sm:$0xf] %v1509
                  %v1511 = vld [vmem:[%s1477 + $0x40] sm:$0xf]
                  %1512 = vst [vmem:[%s1478 + $0x40] sm:$0xf] %v1511
                  %v1513 = vld [vmem:[%s1477 + $0x44] sm:$0xf]
                  %1514 = vst [vmem:[%s1478 + $0x44] sm:$0xf] %v1513
                  %v1515 = vld [vmem:[%s1477 + $0x48] sm:$0xf]
                  %1516 = vst [vmem:[%s1478 + $0x48] sm:$0xf] %v1515
                  %v1517 = vld [vmem:[%s1477 + $0x4c] sm:$0xf]
                  %1518 = vst [vmem:[%s1478 + $0x4c] sm:$0xf] %v1517
                  %v1519 = vld [vmem:[%s1477 + $0x50] sm:$0xf]
                  %1520 = vst [vmem:[%s1478 + $0x50] sm:$0xf] %v1519
                  %v1521 = vld [vmem:[%s1477 + $0x54] sm:$0xf]
                  %1522 = vst [vmem:[%s1478 + $0x54] sm:$0xf] %v1521
                  %v1523 = vld [vmem:[%s1477 + $0x58] sm:$0xf]
                  %1524 = vst [vmem:[%s1478 + $0x58] sm:$0xf] %v1523
                  %v1525 = vld [vmem:[%s1477 + $0x5c] sm:$0xf]
                  %1526 = vst [vmem:[%s1478 + $0x5c] sm:$0xf] %v1525
                  %v1527 = vld [vmem:[%s1477 + $0x60] sm:$0xf]
                  %1528 = vst [vmem:[%s1478 + $0x60] sm:$0xf] %v1527
                  %v1529 = vld [vmem:[%s1477 + $0x64] sm:$0xf]
                  %1530 = vst [vmem:[%s1478 + $0x64] sm:$0xf] %v1529
                  %v1531 = vld [vmem:[%s1477 + $0x68] sm:$0xf]
                  %1532 = vst [vmem:[%s1478 + $0x68] sm:$0xf] %v1531
                  %v1533 = vld [vmem:[%s1477 + $0x6c] sm:$0xf]
                  %1534 = vst [vmem:[%s1478 + $0x6c] sm:$0xf] %v1533
                  %v1535 = vld [vmem:[%s1477 + $0x70] sm:$0xf]
                  %1536 = vst [vmem:[%s1478 + $0x70] sm:$0xf] %v1535
                  %v1537 = vld [vmem:[%s1477 + $0x74] sm:$0xf]
                  %1538 = vst [vmem:[%s1478 + $0x74] sm:$0xf] %v1537
                  %v1539 = vld [vmem:[%s1477 + $0x78] sm:$0xf]
                  %1540 = vst [vmem:[%s1478 + $0x78] sm:$0xf] %v1539
                  %v1541 = vld [vmem:[%s1477 + $0x7c] sm:$0xf]
                  %1542 = vst [vmem:[%s1478 + $0x7c] sm:$0xf] %v1541
                  %v1543 = vld [vmem:[%s1477 + $0x80] sm:$0xf]
                  %1544 = vst [vmem:[%s1478 + $0x80] sm:$0xf] %v1543
                  %v1545 = vld [vmem:[%s1477 + $0x84] sm:$0xf]
                  %1546 = vst [vmem:[%s1478 + $0x84] sm:$0xf] %v1545
                  %v1547 = vld [vmem:[%s1477 + $0x88] sm:$0xf]
                  %1548 = vst [vmem:[%s1478 + $0x88] sm:$0xf] %v1547
                  %v1549 = vld [vmem:[%s1477 + $0x8c] sm:$0xf]
                  %1550 = vst [vmem:[%s1478 + $0x8c] sm:$0xf] %v1549
                  %v1551 = vld [vmem:[%s1477 + $0x90] sm:$0xf]
                  %1552 = vst [vmem:[%s1478 + $0x90] sm:$0xf] %v1551
                  %v1553 = vld [vmem:[%s1477 + $0x94] sm:$0xf]
                  %1554 = vst [vmem:[%s1478 + $0x94] sm:$0xf] %v1553
                  %v1555 = vld [vmem:[%s1477 + $0x98] sm:$0xf]
                  %1556 = vst [vmem:[%s1478 + $0x98] sm:$0xf] %v1555
                  %v1557 = vld [vmem:[%s1477 + $0x9c] sm:$0xf]
                  %1558 = vst [vmem:[%s1478 + $0x9c] sm:$0xf] %v1557
                  %v1559 = vld [vmem:[%s1477 + $0xa0] sm:$0xf]
                  %1560 = vst [vmem:[%s1478 + $0xa0] sm:$0xf] %v1559
                  %v1561 = vld [vmem:[%s1477 + $0xa4] sm:$0xf]
                  %1562 = vst [vmem:[%s1478 + $0xa4] sm:$0xf] %v1561
                  %v1563 = vld [vmem:[%s1477 + $0xa8] sm:$0xf]
                  %1564 = vst [vmem:[%s1478 + $0xa8] sm:$0xf] %v1563
                  %v1565 = vld [vmem:[%s1477 + $0xac] sm:$0xf]
                  %1566 = vst [vmem:[%s1478 + $0xac] sm:$0xf] %v1565
                  %v1567 = vld [vmem:[%s1477 + $0xb0] sm:$0xf]
                  %1568 = vst [vmem:[%s1478 + $0xb0] sm:$0xf] %v1567
                  %v1569 = vld [vmem:[%s1477 + $0xb4] sm:$0xf]
                  %1570 = vst [vmem:[%s1478 + $0xb4] sm:$0xf] %v1569
                  %v1571 = vld [vmem:[%s1477 + $0xb8] sm:$0xf]
                  %1572 = vst [vmem:[%s1478 + $0xb8] sm:$0xf] %v1571
                  %v1573 = vld [vmem:[%s1477 + $0xbc] sm:$0xf]
                  %1574 = vst [vmem:[%s1478 + $0xbc] sm:$0xf] %v1573
                  %v1575 = vld [vmem:[%s1477 + $0xc0] sm:$0xf]
                  %1576 = vst [vmem:[%s1478 + $0xc0] sm:$0xf] %v1575
                  %v1577 = vld [vmem:[%s1477 + $0xc4] sm:$0xf]
                  %1578 = vst [vmem:[%s1478 + $0xc4] sm:$0xf] %v1577
                  %v1579 = vld [vmem:[%s1477 + $0xc8] sm:$0xf]
                  %1580 = vst [vmem:[%s1478 + $0xc8] sm:$0xf] %v1579
                  %v1581 = vld [vmem:[%s1477 + $0xcc] sm:$0xf]
                  %1582 = vst [vmem:[%s1478 + $0xcc] sm:$0xf] %v1581
                  %v1583 = vld [vmem:[%s1477 + $0xd0] sm:$0xf]
                  %1584 = vst [vmem:[%s1478 + $0xd0] sm:$0xf] %v1583
                  %v1585 = vld [vmem:[%s1477 + $0xd4] sm:$0xf]
                  %1586 = vst [vmem:[%s1478 + $0xd4] sm:$0xf] %v1585
                  %v1587 = vld [vmem:[%s1477 + $0xd8] sm:$0xf]
                  %1588 = vst [vmem:[%s1478 + $0xd8] sm:$0xf] %v1587
                  %v1589 = vld [vmem:[%s1477 + $0xdc] sm:$0xf]
                  %1590 = vst [vmem:[%s1478 + $0xdc] sm:$0xf] %v1589
                  %v1591 = vld [vmem:[%s1477 + $0xe0] sm:$0xf]
                  %1592 = vst [vmem:[%s1478 + $0xe0] sm:$0xf] %v1591
                  %v1593 = vld [vmem:[%s1477 + $0xe4] sm:$0xf]
                  %1594 = vst [vmem:[%s1478 + $0xe4] sm:$0xf] %v1593
                  %v1595 = vld [vmem:[%s1477 + $0xe8] sm:$0xf]
                  %1596 = vst [vmem:[%s1478 + $0xe8] sm:$0xf] %v1595
                  %v1597 = vld [vmem:[%s1477 + $0xec] sm:$0xf]
                  %1598 = vst [vmem:[%s1478 + $0xec] sm:$0xf] %v1597
                  %v1599 = vld [vmem:[%s1477 + $0xf0] sm:$0xf]
                  %1600 = vst [vmem:[%s1478 + $0xf0] sm:$0xf] %v1599
                  %v1601 = vld [vmem:[%s1477 + $0xf4] sm:$0xf]
                  %1602 = vst [vmem:[%s1478 + $0xf4] sm:$0xf] %v1601
                  %v1603 = vld [vmem:[%s1477 + $0xf8] sm:$0xf]
                  %1604 = vst [vmem:[%s1478 + $0xf8] sm:$0xf] %v1603
                  %v1605 = vld [vmem:[%s1477 + $0xfc] sm:$0xf]
                  %1606 = vst [vmem:[%s1478 + $0xfc] sm:$0xf] %v1605
                  %s1607 = sadd.s32 1, %s1476
                  %p1608 = scmp.ge.s32.totalorder %s1607, %s1469
                  %s1609 = scalar_select %p1608, 0, %s1607
                  %s1610 = smul.u32 %s1609, 256
                  %s1611 = smul.u32 %s1609, 256
                  %s1612 = scalar_lea.vmem %s1275, %s1610 [#allocation2]
                  %s1613 = scalar_lea.vmem %s1287, %s1611
                $region71: #{forward.7} parent=65 // loop_footer
                  %s1473 = sadd.s32 %s1471, 1
                $region72: #{forward.7} parent=65 // loop_footer_branch
                  %1470 = sbr.rel target = $region68
                $region73: #{forward.7} parent=65 // loop_exit
                  _
                %s1614 = sshrl.u32 %s1282, 6
                %s1615 = sand.u32 %s1282, 63
                %s1616 = smul.u32 %s1614, 64
                %s1617 = smul.u32 4, %s1616
                %s1618 = scalar_lea.vmem %s1275, %s1617 [#allocation2]
                %s1619 = smul.u32 4, %s1616
                %s1620 = scalar_lea.vmem %s1287, %s1619
                // While loop
                $region74: #{forward.7} parent=65 // loop_pre_header
                  _
                $region75: #{forward.7} parent=65 // loop_header
                  %s1622 = sphi 0, %s1624
                  %p1623 = scmp.ge.s32.totalorder %s1622, %s1615
                  %s1627 = sphi 0, %s1634
                  %s1628 = sphi %s1618, %s1637
                  %s1629 = sphi %s1620, %s1638
                $region76: #{forward.7} parent=65 // loop_header_branch
                  %1626 = sbr.rel (%p1623) target = $region80
                $region77: #{forward.7} parent=65 // loop_body
                  %v1630 = vld [vmem:[%s1628] sm:$0xf]
                  %1631 = vst [vmem:[%s1629] sm:$0xf] %v1630
                  %s1632 = sadd.s32 1, %s1627
                  %p1633 = scmp.ge.s32.totalorder %s1632, %s1615
                  %s1634 = scalar_select %p1633, 0, %s1632
                  %s1635 = smul.u32 %s1634, 4
                  %s1636 = smul.u32 %s1634, 4
                  %s1637 = scalar_lea.vmem %s1618, %s1635 [#allocation2]
                  %s1638 = scalar_lea.vmem %s1620, %s1636
                $region78: #{forward.7} parent=65 // loop_footer
                  %s1624 = sadd.s32 %s1622, 1
                $region79: #{forward.7} parent=65 // loop_footer_branch
                  %1621 = sbr.rel target = $region75
                $region80: #{forward.7} parent=65 // loop_exit
                  _
              $region66: #{forward.7} parent=43 // pred_fallthru
                _
            $region44: #{forward.7} parent=39 // pred_fallthru
              _
            // Predicated region
            $region45: #{forward.7} parent=39 // pred_check
              _
            $region46: #{forward.7} parent=39 // pred_check_branch
              %1294 = sbr.rel (0) target = $region48
            $region47: #{forward.7} parent=39 // pred_region
              %s1296 = sshrl.u32 %s1282, 6
              // While loop
              $region49: #{forward.7} parent=47 // loop_pre_header
                _
              $region50: #{forward.7} parent=47 // loop_header
                %s1298 = sphi 0, %s1300
                %p1299 = scmp.ge.s32.totalorder %s1298, %s1296
                %s1303 = sphi 0, %s1436
                %s1304 = sphi %s1275, %s1439
                %s1305 = sphi %s1287, %s1440
              $region51: #{forward.7} parent=47 // loop_header_branch
                %1302 = sbr.rel (%p1299) target = $region55
              $region52: #{forward.7} parent=47 // loop_body
                %v1306 = vld [vmem:[%s1304] sm:$0xf]
                %1307 = vst [vmem:[%s1305] sm:$0xf] %v1306
                %v1308 = vld [vmem:[%s1304 + $0x4] sm:$0xf]
                %1309 = vst [vmem:[%s1305 + $0x4] sm:$0xf] %v1308
                %v1310 = vld [vmem:[%s1304 + $0x8] sm:$0xf]
                %1311 = vst [vmem:[%s1305 + $0x8] sm:$0xf] %v1310
                %v1312 = vld [vmem:[%s1304 + $0xc] sm:$0xf]
                %1313 = vst [vmem:[%s1305 + $0xc] sm:$0xf] %v1312
                %v1314 = vld [vmem:[%s1304 + $0x10] sm:$0xf]
                %1315 = vst [vmem:[%s1305 + $0x10] sm:$0xf] %v1314
                %v1316 = vld [vmem:[%s1304 + $0x14] sm:$0xf]
                %1317 = vst [vmem:[%s1305 + $0x14] sm:$0xf] %v1316
                %v1318 = vld [vmem:[%s1304 + $0x18] sm:$0xf]
                %1319 = vst [vmem:[%s1305 + $0x18] sm:$0xf] %v1318
                %v1320 = vld [vmem:[%s1304 + $0x1c] sm:$0xf]
                %1321 = vst [vmem:[%s1305 + $0x1c] sm:$0xf] %v1320
                %v1322 = vld [vmem:[%s1304 + $0x20] sm:$0xf]
                %1323 = vst [vmem:[%s1305 + $0x20] sm:$0xf] %v1322
                %v1324 = vld [vmem:[%s1304 + $0x24] sm:$0xf]
                %1325 = vst [vmem:[%s1305 + $0x24] sm:$0xf] %v1324
                %v1326 = vld [vmem:[%s1304 + $0x28] sm:$0xf]
                %1327 = vst [vmem:[%s1305 + $0x28] sm:$0xf] %v1326
                %v1328 = vld [vmem:[%s1304 + $0x2c] sm:$0xf]
                %1329 = vst [vmem:[%s1305 + $0x2c] sm:$0xf] %v1328
                %v1330 = vld [vmem:[%s1304 + $0x30] sm:$0xf]
                %1331 = vst [vmem:[%s1305 + $0x30] sm:$0xf] %v1330
                %v1332 = vld [vmem:[%s1304 + $0x34] sm:$0xf]
                %1333 = vst [vmem:[%s1305 + $0x34] sm:$0xf] %v1332
                %v1334 = vld [vmem:[%s1304 + $0x38] sm:$0xf]
                %1335 = vst [vmem:[%s1305 + $0x38] sm:$0xf] %v1334
                %v1336 = vld [vmem:[%s1304 + $0x3c] sm:$0xf]
                %1337 = vst [vmem:[%s1305 + $0x3c] sm:$0xf] %v1336
                %v1338 = vld [vmem:[%s1304 + $0x40] sm:$0xf]
                %1339 = vst [vmem:[%s1305 + $0x40] sm:$0xf] %v1338
                %v1340 = vld [vmem:[%s1304 + $0x44] sm:$0xf]
                %1341 = vst [vmem:[%s1305 + $0x44] sm:$0xf] %v1340
                %v1342 = vld [vmem:[%s1304 + $0x48] sm:$0xf]
                %1343 = vst [vmem:[%s1305 + $0x48] sm:$0xf] %v1342
                %v1344 = vld [vmem:[%s1304 + $0x4c] sm:$0xf]
                %1345 = vst [vmem:[%s1305 + $0x4c] sm:$0xf] %v1344
                %v1346 = vld [vmem:[%s1304 + $0x50] sm:$0xf]
                %1347 = vst [vmem:[%s1305 + $0x50] sm:$0xf] %v1346
                %v1348 = vld [vmem:[%s1304 + $0x54] sm:$0xf]
                %1349 = vst [vmem:[%s1305 + $0x54] sm:$0xf] %v1348
                %v1350 = vld [vmem:[%s1304 + $0x58] sm:$0xf]
                %1351 = vst [vmem:[%s1305 + $0x58] sm:$0xf] %v1350
                %v1352 = vld [vmem:[%s1304 + $0x5c] sm:$0xf]
                %1353 = vst [vmem:[%s1305 + $0x5c] sm:$0xf] %v1352
                %v1354 = vld [vmem:[%s1304 + $0x60] sm:$0xf]
                %1355 = vst [vmem:[%s1305 + $0x60] sm:$0xf] %v1354
                %v1356 = vld [vmem:[%s1304 + $0x64] sm:$0xf]
                %1357 = vst [vmem:[%s1305 + $0x64] sm:$0xf] %v1356
                %v1358 = vld [vmem:[%s1304 + $0x68] sm:$0xf]
                %1359 = vst [vmem:[%s1305 + $0x68] sm:$0xf] %v1358
                %v1360 = vld [vmem:[%s1304 + $0x6c] sm:$0xf]
                %1361 = vst [vmem:[%s1305 + $0x6c] sm:$0xf] %v1360
                %v1362 = vld [vmem:[%s1304 + $0x70] sm:$0xf]
                %1363 = vst [vmem:[%s1305 + $0x70] sm:$0xf] %v1362
                %v1364 = vld [vmem:[%s1304 + $0x74] sm:$0xf]
                %1365 = vst [vmem:[%s1305 + $0x74] sm:$0xf] %v1364
                %v1366 = vld [vmem:[%s1304 + $0x78] sm:$0xf]
                %1367 = vst [vmem:[%s1305 + $0x78] sm:$0xf] %v1366
                %v1368 = vld [vmem:[%s1304 + $0x7c] sm:$0xf]
                %1369 = vst [vmem:[%s1305 + $0x7c] sm:$0xf] %v1368
                %v1370 = vld [vmem:[%s1304 + $0x80] sm:$0xf]
                %1371 = vst [vmem:[%s1305 + $0x80] sm:$0xf] %v1370
                %v1372 = vld [vmem:[%s1304 + $0x84] sm:$0xf]
                %1373 = vst [vmem:[%s1305 + $0x84] sm:$0xf] %v1372
                %v1374 = vld [vmem:[%s1304 + $0x88] sm:$0xf]
                %1375 = vst [vmem:[%s1305 + $0x88] sm:$0xf] %v1374
                %v1376 = vld [vmem:[%s1304 + $0x8c] sm:$0xf]
                %1377 = vst [vmem:[%s1305 + $0x8c] sm:$0xf] %v1376
                %v1378 = vld [vmem:[%s1304 + $0x90] sm:$0xf]
                %1379 = vst [vmem:[%s1305 + $0x90] sm:$0xf] %v1378
                %v1380 = vld [vmem:[%s1304 + $0x94] sm:$0xf]
                %1381 = vst [vmem:[%s1305 + $0x94] sm:$0xf] %v1380
                %v1382 = vld [vmem:[%s1304 + $0x98] sm:$0xf]
                %1383 = vst [vmem:[%s1305 + $0x98] sm:$0xf] %v1382
                %v1384 = vld [vmem:[%s1304 + $0x9c] sm:$0xf]
                %1385 = vst [vmem:[%s1305 + $0x9c] sm:$0xf] %v1384
                %v1386 = vld [vmem:[%s1304 + $0xa0] sm:$0xf]
                %1387 = vst [vmem:[%s1305 + $0xa0] sm:$0xf] %v1386
                %v1388 = vld [vmem:[%s1304 + $0xa4] sm:$0xf]
                %1389 = vst [vmem:[%s1305 + $0xa4] sm:$0xf] %v1388
                %v1390 = vld [vmem:[%s1304 + $0xa8] sm:$0xf]
                %1391 = vst [vmem:[%s1305 + $0xa8] sm:$0xf] %v1390
                %v1392 = vld [vmem:[%s1304 + $0xac] sm:$0xf]
                %1393 = vst [vmem:[%s1305 + $0xac] sm:$0xf] %v1392
                %v1394 = vld [vmem:[%s1304 + $0xb0] sm:$0xf]
                %1395 = vst [vmem:[%s1305 + $0xb0] sm:$0xf] %v1394
                %v1396 = vld [vmem:[%s1304 + $0xb4] sm:$0xf]
                %1397 = vst [vmem:[%s1305 + $0xb4] sm:$0xf] %v1396
                %v1398 = vld [vmem:[%s1304 + $0xb8] sm:$0xf]
                %1399 = vst [vmem:[%s1305 + $0xb8] sm:$0xf] %v1398
                %v1400 = vld [vmem:[%s1304 + $0xbc] sm:$0xf]
                %1401 = vst [vmem:[%s1305 + $0xbc] sm:$0xf] %v1400
                %v1402 = vld [vmem:[%s1304 + $0xc0] sm:$0xf]
                %1403 = vst [vmem:[%s1305 + $0xc0] sm:$0xf] %v1402
                %v1404 = vld [vmem:[%s1304 + $0xc4] sm:$0xf]
                %1405 = vst [vmem:[%s1305 + $0xc4] sm:$0xf] %v1404
                %v1406 = vld [vmem:[%s1304 + $0xc8] sm:$0xf]
                %1407 = vst [vmem:[%s1305 + $0xc8] sm:$0xf] %v1406
                %v1408 = vld [vmem:[%s1304 + $0xcc] sm:$0xf]
                %1409 = vst [vmem:[%s1305 + $0xcc] sm:$0xf] %v1408
                %v1410 = vld [vmem:[%s1304 + $0xd0] sm:$0xf]
                %1411 = vst [vmem:[%s1305 + $0xd0] sm:$0xf] %v1410
                %v1412 = vld [vmem:[%s1304 + $0xd4] sm:$0xf]
                %1413 = vst [vmem:[%s1305 + $0xd4] sm:$0xf] %v1412
                %v1414 = vld [vmem:[%s1304 + $0xd8] sm:$0xf]
                %1415 = vst [vmem:[%s1305 + $0xd8] sm:$0xf] %v1414
                %v1416 = vld [vmem:[%s1304 + $0xdc] sm:$0xf]
                %1417 = vst [vmem:[%s1305 + $0xdc] sm:$0xf] %v1416
                %v1418 = vld [vmem:[%s1304 + $0xe0] sm:$0xf]
                %1419 = vst [vmem:[%s1305 + $0xe0] sm:$0xf] %v1418
                %v1420 = vld [vmem:[%s1304 + $0xe4] sm:$0xf]
                %1421 = vst [vmem:[%s1305 + $0xe4] sm:$0xf] %v1420
                %v1422 = vld [vmem:[%s1304 + $0xe8] sm:$0xf]
                %1423 = vst [vmem:[%s1305 + $0xe8] sm:$0xf] %v1422
                %v1424 = vld [vmem:[%s1304 + $0xec] sm:$0xf]
                %1425 = vst [vmem:[%s1305 + $0xec] sm:$0xf] %v1424
                %v1426 = vld [vmem:[%s1304 + $0xf0] sm:$0xf]
                %1427 = vst [vmem:[%s1305 + $0xf0] sm:$0xf] %v1426
                %v1428 = vld [vmem:[%s1304 + $0xf4] sm:$0xf]
                %1429 = vst [vmem:[%s1305 + $0xf4] sm:$0xf] %v1428
                %v1430 = vld [vmem:[%s1304 + $0xf8] sm:$0xf]
                %1431 = vst [vmem:[%s1305 + $0xf8] sm:$0xf] %v1430
                %v1432 = vld [vmem:[%s1304 + $0xfc] sm:$0xf]
                %1433 = vst [vmem:[%s1305 + $0xfc] sm:$0xf] %v1432
                %s1434 = sadd.s32 1, %s1303
                %p1435 = scmp.ge.s32.totalorder %s1434, %s1296
                %s1436 = scalar_select %p1435, 0, %s1434
                %s1437 = smul.u32 %s1436, 256
                %s1438 = smul.u32 %s1436, 256
                %s1439 = scalar_lea.vmem %s1275, %s1437 [#allocation2]
                %s1440 = scalar_lea.vmem %s1287, %s1438
              $region53: #{forward.7} parent=47 // loop_footer
                %s1300 = sadd.s32 %s1298, 1
              $region54: #{forward.7} parent=47 // loop_footer_branch
                %1297 = sbr.rel target = $region50
              $region55: #{forward.7} parent=47 // loop_exit
                _
              %s1441 = sshrl.u32 %s1282, 6
              %s1442 = sand.u32 %s1282, 63
              %s1443 = smul.u32 %s1441, 64
              %s1444 = smul.u32 4, %s1443
              %s1445 = scalar_lea.vmem %s1275, %s1444 [#allocation2]
              %s1446 = smul.u32 4, %s1443
              %s1447 = scalar_lea.vmem %s1287, %s1446
              // While loop
              $region56: #{forward.7} parent=47 // loop_pre_header
                _
              $region57: #{forward.7} parent=47 // loop_header
                %s1449 = sphi 0, %s1451
                %p1450 = scmp.ge.s32.totalorder %s1449, %s1442
                %s1454 = sphi 0, %s1461
                %s1455 = sphi %s1445, %s1464
                %s1456 = sphi %s1447, %s1465
              $region58: #{forward.7} parent=47 // loop_header_branch
                %1453 = sbr.rel (%p1450) target = $region62
              $region59: #{forward.7} parent=47 // loop_body
                %v1457 = vld [vmem:[%s1455] sm:$0xf]
                %1458 = vst [vmem:[%s1456] sm:$0xf] %v1457
                %s1459 = sadd.s32 1, %s1454
                %p1460 = scmp.ge.s32.totalorder %s1459, %s1442
                %s1461 = scalar_select %p1460, 0, %s1459
                %s1462 = smul.u32 %s1461, 4
                %s1463 = smul.u32 %s1461, 4
                %s1464 = scalar_lea.vmem %s1445, %s1462 [#allocation2]
                %s1465 = scalar_lea.vmem %s1447, %s1463
              $region60: #{forward.7} parent=47 // loop_footer
                %s1451 = sadd.s32 %s1449, 1
              $region61: #{forward.7} parent=47 // loop_footer_branch
                %1448 = sbr.rel target = $region57
              $region62: #{forward.7} parent=47 // loop_exit
                _
            $region48: #{forward.7} parent=39 // pred_fallthru
              _
          $region40: #{forward.7} parent=35 // pred_fallthru
            _
          %1639 = vnop
        $region36: #{forward.7} parent=31 // pred_fallthru
          _
      $region32: #{forward.7} parent=5 // pred_fallthru
        _
      %p1640 = scmp.le.s32.totalorder 2, %s9
      // Predicated region
      $region81: #{forward.7} parent=5 // pred_check
        %p1641 = pneg %p1640
      $region82: #{forward.7} parent=5 // pred_check_branch
        %1643 = sbr.rel (%p1641) target = $region84
      $region83: #{forward.7} parent=5 // pred_region
        %s1644 = ssub.s32 %s9, 2
        // Predicated region
        $region85: #{forward.7} parent=83 // pred_check
          %p1645 = pneg %p130
        $region86: #{forward.7} parent=83 // pred_check_branch
          %1647 = sbr.rel (%p1645) target = $region88
        $region87: #{forward.7} parent=83 // pred_region
          %s1648 = sand.u32 %s115, 1
          %s1649 = sand.u32 %s115, 1
          %s1650 = smul.addr %s1649, 256
          %s1651 = scalar_lea.vmem [#allocation2], %s1650
        $region88: #{forward.7} parent=83 // pred_fallthru
          _
      $region84: #{forward.7} parent=5 // pred_fallthru
        _
    $region6: #{forward.7} parent=1 // loop_footer
      %s13 = sadd.s32 1, %s9
    $region7: #{forward.7} parent=1 // loop_footer_branch
      %8 = sbr.rel target = $region3
    $region8: #{forward.7} parent=1 // loop_exit
      _

// kernel: forward.8
$region0: #{forward.8}
  #allocation0 [shape = 'u32[]', space=smem, size = 0x4, offset = 0x4, fixed_abs, tag = 'smem constant byte address 0x4 - core index']
  #allocation1 [shape = 'u32[144,128]{1,0:T(1,128)}', space=vmem, size = 0x12000, scoped, tag = 'internal scratch']
  %s0 = inlined_call_operand.vmem [shape: bf16[1058,72], index: 0, kind: input, shape index: {}]
  %s1 = inlined_call_operand.vmem [shape: bf16[72,16], index: 1, kind: input, shape index: {}]
  %s2 = inlined_call_operand.vmem [shape: f32[1,16], index: 2, kind: input, shape index: {}]
  %s3 = inlined_call_operand.vmem [shape: bf16[1058,16], index: 3, kind: output, shape index: {}]
  %s4 = sld [smem:[#allocation0]]
  $region89: #{forward.8} parent=0
    _
  %s6 = ssub.s32 1, %s4
  %s7 = scalar_select 0, %s6, %s4
  $region1: #{forward.8} parent=0
    #allocation2 [shape = 'u8[262144]{0}', space=vmem, size = 0x40000, scoped, tag = 'output window, operand 0']
    loop: start=0, step=1, limit=5
    $region2: #{forward.8} parent=1 // loop_pre_header
      _
    $region3: #{forward.8} parent=1 // loop_header
      %s9 = sphi 0, %s13
      %p10 = scmp.ge.s32.totalorder %s9, 5
      %s16 = sphi 0, %s28
      %s17 = sphi 0, %s24
      %s18 = sphi 0, %s16
      %s19 = sphi 0, %s17
      %s20 = sphi 0, %s18
      %s21 = sphi 0, %s19
      %s31 = sphi 0, %s33
      %s34 = sphi 0, %s31
      %s35 = sphi 0, %s34
      %s51 = sphi 0, %s35
      %s57 = sphi 0, %s59
      %s60 = sphi 0, %s57
      %s61 = sphi 0, %s60
      %s77 = sphi 0, %s61
      %s83 = sphi 0, %s85
      %s86 = sphi 0, %s83
      %s87 = sphi 0, %s86
      %s103 = sphi 0, %s87
      %s111 = sphi 0, %s113
      %s114 = sphi 0, %s111
      %s115 = sphi 0, %s114
      %s131 = sphi 0, %s115
    $region4: #{forward.8} parent=1 // loop_header_branch
      %12 = sbr.rel (%p10) target = $region8
    $region5: #{forward.8} parent=1 // loop_body
      %s14 = ssub.s32 %s9, 1
      %s15 = ssub.s32 %s9, 2
      %s22 = sadd.s32 1, %s17
      %p23 = scmp.ge.s32.totalorder %s22, 1
      %s24 = scalar_select %p23, 0, %s22
      %s25 = sadd.s32 1, %s16
      %s26 = scalar_select %p23, %s25, %s16
      %p27 = scmp.ge.s32.totalorder %s26, 3
      %s28 = scalar_select %p27, 0, %s26
      %s29 = ssub.s32 %s16, %s28
      %p30 = scmp.eq.s32.totalorder %s29, 0
      %s32 = sadd.s32 %s31, 1
      %s33 = scalar_select %p30, %s31, %s32
      %p36 = pneg %p30
      %p37 = scmp.eq.s32.totalorder %s9, 2
      %p38 = por %p36, %p37
      %p39 = scmp.ne.s32.totalorder %s31, %s34
      %p40 = scmp.eq.s32.totalorder %s9, 0
      %p41 = por %p39, %p40
      %p42 = scmp.ne.s32.totalorder %s31, %s34
      %p43 = scmp.eq.s32.totalorder %s14, 2
      %p44 = por %p42, %p43
      %p45 = scmp.ne.s32.totalorder %s34, %s35
      %p46 = scmp.eq.s32.totalorder %s14, 0
      %p47 = por %p45, %p46
      %p48 = scmp.ne.s32.totalorder %s34, %s35
      %p49 = scmp.eq.s32.totalorder %s15, 2
      %p50 = por %p48, %p49
      %p52 = scmp.ne.s32.totalorder %s35, %s51
      %p53 = scmp.eq.s32.totalorder %s15, 0
      %p54 = por %p52, %p53
      %s55 = ssub.s32 %s17, %s24
      %p56 = scmp.eq.s32.totalorder %s55, 0
      %s58 = sadd.s32 %s57, 1
      %s59 = scalar_select %p56, %s57, %s58
      %p62 = pneg %p56
      %p63 = scmp.eq.s32.totalorder %s9, 2
      %p64 = por %p62, %p63
      %p65 = scmp.ne.s32.totalorder %s57, %s60
      %p66 = scmp.eq.s32.totalorder %s9, 0
      %p67 = por %p65, %p66
      %p68 = scmp.ne.s32.totalorder %s57, %s60
      %p69 = scmp.eq.s32.totalorder %s14, 2
      %p70 = por %p68, %p69
      %p71 = scmp.ne.s32.totalorder %s60, %s61
      %p72 = scmp.eq.s32.totalorder %s14, 0
      %p73 = por %p71, %p72
      %p74 = scmp.ne.s32.totalorder %s60, %s61
      %p75 = scmp.eq.s32.totalorder %s15, 2
      %p76 = por %p74, %p75
      %p78 = scmp.ne.s32.totalorder %s61, %s77
      %p79 = scmp.eq.s32.totalorder %s15, 0
      %p80 = por %p78, %p79
      %s81 = ssub.s32 %s17, %s24
      %p82 = scmp.eq.s32.totalorder %s81, 0
      %s84 = sadd.s32 %s83, 1
      %s85 = scalar_select %p82, %s83, %s84
      %p88 = pneg %p82
      %p89 = scmp.eq.s32.totalorder %s9, 2
      %p90 = por %p88, %p89
      %p91 = scmp.ne.s32.totalorder %s83, %s86
      %p92 = scmp.eq.s32.totalorder %s9, 0
      %p93 = por %p91, %p92
      %p94 = scmp.ne.s32.totalorder %s83, %s86
      %p95 = scmp.eq.s32.totalorder %s14, 2
      %p96 = por %p94, %p95
      %p97 = scmp.ne.s32.totalorder %s86, %s87
      %p98 = scmp.eq.s32.totalorder %s14, 0
      %p99 = por %p97, %p98
      %p100 = scmp.ne.s32.totalorder %s86, %s87
      %p101 = scmp.eq.s32.totalorder %s15, 2
      %p102 = por %p100, %p101
      %p104 = scmp.ne.s32.totalorder %s87, %s103
      %p105 = scmp.eq.s32.totalorder %s15, 0
      %p106 = por %p104, %p105
      %s107 = ssub.s32 %s16, %s28
      %s108 = ssub.s32 %s17, %s24
      %s109 = sor.u32 %s107, %s108
      %p110 = scmp.eq.s32.totalorder %s109, 0
      %s112 = sadd.s32 %s111, 1
      %s113 = scalar_select %p110, %s111, %s112
      %p116 = pneg %p110
      %p117 = scmp.eq.s32.totalorder %s9, 2
      %p118 = por %p116, %p117
      %p119 = scmp.ne.s32.totalorder %s111, %s114
      %p120 = scmp.eq.s32.totalorder %s9, 0
      %p121 = por %p119, %p120
      %p122 = scmp.ne.s32.totalorder %s111, %s114
      %p123 = scmp.eq.s32.totalorder %s14, 2
      %p124 = por %p122, %p123
      %p125 = scmp.ne.s32.totalorder %s114, %s115
      %p126 = scmp.eq.s32.totalorder %s14, 0
      %p127 = por %p125, %p126
      %p128 = scmp.ne.s32.totalorder %s114, %s115
      %p129 = scmp.eq.s32.totalorder %s15, 2
      %p130 = por %p128, %p129
      %p132 = scmp.ne.s32.totalorder %s115, %s131
      %p133 = scmp.eq.s32.totalorder %s15, 0
      %p134 = por %p132, %p133
      %p135 = scmp.le.s32.totalorder 1, %s9
      %p136 = scmp.lt.s32.totalorder %s9, 4
      %p137 = pnand %p135, %p136
      %p138 = pneg %p137
      // Predicated region
      $region9: #{forward.8} parent=5 // pred_check
        _
      $region10: #{forward.8} parent=5 // pred_check_branch
        %140 = sbr.rel (%p137) target = $region12
      $region11: #{forward.8} parent=5 // pred_region
        %s141 = ssub.s32 %s9, 1
        // Predicated region
        $region13: #{forward.8} parent=11 // pred_check
          %p142 = pneg %p73
        $region14: #{forward.8} parent=11 // pred_check_branch
          %144 = sbr.rel (%p142) target = $region16
        $region15: #{forward.8} parent=11 // pred_region
          %p145 = scmp.lt.s32.totalorder %s19, 0
          %s146 = scalar_select %p145, %s19, 0
          %s147 = smul.addr %s146, 4
          %s148 = scalar_lea.vmem %s1, %s147
        $region16: #{forward.8} parent=11 // pred_fallthru
          _
        // Predicated region
        $region17: #{forward.8} parent=11 // pred_check
          %p149 = pneg %p99
        $region18: #{forward.8} parent=11 // pred_check_branch
          %151 = sbr.rel (%p149) target = $region20
        $region19: #{forward.8} parent=11 // pred_region
          %p152 = scmp.lt.s32.totalorder %s19, 0
          %s153 = scalar_select %p152, %s19, 0
          %s154 = scalar_lea.vmem %s2, %s153
        $region20: #{forward.8} parent=11 // pred_fallthru
          _
      $region12: #{forward.8} parent=5 // pred_fallthru
        _
      %p155 = scmp.lt.s32.totalorder %s9, 3
      // Predicated region
      $region21: #{forward.8} parent=5 // pred_check
        %p156 = pneg %p155
      $region22: #{forward.8} parent=5 // pred_check_branch
        %158 = sbr.rel (%p156) target = $region24
      $region23: #{forward.8} parent=5 // pred_region
        // Predicated region
        $region25: #{forward.8} parent=23 // pred_check
          %p159 = pneg %p41
        $region26: #{forward.8} parent=23 // pred_check_branch
          %161 = sbr.rel (%p159) target = $region28
        $region27: #{forward.8} parent=23 // pred_region
          %s162 = smul.u32 64, %s16
          %s163 = ssub.s32 133, %s162
          %p164 = scmp.lt.s32.totalorder %s163, 64
          %s165 = scalar_select %p164, %s163, 64
          %s166 = smul.u32 64, %s165
          %p167 = scmp.lt.s32.totalorder %s162, 132
          %s168 = scalar_select %p167, %s162, 132
          %s169 = smul.addr %s168, 4
          %s170 = scalar_lea.vmem %s0, %s169
          %s171 = smul.u32 64, %s16
          %s172 = ssub.s32 133, %s171
          %p173 = scmp.lt.s32.totalorder %s172, 64
          %s174 = scalar_select %p173, %s172, 64
          %s175 = smul.u32 64, %s174
        $region28: #{forward.8} parent=23 // pred_fallthru
          _
      $region24: #{forward.8} parent=5 // pred_fallthru
        _
      %p176 = scmp.le.s32.totalorder 1, %s9
      %p177 = scmp.lt.s32.totalorder %s9, 4
      %p178 = pnand %p176, %p177
      %p179 = pneg %p178
      // Predicated region
      $region29: #{forward.8} parent=5 // pred_check
        _
      $region30: #{forward.8} parent=5 // pred_check_branch
        %181 = sbr.rel (%p178) target = $region32
      $region31: #{forward.8} parent=5 // pred_region
        %s182 = ssub.s32 %s9, 1
        %s183 = smul.u32 64, %s18
        %s184 = ssub.s32 133, %s183
        %p185 = scmp.lt.s32.totalorder %s184, 64
        %s186 = scalar_select %p185, %s184, 64
        %s187 = smul.u32 64, %s186
        %p188 = scmp.lt.s32.totalorder %s183, 132
        %s189 = scalar_select %p188, %s183, 132
        %s190 = smul.addr %s189, 4
        %s191 = scalar_lea.vmem %s0, %s190
        %p192 = pneg %p47
        %p193 = pneg %p44
        %p194 = scmp.lt.s32.totalorder %s19, 0
        %s195 = scalar_select %p194, %s19, 0
        %s196 = smul.addr %s195, 4
        %s197 = scalar_lea.vmem %s1, %s196
        %p198 = pneg %p73
        %p199 = pneg %p70
        %p200 = scmp.lt.s32.totalorder %s19, 0
        %s201 = scalar_select %p200, %s19, 0
        %s202 = scalar_lea.vmem %s2, %s201
        %p203 = pneg %p99
        %p204 = pneg %p96
        %p205 = pneg %p127
        %p206 = pneg %p124
        %s207 = sand.u32 %s114, 1
        %s208 = sand.u32 %s114, 1
        %s209 = smul.addr %s208, 256
        %s210 = scalar_lea.vmem [#allocation2], %s209
        %s211 = smul.u32 64, %s18
        %s212 = ssub.s32 133, %s211
        %p213 = scmp.lt.s32.totalorder %s212, 64
        %s214 = scalar_select %p213, %s212, 64
        %s215 = smul.u32 64, %s214
        %p216 = scmp.lt.s32.totalorder %s211, 132
        %s217 = scalar_select %p216, %s211, 132
        %s218 = smul.addr %s217, 4
        %s219 = scalar_lea.vmem %s0, %s218
        %s220 = smul.u32 64, %s18
        %s221 = ssub.s32 133, %s220
        %p222 = scmp.lt.s32.totalorder %s221, 64
        %s223 = scalar_select %p222, %s221, 64
        %s224 = smul.u32 64, %s223
        %p225 = scmp.lt.s32.totalorder %s19, 0
        %s226 = scalar_select %p225, %s19, 0
        %s227 = smul.addr %s226, 4
        %s228 = scalar_lea.vmem %s1, %s227
        %p229 = scmp.lt.s32.totalorder %s19, 0
        %s230 = scalar_select %p229, %s19, 0
        %s231 = scalar_lea.vmem %s2, %s230
        %s232 = smul.u32 64, %s18
        %s233 = ssub.s32 133, %s232
        %p234 = scmp.lt.s32.totalorder %s233, 64
        %s235 = scalar_select %p234, %s233, 64
        %s236 = smul.u32 64, %s235
        %v238 = vld [vmem:[%s219] sm:$0xf]
        %v239 = vld [vmem:[%s219 + $0x4] sm:$0xf]
        %v240 = vld [vmem:[%s219 + $0x8] sm:$0xf]
        %v241 = vld [vmem:[%s219 + $0xc] sm:$0xf]
        %v242 = vld [vmem:[%s219 + $0x10] sm:$0xf]
        %v243 = vld [vmem:[%s219 + $0x14] sm:$0xf]
        %v244 = vld [vmem:[%s219 + $0x18] sm:$0xf]
        %v245 = vld [vmem:[%s219 + $0x1c] sm:$0xf]
        %v246 = vld [vmem:[%s219 + $0x20] sm:$0xf]
        %v247 = vld [vmem:[%s219 + $0x24] sm:$0xf]
        %v248 = vld [vmem:[%s219 + $0x28] sm:$0xf]
        %v249 = vld [vmem:[%s219 + $0x2c] sm:$0xf]
        %v250 = vld [vmem:[%s219 + $0x30] sm:$0xf]
        %v251 = vld [vmem:[%s219 + $0x34] sm:$0xf]
        %v252 = vld [vmem:[%s219 + $0x38] sm:$0xf]
        %v253 = vld [vmem:[%s219 + $0x3c] sm:$0xf]
        %v254 = vld [vmem:[%s219 + $0x40] sm:$0xf]
        %v255 = vld [vmem:[%s219 + $0x44] sm:$0xf]
        %v256 = vld [vmem:[%s219 + $0x48] sm:$0xf]
        %v257 = vld [vmem:[%s219 + $0x4c] sm:$0xf]
        %v258 = vld [vmem:[%s219 + $0x50] sm:$0xf]
        %v259 = vld [vmem:[%s219 + $0x54] sm:$0xf]
        %v260 = vld [vmem:[%s219 + $0x58] sm:$0xf]
        %v261 = vld [vmem:[%s219 + $0x5c] sm:$0xf]
        %v262 = vld [vmem:[%s219 + $0x60] sm:$0xf]
        %v263 = vld [vmem:[%s219 + $0x64] sm:$0xf]
        %v264 = vld [vmem:[%s219 + $0x68] sm:$0xf]
        %v265 = vld [vmem:[%s219 + $0x6c] sm:$0xf]
        %v266 = vld [vmem:[%s219 + $0x70] sm:$0xf]
        %v267 = vld [vmem:[%s219 + $0x74] sm:$0xf]
        %v268 = vld [vmem:[%s219 + $0x78] sm:$0xf]
        %v269 = vld [vmem:[%s219 + $0x7c] sm:$0xf]
        %v270 = vld [vmem:[%s219 + $0x80] sm:$0xf]
        %v271 = vld [vmem:[%s219 + $0x84] sm:$0xf]
        %v272 = vld [vmem:[%s219 + $0x88] sm:$0xf]
        %v273 = vld [vmem:[%s219 + $0x8c] sm:$0xf]
        %v274 = vld [vmem:[%s219 + $0x90] sm:$0xf]
        %v275 = vld [vmem:[%s219 + $0x94] sm:$0xf]
        %v276 = vld [vmem:[%s219 + $0x98] sm:$0xf]
        %v277 = vld [vmem:[%s219 + $0x9c] sm:$0xf]
        %v278 = vld [vmem:[%s219 + $0xa0] sm:$0xf]
        %v279 = vld [vmem:[%s219 + $0xa4] sm:$0xf]
        %v280 = vld [vmem:[%s219 + $0xa8] sm:$0xf]
        %v281 = vld [vmem:[%s219 + $0xac] sm:$0xf]
        %v282 = vld [vmem:[%s219 + $0xb0] sm:$0xf]
        %v283 = vld [vmem:[%s219 + $0xb4] sm:$0xf]
        %v284 = vld [vmem:[%s219 + $0xb8] sm:$0xf]
        %v285 = vld [vmem:[%s219 + $0xbc] sm:$0xf]
        %v286 = vld [vmem:[%s219 + $0xc0] sm:$0xf]
        %v287 = vld [vmem:[%s219 + $0xc4] sm:$0xf]
        %v288 = vld [vmem:[%s219 + $0xc8] sm:$0xf]
        %v289 = vld [vmem:[%s219 + $0xcc] sm:$0xf]
        %v290 = vld [vmem:[%s219 + $0xd0] sm:$0xf]
        %v291 = vld [vmem:[%s219 + $0xd4] sm:$0xf]
        %v292 = vld [vmem:[%s219 + $0xd8] sm:$0xf]
        %v293 = vld [vmem:[%s219 + $0xdc] sm:$0xf]
        %v294 = vld [vmem:[%s219 + $0xe0] sm:$0xf]
        %v295 = vld [vmem:[%s219 + $0xe4] sm:$0xf]
        %v296 = vld [vmem:[%s219 + $0xe8] sm:$0xf]
        %v297 = vld [vmem:[%s219 + $0xec] sm:$0xf]
        %v298 = vld [vmem:[%s219 + $0xf0] sm:$0xf]
        %v299 = vld [vmem:[%s219 + $0xf4] sm:$0xf]
        %v300 = vld [vmem:[%s219 + $0xf8] sm:$0xf]
        %v301 = vld [vmem:[%s219 + $0xfc] sm:$0xf]
        %v302 = vld [vmem:[%s228] sm:$0xf]
        %v303 = vld [vmem:[%s228 + $0x4] sm:$0xf]
        %v304 = vld [vmem:[%s228 + $0x8] sm:$0xf]
        %v305 = vld [vmem:[%s228 + $0xc] sm:$0xf]
        %v306 = vld [vmem:[%s228 + $0x10] sm:$0xf]
        %v307 = vld [vmem:[%s228 + $0x14] sm:$0xf]
        %v308 = vld [vmem:[%s228 + $0x18] sm:$0xf]
        %v309 = vld [vmem:[%s228 + $0x1c] sm:$0xf]
        %v310 = vld [vmem:[%s228 + $0x20] sm:$0xf]
        %v311 = vld [vmem:[%s231] sm:$0x1]
        %v313 = vlaneseq
        %v314 = vshrl.u32 %v313, 7
        %v315 = vsub.s32 0, %v314
        %v316 = vrot.slane %v311, %v315
        %v382 = vunpack.c.l.b16 %v238
        %v383 = vunpack.c.l.b16 %v239
        %v384 = vunpack.c.l.b16 %v240
        %v385 = vunpack.c.l.b16 %v241
        %v386 = vunpack.c.l.b16 %v242
        %v387 = vunpack.c.l.b16 %v243
        %v388 = vunpack.c.l.b16 %v244
        %v389 = vunpack.c.l.b16 %v245
        %v390 = vunpack.c.l.b16 %v246
        %v391 = vunpack.c.l.b16 %v247
        %v392 = vunpack.c.l.b16 %v248
        %v393 = vunpack.c.l.b16 %v249
        %v394 = vunpack.c.l.b16 %v250
        %v395 = vunpack.c.l.b16 %v251
        %v396 = vunpack.c.l.b16 %v252
        %v397 = vunpack.c.l.b16 %v253
        %v398 = vunpack.c.l.b16 %v254
        %v399 = vunpack.c.l.b16 %v255
        %v400 = vunpack.c.l.b16 %v256
        %v401 = vunpack.c.l.b16 %v257
        %v402 = vunpack.c.l.b16 %v258
        %v403 = vunpack.c.l.b16 %v259
        %v404 = vunpack.c.l.b16 %v260
        %v405 = vunpack.c.l.b16 %v261
        %v406 = vunpack.c.l.b16 %v262
        %v407 = vunpack.c.l.b16 %v263
        %v408 = vunpack.c.l.b16 %v264
        %v409 = vunpack.c.l.b16 %v265
        %v410 = vunpack.c.l.b16 %v266
        %v411 = vunpack.c.l.b16 %v267
        %v412 = vunpack.c.l.b16 %v268
        %v413 = vunpack.c.l.b16 %v269
        %v414 = vunpack.c.l.b16 %v270
        %v415 = vunpack.c.l.b16 %v271
        %v416 = vunpack.c.l.b16 %v272
        %v417 = vunpack.c.l.b16 %v273
        %v418 = vunpack.c.l.b16 %v274
        %v419 = vunpack.c.l.b16 %v275
        %v420 = vunpack.c.l.b16 %v276
        %v421 = vunpack.c.l.b16 %v277
        %v422 = vunpack.c.l.b16 %v278
        %v423 = vunpack.c.l.b16 %v279
        %v424 = vunpack.c.l.b16 %v280
        %v425 = vunpack.c.l.b16 %v281
        %v426 = vunpack.c.l.b16 %v282
        %v427 = vunpack.c.l.b16 %v283
        %v428 = vunpack.c.l.b16 %v284
        %v429 = vunpack.c.l.b16 %v285
        %v430 = vunpack.c.l.b16 %v286
        %v431 = vunpack.c.l.b16 %v287
        %v432 = vunpack.c.l.b16 %v288
        %v433 = vunpack.c.l.b16 %v289
        %v434 = vunpack.c.l.b16 %v290
        %v435 = vunpack.c.l.b16 %v291
        %v436 = vunpack.c.l.b16 %v292
        %v437 = vunpack.c.l.b16 %v293
        %v438 = vunpack.c.l.b16 %v294
        %v439 = vunpack.c.l.b16 %v295
        %v440 = vunpack.c.l.b16 %v296
        %v441 = vunpack.c.l.b16 %v297
        %v442 = vunpack.c.l.b16 %v298
        %v443 = vunpack.c.l.b16 %v299
        %v444 = vunpack.c.l.b16 %v300
        %v445 = vunpack.c.l.b16 %v301
        %v446 = vpack.c.b16 %v383, %v382
        %v447 = vpack.c.b16 %v385, %v384
        %v448 = vpack.c.b16 %v387, %v386
        %v449 = vpack.c.b16 %v389, %v388
        %v450 = vpack.c.b16 %v391, %v390
        %v451 = vpack.c.b16 %v393, %v392
        %v452 = vpack.c.b16 %v395, %v394
        %v453 = vpack.c.b16 %v397, %v396
        %v454 = vpack.c.b16 %v399, %v398
        %v455 = vpack.c.b16 %v401, %v400
        %v456 = vpack.c.b16 %v403, %v402
        %v457 = vpack.c.b16 %v405, %v404
        %v458 = vpack.c.b16 %v407, %v406
        %v459 = vpack.c.b16 %v409, %v408
        %v460 = vpack.c.b16 %v411, %v410
        %v461 = vpack.c.b16 %v413, %v412
        %v462 = vpack.c.b16 %v415, %v414
        %v463 = vpack.c.b16 %v417, %v416
        %v464 = vpack.c.b16 %v419, %v418
        %v465 = vpack.c.b16 %v421, %v420
        %v466 = vpack.c.b16 %v423, %v422
        %v467 = vpack.c.b16 %v425, %v424
        %v468 = vpack.c.b16 %v427, %v426
        %v469 = vpack.c.b16 %v429, %v428
        %v470 = vpack.c.b16 %v431, %v430
        %v471 = vpack.c.b16 %v433, %v432
        %v472 = vpack.c.b16 %v435, %v434
        %v473 = vpack.c.b16 %v437, %v436
        %v474 = vpack.c.b16 %v439, %v438
        %v475 = vpack.c.b16 %v441, %v440
        %v476 = vpack.c.b16 %v443, %v442
        %v477 = vpack.c.b16 %v445, %v444
        %v487 = vunpack.c.l.b16 %v302
        %v488 = vunpack.c.l.b16 %v303
        %v489 = vunpack.c.l.b16 %v304
        %v490 = vunpack.c.l.b16 %v305
        %v491 = vunpack.c.l.b16 %v306
        %v492 = vunpack.c.l.b16 %v307
        %v493 = vunpack.c.l.b16 %v308
        %v494 = vunpack.c.l.b16 %v309
        %v495 = vunpack.c.l.b16 %v310
        %v496 = vpack.c.b16 %v488, %v487
        %v497 = vpack.c.b16 %v490, %v489
        %v498 = vpack.c.b16 %v492, %v491
        %v499 = vpack.c.b16 %v494, %v493
        %v500 = vpack.c.b16 %v495, %v495
        %vm505 = vcmask 588800
        %v507 = vsel %vm505, %v446, 0
        %v510 = vsel %vm505, %v447, 0
        %v513 = vsel %vm505, %v448, 0
        %v516 = vsel %vm505, %v449, 0
        %v519 = vsel %vm505, %v450, 0
        %v522 = vsel %vm505, %v451, 0
        %v525 = vsel %vm505, %v452, 0
        %v528 = vsel %vm505, %v453, 0
        %v531 = vsel %vm505, %v454, 0
        %v534 = vsel %vm505, %v455, 0
        %v537 = vsel %vm505, %v456, 0
        %v540 = vsel %vm505, %v457, 0
        %v543 = vsel %vm505, %v458, 0
        %v546 = vsel %vm505, %v459, 0
        %v549 = vsel %vm505, %v460, 0
        %v552 = vsel %vm505, %v461, 0
        %v555 = vsel %vm505, %v462, 0
        %v558 = vsel %vm505, %v463, 0
        %v561 = vsel %vm505, %v464, 0
        %v564 = vsel %vm505, %v465, 0
        %v567 = vsel %vm505, %v466, 0
        %v570 = vsel %vm505, %v467, 0
        %v573 = vsel %vm505, %v468, 0
        %v576 = vsel %vm505, %v469, 0
        %v579 = vsel %vm505, %v470, 0
        %v582 = vsel %vm505, %v471, 0
        %v585 = vsel %vm505, %v472, 0
        %v588 = vsel %vm505, %v473, 0
        %v591 = vsel %vm505, %v474, 0
        %v594 = vsel %vm505, %v475, 0
        %v597 = vsel %vm505, %v476, 0
        %v600 = vsel %vm505, %v477, 0
        %vm602 = vcmask 1043456
        %v604 = vsel %vm602, %v500, 0
        %606 = vmatprep.subr.bf16.mxu0 0
        %607 = vmatpush1.bf16.msra.mxu0 %v496
        %608 = vmatprep.subr.bf16.mxu0 0
        %609 = vmatpush1.bf16.msra.mxu0 %v497
        %610 = vmatprep.subr.bf16.mxu0 0
        %611 = vmatpush1.bf16.msra.mxu0 %v498
        %612 = vmatprep.subr.bf16.mxu0 0
        %613 = vmatpush1.bf16.msra.mxu0 %v499
        %614 = vmatprep.subr.bf16.mxu0 0
        %615 = vmatpush1.bf16.msra.mxu0 %v604
        %616 = vmatprep.subr.bf16.mxu0 0
        %617 = vmatpush1.bf16.msra.mxu0 0
        %618 = vmatprep.subr.bf16.mxu0 0
        %619 = vmatpush1.bf16.msra.mxu0 0
        %620 = vmatprep.subr.bf16.mxu0 0
        %621 = vmatpush1.bf16.msra.mxu0 0
        %622 = vmatprep.subr.bf16.mxu0 0
        %623 = vmatpush1.bf16.msra.mxu0 0
        %624 = vmatprep.subr.bf16.mxu0 0
        %625 = vmatpush1.bf16.msra.mxu0 0
        %626 = vmatprep.subr.bf16.mxu0 0
        %627 = vmatpush1.bf16.msra.mxu0 0
        %628 = vmatprep.subr.bf16.mxu0 0
        %629 = vmatpush1.bf16.msra.mxu0 0
        %630 = vmatprep.subr.bf16.mxu0 0
        %631 = vmatpush1.bf16.msra.mxu0 0
        %632 = vmatprep.subr.bf16.mxu0 0
        %633 = vmatpush1.bf16.msra.mxu0 0
        %634 = vmatprep.subr.bf16.mxu0 0
        %635 = vmatpush1.bf16.msra.mxu0 0
        %636 = vmatprep.subr.bf16.mxu0 0
        %637 = vmatpush1.bf16.msra.mxu0 0
        %638 = vmatprep.mubr.bf16.mxu0 0
        %639 = vmatmul.mubr.bf16.gmra.mrb[0].mxu0 %v507
        %v640 = vpop.f32.mrb[0].mxu0
        %v641 = vadd.f32 %v316, %v640
        %v642 = vpop.f32.mrb[0].mxu0
        %v643 = vpop.f32.mrb[0].mxu0
        %v644 = vadd.f32 %v316, %v643
        %v645 = vpop.f32.mrb[0].mxu0
        %646 = vmatprep.mubr.bf16.mxu0 0
        %647 = vmatmul.mubr.bf16.gmra.mrb[0].mxu0 %v510
        %v648 = vpop.f32.mrb[0].mxu0
        %v649 = vadd.f32 %v316, %v648
        %v650 = vpop.f32.mrb[0].mxu0
        %v651 = vpop.f32.mrb[0].mxu0
        %v652 = vadd.f32 %v316, %v651
        %v653 = vpop.f32.mrb[0].mxu0
        %654 = vmatprep.mubr.bf16.mxu0 0
        %655 = vmatmul.mubr.bf16.gmra.mrb[0].mxu0 %v513
        %v656 = vpop.f32.mrb[0].mxu0
        %v657 = vadd.f32 %v316, %v656
        %v658 = vpop.f32.mrb[0].mxu0
        %v659 = vpop.f32.mrb[0].mxu0
        %v660 = vadd.f32 %v316, %v659
        %v661 = vpop.f32.mrb[0].mxu0
        %662 = vmatprep.mubr.bf16.mxu0 0
        %663 = vmatmul.mubr.bf16.gmra.mrb[0].mxu0 %v516
        %v664 = vpop.f32.mrb[0].mxu0
        %v665 = vadd.f32 %v316, %v664
        %v666 = vpop.f32.mrb[0].mxu0
        %v667 = vpop.f32.mrb[0].mxu0
        %v668 = vadd.f32 %v316, %v667
        %v669 = vpop.f32.mrb[0].mxu0
        %670 = vmatprep.mubr.bf16.mxu0 0
        %671 = vmatmul.mubr.bf16.gmra.mrb[0].mxu0 %v519
        %v672 = vpop.f32.mrb[0].mxu0
        %v673 = vadd.f32 %v316, %v672
        %v674 = vpop.f32.mrb[0].mxu0
        %v675 = vpop.f32.mrb[0].mxu0
        %v676 = vadd.f32 %v316, %v675
        %v677 = vpop.f32.mrb[0].mxu0
        %678 = vmatprep.mubr.bf16.mxu0 0
        %679 = vmatmul.mubr.bf16.gmra.mrb[0].mxu0 %v522
        %v680 = vpop.f32.mrb[0].mxu0
        %v681 = vadd.f32 %v316, %v680
        %v682 = vpop.f32.mrb[0].mxu0
        %v683 = vpop.f32.mrb[0].mxu0
        %v684 = vadd.f32 %v316, %v683
        %v685 = vpop.f32.mrb[0].mxu0
        %686 = vmatprep.mubr.bf16.mxu0 0
        %687 = vmatmul.mubr.bf16.gmra.mrb[0].mxu0 %v525
        %v688 = vpop.f32.mrb[0].mxu0
        %v689 = vadd.f32 %v316, %v688
        %v690 = vpop.f32.mrb[0].mxu0
        %v691 = vpop.f32.mrb[0].mxu0
        %v692 = vadd.f32 %v316, %v691
        %v693 = vpop.f32.mrb[0].mxu0
        %694 = vmatprep.mubr.bf16.mxu0 0
        %695 = vmatmul.mubr.bf16.gmra.mrb[0].mxu0 %v528
        %v696 = vpop.f32.mrb[0].mxu0
        %v697 = vadd.f32 %v316, %v696
        %v698 = vpop.f32.mrb[0].mxu0
        %v699 = vpop.f32.mrb[0].mxu0
        %v700 = vadd.f32 %v316, %v699
        %v701 = vpop.f32.mrb[0].mxu0
        %702 = vmatprep.mubr.bf16.mxu0 0
        %703 = vmatmul.mubr.bf16.gmra.mrb[0].mxu0 %v531
        %v704 = vpop.f32.mrb[0].mxu0
        %v705 = vadd.f32 %v316, %v704
        %v706 = vpop.f32.mrb[0].mxu0
        %v707 = vpop.f32.mrb[0].mxu0
        %v708 = vadd.f32 %v316, %v707
        %v709 = vpop.f32.mrb[0].mxu0
        %710 = vmatprep.mubr.bf16.mxu0 0
        %711 = vmatmul.mubr.bf16.gmra.mrb[0].mxu0 %v534
        %v712 = vpop.f32.mrb[0].mxu0
        %v713 = vadd.f32 %v316, %v712
        %v714 = vpop.f32.mrb[0].mxu0
        %v715 = vpop.f32.mrb[0].mxu0
        %v716 = vadd.f32 %v316, %v715
        %v717 = vpop.f32.mrb[0].mxu0
        %718 = vmatprep.mubr.bf16.mxu0 0
        %719 = vmatmul.mubr.bf16.gmra.mrb[0].mxu0 %v537
        %v720 = vpop.f32.mrb[0].mxu0
        %v721 = vadd.f32 %v316, %v720
        %v722 = vpop.f32.mrb[0].mxu0
        %v723 = vpop.f32.mrb[0].mxu0
        %v724 = vadd.f32 %v316, %v723
        %v725 = vpop.f32.mrb[0].mxu0
        %726 = vmatprep.mubr.bf16.mxu0 0
        %727 = vmatmul.mubr.bf16.gmra.mrb[0].mxu0 %v540
        %v728 = vpop.f32.mrb[0].mxu0
        %v729 = vadd.f32 %v316, %v728
        %v730 = vpop.f32.mrb[0].mxu0
        %v731 = vpop.f32.mrb[0].mxu0
        %v732 = vadd.f32 %v316, %v731
        %v733 = vpop.f32.mrb[0].mxu0
        %734 = vmatprep.mubr.bf16.mxu0 0
        %735 = vmatmul.mubr.bf16.gmra.mrb[0].mxu0 %v543
        %v736 = vpop.f32.mrb[0].mxu0
        %v737 = vadd.f32 %v316, %v736
        %v738 = vpop.f32.mrb[0].mxu0
        %v739 = vpop.f32.mrb[0].mxu0
        %v740 = vadd.f32 %v316, %v739
        %v741 = vpop.f32.mrb[0].mxu0
        %742 = vmatprep.mubr.bf16.mxu0 0
        %743 = vmatmul.mubr.bf16.gmra.mrb[0].mxu0 %v546
        %v744 = vpop.f32.mrb[0].mxu0
        %v745 = vadd.f32 %v316, %v744
        %v746 = vpop.f32.mrb[0].mxu0
        %v747 = vpop.f32.mrb[0].mxu0
        %v748 = vadd.f32 %v316, %v747
        %v749 = vpop.f32.mrb[0].mxu0
        %750 = vmatprep.mubr.bf16.mxu0 0
        %751 = vmatmul.mubr.bf16.gmra.mrb[0].mxu0 %v549
        %v752 = vpop.f32.mrb[0].mxu0
        %v753 = vadd.f32 %v316, %v752
        %v754 = vpop.f32.mrb[0].mxu0
        %v755 = vpop.f32.mrb[0].mxu0
        %v756 = vadd.f32 %v316, %v755
        %v757 = vpop.f32.mrb[0].mxu0
        %758 = vmatprep.mubr.bf16.mxu0 0
        %759 = vmatmul.mubr.bf16.gmra.mrb[0].mxu0 %v552
        %v760 = vpop.f32.mrb[0].mxu0
        %v761 = vadd.f32 %v316, %v760
        %v762 = vpop.f32.mrb[0].mxu0
        %v763 = vpop.f32.mrb[0].mxu0
        %v764 = vadd.f32 %v316, %v763
        %v765 = vpop.f32.mrb[0].mxu0
        %766 = vmatprep.mubr.bf16.mxu0 0
        %767 = vmatmul.mubr.bf16.gmra.mrb[0].mxu0 %v555
        %v768 = vpop.f32.mrb[0].mxu0
        %v769 = vadd.f32 %v316, %v768
        %v770 = vpop.f32.mrb[0].mxu0
        %v771 = vpop.f32.mrb[0].mxu0
        %v772 = vadd.f32 %v316, %v771
        %v773 = vpop.f32.mrb[0].mxu0
        %774 = vmatprep.mubr.bf16.mxu0 0
        %775 = vmatmul.mubr.bf16.gmra.mrb[0].mxu0 %v558
        %v776 = vpop.f32.mrb[0].mxu0
        %v777 = vadd.f32 %v316, %v776
        %v778 = vpop.f32.mrb[0].mxu0
        %v779 = vpop.f32.mrb[0].mxu0
        %v780 = vadd.f32 %v316, %v779
        %v781 = vpop.f32.mrb[0].mxu0
        %782 = vmatprep.mubr.bf16.mxu0 0
        %783 = vmatmul.mubr.bf16.gmra.mrb[0].mxu0 %v561
        %v784 = vpop.f32.mrb[0].mxu0
        %v785 = vadd.f32 %v316, %v784
        %v786 = vpop.f32.mrb[0].mxu0
        %v787 = vpop.f32.mrb[0].mxu0
        %v788 = vadd.f32 %v316, %v787
        %v789 = vpop.f32.mrb[0].mxu0
        %790 = vmatprep.mubr.bf16.mxu0 0
        %791 = vmatmul.mubr.bf16.gmra.mrb[0].mxu0 %v564
        %v792 = vpop.f32.mrb[0].mxu0
        %v793 = vadd.f32 %v316, %v792
        %v794 = vpop.f32.mrb[0].mxu0
        %v795 = vpop.f32.mrb[0].mxu0
        %v796 = vadd.f32 %v316, %v795
        %v797 = vpop.f32.mrb[0].mxu0
        %798 = vmatprep.mubr.bf16.mxu0 0
        %799 = vmatmul.mubr.bf16.gmra.mrb[0].mxu0 %v567
        %v800 = vpop.f32.mrb[0].mxu0
        %v801 = vadd.f32 %v316, %v800
        %v802 = vpop.f32.mrb[0].mxu0
        %v803 = vpop.f32.mrb[0].mxu0
        %v804 = vadd.f32 %v316, %v803
        %v805 = vpop.f32.mrb[0].mxu0
        %806 = vmatprep.mubr.bf16.mxu0 0
        %807 = vmatmul.mubr.bf16.gmra.mrb[0].mxu0 %v570
        %v808 = vpop.f32.mrb[0].mxu0
        %v809 = vadd.f32 %v316, %v808
        %v810 = vpop.f32.mrb[0].mxu0
        %v811 = vpop.f32.mrb[0].mxu0
        %v812 = vadd.f32 %v316, %v811
        %v813 = vpop.f32.mrb[0].mxu0
        %814 = vmatprep.mubr.bf16.mxu0 0
        %815 = vmatmul.mubr.bf16.gmra.mrb[0].mxu0 %v573
        %v816 = vpop.f32.mrb[0].mxu0
        %v817 = vadd.f32 %v316, %v816
        %v818 = vpop.f32.mrb[0].mxu0
        %v819 = vpop.f32.mrb[0].mxu0
        %v820 = vadd.f32 %v316, %v819
        %v821 = vpop.f32.mrb[0].mxu0
        %822 = vmatprep.mubr.bf16.mxu0 0
        %823 = vmatmul.mubr.bf16.gmra.mrb[0].mxu0 %v576
        %v824 = vpop.f32.mrb[0].mxu0
        %v825 = vadd.f32 %v316, %v824
        %v826 = vpop.f32.mrb[0].mxu0
        %v827 = vpop.f32.mrb[0].mxu0
        %v828 = vadd.f32 %v316, %v827
        %v829 = vpop.f32.mrb[0].mxu0
        %830 = vmatprep.mubr.bf16.mxu0 0
        %831 = vmatmul.mubr.bf16.gmra.mrb[0].mxu0 %v579
        %v832 = vpop.f32.mrb[0].mxu0
        %v833 = vadd.f32 %v316, %v832
        %v834 = vpop.f32.mrb[0].mxu0
        %v835 = vpop.f32.mrb[0].mxu0
        %v836 = vadd.f32 %v316, %v835
        %v837 = vpop.f32.mrb[0].mxu0
        %838 = vmatprep.mubr.bf16.mxu0 0
        %839 = vmatmul.mubr.bf16.gmra.mrb[0].mxu0 %v582
        %v840 = vpop.f32.mrb[0].mxu0
        %v841 = vadd.f32 %v316, %v840
        %v842 = vpop.f32.mrb[0].mxu0
        %v843 = vpop.f32.mrb[0].mxu0
        %v844 = vadd.f32 %v316, %v843
        %v845 = vpop.f32.mrb[0].mxu0
        %846 = vmatprep.mubr.bf16.mxu0 0
        %847 = vmatmul.mubr.bf16.gmra.mrb[0].mxu0 %v585
        %v848 = vpop.f32.mrb[0].mxu0
        %v849 = vadd.f32 %v316, %v848
        %v850 = vpop.f32.mrb[0].mxu0
        %v851 = vpop.f32.mrb[0].mxu0
        %v852 = vadd.f32 %v316, %v851
        %v853 = vpop.f32.mrb[0].mxu0
        %854 = vmatprep.mubr.bf16.mxu0 0
        %855 = vmatmul.mubr.bf16.gmra.mrb[0].mxu0 %v588
        %v856 = vpop.f32.mrb[0].mxu0
        %v857 = vadd.f32 %v316, %v856
        %v858 = vpop.f32.mrb[0].mxu0
        %v859 = vpop.f32.mrb[0].mxu0
        %v860 = vadd.f32 %v316, %v859
        %v861 = vpop.f32.mrb[0].mxu0
        %862 = vmatprep.mubr.bf16.mxu0 0
        %863 = vmatmul.mubr.bf16.gmra.mrb[0].mxu0 %v591
        %v864 = vpop.f32.mrb[0].mxu0
        %v865 = vadd.f32 %v316, %v864
        %v866 = vpop.f32.mrb[0].mxu0
        %v867 = vpop.f32.mrb[0].mxu0
        %v868 = vadd.f32 %v316, %v867
        %v869 = vpop.f32.mrb[0].mxu0
        %870 = vmatprep.mubr.bf16.mxu0 0
        %871 = vmatmul.mubr.bf16.gmra.mrb[0].mxu0 %v594
        %v872 = vpop.f32.mrb[0].mxu0
        %v873 = vadd.f32 %v316, %v872
        %v874 = vpop.f32.mrb[0].mxu0
        %v875 = vpop.f32.mrb[0].mxu0
        %v876 = vadd.f32 %v316, %v875
        %v877 = vpop.f32.mrb[0].mxu0
        %878 = vmatprep.mubr.bf16.mxu0 0
        %879 = vmatmul.mubr.bf16.gmra.mrb[0].mxu0 %v597
        %v880 = vpop.f32.mrb[0].mxu0
        %v881 = vadd.f32 %v316, %v880
        %v882 = vpop.f32.mrb[0].mxu0
        %v883 = vpop.f32.mrb[0].mxu0
        %v884 = vadd.f32 %v316, %v883
        %v885 = vpop.f32.mrb[0].mxu0
        %886 = vmatprep.mubr.bf16.mxu0 0
        %887 = vmatmul.mubr.bf16.gmra.mrb[0].mxu0 %v600
        %v888 = vpop.f32.mrb[0].mxu0
        %v889 = vadd.f32 %v316, %v888
        %v890 = vpop.f32.mrb[0].mxu0
        %v891 = vpop.f32.mrb[0].mxu0
        %v892 = vadd.f32 %v316, %v891
        %v893 = vpop.f32.mrb[0].mxu0
        %894 = vdwg.mxu0
        %v895 = vmax.f32 %v641, 0.0
        %v896 = vmax.f32 %v644, 0.0
        %v897 = vmax.f32 %v649, 0.0
        %v898 = vmax.f32 %v652, 0.0
        %v899 = vmax.f32 %v657, 0.0
        %v900 = vmax.f32 %v660, 0.0
        %v901 = vmax.f32 %v665, 0.0
        %v902 = vmax.f32 %v668, 0.0
        %v903 = vmax.f32 %v673, 0.0
        %v904 = vmax.f32 %v676, 0.0
        %v905 = vmax.f32 %v681, 0.0
        %v906 = vmax.f32 %v684, 0.0
        %v907 = vmax.f32 %v689, 0.0
        %v908 = vmax.f32 %v692, 0.0
        %v909 = vmax.f32 %v697, 0.0
        %v910 = vmax.f32 %v700, 0.0
        %v911 = vmax.f32 %v705, 0.0
        %v912 = vmax.f32 %v708, 0.0
        %v913 = vmax.f32 %v713, 0.0
        %v914 = vmax.f32 %v716, 0.0
        %v915 = vmax.f32 %v721, 0.0
        %v916 = vmax.f32 %v724, 0.0
        %v917 = vmax.f32 %v729, 0.0
        %v918 = vmax.f32 %v732, 0.0
        %v919 = vmax.f32 %v737, 0.0
        %v920 = vmax.f32 %v740, 0.0
        %v921 = vmax.f32 %v745, 0.0
        %v922 = vmax.f32 %v748, 0.0
        %v923 = vmax.f32 %v753, 0.0
        %v924 = vmax.f32 %v756, 0.0
        %v925 = vmax.f32 %v761, 0.0
        %v926 = vmax.f32 %v764, 0.0
        %v927 = vmax.f32 %v769, 0.0
        %v928 = vmax.f32 %v772, 0.0
        %v929 = vmax.f32 %v777, 0.0
        %v930 = vmax.f32 %v780, 0.0
        %v931 = vmax.f32 %v785, 0.0
        %v932 = vmax.f32 %v788, 0.0
        %v933 = vmax.f32 %v793, 0.0
        %v934 = vmax.f32 %v796, 0.0
        %v935 = vmax.f32 %v801, 0.0
        %v936 = vmax.f32 %v804, 0.0
        %v937 = vmax.f32 %v809, 0.0
        %v938 = vmax.f32 %v812, 0.0
        %v939 = vmax.f32 %v817, 0.0
        %v940 = vmax.f32 %v820, 0.0
        %v941 = vmax.f32 %v825, 0.0
        %v942 = vmax.f32 %v828, 0.0
        %v943 = vmax.f32 %v833, 0.0
        %v944 = vmax.f32 %v836, 0.0
        %v945 = vmax.f32 %v841, 0.0
        %v946 = vmax.f32 %v844, 0.0
        %v947 = vmax.f32 %v849, 0.0
        %v948 = vmax.f32 %v852, 0.0
        %v949 = vmax.f32 %v857, 0.0
        %v950 = vmax.f32 %v860, 0.0
        %v951 = vmax.f32 %v865, 0.0
        %v952 = vmax.f32 %v868, 0.0
        %v953 = vmax.f32 %v873, 0.0
        %v954 = vmax.f32 %v876, 0.0
        %v955 = vmax.f32 %v881, 0.0
        %v956 = vmax.f32 %v884, 0.0
        %v957 = vmax.f32 %v889, 0.0
        %v958 = vmax.f32 %v892, 0.0
        %v959 = vpack.c.bf16 %v896, %v895
        %v960 = vpack.c.bf16 %v898, %v897
        %v961 = vpack.c.bf16 %v900, %v899
        %v962 = vpack.c.bf16 %v902, %v901
        %v963 = vpack.c.bf16 %v904, %v903
        %v964 = vpack.c.bf16 %v906, %v905
        %v965 = vpack.c.bf16 %v908, %v907
        %v966 = vpack.c.bf16 %v910, %v909
        %v967 = vpack.c.bf16 %v912, %v911
        %v968 = vpack.c.bf16 %v914, %v913
        %v969 = vpack.c.bf16 %v916, %v915
        %v970 = vpack.c.bf16 %v918, %v917
        %v971 = vpack.c.bf16 %v920, %v919
        %v972 = vpack.c.bf16 %v922, %v921
        %v973 = vpack.c.bf16 %v924, %v923
        %v974 = vpack.c.bf16 %v926, %v925
        %v975 = vpack.c.bf16 %v928, %v927
        %v976 = vpack.c.bf16 %v930, %v929
        %v977 = vpack.c.bf16 %v932, %v931
        %v978 = vpack.c.bf16 %v934, %v933
        %v979 = vpack.c.bf16 %v936, %v935
        %v980 = vpack.c.bf16 %v938, %v937
        %v981 = vpack.c.bf16 %v940, %v939
        %v982 = vpack.c.bf16 %v942, %v941
        %v983 = vpack.c.bf16 %v944, %v943
        %v984 = vpack.c.bf16 %v946, %v945
        %v985 = vpack.c.bf16 %v948, %v947
        %v986 = vpack.c.bf16 %v950, %v949
        %v987 = vpack.c.bf16 %v952, %v951
        %v988 = vpack.c.bf16 %v954, %v953
        %v989 = vpack.c.bf16 %v956, %v955
        %v990 = vpack.c.bf16 %v958, %v957
        %v1023 = vunpack.c.l.b16 %v959
        %v1024 = vunpack.c.h.b16 %v959
        %v1025 = vunpack.c.l.b16 %v960
        %v1026 = vunpack.c.h.b16 %v960
        %v1027 = vunpack.c.l.b16 %v961
        %v1028 = vunpack.c.h.b16 %v961
        %v1029 = vunpack.c.l.b16 %v962
        %v1030 = vunpack.c.h.b16 %v962
        %v1031 = vunpack.c.l.b16 %v963
        %v1032 = vunpack.c.h.b16 %v963
        %v1033 = vunpack.c.l.b16 %v964
        %v1034 = vunpack.c.h.b16 %v964
        %v1035 = vunpack.c.l.b16 %v965
        %v1036 = vunpack.c.h.b16 %v965
        %v1037 = vunpack.c.l.b16 %v966
        %v1038 = vunpack.c.h.b16 %v966
        %v1039 = vunpack.c.l.b16 %v967
        %v1040 = vunpack.c.h.b16 %v967
        %v1041 = vunpack.c.l.b16 %v968
        %v1042 = vunpack.c.h.b16 %v968
        %v1043 = vunpack.c.l.b16 %v969
        %v1044 = vunpack.c.h.b16 %v969
        %v1045 = vunpack.c.l.b16 %v970
        %v1046 = vunpack.c.h.b16 %v970
        %v1047 = vunpack.c.l.b16 %v971
        %v1048 = vunpack.c.h.b16 %v971
        %v1049 = vunpack.c.l.b16 %v972
        %v1050 = vunpack.c.h.b16 %v972
        %v1051 = vunpack.c.l.b16 %v973
        %v1052 = vunpack.c.h.b16 %v973
        %v1053 = vunpack.c.l.b16 %v974
        %v1054 = vunpack.c.h.b16 %v974
        %v1055 = vunpack.c.l.b16 %v975
        %v1056 = vunpack.c.h.b16 %v975
        %v1057 = vunpack.c.l.b16 %v976
        %v1058 = vunpack.c.h.b16 %v976
        %v1059 = vunpack.c.l.b16 %v977
        %v1060 = vunpack.c.h.b16 %v977
        %v1061 = vunpack.c.l.b16 %v978
        %v1062 = vunpack.c.h.b16 %v978
        %v1063 = vunpack.c.l.b16 %v979
        %v1064 = vunpack.c.h.b16 %v979
        %v1065 = vunpack.c.l.b16 %v980
        %v1066 = vunpack.c.h.b16 %v980
        %v1067 = vunpack.c.l.b16 %v981
        %v1068 = vunpack.c.h.b16 %v981
        %v1069 = vunpack.c.l.b16 %v982
        %v1070 = vunpack.c.h.b16 %v982
        %v1071 = vunpack.c.l.b16 %v983
        %v1072 = vunpack.c.h.b16 %v983
        %v1073 = vunpack.c.l.b16 %v984
        %v1074 = vunpack.c.h.b16 %v984
        %v1075 = vunpack.c.l.b16 %v985
        %v1076 = vunpack.c.h.b16 %v985
        %v1077 = vunpack.c.l.b16 %v986
        %v1078 = vunpack.c.h.b16 %v986
        %v1079 = vunpack.c.l.b16 %v987
        %v1080 = vunpack.c.h.b16 %v987
        %v1081 = vunpack.c.l.b16 %v988
        %v1082 = vunpack.c.h.b16 %v988
        %v1083 = vunpack.c.l.b16 %v989
        %v1084 = vunpack.c.h.b16 %v989
        %v1085 = vunpack.c.l.b16 %v990
        %v1086 = vunpack.c.h.b16 %v990
        %v1087 = vpack.c.b16 %v1023, %v1023
        %v1088 = vpack.c.b16 %v1024, %v1024
        %v1089 = vpack.c.b16 %v1025, %v1025
        %v1090 = vpack.c.b16 %v1026, %v1026
        %v1091 = vpack.c.b16 %v1027, %v1027
        %v1092 = vpack.c.b16 %v1028, %v1028
        %v1093 = vpack.c.b16 %v1029, %v1029
        %v1094 = vpack.c.b16 %v1030, %v1030
        %v1095 = vpack.c.b16 %v1031, %v1031
        %v1096 = vpack.c.b16 %v1032, %v1032
        %v1097 = vpack.c.b16 %v1033, %v1033
        %v1098 = vpack.c.b16 %v1034, %v1034
        %v1099 = vpack.c.b16 %v1035, %v1035
        %v1100 = vpack.c.b16 %v1036, %v1036
        %v1101 = vpack.c.b16 %v1037, %v1037
        %v1102 = vpack.c.b16 %v1038, %v1038
        %v1103 = vpack.c.b16 %v1039, %v1039
        %v1104 = vpack.c.b16 %v1040, %v1040
        %v1105 = vpack.c.b16 %v1041, %v1041
        %v1106 = vpack.c.b16 %v1042, %v1042
        %v1107 = vpack.c.b16 %v1043, %v1043
        %v1108 = vpack.c.b16 %v1044, %v1044
        %v1109 = vpack.c.b16 %v1045, %v1045
        %v1110 = vpack.c.b16 %v1046, %v1046
        %v1111 = vpack.c.b16 %v1047, %v1047
        %v1112 = vpack.c.b16 %v1048, %v1048
        %v1113 = vpack.c.b16 %v1049, %v1049
        %v1114 = vpack.c.b16 %v1050, %v1050
        %v1115 = vpack.c.b16 %v1051, %v1051
        %v1116 = vpack.c.b16 %v1052, %v1052
        %v1117 = vpack.c.b16 %v1053, %v1053
        %v1118 = vpack.c.b16 %v1054, %v1054
        %v1119 = vpack.c.b16 %v1055, %v1055
        %v1120 = vpack.c.b16 %v1056, %v1056
        %v1121 = vpack.c.b16 %v1057, %v1057
        %v1122 = vpack.c.b16 %v1058, %v1058
        %v1123 = vpack.c.b16 %v1059, %v1059
        %v1124 = vpack.c.b16 %v1060, %v1060
        %v1125 = vpack.c.b16 %v1061, %v1061
        %v1126 = vpack.c.b16 %v1062, %v1062
        %v1127 = vpack.c.b16 %v1063, %v1063
        %v1128 = vpack.c.b16 %v1064, %v1064
        %v1129 = vpack.c.b16 %v1065, %v1065
        %v1130 = vpack.c.b16 %v1066, %v1066
        %v1131 = vpack.c.b16 %v1067, %v1067
        %v1132 = vpack.c.b16 %v1068, %v1068
        %v1133 = vpack.c.b16 %v1069, %v1069
        %v1134 = vpack.c.b16 %v1070, %v1070
        %v1135 = vpack.c.b16 %v1071, %v1071
        %v1136 = vpack.c.b16 %v1072, %v1072
        %v1137 = vpack.c.b16 %v1073, %v1073
        %v1138 = vpack.c.b16 %v1074, %v1074
        %v1139 = vpack.c.b16 %v1075, %v1075
        %v1140 = vpack.c.b16 %v1076, %v1076
        %v1141 = vpack.c.b16 %v1077, %v1077
        %v1142 = vpack.c.b16 %v1078, %v1078
        %v1143 = vpack.c.b16 %v1079, %v1079
        %v1144 = vpack.c.b16 %v1080, %v1080
        %v1145 = vpack.c.b16 %v1081, %v1081
        %v1146 = vpack.c.b16 %v1082, %v1082
        %v1147 = vpack.c.b16 %v1083, %v1083
        %v1148 = vpack.c.b16 %v1084, %v1084
        %v1149 = vpack.c.b16 %v1085, %v1085
        %v1150 = vpack.c.b16 %v1086, %v1086
        %vm1215 = vcmask 125952
        %1216 = vst.msk [vmem:[%s210] sm:$0xf] %vm1215, %v1087
        %1217 = vst.msk [vmem:[%s210 + $0x4] sm:$0xf] %vm1215, %v1088
        %1218 = vst.msk [vmem:[%s210 + $0x8] sm:$0xf] %vm1215, %v1089
        %1219 = vst.msk [vmem:[%s210 + $0xc] sm:$0xf] %vm1215, %v1090
        %1220 = vst.msk [vmem:[%s210 + $0x10] sm:$0xf] %vm1215, %v1091
        %1221 = vst.msk [vmem:[%s210 + $0x14] sm:$0xf] %vm1215, %v1092
        %1222 = vst.msk [vmem:[%s210 + $0x18] sm:$0xf] %vm1215, %v1093
        %1223 = vst.msk [vmem:[%s210 + $0x1c] sm:$0xf] %vm1215, %v1094
        %1224 = vst.msk [vmem:[%s210 + $0x20] sm:$0xf] %vm1215, %v1095
        %1225 = vst.msk [vmem:[%s210 + $0x24] sm:$0xf] %vm1215, %v1096
        %1226 = vst.msk [vmem:[%s210 + $0x28] sm:$0xf] %vm1215, %v1097
        %1227 = vst.msk [vmem:[%s210 + $0x2c] sm:$0xf] %vm1215, %v1098
        %1228 = vst.msk [vmem:[%s210 + $0x30] sm:$0xf] %vm1215, %v1099
        %1229 = vst.msk [vmem:[%s210 + $0x34] sm:$0xf] %vm1215, %v1100
        %1230 = vst.msk [vmem:[%s210 + $0x38] sm:$0xf] %vm1215, %v1101
        %1231 = vst.msk [vmem:[%s210 + $0x3c] sm:$0xf] %vm1215, %v1102
        %1232 = vst.msk [vmem:[%s210 + $0x40] sm:$0xf] %vm1215, %v1103
        %1233 = vst.msk [vmem:[%s210 + $0x44] sm:$0xf] %vm1215, %v1104
        %1234 = vst.msk [vmem:[%s210 + $0x48] sm:$0xf] %vm1215, %v1105
        %1235 = vst.msk [vmem:[%s210 + $0x4c] sm:$0xf] %vm1215, %v1106
        %1236 = vst.msk [vmem:[%s210 + $0x50] sm:$0xf] %vm1215, %v1107
        %1237 = vst.msk [vmem:[%s210 + $0x54] sm:$0xf] %vm1215, %v1108
        %1238 = vst.msk [vmem:[%s210 + $0x58] sm:$0xf] %vm1215, %v1109
        %1239 = vst.msk [vmem:[%s210 + $0x5c] sm:$0xf] %vm1215, %v1110
        %1240 = vst.msk [vmem:[%s210 + $0x60] sm:$0xf] %vm1215, %v1111
        %1241 = vst.msk [vmem:[%s210 + $0x64] sm:$0xf] %vm1215, %v1112
        %1242 = vst.msk [vmem:[%s210 + $0x68] sm:$0xf] %vm1215, %v1113
        %1243 = vst.msk [vmem:[%s210 + $0x6c] sm:$0xf] %vm1215, %v1114
        %1244 = vst.msk [vmem:[%s210 + $0x70] sm:$0xf] %vm1215, %v1115
        %1245 = vst.msk [vmem:[%s210 + $0x74] sm:$0xf] %vm1215, %v1116
        %1246 = vst.msk [vmem:[%s210 + $0x78] sm:$0xf] %vm1215, %v1117
        %1247 = vst.msk [vmem:[%s210 + $0x7c] sm:$0xf] %vm1215, %v1118
        %1248 = vst.msk [vmem:[%s210 + $0x80] sm:$0xf] %vm1215, %v1119
        %1249 = vst.msk [vmem:[%s210 + $0x84] sm:$0xf] %vm1215, %v1120
        %1250 = vst.msk [vmem:[%s210 + $0x88] sm:$0xf] %vm1215, %v1121
        %1251 = vst.msk [vmem:[%s210 + $0x8c] sm:$0xf] %vm1215, %v1122
        %1252 = vst.msk [vmem:[%s210 + $0x90] sm:$0xf] %vm1215, %v1123
        %1253 = vst.msk [vmem:[%s210 + $0x94] sm:$0xf] %vm1215, %v1124
        %1254 = vst.msk [vmem:[%s210 + $0x98] sm:$0xf] %vm1215, %v1125
        %1255 = vst.msk [vmem:[%s210 + $0x9c] sm:$0xf] %vm1215, %v1126
        %1256 = vst.msk [vmem:[%s210 + $0xa0] sm:$0xf] %vm1215, %v1127
        %1257 = vst.msk [vmem:[%s210 + $0xa4] sm:$0xf] %vm1215, %v1128
        %1258 = vst.msk [vmem:[%s210 + $0xa8] sm:$0xf] %vm1215, %v1129
        %1259 = vst.msk [vmem:[%s210 + $0xac] sm:$0xf] %vm1215, %v1130
        %1260 = vst.msk [vmem:[%s210 + $0xb0] sm:$0xf] %vm1215, %v1131
        %1261 = vst.msk [vmem:[%s210 + $0xb4] sm:$0xf] %vm1215, %v1132
        %1262 = vst.msk [vmem:[%s210 + $0xb8] sm:$0xf] %vm1215, %v1133
        %1263 = vst.msk [vmem:[%s210 + $0xbc] sm:$0xf] %vm1215, %v1134
        %1264 = vst.msk [vmem:[%s210 + $0xc0] sm:$0xf] %vm1215, %v1135
        %1265 = vst.msk [vmem:[%s210 + $0xc4] sm:$0xf] %vm1215, %v1136
        %1266 = vst.msk [vmem:[%s210 + $0xc8] sm:$0xf] %vm1215, %v1137
        %1267 = vst.msk [vmem:[%s210 + $0xcc] sm:$0xf] %vm1215, %v1138
        %1268 = vst.msk [vmem:[%s210 + $0xd0] sm:$0xf] %vm1215, %v1139
        %1269 = vst.msk [vmem:[%s210 + $0xd4] sm:$0xf] %vm1215, %v1140
        %1270 = vst.msk [vmem:[%s210 + $0xd8] sm:$0xf] %vm1215, %v1141
        %1271 = vst.msk [vmem:[%s210 + $0xdc] sm:$0xf] %vm1215, %v1142
        %1272 = vst.msk [vmem:[%s210 + $0xe0] sm:$0xf] %vm1215, %v1143
        %1273 = vst.msk [vmem:[%s210 + $0xe4] sm:$0xf] %vm1215, %v1144
        %1274 = vst.msk [vmem:[%s210 + $0xe8] sm:$0xf] %vm1215, %v1145
        %1275 = vst.msk [vmem:[%s210 + $0xec] sm:$0xf] %vm1215, %v1146
        %1276 = vst.msk [vmem:[%s210 + $0xf0] sm:$0xf] %vm1215, %v1147
        %1277 = vst.msk [vmem:[%s210 + $0xf4] sm:$0xf] %vm1215, %v1148
        %1278 = vst.msk [vmem:[%s210 + $0xf8] sm:$0xf] %vm1215, %v1149
        %1279 = vst.msk [vmem:[%s210 + $0xfc] sm:$0xf] %vm1215, %v1150
        %s1280 = sand.u32 %s114, 1
        %s1281 = sand.u32 %s114, 1
        %s1282 = smul.addr %s1281, 256
        %s1283 = scalar_lea.vmem [#allocation2], %s1282
        // Predicated region
        $region33: #{forward.8} parent=31 // pred_check
          %p1284 = pneg %p124
        $region34: #{forward.8} parent=31 // pred_check_branch
          %1286 = sbr.rel (%p1284) target = $region36
        $region35: #{forward.8} parent=31 // pred_region
          %s1287 = smul.u32 64, %s18
          %s1288 = ssub.s32 133, %s1287
          %p1289 = scmp.lt.s32.totalorder %s1288, 64
          %s1290 = scalar_select %p1289, %s1288, 64
          %s1291 = smul.u32 64, %s1290
          %p1292 = scmp.ne.s32.totalorder 0, %s1291
          %s1293 = sadd.s32 %s19, %s1287
          %s1294 = smul.addr %s1293, 4
          %s1295 = scalar_lea.vmem %s3, %s1294
          // Predicated region
          $region37: #{forward.8} parent=35 // pred_check
            %p1296 = pneg %p1292
          $region38: #{forward.8} parent=35 // pred_check_branch
            %1298 = sbr.rel (%p1296) target = $region40
          $region39: #{forward.8} parent=35 // pred_region
            // Predicated region
            $region41: #{forward.8} parent=39 // pred_check
              _
            $region42: #{forward.8} parent=39 // pred_check_branch
              %1300 = sbr.rel target = $region44
            $region43: #{forward.8} parent=39 // pred_region
              // Predicated region
              $region63: #{forward.8} parent=43 // pred_check
                _
              $region64: #{forward.8} parent=43 // pred_check_branch
                %1475 = sbr.rel (0) target = $region66
              $region65: #{forward.8} parent=43 // pred_region
                %s1477 = sshrl.u32 %s1290, 6
                // While loop
                $region67: #{forward.8} parent=65 // loop_pre_header
                  _
                $region68: #{forward.8} parent=65 // loop_header
                  %s1479 = sphi 0, %s1481
                  %p1480 = scmp.ge.s32.totalorder %s1479, %s1477
                  %s1484 = sphi 0, %s1617
                  %s1485 = sphi %s1283, %s1620
                  %s1486 = sphi %s1295, %s1621
                $region69: #{forward.8} parent=65 // loop_header_branch
                  %1483 = sbr.rel (%p1480) target = $region73
                $region70: #{forward.8} parent=65 // loop_body
                  %v1487 = vld [vmem:[%s1485] sm:$0xf]
                  %1488 = vst [vmem:[%s1486] sm:$0xf] %v1487
                  %v1489 = vld [vmem:[%s1485 + $0x4] sm:$0xf]
                  %1490 = vst [vmem:[%s1486 + $0x4] sm:$0xf] %v1489
                  %v1491 = vld [vmem:[%s1485 + $0x8] sm:$0xf]
                  %1492 = vst [vmem:[%s1486 + $0x8] sm:$0xf] %v1491
                  %v1493 = vld [vmem:[%s1485 + $0xc] sm:$0xf]
                  %1494 = vst [vmem:[%s1486 + $0xc] sm:$0xf] %v1493
                  %v1495 = vld [vmem:[%s1485 + $0x10] sm:$0xf]
                  %1496 = vst [vmem:[%s1486 + $0x10] sm:$0xf] %v1495
                  %v1497 = vld [vmem:[%s1485 + $0x14] sm:$0xf]
                  %1498 = vst [vmem:[%s1486 + $0x14] sm:$0xf] %v1497
                  %v1499 = vld [vmem:[%s1485 + $0x18] sm:$0xf]
                  %1500 = vst [vmem:[%s1486 + $0x18] sm:$0xf] %v1499
                  %v1501 = vld [vmem:[%s1485 + $0x1c] sm:$0xf]
                  %1502 = vst [vmem:[%s1486 + $0x1c] sm:$0xf] %v1501
                  %v1503 = vld [vmem:[%s1485 + $0x20] sm:$0xf]
                  %1504 = vst [vmem:[%s1486 + $0x20] sm:$0xf] %v1503
                  %v1505 = vld [vmem:[%s1485 + $0x24] sm:$0xf]
                  %1506 = vst [vmem:[%s1486 + $0x24] sm:$0xf] %v1505
                  %v1507 = vld [vmem:[%s1485 + $0x28] sm:$0xf]
                  %1508 = vst [vmem:[%s1486 + $0x28] sm:$0xf] %v1507
                  %v1509 = vld [vmem:[%s1485 + $0x2c] sm:$0xf]
                  %1510 = vst [vmem:[%s1486 + $0x2c] sm:$0xf] %v1509
                  %v1511 = vld [vmem:[%s1485 + $0x30] sm:$0xf]
                  %1512 = vst [vmem:[%s1486 + $0x30] sm:$0xf] %v1511
                  %v1513 = vld [vmem:[%s1485 + $0x34] sm:$0xf]
                  %1514 = vst [vmem:[%s1486 + $0x34] sm:$0xf] %v1513
                  %v1515 = vld [vmem:[%s1485 + $0x38] sm:$0xf]
                  %1516 = vst [vmem:[%s1486 + $0x38] sm:$0xf] %v1515
                  %v1517 = vld [vmem:[%s1485 + $0x3c] sm:$0xf]
                  %1518 = vst [vmem:[%s1486 + $0x3c] sm:$0xf] %v1517
                  %v1519 = vld [vmem:[%s1485 + $0x40] sm:$0xf]
                  %1520 = vst [vmem:[%s1486 + $0x40] sm:$0xf] %v1519
                  %v1521 = vld [vmem:[%s1485 + $0x44] sm:$0xf]
                  %1522 = vst [vmem:[%s1486 + $0x44] sm:$0xf] %v1521
                  %v1523 = vld [vmem:[%s1485 + $0x48] sm:$0xf]
                  %1524 = vst [vmem:[%s1486 + $0x48] sm:$0xf] %v1523
                  %v1525 = vld [vmem:[%s1485 + $0x4c] sm:$0xf]
                  %1526 = vst [vmem:[%s1486 + $0x4c] sm:$0xf] %v1525
                  %v1527 = vld [vmem:[%s1485 + $0x50] sm:$0xf]
                  %1528 = vst [vmem:[%s1486 + $0x50] sm:$0xf] %v1527
                  %v1529 = vld [vmem:[%s1485 + $0x54] sm:$0xf]
                  %1530 = vst [vmem:[%s1486 + $0x54] sm:$0xf] %v1529
                  %v1531 = vld [vmem:[%s1485 + $0x58] sm:$0xf]
                  %1532 = vst [vmem:[%s1486 + $0x58] sm:$0xf] %v1531
                  %v1533 = vld [vmem:[%s1485 + $0x5c] sm:$0xf]
                  %1534 = vst [vmem:[%s1486 + $0x5c] sm:$0xf] %v1533
                  %v1535 = vld [vmem:[%s1485 + $0x60] sm:$0xf]
                  %1536 = vst [vmem:[%s1486 + $0x60] sm:$0xf] %v1535
                  %v1537 = vld [vmem:[%s1485 + $0x64] sm:$0xf]
                  %1538 = vst [vmem:[%s1486 + $0x64] sm:$0xf] %v1537
                  %v1539 = vld [vmem:[%s1485 + $0x68] sm:$0xf]
                  %1540 = vst [vmem:[%s1486 + $0x68] sm:$0xf] %v1539
                  %v1541 = vld [vmem:[%s1485 + $0x6c] sm:$0xf]
                  %1542 = vst [vmem:[%s1486 + $0x6c] sm:$0xf] %v1541
                  %v1543 = vld [vmem:[%s1485 + $0x70] sm:$0xf]
                  %1544 = vst [vmem:[%s1486 + $0x70] sm:$0xf] %v1543
                  %v1545 = vld [vmem:[%s1485 + $0x74] sm:$0xf]
                  %1546 = vst [vmem:[%s1486 + $0x74] sm:$0xf] %v1545
                  %v1547 = vld [vmem:[%s1485 + $0x78] sm:$0xf]
                  %1548 = vst [vmem:[%s1486 + $0x78] sm:$0xf] %v1547
                  %v1549 = vld [vmem:[%s1485 + $0x7c] sm:$0xf]
                  %1550 = vst [vmem:[%s1486 + $0x7c] sm:$0xf] %v1549
                  %v1551 = vld [vmem:[%s1485 + $0x80] sm:$0xf]
                  %1552 = vst [vmem:[%s1486 + $0x80] sm:$0xf] %v1551
                  %v1553 = vld [vmem:[%s1485 + $0x84] sm:$0xf]
                  %1554 = vst [vmem:[%s1486 + $0x84] sm:$0xf] %v1553
                  %v1555 = vld [vmem:[%s1485 + $0x88] sm:$0xf]
                  %1556 = vst [vmem:[%s1486 + $0x88] sm:$0xf] %v1555
                  %v1557 = vld [vmem:[%s1485 + $0x8c] sm:$0xf]
                  %1558 = vst [vmem:[%s1486 + $0x8c] sm:$0xf] %v1557
                  %v1559 = vld [vmem:[%s1485 + $0x90] sm:$0xf]
                  %1560 = vst [vmem:[%s1486 + $0x90] sm:$0xf] %v1559
                  %v1561 = vld [vmem:[%s1485 + $0x94] sm:$0xf]
                  %1562 = vst [vmem:[%s1486 + $0x94] sm:$0xf] %v1561
                  %v1563 = vld [vmem:[%s1485 + $0x98] sm:$0xf]
                  %1564 = vst [vmem:[%s1486 + $0x98] sm:$0xf] %v1563
                  %v1565 = vld [vmem:[%s1485 + $0x9c] sm:$0xf]
                  %1566 = vst [vmem:[%s1486 + $0x9c] sm:$0xf] %v1565
                  %v1567 = vld [vmem:[%s1485 + $0xa0] sm:$0xf]
                  %1568 = vst [vmem:[%s1486 + $0xa0] sm:$0xf] %v1567
                  %v1569 = vld [vmem:[%s1485 + $0xa4] sm:$0xf]
                  %1570 = vst [vmem:[%s1486 + $0xa4] sm:$0xf] %v1569
                  %v1571 = vld [vmem:[%s1485 + $0xa8] sm:$0xf]
                  %1572 = vst [vmem:[%s1486 + $0xa8] sm:$0xf] %v1571
                  %v1573 = vld [vmem:[%s1485 + $0xac] sm:$0xf]
                  %1574 = vst [vmem:[%s1486 + $0xac] sm:$0xf] %v1573
                  %v1575 = vld [vmem:[%s1485 + $0xb0] sm:$0xf]
                  %1576 = vst [vmem:[%s1486 + $0xb0] sm:$0xf] %v1575
                  %v1577 = vld [vmem:[%s1485 + $0xb4] sm:$0xf]
                  %1578 = vst [vmem:[%s1486 + $0xb4] sm:$0xf] %v1577
                  %v1579 = vld [vmem:[%s1485 + $0xb8] sm:$0xf]
                  %1580 = vst [vmem:[%s1486 + $0xb8] sm:$0xf] %v1579
                  %v1581 = vld [vmem:[%s1485 + $0xbc] sm:$0xf]
                  %1582 = vst [vmem:[%s1486 + $0xbc] sm:$0xf] %v1581
                  %v1583 = vld [vmem:[%s1485 + $0xc0] sm:$0xf]
                  %1584 = vst [vmem:[%s1486 + $0xc0] sm:$0xf] %v1583
                  %v1585 = vld [vmem:[%s1485 + $0xc4] sm:$0xf]
                  %1586 = vst [vmem:[%s1486 + $0xc4] sm:$0xf] %v1585
                  %v1587 = vld [vmem:[%s1485 + $0xc8] sm:$0xf]
                  %1588 = vst [vmem:[%s1486 + $0xc8] sm:$0xf] %v1587
                  %v1589 = vld [vmem:[%s1485 + $0xcc] sm:$0xf]
                  %1590 = vst [vmem:[%s1486 + $0xcc] sm:$0xf] %v1589
                  %v1591 = vld [vmem:[%s1485 + $0xd0] sm:$0xf]
                  %1592 = vst [vmem:[%s1486 + $0xd0] sm:$0xf] %v1591
                  %v1593 = vld [vmem:[%s1485 + $0xd4] sm:$0xf]
                  %1594 = vst [vmem:[%s1486 + $0xd4] sm:$0xf] %v1593
                  %v1595 = vld [vmem:[%s1485 + $0xd8] sm:$0xf]
                  %1596 = vst [vmem:[%s1486 + $0xd8] sm:$0xf] %v1595
                  %v1597 = vld [vmem:[%s1485 + $0xdc] sm:$0xf]
                  %1598 = vst [vmem:[%s1486 + $0xdc] sm:$0xf] %v1597
                  %v1599 = vld [vmem:[%s1485 + $0xe0] sm:$0xf]
                  %1600 = vst [vmem:[%s1486 + $0xe0] sm:$0xf] %v1599
                  %v1601 = vld [vmem:[%s1485 + $0xe4] sm:$0xf]
                  %1602 = vst [vmem:[%s1486 + $0xe4] sm:$0xf] %v1601
                  %v1603 = vld [vmem:[%s1485 + $0xe8] sm:$0xf]
                  %1604 = vst [vmem:[%s1486 + $0xe8] sm:$0xf] %v1603
                  %v1605 = vld [vmem:[%s1485 + $0xec] sm:$0xf]
                  %1606 = vst [vmem:[%s1486 + $0xec] sm:$0xf] %v1605
                  %v1607 = vld [vmem:[%s1485 + $0xf0] sm:$0xf]
                  %1608 = vst [vmem:[%s1486 + $0xf0] sm:$0xf] %v1607
                  %v1609 = vld [vmem:[%s1485 + $0xf4] sm:$0xf]
                  %1610 = vst [vmem:[%s1486 + $0xf4] sm:$0xf] %v1609
                  %v1611 = vld [vmem:[%s1485 + $0xf8] sm:$0xf]
                  %1612 = vst [vmem:[%s1486 + $0xf8] sm:$0xf] %v1611
                  %v1613 = vld [vmem:[%s1485 + $0xfc] sm:$0xf]
                  %1614 = vst [vmem:[%s1486 + $0xfc] sm:$0xf] %v1613
                  %s1615 = sadd.s32 1, %s1484
                  %p1616 = scmp.ge.s32.totalorder %s1615, %s1477
                  %s1617 = scalar_select %p1616, 0, %s1615
                  %s1618 = smul.u32 %s1617, 256
                  %s1619 = smul.u32 %s1617, 256
                  %s1620 = scalar_lea.vmem %s1283, %s1618 [#allocation2]
                  %s1621 = scalar_lea.vmem %s1295, %s1619
                $region71: #{forward.8} parent=65 // loop_footer
                  %s1481 = sadd.s32 %s1479, 1
                $region72: #{forward.8} parent=65 // loop_footer_branch
                  %1478 = sbr.rel target = $region68
                $region73: #{forward.8} parent=65 // loop_exit
                  _
                %s1622 = sshrl.u32 %s1290, 6
                %s1623 = sand.u32 %s1290, 63
                %s1624 = smul.u32 %s1622, 64
                %s1625 = smul.u32 4, %s1624
                %s1626 = scalar_lea.vmem %s1283, %s1625 [#allocation2]
                %s1627 = smul.u32 4, %s1624
                %s1628 = scalar_lea.vmem %s1295, %s1627
                // While loop
                $region74: #{forward.8} parent=65 // loop_pre_header
                  _
                $region75: #{forward.8} parent=65 // loop_header
                  %s1630 = sphi 0, %s1632
                  %p1631 = scmp.ge.s32.totalorder %s1630, %s1623
                  %s1635 = sphi 0, %s1642
                  %s1636 = sphi %s1626, %s1645
                  %s1637 = sphi %s1628, %s1646
                $region76: #{forward.8} parent=65 // loop_header_branch
                  %1634 = sbr.rel (%p1631) target = $region80
                $region77: #{forward.8} parent=65 // loop_body
                  %v1638 = vld [vmem:[%s1636] sm:$0xf]
                  %1639 = vst [vmem:[%s1637] sm:$0xf] %v1638
                  %s1640 = sadd.s32 1, %s1635
                  %p1641 = scmp.ge.s32.totalorder %s1640, %s1623
                  %s1642 = scalar_select %p1641, 0, %s1640
                  %s1643 = smul.u32 %s1642, 4
                  %s1644 = smul.u32 %s1642, 4
                  %s1645 = scalar_lea.vmem %s1626, %s1643 [#allocation2]
                  %s1646 = scalar_lea.vmem %s1628, %s1644
                $region78: #{forward.8} parent=65 // loop_footer
                  %s1632 = sadd.s32 %s1630, 1
                $region79: #{forward.8} parent=65 // loop_footer_branch
                  %1629 = sbr.rel target = $region75
                $region80: #{forward.8} parent=65 // loop_exit
                  _
              $region66: #{forward.8} parent=43 // pred_fallthru
                _
            $region44: #{forward.8} parent=39 // pred_fallthru
              _
            // Predicated region
            $region45: #{forward.8} parent=39 // pred_check
              _
            $region46: #{forward.8} parent=39 // pred_check_branch
              %1302 = sbr.rel (0) target = $region48
            $region47: #{forward.8} parent=39 // pred_region
              %s1304 = sshrl.u32 %s1290, 6
              // While loop
              $region49: #{forward.8} parent=47 // loop_pre_header
                _
              $region50: #{forward.8} parent=47 // loop_header
                %s1306 = sphi 0, %s1308
                %p1307 = scmp.ge.s32.totalorder %s1306, %s1304
                %s1311 = sphi 0, %s1444
                %s1312 = sphi %s1283, %s1447
                %s1313 = sphi %s1295, %s1448
              $region51: #{forward.8} parent=47 // loop_header_branch
                %1310 = sbr.rel (%p1307) target = $region55
              $region52: #{forward.8} parent=47 // loop_body
                %v1314 = vld [vmem:[%s1312] sm:$0xf]
                %1315 = vst [vmem:[%s1313] sm:$0xf] %v1314
                %v1316 = vld [vmem:[%s1312 + $0x4] sm:$0xf]
                %1317 = vst [vmem:[%s1313 + $0x4] sm:$0xf] %v1316
                %v1318 = vld [vmem:[%s1312 + $0x8] sm:$0xf]
                %1319 = vst [vmem:[%s1313 + $0x8] sm:$0xf] %v1318
                %v1320 = vld [vmem:[%s1312 + $0xc] sm:$0xf]
                %1321 = vst [vmem:[%s1313 + $0xc] sm:$0xf] %v1320
                %v1322 = vld [vmem:[%s1312 + $0x10] sm:$0xf]
                %1323 = vst [vmem:[%s1313 + $0x10] sm:$0xf] %v1322
                %v1324 = vld [vmem:[%s1312 + $0x14] sm:$0xf]
                %1325 = vst [vmem:[%s1313 + $0x14] sm:$0xf] %v1324
                %v1326 = vld [vmem:[%s1312 + $0x18] sm:$0xf]
                %1327 = vst [vmem:[%s1313 + $0x18] sm:$0xf] %v1326
                %v1328 = vld [vmem:[%s1312 + $0x1c] sm:$0xf]
                %1329 = vst [vmem:[%s1313 + $0x1c] sm:$0xf] %v1328
                %v1330 = vld [vmem:[%s1312 + $0x20] sm:$0xf]
                %1331 = vst [vmem:[%s1313 + $0x20] sm:$0xf] %v1330
                %v1332 = vld [vmem:[%s1312 + $0x24] sm:$0xf]
                %1333 = vst [vmem:[%s1313 + $0x24] sm:$0xf] %v1332
                %v1334 = vld [vmem:[%s1312 + $0x28] sm:$0xf]
                %1335 = vst [vmem:[%s1313 + $0x28] sm:$0xf] %v1334
                %v1336 = vld [vmem:[%s1312 + $0x2c] sm:$0xf]
                %1337 = vst [vmem:[%s1313 + $0x2c] sm:$0xf] %v1336
                %v1338 = vld [vmem:[%s1312 + $0x30] sm:$0xf]
                %1339 = vst [vmem:[%s1313 + $0x30] sm:$0xf] %v1338
                %v1340 = vld [vmem:[%s1312 + $0x34] sm:$0xf]
                %1341 = vst [vmem:[%s1313 + $0x34] sm:$0xf] %v1340
                %v1342 = vld [vmem:[%s1312 + $0x38] sm:$0xf]
                %1343 = vst [vmem:[%s1313 + $0x38] sm:$0xf] %v1342
                %v1344 = vld [vmem:[%s1312 + $0x3c] sm:$0xf]
                %1345 = vst [vmem:[%s1313 + $0x3c] sm:$0xf] %v1344
                %v1346 = vld [vmem:[%s1312 + $0x40] sm:$0xf]
                %1347 = vst [vmem:[%s1313 + $0x40] sm:$0xf] %v1346
                %v1348 = vld [vmem:[%s1312 + $0x44] sm:$0xf]
                %1349 = vst [vmem:[%s1313 + $0x44] sm:$0xf] %v1348
                %v1350 = vld [vmem:[%s1312 + $0x48] sm:$0xf]
                %1351 = vst [vmem:[%s1313 + $0x48] sm:$0xf] %v1350
                %v1352 = vld [vmem:[%s1312 + $0x4c] sm:$0xf]
                %1353 = vst [vmem:[%s1313 + $0x4c] sm:$0xf] %v1352
                %v1354 = vld [vmem:[%s1312 + $0x50] sm:$0xf]
                %1355 = vst [vmem:[%s1313 + $0x50] sm:$0xf] %v1354
                %v1356 = vld [vmem:[%s1312 + $0x54] sm:$0xf]
                %1357 = vst [vmem:[%s1313 + $0x54] sm:$0xf] %v1356
                %v1358 = vld [vmem:[%s1312 + $0x58] sm:$0xf]
                %1359 = vst [vmem:[%s1313 + $0x58] sm:$0xf] %v1358
                %v1360 = vld [vmem:[%s1312 + $0x5c] sm:$0xf]
                %1361 = vst [vmem:[%s1313 + $0x5c] sm:$0xf] %v1360
                %v1362 = vld [vmem:[%s1312 + $0x60] sm:$0xf]
                %1363 = vst [vmem:[%s1313 + $0x60] sm:$0xf] %v1362
                %v1364 = vld [vmem:[%s1312 + $0x64] sm:$0xf]
                %1365 = vst [vmem:[%s1313 + $0x64] sm:$0xf] %v1364
                %v1366 = vld [vmem:[%s1312 + $0x68] sm:$0xf]
                %1367 = vst [vmem:[%s1313 + $0x68] sm:$0xf] %v1366
                %v1368 = vld [vmem:[%s1312 + $0x6c] sm:$0xf]
                %1369 = vst [vmem:[%s1313 + $0x6c] sm:$0xf] %v1368
                %v1370 = vld [vmem:[%s1312 + $0x70] sm:$0xf]
                %1371 = vst [vmem:[%s1313 + $0x70] sm:$0xf] %v1370
                %v1372 = vld [vmem:[%s1312 + $0x74] sm:$0xf]
                %1373 = vst [vmem:[%s1313 + $0x74] sm:$0xf] %v1372
                %v1374 = vld [vmem:[%s1312 + $0x78] sm:$0xf]
                %1375 = vst [vmem:[%s1313 + $0x78] sm:$0xf] %v1374
                %v1376 = vld [vmem:[%s1312 + $0x7c] sm:$0xf]
                %1377 = vst [vmem:[%s1313 + $0x7c] sm:$0xf] %v1376
                %v1378 = vld [vmem:[%s1312 + $0x80] sm:$0xf]
                %1379 = vst [vmem:[%s1313 + $0x80] sm:$0xf] %v1378
                %v1380 = vld [vmem:[%s1312 + $0x84] sm:$0xf]
                %1381 = vst [vmem:[%s1313 + $0x84] sm:$0xf] %v1380
                %v1382 = vld [vmem:[%s1312 + $0x88] sm:$0xf]
                %1383 = vst [vmem:[%s1313 + $0x88] sm:$0xf] %v1382
                %v1384 = vld [vmem:[%s1312 + $0x8c] sm:$0xf]
                %1385 = vst [vmem:[%s1313 + $0x8c] sm:$0xf] %v1384
                %v1386 = vld [vmem:[%s1312 + $0x90] sm:$0xf]
                %1387 = vst [vmem:[%s1313 + $0x90] sm:$0xf] %v1386
                %v1388 = vld [vmem:[%s1312 + $0x94] sm:$0xf]
                %1389 = vst [vmem:[%s1313 + $0x94] sm:$0xf] %v1388
                %v1390 = vld [vmem:[%s1312 + $0x98] sm:$0xf]
                %1391 = vst [vmem:[%s1313 + $0x98] sm:$0xf] %v1390
                %v1392 = vld [vmem:[%s1312 + $0x9c] sm:$0xf]
                %1393 = vst [vmem:[%s1313 + $0x9c] sm:$0xf] %v1392
                %v1394 = vld [vmem:[%s1312 + $0xa0] sm:$0xf]
                %1395 = vst [vmem:[%s1313 + $0xa0] sm:$0xf] %v1394
                %v1396 = vld [vmem:[%s1312 + $0xa4] sm:$0xf]
                %1397 = vst [vmem:[%s1313 + $0xa4] sm:$0xf] %v1396
                %v1398 = vld [vmem:[%s1312 + $0xa8] sm:$0xf]
                %1399 = vst [vmem:[%s1313 + $0xa8] sm:$0xf] %v1398
                %v1400 = vld [vmem:[%s1312 + $0xac] sm:$0xf]
                %1401 = vst [vmem:[%s1313 + $0xac] sm:$0xf] %v1400
                %v1402 = vld [vmem:[%s1312 + $0xb0] sm:$0xf]
                %1403 = vst [vmem:[%s1313 + $0xb0] sm:$0xf] %v1402
                %v1404 = vld [vmem:[%s1312 + $0xb4] sm:$0xf]
                %1405 = vst [vmem:[%s1313 + $0xb4] sm:$0xf] %v1404
                %v1406 = vld [vmem:[%s1312 + $0xb8] sm:$0xf]
                %1407 = vst [vmem:[%s1313 + $0xb8] sm:$0xf] %v1406
                %v1408 = vld [vmem:[%s1312 + $0xbc] sm:$0xf]
                %1409 = vst [vmem:[%s1313 + $0xbc] sm:$0xf] %v1408
                %v1410 = vld [vmem:[%s1312 + $0xc0] sm:$0xf]
                %1411 = vst [vmem:[%s1313 + $0xc0] sm:$0xf] %v1410
                %v1412 = vld [vmem:[%s1312 + $0xc4] sm:$0xf]
                %1413 = vst [vmem:[%s1313 + $0xc4] sm:$0xf] %v1412
                %v1414 = vld [vmem:[%s1312 + $0xc8] sm:$0xf]
                %1415 = vst [vmem:[%s1313 + $0xc8] sm:$0xf] %v1414
                %v1416 = vld [vmem:[%s1312 + $0xcc] sm:$0xf]
                %1417 = vst [vmem:[%s1313 + $0xcc] sm:$0xf] %v1416
                %v1418 = vld [vmem:[%s1312 + $0xd0] sm:$0xf]
                %1419 = vst [vmem:[%s1313 + $0xd0] sm:$0xf] %v1418
                %v1420 = vld [vmem:[%s1312 + $0xd4] sm:$0xf]
                %1421 = vst [vmem:[%s1313 + $0xd4] sm:$0xf] %v1420
                %v1422 = vld [vmem:[%s1312 + $0xd8] sm:$0xf]
                %1423 = vst [vmem:[%s1313 + $0xd8] sm:$0xf] %v1422
                %v1424 = vld [vmem:[%s1312 + $0xdc] sm:$0xf]
                %1425 = vst [vmem:[%s1313 + $0xdc] sm:$0xf] %v1424
                %v1426 = vld [vmem:[%s1312 + $0xe0] sm:$0xf]
                %1427 = vst [vmem:[%s1313 + $0xe0] sm:$0xf] %v1426
                %v1428 = vld [vmem:[%s1312 + $0xe4] sm:$0xf]
                %1429 = vst [vmem:[%s1313 + $0xe4] sm:$0xf] %v1428
                %v1430 = vld [vmem:[%s1312 + $0xe8] sm:$0xf]
                %1431 = vst [vmem:[%s1313 + $0xe8] sm:$0xf] %v1430
                %v1432 = vld [vmem:[%s1312 + $0xec] sm:$0xf]
                %1433 = vst [vmem:[%s1313 + $0xec] sm:$0xf] %v1432
                %v1434 = vld [vmem:[%s1312 + $0xf0] sm:$0xf]
                %1435 = vst [vmem:[%s1313 + $0xf0] sm:$0xf] %v1434
                %v1436 = vld [vmem:[%s1312 + $0xf4] sm:$0xf]
                %1437 = vst [vmem:[%s1313 + $0xf4] sm:$0xf] %v1436
                %v1438 = vld [vmem:[%s1312 + $0xf8] sm:$0xf]
                %1439 = vst [vmem:[%s1313 + $0xf8] sm:$0xf] %v1438
                %v1440 = vld [vmem:[%s1312 + $0xfc] sm:$0xf]
                %1441 = vst [vmem:[%s1313 + $0xfc] sm:$0xf] %v1440
                %s1442 = sadd.s32 1, %s1311
                %p1443 = scmp.ge.s32.totalorder %s1442, %s1304
                %s1444 = scalar_select %p1443, 0, %s1442
                %s1445 = smul.u32 %s1444, 256
                %s1446 = smul.u32 %s1444, 256
                %s1447 = scalar_lea.vmem %s1283, %s1445 [#allocation2]
                %s1448 = scalar_lea.vmem %s1295, %s1446
              $region53: #{forward.8} parent=47 // loop_footer
                %s1308 = sadd.s32 %s1306, 1
              $region54: #{forward.8} parent=47 // loop_footer_branch
                %1305 = sbr.rel target = $region50
              $region55: #{forward.8} parent=47 // loop_exit
                _
              %s1449 = sshrl.u32 %s1290, 6
              %s1450 = sand.u32 %s1290, 63
              %s1451 = smul.u32 %s1449, 64
              %s1452 = smul.u32 4, %s1451
              %s1453 = scalar_lea.vmem %s1283, %s1452 [#allocation2]
              %s1454 = smul.u32 4, %s1451
              %s1455 = scalar_lea.vmem %s1295, %s1454
              // While loop
              $region56: #{forward.8} parent=47 // loop_pre_header
                _
              $region57: #{forward.8} parent=47 // loop_header
                %s1457 = sphi 0, %s1459
                %p1458 = scmp.ge.s32.totalorder %s1457, %s1450
                %s1462 = sphi 0, %s1469
                %s1463 = sphi %s1453, %s1472
                %s1464 = sphi %s1455, %s1473
              $region58: #{forward.8} parent=47 // loop_header_branch
                %1461 = sbr.rel (%p1458) target = $region62
              $region59: #{forward.8} parent=47 // loop_body
                %v1465 = vld [vmem:[%s1463] sm:$0xf]
                %1466 = vst [vmem:[%s1464] sm:$0xf] %v1465
                %s1467 = sadd.s32 1, %s1462
                %p1468 = scmp.ge.s32.totalorder %s1467, %s1450
                %s1469 = scalar_select %p1468, 0, %s1467
                %s1470 = smul.u32 %s1469, 4
                %s1471 = smul.u32 %s1469, 4
                %s1472 = scalar_lea.vmem %s1453, %s1470 [#allocation2]
                %s1473 = scalar_lea.vmem %s1455, %s1471
              $region60: #{forward.8} parent=47 // loop_footer
                %s1459 = sadd.s32 %s1457, 1
              $region61: #{forward.8} parent=47 // loop_footer_branch
                %1456 = sbr.rel target = $region57
              $region62: #{forward.8} parent=47 // loop_exit
                _
            $region48: #{forward.8} parent=39 // pred_fallthru
              _
          $region40: #{forward.8} parent=35 // pred_fallthru
            _
          %1647 = vnop
        $region36: #{forward.8} parent=31 // pred_fallthru
          _
      $region32: #{forward.8} parent=5 // pred_fallthru
        _
      %p1648 = scmp.le.s32.totalorder 2, %s9
      // Predicated region
      $region81: #{forward.8} parent=5 // pred_check
        %p1649 = pneg %p1648
      $region82: #{forward.8} parent=5 // pred_check_branch
        %1651 = sbr.rel (%p1649) target = $region84
      $region83: #{forward.8} parent=5 // pred_region
        %s1652 = ssub.s32 %s9, 2
        // Predicated region
        $region85: #{forward.8} parent=83 // pred_check
          %p1653 = pneg %p130
        $region86: #{forward.8} parent=83 // pred_check_branch
          %1655 = sbr.rel (%p1653) target = $region88
        $region87: #{forward.8} parent=83 // pred_region
          %s1656 = sand.u32 %s115, 1
          %s1657 = sand.u32 %s115, 1
          %s1658 = smul.addr %s1657, 256
          %s1659 = scalar_lea.vmem [#allocation2], %s1658
        $region88: #{forward.8} parent=83 // pred_fallthru
          _
      $region84: #{forward.8} parent=5 // pred_fallthru
        _
    $region6: #{forward.8} parent=1 // loop_footer
      %s13 = sadd.s32 1, %s9
    $region7: #{forward.8} parent=1 // loop_footer_branch
      %8 = sbr.rel target = $region3
    $region8: #{forward.8} parent=1 // loop_exit
      _

// kernel: forward.9
$region0: #{forward.9}
  #allocation0 [shape = 'u32[]', space=smem, size = 0x4, offset = 0x4, fixed_abs, tag = 'smem constant byte address 0x4 - core index']
  #allocation1 [shape = 'u32[144,128]{1,0:T(1,128)}', space=vmem, size = 0x12000, scoped, tag = 'internal scratch']
  %s0 = inlined_call_operand.vmem [shape: bf16[242,144], index: 0, kind: input, shape index: {}]
  %s1 = inlined_call_operand.vmem [shape: bf16[144,32], index: 1, kind: input, shape index: {}]
  %s2 = inlined_call_operand.vmem [shape: f32[1,32], index: 2, kind: input, shape index: {}]
  %s3 = inlined_call_operand.vmem [shape: bf16[242,32], index: 3, kind: output, shape index: {}]
  %s4 = sld [smem:[#allocation0]]
  $region22: #{forward.9} parent=0
    _
  %s6 = ssub.s32 1, %s4
  %s7 = scalar_select 0, %s6, %s4
  // Predicated region
  $region2: #{forward.9} parent=0 // pred_check
    _
  $region3: #{forward.9} parent=0 // pred_check_branch
    %9 = sbr.rel (0) target = $region5
  $region4: #{forward.9} parent=0 // pred_region
    _
  $region5: #{forward.9} parent=0 // pred_fallthru
    _
  // Predicated region
  $region6: #{forward.9} parent=0 // pred_check
    _
  $region7: #{forward.9} parent=0 // pred_check_branch
    %11 = sbr.rel (0) target = $region9
  $region8: #{forward.9} parent=0 // pred_region
    _
  $region9: #{forward.9} parent=0 // pred_fallthru
    _
  // Predicated region
  $region10: #{forward.9} parent=0 // pred_check
    _
  $region11: #{forward.9} parent=0 // pred_check_branch
    %13 = sbr.rel (0) target = $region13
  $region12: #{forward.9} parent=0 // pred_region
    _
  $region13: #{forward.9} parent=0 // pred_fallthru
    _
  %v15 = vld [vmem:[%s0] sm:$0xff]
  %v16 = vld [vmem:[%s0 + $0x8] sm:$0xff]
  %v17 = vld [vmem:[%s0 + $0x10] sm:$0xff]
  %v18 = vld [vmem:[%s0 + $0x18] sm:$0xff]
  %v19 = vld [vmem:[%s0 + $0x20] sm:$0xff]
  %v20 = vld [vmem:[%s0 + $0x28] sm:$0xff]
  %v21 = vld [vmem:[%s0 + $0x30] sm:$0xff]
  %v22 = vld [vmem:[%s0 + $0x38] sm:$0xff]
  %v23 = vld [vmem:[%s0 + $0x40] sm:$0xff]
  %v24 = vld [vmem:[%s0 + $0x48] sm:$0xff]
  %v25 = vld [vmem:[%s0 + $0x50] sm:$0xff]
  %v26 = vld [vmem:[%s0 + $0x58] sm:$0xff]
  %v27 = vld [vmem:[%s0 + $0x60] sm:$0xff]
  %v28 = vld [vmem:[%s0 + $0x68] sm:$0xff]
  %v29 = vld [vmem:[%s0 + $0x70] sm:$0xff]
  %v30 = vld [vmem:[%s0 + $0x78] sm:$0xff]
  %v31 = vld [vmem:[%s0 + $0x80] sm:$0xff]
  %v32 = vld [vmem:[%s0 + $0x88] sm:$0xff]
  %v33 = vld [vmem:[%s0 + $0x90] sm:$0xff]
  %v34 = vld [vmem:[%s0 + $0x98] sm:$0xff]
  %v35 = vld [vmem:[%s0 + $0xa0] sm:$0xff]
  %v36 = vld [vmem:[%s0 + $0xa8] sm:$0xff]
  %v37 = vld [vmem:[%s0 + $0xb0] sm:$0xff]
  %v38 = vld [vmem:[%s0 + $0xb8] sm:$0xff]
  %v39 = vld [vmem:[%s0 + $0xc0] sm:$0xff]
  %v40 = vld [vmem:[%s0 + $0xc8] sm:$0xff]
  %v41 = vld [vmem:[%s0 + $0xd0] sm:$0xff]
  %v42 = vld [vmem:[%s0 + $0xd8] sm:$0xff]
  %v43 = vld [vmem:[%s0 + $0xe0] sm:$0xff]
  %v44 = vld [vmem:[%s0 + $0xe8] sm:$0xff]
  %v45 = vld [vmem:[%s0 + $0xf0] sm:$0x11]
  %v46 = vld [vmem:[%s1] sm:$0xf]
  %v47 = vld [vmem:[%s1 + $0x4] sm:$0xf]
  %v48 = vld [vmem:[%s1 + $0x8] sm:$0xf]
  %v49 = vld [vmem:[%s1 + $0xc] sm:$0xf]
  %v50 = vld [vmem:[%s1 + $0x10] sm:$0xf]
  %v51 = vld [vmem:[%s1 + $0x14] sm:$0xf]
  %v52 = vld [vmem:[%s1 + $0x18] sm:$0xf]
  %v53 = vld [vmem:[%s1 + $0x1c] sm:$0xf]
  %v54 = vld [vmem:[%s1 + $0x20] sm:$0xf]
  %v55 = vld [vmem:[%s1 + $0x24] sm:$0xf]
  %v56 = vld [vmem:[%s1 + $0x28] sm:$0xf]
  %v57 = vld [vmem:[%s1 + $0x2c] sm:$0xf]
  %v58 = vld [vmem:[%s1 + $0x30] sm:$0xf]
  %v59 = vld [vmem:[%s1 + $0x34] sm:$0xf]
  %v60 = vld [vmem:[%s1 + $0x38] sm:$0xf]
  %v61 = vld [vmem:[%s1 + $0x3c] sm:$0xf]
  %v62 = vld [vmem:[%s1 + $0x40] sm:$0xf]
  %v63 = vld [vmem:[%s1 + $0x44] sm:$0xf]
  %v64 = vld [vmem:[%s2] sm:$0x1]
  %v66 = vlaneseq
  %v67 = vshrl.u32 %v66, 7
  %v68 = vsub.s32 0, %v67
  %v69 = vrot.slane %v64, %v68
  %v102 = vunpack.c.l.b16 %v15
  %v103 = vunpack.c.h.b16 %v15
  %v104 = vunpack.c.l.b16 %v16
  %v105 = vunpack.c.h.b16 %v16
  %v106 = vunpack.c.l.b16 %v17
  %v107 = vunpack.c.h.b16 %v17
  %v108 = vunpack.c.l.b16 %v18
  %v109 = vunpack.c.h.b16 %v18
  %v110 = vunpack.c.l.b16 %v19
  %v111 = vunpack.c.h.b16 %v19
  %v112 = vunpack.c.l.b16 %v20
  %v113 = vunpack.c.h.b16 %v20
  %v114 = vunpack.c.l.b16 %v21
  %v115 = vunpack.c.h.b16 %v21
  %v116 = vunpack.c.l.b16 %v22
  %v117 = vunpack.c.h.b16 %v22
  %v118 = vunpack.c.l.b16 %v23
  %v119 = vunpack.c.h.b16 %v23
  %v120 = vunpack.c.l.b16 %v24
  %v121 = vunpack.c.h.b16 %v24
  %v122 = vunpack.c.l.b16 %v25
  %v123 = vunpack.c.h.b16 %v25
  %v124 = vunpack.c.l.b16 %v26
  %v125 = vunpack.c.h.b16 %v26
  %v126 = vunpack.c.l.b16 %v27
  %v127 = vunpack.c.h.b16 %v27
  %v128 = vunpack.c.l.b16 %v28
  %v129 = vunpack.c.h.b16 %v28
  %v130 = vunpack.c.l.b16 %v29
  %v131 = vunpack.c.h.b16 %v29
  %v132 = vunpack.c.l.b16 %v30
  %v133 = vunpack.c.h.b16 %v30
  %v134 = vunpack.c.l.b16 %v31
  %v135 = vunpack.c.h.b16 %v31
  %v136 = vunpack.c.l.b16 %v32
  %v137 = vunpack.c.h.b16 %v32
  %v138 = vunpack.c.l.b16 %v33
  %v139 = vunpack.c.h.b16 %v33
  %v140 = vunpack.c.l.b16 %v34
  %v141 = vunpack.c.h.b16 %v34
  %v142 = vunpack.c.l.b16 %v35
  %v143 = vunpack.c.h.b16 %v35
  %v144 = vunpack.c.l.b16 %v36
  %v145 = vunpack.c.h.b16 %v36
  %v146 = vunpack.c.l.b16 %v37
  %v147 = vunpack.c.h.b16 %v37
  %v148 = vunpack.c.l.b16 %v38
  %v149 = vunpack.c.h.b16 %v38
  %v150 = vunpack.c.l.b16 %v39
  %v151 = vunpack.c.h.b16 %v39
  %v152 = vunpack.c.l.b16 %v40
  %v153 = vunpack.c.h.b16 %v40
  %v154 = vunpack.c.l.b16 %v41
  %v155 = vunpack.c.h.b16 %v41
  %v156 = vunpack.c.l.b16 %v42
  %v157 = vunpack.c.h.b16 %v42
  %v158 = vunpack.c.l.b16 %v43
  %v159 = vunpack.c.h.b16 %v43
  %v160 = vunpack.c.l.b16 %v44
  %v161 = vunpack.c.h.b16 %v44
  %v162 = vunpack.c.l.b16 %v45
  %v163 = vunpack.c.h.b16 %v45
  %v164 = vpack.c.b16 %v104, %v102
  %v165 = vpack.c.b16 %v105, %v103
  %v166 = vpack.c.b16 %v108, %v106
  %v167 = vpack.c.b16 %v109, %v107
  %v168 = vpack.c.b16 %v112, %v110
  %v169 = vpack.c.b16 %v113, %v111
  %v170 = vpack.c.b16 %v116, %v114
  %v171 = vpack.c.b16 %v117, %v115
  %v172 = vpack.c.b16 %v120, %v118
  %v173 = vpack.c.b16 %v121, %v119
  %v174 = vpack.c.b16 %v124, %v122
  %v175 = vpack.c.b16 %v125, %v123
  %v176 = vpack.c.b16 %v128, %v126
  %v177 = vpack.c.b16 %v129, %v127
  %v178 = vpack.c.b16 %v132, %v130
  %v179 = vpack.c.b16 %v133, %v131
  %v180 = vpack.c.b16 %v136, %v134
  %v181 = vpack.c.b16 %v137, %v135
  %v182 = vpack.c.b16 %v140, %v138
  %v183 = vpack.c.b16 %v141, %v139
  %v184 = vpack.c.b16 %v144, %v142
  %v185 = vpack.c.b16 %v145, %v143
  %v186 = vpack.c.b16 %v148, %v146
  %v187 = vpack.c.b16 %v149, %v147
  %v188 = vpack.c.b16 %v152, %v150
  %v189 = vpack.c.b16 %v153, %v151
  %v190 = vpack.c.b16 %v156, %v154
  %v191 = vpack.c.b16 %v157, %v155
  %v192 = vpack.c.b16 %v160, %v158
  %v193 = vpack.c.b16 %v161, %v159
  %v194 = vpack.c.b16 %v162, %v162
  %v195 = vpack.c.b16 %v163, %v163
  %v230 = vunpack.c.l.b16 %v46
  %v231 = vunpack.c.l.b16 %v47
  %v232 = vunpack.c.l.b16 %v48
  %v233 = vunpack.c.l.b16 %v49
  %v234 = vunpack.c.l.b16 %v50
  %v235 = vunpack.c.l.b16 %v51
  %v236 = vunpack.c.l.b16 %v52
  %v237 = vunpack.c.l.b16 %v53
  %v238 = vunpack.c.l.b16 %v54
  %v239 = vunpack.c.l.b16 %v55
  %v240 = vunpack.c.l.b16 %v56
  %v241 = vunpack.c.l.b16 %v57
  %v242 = vunpack.c.l.b16 %v58
  %v243 = vunpack.c.l.b16 %v59
  %v244 = vunpack.c.l.b16 %v60
  %v245 = vunpack.c.l.b16 %v61
  %v246 = vunpack.c.l.b16 %v62
  %v247 = vunpack.c.l.b16 %v63
  %v248 = vpack.c.b16 %v231, %v230
  %v249 = vpack.c.b16 %v233, %v232
  %v250 = vpack.c.b16 %v235, %v234
  %v251 = vpack.c.b16 %v237, %v236
  %v252 = vpack.c.b16 %v239, %v238
  %v253 = vpack.c.b16 %v241, %v240
  %v254 = vpack.c.b16 %v243, %v242
  %v255 = vpack.c.b16 %v245, %v244
  %v256 = vpack.c.b16 %v247, %v246
  %vm266 = vcmask 130048
  %v268 = vsel %vm266, %v165, 0
  %v271 = vsel %vm266, %v167, 0
  %v274 = vsel %vm266, %v169, 0
  %v277 = vsel %vm266, %v171, 0
  %v280 = vsel %vm266, %v173, 0
  %v283 = vsel %vm266, %v175, 0
  %v286 = vsel %vm266, %v177, 0
  %v289 = vsel %vm266, %v179, 0
  %v292 = vsel %vm266, %v181, 0
  %v295 = vsel %vm266, %v183, 0
  %v298 = vsel %vm266, %v185, 0
  %v301 = vsel %vm266, %v187, 0
  %v304 = vsel %vm266, %v189, 0
  %v307 = vsel %vm266, %v191, 0
  %v310 = vsel %vm266, %v193, 0
  %v313 = vsel %vm266, %v195, 0
  %315 = vmatprep.subr.bf16.mxu0 0
  %316 = vmatpush1.bf16.msra.mxu0 %v248
  %317 = vmatprep.subr.bf16.mxu0 0
  %318 = vmatpush1.bf16.msra.mxu0 %v249
  %319 = vmatprep.subr.bf16.mxu0 0
  %320 = vmatpush1.bf16.msra.mxu0 %v250
  %321 = vmatprep.subr.bf16.mxu0 0
  %322 = vmatpush1.bf16.msra.mxu0 %v251
  %323 = vmatprep.subr.bf16.mxu0 0
  %324 = vmatpush1.bf16.msra.mxu0 %v252
  %325 = vmatprep.subr.bf16.mxu0 0
  %326 = vmatpush1.bf16.msra.mxu0 %v253
  %327 = vmatprep.subr.bf16.mxu0 0
  %328 = vmatpush1.bf16.msra.mxu0 %v254
  %329 = vmatprep.subr.bf16.mxu0 0
  %330 = vmatpush1.bf16.msra.mxu0 %v255
  %331 = vmatprep.subr.bf16.mxu0 0
  %332 = vmatpush1.bf16.msra.mxu0 %v256
  %333 = vmatprep.subr.bf16.mxu0 0
  %334 = vmatpush1.bf16.msra.mxu0 0
  %335 = vmatprep.subr.bf16.mxu0 0
  %336 = vmatpush1.bf16.msra.mxu0 0
  %337 = vmatprep.subr.bf16.mxu0 0
  %338 = vmatpush1.bf16.msra.mxu0 0
  %339 = vmatprep.subr.bf16.mxu0 0
  %340 = vmatpush1.bf16.msra.mxu0 0
  %341 = vmatprep.subr.bf16.mxu0 0
  %342 = vmatpush1.bf16.msra.mxu0 0
  %343 = vmatprep.subr.bf16.mxu0 0
  %344 = vmatpush1.bf16.msra.mxu0 0
  %345 = vmatprep.subr.bf16.mxu0 0
  %346 = vmatpush1.bf16.msra.mxu0 0
  %347 = vmatprep.mubr.bf16.mxu0 %v268
  %348 = vmatmul.mubr.bf16.gmra.mrb[0].mxu0 %v164
  %v349 = vpop.f32.mrb[0].mxu0
  %v350 = vadd.f32 %v69, %v349
  %v351 = vpop.f32.mrb[0].mxu0
  %v352 = vpop.f32.mrb[0].mxu0
  %v353 = vadd.f32 %v69, %v352
  %v354 = vpop.f32.mrb[0].mxu0
  %355 = vmatprep.mubr.bf16.mxu0 %v271
  %356 = vmatmul.mubr.bf16.gmra.mrb[0].mxu0 %v166
  %v357 = vpop.f32.mrb[0].mxu0
  %v358 = vadd.f32 %v69, %v357
  %v359 = vpop.f32.mrb[0].mxu0
  %v360 = vpop.f32.mrb[0].mxu0
  %v361 = vadd.f32 %v69, %v360
  %v362 = vpop.f32.mrb[0].mxu0
  %363 = vmatprep.mubr.bf16.mxu0 %v274
  %364 = vmatmul.mubr.bf16.gmra.mrb[0].mxu0 %v168
  %v365 = vpop.f32.mrb[0].mxu0
  %v366 = vadd.f32 %v69, %v365
  %v367 = vpop.f32.mrb[0].mxu0
  %v368 = vpop.f32.mrb[0].mxu0
  %v369 = vadd.f32 %v69, %v368
  %v370 = vpop.f32.mrb[0].mxu0
  %371 = vmatprep.mubr.bf16.mxu0 %v277
  %372 = vmatmul.mubr.bf16.gmra.mrb[0].mxu0 %v170
  %v373 = vpop.f32.mrb[0].mxu0
  %v374 = vadd.f32 %v69, %v373
  %v375 = vpop.f32.mrb[0].mxu0
  %v376 = vpop.f32.mrb[0].mxu0
  %v377 = vadd.f32 %v69, %v376
  %v378 = vpop.f32.mrb[0].mxu0
  %379 = vmatprep.mubr.bf16.mxu0 %v280
  %380 = vmatmul.mubr.bf16.gmra.mrb[0].mxu0 %v172
  %v381 = vpop.f32.mrb[0].mxu0
  %v382 = vadd.f32 %v69, %v381
  %v383 = vpop.f32.mrb[0].mxu0
  %v384 = vpop.f32.mrb[0].mxu0
  %v385 = vadd.f32 %v69, %v384
  %v386 = vpop.f32.mrb[0].mxu0
  %387 = vmatprep.mubr.bf16.mxu0 %v283
  %388 = vmatmul.mubr.bf16.gmra.mrb[0].mxu0 %v174
  %v389 = vpop.f32.mrb[0].mxu0
  %v390 = vadd.f32 %v69, %v389
  %v391 = vpop.f32.mrb[0].mxu0
  %v392 = vpop.f32.mrb[0].mxu0
  %v393 = vadd.f32 %v69, %v392
  %v394 = vpop.f32.mrb[0].mxu0
  %395 = vmatprep.mubr.bf16.mxu0 %v286
  %396 = vmatmul.mubr.bf16.gmra.mrb[0].mxu0 %v176
  %v397 = vpop.f32.mrb[0].mxu0
  %v398 = vadd.f32 %v69, %v397
  %v399 = vpop.f32.mrb[0].mxu0
  %v400 = vpop.f32.mrb[0].mxu0
  %v401 = vadd.f32 %v69, %v400
  %v402 = vpop.f32.mrb[0].mxu0
  %403 = vmatprep.mubr.bf16.mxu0 %v289
  %404 = vmatmul.mubr.bf16.gmra.mrb[0].mxu0 %v178
  %v405 = vpop.f32.mrb[0].mxu0
  %v406 = vadd.f32 %v69, %v405
  %v407 = vpop.f32.mrb[0].mxu0
  %v408 = vpop.f32.mrb[0].mxu0
  %v409 = vadd.f32 %v69, %v408
  %v410 = vpop.f32.mrb[0].mxu0
  %411 = vmatprep.mubr.bf16.mxu0 %v292
  %412 = vmatmul.mubr.bf16.gmra.mrb[0].mxu0 %v180
  %v413 = vpop.f32.mrb[0].mxu0
  %v414 = vadd.f32 %v69, %v413
  %v415 = vpop.f32.mrb[0].mxu0
  %v416 = vpop.f32.mrb[0].mxu0
  %v417 = vadd.f32 %v69, %v416
  %v418 = vpop.f32.mrb[0].mxu0
  %419 = vmatprep.mubr.bf16.mxu0 %v295
  %420 = vmatmul.mubr.bf16.gmra.mrb[0].mxu0 %v182
  %v421 = vpop.f32.mrb[0].mxu0
  %v422 = vadd.f32 %v69, %v421
  %v423 = vpop.f32.mrb[0].mxu0
  %v424 = vpop.f32.mrb[0].mxu0
  %v425 = vadd.f32 %v69, %v424
  %v426 = vpop.f32.mrb[0].mxu0
  %427 = vmatprep.mubr.bf16.mxu0 %v298
  %428 = vmatmul.mubr.bf16.gmra.mrb[0].mxu0 %v184
  %v429 = vpop.f32.mrb[0].mxu0
  %v430 = vadd.f32 %v69, %v429
  %v431 = vpop.f32.mrb[0].mxu0
  %v432 = vpop.f32.mrb[0].mxu0
  %v433 = vadd.f32 %v69, %v432
  %v434 = vpop.f32.mrb[0].mxu0
  %435 = vmatprep.mubr.bf16.mxu0 %v301
  %436 = vmatmul.mubr.bf16.gmra.mrb[0].mxu0 %v186
  %v437 = vpop.f32.mrb[0].mxu0
  %v438 = vadd.f32 %v69, %v437
  %v439 = vpop.f32.mrb[0].mxu0
  %v440 = vpop.f32.mrb[0].mxu0
  %v441 = vadd.f32 %v69, %v440
  %v442 = vpop.f32.mrb[0].mxu0
  %443 = vmatprep.mubr.bf16.mxu0 %v304
  %444 = vmatmul.mubr.bf16.gmra.mrb[0].mxu0 %v188
  %v445 = vpop.f32.mrb[0].mxu0
  %v446 = vadd.f32 %v69, %v445
  %v447 = vpop.f32.mrb[0].mxu0
  %v448 = vpop.f32.mrb[0].mxu0
  %v449 = vadd.f32 %v69, %v448
  %v450 = vpop.f32.mrb[0].mxu0
  %451 = vmatprep.mubr.bf16.mxu0 %v307
  %452 = vmatmul.mubr.bf16.gmra.mrb[0].mxu0 %v190
  %v453 = vpop.f32.mrb[0].mxu0
  %v454 = vadd.f32 %v69, %v453
  %v455 = vpop.f32.mrb[0].mxu0
  %v456 = vpop.f32.mrb[0].mxu0
  %v457 = vadd.f32 %v69, %v456
  %v458 = vpop.f32.mrb[0].mxu0
  %459 = vmatprep.mubr.bf16.mxu0 %v310
  %460 = vmatmul.mubr.bf16.gmra.mrb[0].mxu0 %v192
  %v461 = vpop.f32.mrb[0].mxu0
  %v462 = vadd.f32 %v69, %v461
  %v463 = vpop.f32.mrb[0].mxu0
  %v464 = vpop.f32.mrb[0].mxu0
  %v465 = vadd.f32 %v69, %v464
  %v466 = vpop.f32.mrb[0].mxu0
  %467 = vmatprep.mubr.bf16.mxu0 %v313
  %468 = vmatmul.mubr.bf16.gmra.mrb[0].mxu0 %v194
  %v469 = vpop.f32.mrb[0].mxu0
  %v470 = vadd.f32 %v69, %v469
  %v471 = vpop.f32.mrb[0].mxu0
  %v472 = vpop.f32.mrb[0].mxu0
  %v473 = vpop.f32.mrb[0].mxu0
  %474 = vdwg.mxu0
  %v475 = vmax.f32 %v350, 0.0
  %v476 = vmax.f32 %v353, 0.0
  %v477 = vmax.f32 %v358, 0.0
  %v478 = vmax.f32 %v361, 0.0
  %v479 = vmax.f32 %v366, 0.0
  %v480 = vmax.f32 %v369, 0.0
  %v481 = vmax.f32 %v374, 0.0
  %v482 = vmax.f32 %v377, 0.0
  %v483 = vmax.f32 %v382, 0.0
  %v484 = vmax.f32 %v385, 0.0
  %v485 = vmax.f32 %v390, 0.0
  %v486 = vmax.f32 %v393, 0.0
  %v487 = vmax.f32 %v398, 0.0
  %v488 = vmax.f32 %v401, 0.0
  %v489 = vmax.f32 %v406, 0.0
  %v490 = vmax.f32 %v409, 0.0
  %v491 = vmax.f32 %v414, 0.0
  %v492 = vmax.f32 %v417, 0.0
  %v493 = vmax.f32 %v422, 0.0
  %v494 = vmax.f32 %v425, 0.0
  %v495 = vmax.f32 %v430, 0.0
  %v496 = vmax.f32 %v433, 0.0
  %v497 = vmax.f32 %v438, 0.0
  %v498 = vmax.f32 %v441, 0.0
  %v499 = vmax.f32 %v446, 0.0
  %v500 = vmax.f32 %v449, 0.0
  %v501 = vmax.f32 %v454, 0.0
  %v502 = vmax.f32 %v457, 0.0
  %v503 = vmax.f32 %v462, 0.0
  %v504 = vmax.f32 %v465, 0.0
  %v505 = vmax.f32 %v470, 0.0
  %v506 = vpack.c.bf16 %v476, %v475
  %v507 = vpack.c.bf16 %v478, %v477
  %v508 = vpack.c.bf16 %v480, %v479
  %v509 = vpack.c.bf16 %v482, %v481
  %v510 = vpack.c.bf16 %v484, %v483
  %v511 = vpack.c.bf16 %v486, %v485
  %v512 = vpack.c.bf16 %v488, %v487
  %v513 = vpack.c.bf16 %v490, %v489
  %v514 = vpack.c.bf16 %v492, %v491
  %v515 = vpack.c.bf16 %v494, %v493
  %v516 = vpack.c.bf16 %v496, %v495
  %v517 = vpack.c.bf16 %v498, %v497
  %v518 = vpack.c.bf16 %v500, %v499
  %v519 = vpack.c.bf16 %v502, %v501
  %v520 = vpack.c.bf16 %v504, %v503
  %v521 = vpack.c.bf16 %v505, %v505
  %v538 = vunpack.c.l.b16 %v506
  %v539 = vunpack.c.h.b16 %v506
  %v540 = vunpack.c.l.b16 %v507
  %v541 = vunpack.c.h.b16 %v507
  %v542 = vunpack.c.l.b16 %v508
  %v543 = vunpack.c.h.b16 %v508
  %v544 = vunpack.c.l.b16 %v509
  %v545 = vunpack.c.h.b16 %v509
  %v546 = vunpack.c.l.b16 %v510
  %v547 = vunpack.c.h.b16 %v510
  %v548 = vunpack.c.l.b16 %v511
  %v549 = vunpack.c.h.b16 %v511
  %v550 = vunpack.c.l.b16 %v512
  %v551 = vunpack.c.h.b16 %v512
  %v552 = vunpack.c.l.b16 %v513
  %v553 = vunpack.c.h.b16 %v513
  %v554 = vunpack.c.l.b16 %v514
  %v555 = vunpack.c.h.b16 %v514
  %v556 = vunpack.c.l.b16 %v515
  %v557 = vunpack.c.h.b16 %v515
  %v558 = vunpack.c.l.b16 %v516
  %v559 = vunpack.c.h.b16 %v516
  %v560 = vunpack.c.l.b16 %v517
  %v561 = vunpack.c.h.b16 %v517
  %v562 = vunpack.c.l.b16 %v518
  %v563 = vunpack.c.h.b16 %v518
  %v564 = vunpack.c.l.b16 %v519
  %v565 = vunpack.c.h.b16 %v519
  %v566 = vunpack.c.l.b16 %v520
  %v567 = vunpack.c.h.b16 %v520
  %v568 = vunpack.c.l.b16 %v521
  %v569 = vpack.c.b16 %v538, %v538
  %v570 = vpack.c.b16 %v539, %v539
  %v571 = vpack.c.b16 %v540, %v540
  %v572 = vpack.c.b16 %v541, %v541
  %v573 = vpack.c.b16 %v542, %v542
  %v574 = vpack.c.b16 %v543, %v543
  %v575 = vpack.c.b16 %v544, %v544
  %v576 = vpack.c.b16 %v545, %v545
  %v577 = vpack.c.b16 %v546, %v546
  %v578 = vpack.c.b16 %v547, %v547
  %v579 = vpack.c.b16 %v548, %v548
  %v580 = vpack.c.b16 %v549, %v549
  %v581 = vpack.c.b16 %v550, %v550
  %v582 = vpack.c.b16 %v551, %v551
  %v583 = vpack.c.b16 %v552, %v552
  %v584 = vpack.c.b16 %v553, %v553
  %v585 = vpack.c.b16 %v554, %v554
  %v586 = vpack.c.b16 %v555, %v555
  %v587 = vpack.c.b16 %v556, %v556
  %v588 = vpack.c.b16 %v557, %v557
  %v589 = vpack.c.b16 %v558, %v558
  %v590 = vpack.c.b16 %v559, %v559
  %v591 = vpack.c.b16 %v560, %v560
  %v592 = vpack.c.b16 %v561, %v561
  %v593 = vpack.c.b16 %v562, %v562
  %v594 = vpack.c.b16 %v563, %v563
  %v595 = vpack.c.b16 %v564, %v564
  %v596 = vpack.c.b16 %v565, %v565
  %v597 = vpack.c.b16 %v566, %v566
  %v598 = vpack.c.b16 %v567, %v567
  %v599 = vpack.c.b16 %v568, %v568
  %vm631 = vcmask 257024
  %632 = vst.msk [vmem:[%s3] sm:$0xf] %vm631, %v569
  %633 = vst.msk [vmem:[%s3 + $0x4] sm:$0xf] %vm631, %v570
  %634 = vst.msk [vmem:[%s3 + $0x8] sm:$0xf] %vm631, %v571
  %635 = vst.msk [vmem:[%s3 + $0xc] sm:$0xf] %vm631, %v572
  %636 = vst.msk [vmem:[%s3 + $0x10] sm:$0xf] %vm631, %v573
  %637 = vst.msk [vmem:[%s3 + $0x14] sm:$0xf] %vm631, %v574
  %638 = vst.msk [vmem:[%s3 + $0x18] sm:$0xf] %vm631, %v575
  %639 = vst.msk [vmem:[%s3 + $0x1c] sm:$0xf] %vm631, %v576
  %640 = vst.msk [vmem:[%s3 + $0x20] sm:$0xf] %vm631, %v577
  %641 = vst.msk [vmem:[%s3 + $0x24] sm:$0xf] %vm631, %v578
  %642 = vst.msk [vmem:[%s3 + $0x28] sm:$0xf] %vm631, %v579
  %643 = vst.msk [vmem:[%s3 + $0x2c] sm:$0xf] %vm631, %v580
  %644 = vst.msk [vmem:[%s3 + $0x30] sm:$0xf] %vm631, %v581
  %645 = vst.msk [vmem:[%s3 + $0x34] sm:$0xf] %vm631, %v582
  %646 = vst.msk [vmem:[%s3 + $0x38] sm:$0xf] %vm631, %v583
  %647 = vst.msk [vmem:[%s3 + $0x3c] sm:$0xf] %vm631, %v584
  %648 = vst.msk [vmem:[%s3 + $0x40] sm:$0xf] %vm631, %v585
  %649 = vst.msk [vmem:[%s3 + $0x44] sm:$0xf] %vm631, %v586
  %650 = vst.msk [vmem:[%s3 + $0x48] sm:$0xf] %vm631, %v587
  %651 = vst.msk [vmem:[%s3 + $0x4c] sm:$0xf] %vm631, %v588
  %652 = vst.msk [vmem:[%s3 + $0x50] sm:$0xf] %vm631, %v589
  %653 = vst.msk [vmem:[%s3 + $0x54] sm:$0xf] %vm631, %v590
  %654 = vst.msk [vmem:[%s3 + $0x58] sm:$0xf] %vm631, %v591
  %655 = vst.msk [vmem:[%s3 + $0x5c] sm:$0xf] %vm631, %v592
  %656 = vst.msk [vmem:[%s3 + $0x60] sm:$0xf] %vm631, %v593
  %657 = vst.msk [vmem:[%s3 + $0x64] sm:$0xf] %vm631, %v594
  %658 = vst.msk [vmem:[%s3 + $0x68] sm:$0xf] %vm631, %v595
  %659 = vst.msk [vmem:[%s3 + $0x6c] sm:$0xf] %vm631, %v596
  %660 = vst.msk [vmem:[%s3 + $0x70] sm:$0xf] %vm631, %v597
  %661 = vst.msk [vmem:[%s3 + $0x74] sm:$0xf] %vm631, %v598
  %vm662 = vcmask 253952
  %663 = vst.msk [vmem:[%s3 + $0x78] sm:$0x1] %vm662, %v599
  // Predicated region
  $region14: #{forward.9} parent=0 // pred_check
    _
  $region15: #{forward.9} parent=0 // pred_check_branch
    %665 = sbr.rel (0) target = $region17
  $region16: #{forward.9} parent=0 // pred_region
    _
  $region17: #{forward.9} parent=0 // pred_fallthru
    _
  // Predicated region
  $region18: #{forward.9} parent=0 // pred_check
    _
  $region19: #{forward.9} parent=0 // pred_check_branch
    %667 = sbr.rel (0) target = $region21
  $region20: #{forward.9} parent=0 // pred_region
    _
  $region21: #{forward.9} parent=0 // pred_fallthru
    _

// kernel: forward.10
$region0: #{forward.10}
  #allocation0 [shape = 'u32[]', space=smem, size = 0x4, offset = 0x4, fixed_abs, tag = 'smem constant byte address 0x4 - core index']
  #allocation1 [shape = 'u32[144,128]{1,0:T(1,128)}', space=vmem, size = 0x12000, scoped, tag = 'internal scratch']
  %s0 = inlined_call_operand.vmem [shape: bf16[50,288], index: 0, kind: input, shape index: {}]
  %s1 = inlined_call_operand.vmem [shape: bf16[288,64], index: 1, kind: input, shape index: {}]
  %s2 = inlined_call_operand.vmem [shape: f32[1,64], index: 2, kind: input, shape index: {}]
  %s3 = inlined_call_operand.vmem [shape: bf16[50,64], index: 3, kind: output, shape index: {}]
  %s4 = sld [smem:[#allocation0]]
  $region22: #{forward.10} parent=0
    _
  %s6 = ssub.s32 1, %s4
  %s7 = scalar_select 0, %s6, %s4
  // Predicated region
  $region2: #{forward.10} parent=0 // pred_check
    _
  $region3: #{forward.10} parent=0 // pred_check_branch
    %9 = sbr.rel (0) target = $region5
  $region4: #{forward.10} parent=0 // pred_region
    _
  $region5: #{forward.10} parent=0 // pred_fallthru
    _
  // Predicated region
  $region6: #{forward.10} parent=0 // pred_check
    _
  $region7: #{forward.10} parent=0 // pred_check_branch
    %11 = sbr.rel (0) target = $region9
  $region8: #{forward.10} parent=0 // pred_region
    _
  $region9: #{forward.10} parent=0 // pred_fallthru
    _
  // Predicated region
  $region10: #{forward.10} parent=0 // pred_check
    _
  $region11: #{forward.10} parent=0 // pred_check_branch
    %13 = sbr.rel (0) target = $region13
  $region12: #{forward.10} parent=0 // pred_region
    _
  $region13: #{forward.10} parent=0 // pred_fallthru
    _
  %v15 = vld [vmem:[%s0] sm:$0xff]
  %v16 = vld [vmem:[%s0 + $0x8] sm:$0xf]
  %v17 = vld [vmem:[%s0 + $0xc] sm:$0xff]
  %v18 = vld [vmem:[%s0 + $0x14] sm:$0xf]
  %v19 = vld [vmem:[%s0 + $0x18] sm:$0xff]
  %v20 = vld [vmem:[%s0 + $0x20] sm:$0xf]
  %v21 = vld [vmem:[%s0 + $0x24] sm:$0xff]
  %v22 = vld [vmem:[%s0 + $0x2c] sm:$0xf]
  %v23 = vld [vmem:[%s0 + $0x30] sm:$0xff]
  %v24 = vld [vmem:[%s0 + $0x38] sm:$0xf]
  %v25 = vld [vmem:[%s0 + $0x3c] sm:$0xff]
  %v26 = vld [vmem:[%s0 + $0x44] sm:$0xf]
  %v27 = vld [vmem:[%s0 + $0x48] sm:$0x11]
  %v28 = vld [vmem:[%s0 + $0x50] sm:$0x1]
  %v29 = vld [vmem:[%s1] sm:$0xf]
  %v30 = vld [vmem:[%s1 + $0x4] sm:$0xf]
  %v31 = vld [vmem:[%s1 + $0x8] sm:$0xf]
  %v32 = vld [vmem:[%s1 + $0xc] sm:$0xf]
  %v33 = vld [vmem:[%s1 + $0x10] sm:$0xf]
  %v34 = vld [vmem:[%s1 + $0x14] sm:$0xf]
  %v35 = vld [vmem:[%s1 + $0x18] sm:$0xf]
  %v36 = vld [vmem:[%s1 + $0x1c] sm:$0xf]
  %v37 = vld [vmem:[%s1 + $0x20] sm:$0xf]
  %v38 = vld [vmem:[%s1 + $0x24] sm:$0xf]
  %v39 = vld [vmem:[%s1 + $0x28] sm:$0xf]
  %v40 = vld [vmem:[%s1 + $0x2c] sm:$0xf]
  %v41 = vld [vmem:[%s1 + $0x30] sm:$0xf]
  %v42 = vld [vmem:[%s1 + $0x34] sm:$0xf]
  %v43 = vld [vmem:[%s1 + $0x38] sm:$0xf]
  %v44 = vld [vmem:[%s1 + $0x3c] sm:$0xf]
  %v45 = vld [vmem:[%s1 + $0x40] sm:$0xf]
  %v46 = vld [vmem:[%s1 + $0x44] sm:$0xf]
  %v47 = vld [vmem:[%s1 + $0x48] sm:$0xf]
  %v48 = vld [vmem:[%s1 + $0x4c] sm:$0xf]
  %v49 = vld [vmem:[%s1 + $0x50] sm:$0xf]
  %v50 = vld [vmem:[%s1 + $0x54] sm:$0xf]
  %v51 = vld [vmem:[%s1 + $0x58] sm:$0xf]
  %v52 = vld [vmem:[%s1 + $0x5c] sm:$0xf]
  %v53 = vld [vmem:[%s1 + $0x60] sm:$0xf]
  %v54 = vld [vmem:[%s1 + $0x64] sm:$0xf]
  %v55 = vld [vmem:[%s1 + $0x68] sm:$0xf]
  %v56 = vld [vmem:[%s1 + $0x6c] sm:$0xf]
  %v57 = vld [vmem:[%s1 + $0x70] sm:$0xf]
  %v58 = vld [vmem:[%s1 + $0x74] sm:$0xf]
  %v59 = vld [vmem:[%s1 + $0x78] sm:$0xf]
  %v60 = vld [vmem:[%s1 + $0x7c] sm:$0xf]
  %v61 = vld [vmem:[%s1 + $0x80] sm:$0xf]
  %v62 = vld [vmem:[%s1 + $0x84] sm:$0xf]
  %v63 = vld [vmem:[%s1 + $0x88] sm:$0xf]
  %v64 = vld [vmem:[%s1 + $0x8c] sm:$0xf]
  %v65 = vld [vmem:[%s2] sm:$0x1]
  %v67 = vlaneseq
  %v68 = vshrl.u32 %v67, 7
  %v69 = vsub.s32 0, %v68
  %v70 = vrot.slane %v65, %v69
  %v86 = vunpack.c.l.b16 %v15
  %v87 = vunpack.c.h.b16 %v15
  %v88 = vunpack.c.l.b16 %v16
  %v89 = vunpack.c.l.b16 %v17
  %v90 = vunpack.c.h.b16 %v17
  %v91 = vunpack.c.l.b16 %v18
  %v92 = vunpack.c.l.b16 %v19
  %v93 = vunpack.c.h.b16 %v19
  %v94 = vunpack.c.l.b16 %v20
  %v95 = vunpack.c.l.b16 %v21
  %v96 = vunpack.c.h.b16 %v21
  %v97 = vunpack.c.l.b16 %v22
  %v98 = vunpack.c.l.b16 %v23
  %v99 = vunpack.c.h.b16 %v23
  %v100 = vunpack.c.l.b16 %v24
  %v101 = vunpack.c.l.b16 %v25
  %v102 = vunpack.c.h.b16 %v25
  %v103 = vunpack.c.l.b16 %v26
  %v104 = vunpack.c.l.b16 %v27
  %v105 = vunpack.c.h.b16 %v27
  %v106 = vunpack.c.l.b16 %v28
  %v107 = vpack.c.b16 %v89, %v86
  %v108 = vpack.c.b16 %v90, %v87
  %v109 = vpack.c.b16 %v91, %v88
  %v110 = vpack.c.b16 %v95, %v92
  %v111 = vpack.c.b16 %v96, %v93
  %v112 = vpack.c.b16 %v97, %v94
  %v113 = vpack.c.b16 %v101, %v98
  %v114 = vpack.c.b16 %v102, %v99
  %v115 = vpack.c.b16 %v103, %v100
  %v116 = vpack.c.b16 %v104, %v104
  %v117 = vpack.c.b16 %v105, %v105
  %v118 = vpack.c.b16 %v106, %v106
  %v163 = vunpack.c.l.b16 %v29
  %v164 = vunpack.c.l.b16 %v30
  %v165 = vunpack.c.l.b16 %v31
  %v166 = vunpack.c.l.b16 %v32
  %v167 = vunpack.c.l.b16 %v33
  %v168 = vunpack.c.l.b16 %v34
  %v169 = vunpack.c.l.b16 %v35
  %v170 = vunpack.c.l.b16 %v36
  %v171 = vunpack.c.l.b16 %v37
  %v172 = vunpack.c.l.b16 %v38
  %v173 = vunpack.c.l.b16 %v39
  %v174 = vunpack.c.l.b16 %v40
  %v175 = vunpack.c.l.b16 %v41
  %v176 = vunpack.c.l.b16 %v42
  %v177 = vunpack.c.l.b16 %v43
  %v178 = vunpack.c.l.b16 %v44
  %v179 = vunpack.c.l.b16 %v45
  %v180 = vunpack.c.l.b16 %v46
  %v181 = vunpack.c.l.b16 %v47
  %v182 = vunpack.c.l.b16 %v48
  %v183 = vunpack.c.l.b16 %v49
  %v184 = vunpack.c.l.b16 %v50
  %v185 = vunpack.c.l.b16 %v51
  %v186 = vunpack.c.l.b16 %v52
  %v187 = vunpack.c.l.b16 %v53
  %v188 = vunpack.c.l.b16 %v54
  %v189 = vunpack.c.l.b16 %v55
  %v190 = vunpack.c.l.b16 %v56
  %v191 = vunpack.c.l.b16 %v57
  %v192 = vunpack.c.l.b16 %v58
  %v193 = vunpack.c.l.b16 %v59
  %v194 = vunpack.c.l.b16 %v60
  %v195 = vunpack.c.l.b16 %v61
  %v196 = vunpack.c.l.b16 %v62
  %v197 = vunpack.c.l.b16 %v63
  %v198 = vunpack.c.l.b16 %v64
  %v199 = vpack.c.b16 %v164, %v163
  %v200 = vpack.c.b16 %v166, %v165
  %v201 = vpack.c.b16 %v168, %v167
  %v202 = vpack.c.b16 %v170, %v169
  %v203 = vpack.c.b16 %v172, %v171
  %v204 = vpack.c.b16 %v174, %v173
  %v205 = vpack.c.b16 %v176, %v175
  %v206 = vpack.c.b16 %v178, %v177
  %v207 = vpack.c.b16 %v180, %v179
  %v208 = vpack.c.b16 %v182, %v181
  %v209 = vpack.c.b16 %v184, %v183
  %v210 = vpack.c.b16 %v186, %v185
  %v211 = vpack.c.b16 %v188, %v187
  %v212 = vpack.c.b16 %v190, %v189
  %v213 = vpack.c.b16 %v192, %v191
  %v214 = vpack.c.b16 %v194, %v193
  %v215 = vpack.c.b16 %v196, %v195
  %v216 = vpack.c.b16 %v198, %v197
  %vm235 = vcmask 261120
  %v237 = vsel %vm235, %v109, 0
  %v240 = vsel %vm235, %v112, 0
  %v243 = vsel %vm235, %v115, 0
  %v246 = vsel %vm235, %v118, 0
  %248 = vmatprep.subr.bf16.mxu0 0
  %249 = vmatpush1.bf16.msra.mxu0 %v199
  %250 = vmatprep.subr.bf16.mxu0 0
  %251 = vmatpush1.bf16.msra.mxu0 %v200
  %252 = vmatprep.subr.bf16.mxu0 0
  %253 = vmatpush1.bf16.msra.mxu0 %v201
  %254 = vmatprep.subr.bf16.mxu0 0
  %255 = vmatpush1.bf16.msra.mxu0 %v202
  %256 = vmatprep.subr.bf16.mxu0 0
  %257 = vmatpush1.bf16.msra.mxu0 %v203
  %258 = vmatprep.subr.bf16.mxu0 0
  %259 = vmatpush1.bf16.msra.mxu0 %v204
  %260 = vmatprep.subr.bf16.mxu0 0
  %261 = vmatpush1.bf16.msra.mxu0 %v205
  %262 = vmatprep.subr.bf16.mxu0 0
  %263 = vmatpush1.bf16.msra.mxu0 %v206
  %264 = vmatprep.subr.bf16.mxu0 0
  %265 = vmatpush1.bf16.msra.mxu0 %v207
  %266 = vmatprep.subr.bf16.mxu0 0
  %267 = vmatpush1.bf16.msra.mxu0 %v208
  %268 = vmatprep.subr.bf16.mxu0 0
  %269 = vmatpush1.bf16.msra.mxu0 %v209
  %270 = vmatprep.subr.bf16.mxu0 0
  %271 = vmatpush1.bf16.msra.mxu0 %v210
  %272 = vmatprep.subr.bf16.mxu0 0
  %273 = vmatpush1.bf16.msra.mxu0 %v211
  %274 = vmatprep.subr.bf16.mxu0 0
  %275 = vmatpush1.bf16.msra.mxu0 %v212
  %276 = vmatprep.subr.bf16.mxu0 0
  %277 = vmatpush1.bf16.msra.mxu0 %v213
  %278 = vmatprep.subr.bf16.mxu0 0
  %279 = vmatpush1.bf16.msra.mxu0 %v214
  %280 = vmatprep.mubr.bf16.mxu0 %v108
  %281 = vmatmul.mubr.bf16.gmra.mrb[0].mxu0 %v107
  %v282 = vpop.f32.mrb[0].mxu0
  %v283 = vadd.f32 %v70, %v282
  %v284 = vpop.f32.mrb[0].mxu0
  %v285 = vpop.f32.mrb[0].mxu0
  %v286 = vadd.f32 %v70, %v285
  %v287 = vpop.f32.mrb[0].mxu0
  %288 = vmatprep.mubr.bf16.mxu0 %v111
  %289 = vmatmul.mubr.bf16.gmra.mrb[0].mxu0 %v110
  %v290 = vpop.f32.mrb[0].mxu0
  %v291 = vadd.f32 %v70, %v290
  %v292 = vpop.f32.mrb[0].mxu0
  %v293 = vpop.f32.mrb[0].mxu0
  %v294 = vadd.f32 %v70, %v293
  %v295 = vpop.f32.mrb[0].mxu0
  %296 = vmatprep.mubr.bf16.mxu0 %v114
  %297 = vmatmul.mubr.bf16.gmra.mrb[0].mxu0 %v113
  %v298 = vpop.f32.mrb[0].mxu0
  %v299 = vadd.f32 %v70, %v298
  %v300 = vpop.f32.mrb[0].mxu0
  %v301 = vpop.f32.mrb[0].mxu0
  %v302 = vadd.f32 %v70, %v301
  %v303 = vpop.f32.mrb[0].mxu0
  %304 = vmatprep.mubr.bf16.mxu0 %v117
  %305 = vmatmul.mubr.bf16.gmra.mrb[0].mxu0 %v116
  %v306 = vpop.f32.mrb[0].mxu0
  %v307 = vadd.f32 %v70, %v306
  %v308 = vpop.f32.mrb[0].mxu0
  %v309 = vpop.f32.mrb[0].mxu0
  %v310 = vpop.f32.mrb[0].mxu0
  %311 = vdwg.mxu0
  %312 = vmatprep.subr.bf16.mxu0 0
  %313 = vmatpush1.bf16.msra.mxu0 %v215
  %314 = vmatprep.subr.bf16.mxu0 0
  %315 = vmatpush1.bf16.msra.mxu0 %v216
  %316 = vmatprep.subr.bf16.mxu0 0
  %317 = vmatpush1.bf16.msra.mxu0 0
  %318 = vmatprep.subr.bf16.mxu0 0
  %319 = vmatpush1.bf16.msra.mxu0 0
  %320 = vmatprep.subr.bf16.mxu0 0
  %321 = vmatpush1.bf16.msra.mxu0 0
  %322 = vmatprep.subr.bf16.mxu0 0
  %323 = vmatpush1.bf16.msra.mxu0 0
  %324 = vmatprep.subr.bf16.mxu0 0
  %325 = vmatpush1.bf16.msra.mxu0 0
  %326 = vmatprep.subr.bf16.mxu0 0
  %327 = vmatpush1.bf16.msra.mxu0 0
  %328 = vmatprep.subr.bf16.mxu0 0
  %329 = vmatpush1.bf16.msra.mxu0 0
  %330 = vmatprep.subr.bf16.mxu0 0
  %331 = vmatpush1.bf16.msra.mxu0 0
  %332 = vmatprep.subr.bf16.mxu0 0
  %333 = vmatpush1.bf16.msra.mxu0 0
  %334 = vmatprep.subr.bf16.mxu0 0
  %335 = vmatpush1.bf16.msra.mxu0 0
  %336 = vmatprep.subr.bf16.mxu0 0
  %337 = vmatpush1.bf16.msra.mxu0 0
  %338 = vmatprep.subr.bf16.mxu0 0
  %339 = vmatpush1.bf16.msra.mxu0 0
  %340 = vmatprep.subr.bf16.mxu0 0
  %341 = vmatpush1.bf16.msra.mxu0 0
  %342 = vmatprep.subr.bf16.mxu0 0
  %343 = vmatpush1.bf16.msra.mxu0 0
  %344 = vmatprep.mubr.bf16.mxu0 0
  %345 = vmatmul.mubr.bf16.gmra.mrb[0].mxu0 %v237
  %v346 = vpop.f32.mrb[0].mxu0
  %v347 = vadd.f32 %v283, %v346
  %v348 = vpop.f32.mrb[0].mxu0
  %v349 = vpop.f32.mrb[0].mxu0
  %v350 = vadd.f32 %v286, %v349
  %v351 = vpop.f32.mrb[0].mxu0
  %352 = vmatprep.mubr.bf16.mxu0 0
  %353 = vmatmul.mubr.bf16.gmra.mrb[0].mxu0 %v240
  %v354 = vpop.f32.mrb[0].mxu0
  %v355 = vadd.f32 %v291, %v354
  %v356 = vpop.f32.mrb[0].mxu0
  %v357 = vpop.f32.mrb[0].mxu0
  %v358 = vadd.f32 %v294, %v357
  %v359 = vpop.f32.mrb[0].mxu0
  %360 = vmatprep.mubr.bf16.mxu0 0
  %361 = vmatmul.mubr.bf16.gmra.mrb[0].mxu0 %v243
  %v362 = vpop.f32.mrb[0].mxu0
  %v363 = vadd.f32 %v299, %v362
  %v364 = vpop.f32.mrb[0].mxu0
  %v365 = vpop.f32.mrb[0].mxu0
  %v366 = vadd.f32 %v302, %v365
  %v367 = vpop.f32.mrb[0].mxu0
  %368 = vmatprep.mubr.bf16.mxu0 0
  %369 = vmatmul.mubr.bf16.gmra.mrb[0].mxu0 %v246
  %v370 = vpop.f32.mrb[0].mxu0
  %v371 = vadd.f32 %v307, %v370
  %v372 = vpop.f32.mrb[0].mxu0
  %v373 = vpop.f32.mrb[0].mxu0
  %v374 = vpop.f32.mrb[0].mxu0
  %375 = vdwg.mxu0
  %v376 = vmax.f32 %v347, 0.0
  %v377 = vmax.f32 %v350, 0.0
  %v378 = vmax.f32 %v355, 0.0
  %v379 = vmax.f32 %v358, 0.0
  %v380 = vmax.f32 %v363, 0.0
  %v381 = vmax.f32 %v366, 0.0
  %v382 = vmax.f32 %v371, 0.0
  %v383 = vpack.c.bf16 %v377, %v376
  %v384 = vpack.c.bf16 %v379, %v378
  %v385 = vpack.c.bf16 %v381, %v380
  %v386 = vpack.c.bf16 %v382, %v382
  %v391 = vunpack.c.l.b16 %v383
  %v392 = vunpack.c.h.b16 %v383
  %v393 = vunpack.c.l.b16 %v384
  %v394 = vunpack.c.h.b16 %v384
  %v395 = vunpack.c.l.b16 %v385
  %v396 = vunpack.c.h.b16 %v385
  %v397 = vunpack.c.l.b16 %v386
  %v398 = vpack.c.b16 %v391, %v391
  %v399 = vpack.c.b16 %v392, %v392
  %v400 = vpack.c.b16 %v393, %v393
  %v401 = vpack.c.b16 %v394, %v394
  %v402 = vpack.c.b16 %v395, %v395
  %v403 = vpack.c.b16 %v396, %v396
  %v404 = vpack.c.b16 %v397, %v397
  %vm412 = vcmask 519168
  %413 = vst.msk [vmem:[%s3] sm:$0xf] %vm412, %v398
  %414 = vst.msk [vmem:[%s3 + $0x4] sm:$0xf] %vm412, %v399
  %415 = vst.msk [vmem:[%s3 + $0x8] sm:$0xf] %vm412, %v400
  %416 = vst.msk [vmem:[%s3 + $0xc] sm:$0xf] %vm412, %v401
  %417 = vst.msk [vmem:[%s3 + $0x10] sm:$0xf] %vm412, %v402
  %418 = vst.msk [vmem:[%s3 + $0x14] sm:$0xf] %vm412, %v403
  %vm419 = vcmask 516096
  %420 = vst.msk [vmem:[%s3 + $0x18] sm:$0x1] %vm419, %v404
  // Predicated region
  $region14: #{forward.10} parent=0 // pred_check
    _
  $region15: #{forward.10} parent=0 // pred_check_branch
    %422 = sbr.rel (0) target = $region17
  $region16: #{forward.10} parent=0 // pred_region
    _
  $region17: #{forward.10} parent=0 // pred_fallthru
    _
  // Predicated region
  $region18: #{forward.10} parent=0 // pred_check
    _
  $region19: #{forward.10} parent=0 // pred_check_branch
    %424 = sbr.rel (0) target = $region21
  $region20: #{forward.10} parent=0 // pred_region
    _
  $region21: #{forward.10} parent=0 // pred_fallthru
    _

// kernel: forward.11
$region0: #{forward.11}
  #allocation0 [shape = 'u32[]', space=smem, size = 0x4, offset = 0x4, fixed_abs, tag = 'smem constant byte address 0x4 - core index']
  #allocation1 [shape = 'u32[144,128]{1,0:T(1,128)}', space=vmem, size = 0x12000, scoped, tag = 'internal scratch']
  %s0 = inlined_call_operand.vmem [shape: bf16[18,576], index: 0, kind: input, shape index: {}]
  %s1 = inlined_call_operand.vmem [shape: bf16[576,128], index: 1, kind: input, shape index: {}]
  %s2 = inlined_call_operand.vmem [shape: f32[1,128], index: 2, kind: input, shape index: {}]
  %s3 = inlined_call_operand.vmem [shape: bf16[18,128], index: 3, kind: output, shape index: {}]
  %s4 = sld [smem:[#allocation0]]
  $region22: #{forward.11} parent=0
    _
  %s6 = ssub.s32 1, %s4
  %s7 = scalar_select 0, %s6, %s4
  // Predicated region
  $region2: #{forward.11} parent=0 // pred_check
    _
  $region3: #{forward.11} parent=0 // pred_check_branch
    %9 = sbr.rel (0) target = $region5
  $region4: #{forward.11} parent=0 // pred_region
    _
  $region5: #{forward.11} parent=0 // pred_fallthru
    _
  // Predicated region
  $region6: #{forward.11} parent=0 // pred_check
    _
  $region7: #{forward.11} parent=0 // pred_check_branch
    %11 = sbr.rel (0) target = $region9
  $region8: #{forward.11} parent=0 // pred_region
    _
  $region9: #{forward.11} parent=0 // pred_fallthru
    _
  // Predicated region
  $region10: #{forward.11} parent=0 // pred_check
    _
  $region11: #{forward.11} parent=0 // pred_check_branch
    %13 = sbr.rel (0) target = $region13
  $region12: #{forward.11} parent=0 // pred_region
    _
  $region13: #{forward.11} parent=0 // pred_fallthru
    _
  %v15 = vld [vmem:[%s0] sm:$0xff]
  %v16 = vld [vmem:[%s0 + $0x8] sm:$0xff]
  %v17 = vld [vmem:[%s0 + $0x10] sm:$0xf]
  %v18 = vld [vmem:[%s0 + $0x14] sm:$0xff]
  %v19 = vld [vmem:[%s0 + $0x1c] sm:$0xff]
  %v20 = vld [vmem:[%s0 + $0x24] sm:$0xf]
  %v21 = vld [vmem:[%s0 + $0x28] sm:$0x11]
  %v22 = vld [vmem:[%s0 + $0x30] sm:$0x11]
  %v23 = vld [vmem:[%s0 + $0x38] sm:$0x1]
  %v24 = vld [vmem:[%s1] sm:$0xf]
  %v25 = vld [vmem:[%s1 + $0x4] sm:$0xf]
  %v26 = vld [vmem:[%s1 + $0x8] sm:$0xf]
  %v27 = vld [vmem:[%s1 + $0xc] sm:$0xf]
  %v28 = vld [vmem:[%s1 + $0x10] sm:$0xf]
  %v29 = vld [vmem:[%s1 + $0x14] sm:$0xf]
  %v30 = vld [vmem:[%s1 + $0x18] sm:$0xf]
  %v31 = vld [vmem:[%s1 + $0x1c] sm:$0xf]
  %v32 = vld [vmem:[%s1 + $0x20] sm:$0xf]
  %v33 = vld [vmem:[%s1 + $0x24] sm:$0xf]
  %v34 = vld [vmem:[%s1 + $0x28] sm:$0xf]
  %v35 = vld [vmem:[%s1 + $0x2c] sm:$0xf]
  %v36 = vld [vmem:[%s1 + $0x30] sm:$0xf]
  %v37 = vld [vmem:[%s1 + $0x34] sm:$0xf]
  %v38 = vld [vmem:[%s1 + $0x38] sm:$0xf]
  %v39 = vld [vmem:[%s1 + $0x3c] sm:$0xf]
  %v40 = vld [vmem:[%s1 + $0x40] sm:$0xf]
  %v41 = vld [vmem:[%s1 + $0x44] sm:$0xf]
  %v42 = vld [vmem:[%s1 + $0x48] sm:$0xf]
  %v43 = vld [vmem:[%s1 + $0x4c] sm:$0xf]
  %v44 = vld [vmem:[%s1 + $0x50] sm:$0xf]
  %v45 = vld [vmem:[%s1 + $0x54] sm:$0xf]
  %v46 = vld [vmem:[%s1 + $0x58] sm:$0xf]
  %v47 = vld [vmem:[%s1 + $0x5c] sm:$0xf]
  %v48 = vld [vmem:[%s1 + $0x60] sm:$0xf]
  %v49 = vld [vmem:[%s1 + $0x64] sm:$0xf]
  %v50 = vld [vmem:[%s1 + $0x68] sm:$0xf]
  %v51 = vld [vmem:[%s1 + $0x6c] sm:$0xf]
  %v52 = vld [vmem:[%s1 + $0x70] sm:$0xf]
  %v53 = vld [vmem:[%s1 + $0x74] sm:$0xf]
  %v54 = vld [vmem:[%s1 + $0x78] sm:$0xf]
  %v55 = vld [vmem:[%s1 + $0x7c] sm:$0xf]
  %v56 = vld [vmem:[%s1 + $0x80] sm:$0xf]
  %v57 = vld [vmem:[%s1 + $0x84] sm:$0xf]
  %v58 = vld [vmem:[%s1 + $0x88] sm:$0xf]
  %v59 = vld [vmem:[%s1 + $0x8c] sm:$0xf]
  %v60 = vld [vmem:[%s1 + $0x90] sm:$0xf]
  %v61 = vld [vmem:[%s1 + $0x94] sm:$0xf]
  %v62 = vld [vmem:[%s1 + $0x98] sm:$0xf]
  %v63 = vld [vmem:[%s1 + $0x9c] sm:$0xf]
  %v64 = vld [vmem:[%s1 + $0xa0] sm:$0xf]
  %v65 = vld [vmem:[%s1 + $0xa4] sm:$0xf]
  %v66 = vld [vmem:[%s1 + $0xa8] sm:$0xf]
  %v67 = vld [vmem:[%s1 + $0xac] sm:$0xf]
  %v68 = vld [vmem:[%s1 + $0xb0] sm:$0xf]
  %v69 = vld [vmem:[%s1 + $0xb4] sm:$0xf]
  %v70 = vld [vmem:[%s1 + $0xb8] sm:$0xf]
  %v71 = vld [vmem:[%s1 + $0xbc] sm:$0xf]
  %v72 = vld [vmem:[%s1 + $0xc0] sm:$0xf]
  %v73 = vld [vmem:[%s1 + $0xc4] sm:$0xf]
  %v74 = vld [vmem:[%s1 + $0xc8] sm:$0xf]
  %v75 = vld [vmem:[%s1 + $0xcc] sm:$0xf]
  %v76 = vld [vmem:[%s1 + $0xd0] sm:$0xf]
  %v77 = vld [vmem:[%s1 + $0xd4] sm:$0xf]
  %v78 = vld [vmem:[%s1 + $0xd8] sm:$0xf]
  %v79 = vld [vmem:[%s1 + $0xdc] sm:$0xf]
  %v80 = vld [vmem:[%s1 + $0xe0] sm:$0xf]
  %v81 = vld [vmem:[%s1 + $0xe4] sm:$0xf]
  %v82 = vld [vmem:[%s1 + $0xe8] sm:$0xf]
  %v83 = vld [vmem:[%s1 + $0xec] sm:$0xf]
  %v84 = vld [vmem:[%s1 + $0xf0] sm:$0xf]
  %v85 = vld [vmem:[%s1 + $0xf4] sm:$0xf]
  %v86 = vld [vmem:[%s1 + $0xf8] sm:$0xf]
  %v87 = vld [vmem:[%s1 + $0xfc] sm:$0xf]
  %v88 = vld [vmem:[%s1 + $0x100] sm:$0xf]
  %v89 = vld [vmem:[%s1 + $0x104] sm:$0xf]
  %v90 = vld [vmem:[%s1 + $0x108] sm:$0xf]
  %v91 = vld [vmem:[%s1 + $0x10c] sm:$0xf]
  %v92 = vld [vmem:[%s1 + $0x110] sm:$0xf]
  %v93 = vld [vmem:[%s1 + $0x114] sm:$0xf]
  %v94 = vld [vmem:[%s1 + $0x118] sm:$0xf]
  %v95 = vld [vmem:[%s1 + $0x11c] sm:$0xf]
  %v96 = vld [vmem:[%s2] sm:$0x1]
  %v98 = vlaneseq
  %v99 = vshrl.u32 %v98, 7
  %v100 = vsub.s32 0, %v99
  %v101 = vrot.slane %v96, %v100
  %v112 = vunpack.c.l.b16 %v15
  %v113 = vunpack.c.h.b16 %v15
  %v114 = vunpack.c.l.b16 %v16
  %v115 = vunpack.c.h.b16 %v16
  %v116 = vunpack.c.l.b16 %v17
  %v117 = vunpack.c.l.b16 %v18
  %v118 = vunpack.c.h.b16 %v18
  %v119 = vunpack.c.l.b16 %v19
  %v120 = vunpack.c.h.b16 %v19
  %v121 = vunpack.c.l.b16 %v20
  %v122 = vunpack.c.l.b16 %v21
  %v123 = vunpack.c.h.b16 %v21
  %v124 = vunpack.c.l.b16 %v22
  %v125 = vunpack.c.h.b16 %v22
  %v126 = vunpack.c.l.b16 %v23
  %v127 = vpack.c.b16 %v117, %v112
  %v128 = vpack.c.b16 %v118, %v113
  %v129 = vpack.c.b16 %v119, %v114
  %v130 = vpack.c.b16 %v120, %v115
  %v131 = vpack.c.b16 %v121, %v116
  %v132 = vpack.c.b16 %v122, %v122
  %v133 = vpack.c.b16 %v123, %v123
  %v134 = vpack.c.b16 %v124, %v124
  %v135 = vpack.c.b16 %v125, %v125
  %v136 = vpack.c.b16 %v126, %v126
  %v217 = vunpack.c.l.b16 %v24
  %v218 = vunpack.c.l.b16 %v25
  %v219 = vunpack.c.l.b16 %v26
  %v220 = vunpack.c.l.b16 %v27
  %v221 = vunpack.c.l.b16 %v28
  %v222 = vunpack.c.l.b16 %v29
  %v223 = vunpack.c.l.b16 %v30
  %v224 = vunpack.c.l.b16 %v31
  %v225 = vunpack.c.l.b16 %v32
  %v226 = vunpack.c.l.b16 %v33
  %v227 = vunpack.c.l.b16 %v34
  %v228 = vunpack.c.l.b16 %v35
  %v229 = vunpack.c.l.b16 %v36
  %v230 = vunpack.c.l.b16 %v37
  %v231 = vunpack.c.l.b16 %v38
  %v232 = vunpack.c.l.b16 %v39
  %v233 = vunpack.c.l.b16 %v40
  %v234 = vunpack.c.l.b16 %v41
  %v235 = vunpack.c.l.b16 %v42
  %v236 = vunpack.c.l.b16 %v43
  %v237 = vunpack.c.l.b16 %v44
  %v238 = vunpack.c.l.b16 %v45
  %v239 = vunpack.c.l.b16 %v46
  %v240 = vunpack.c.l.b16 %v47
  %v241 = vunpack.c.l.b16 %v48
  %v242 = vunpack.c.l.b16 %v49
  %v243 = vunpack.c.l.b16 %v50
  %v244 = vunpack.c.l.b16 %v51
  %v245 = vunpack.c.l.b16 %v52
  %v246 = vunpack.c.l.b16 %v53
  %v247 = vunpack.c.l.b16 %v54
  %v248 = vunpack.c.l.b16 %v55
  %v249 = vunpack.c.l.b16 %v56
  %v250 = vunpack.c.l.b16 %v57
  %v251 = vunpack.c.l.b16 %v58
  %v252 = vunpack.c.l.b16 %v59
  %v253 = vunpack.c.l.b16 %v60
  %v254 = vunpack.c.l.b16 %v61
  %v255 = vunpack.c.l.b16 %v62
  %v256 = vunpack.c.l.b16 %v63
  %v257 = vunpack.c.l.b16 %v64
  %v258 = vunpack.c.l.b16 %v65
  %v259 = vunpack.c.l.b16 %v66
  %v260 = vunpack.c.l.b16 %v67
  %v261 = vunpack.c.l.b16 %v68
  %v262 = vunpack.c.l.b16 %v69
  %v263 = vunpack.c.l.b16 %v70
  %v264 = vunpack.c.l.b16 %v71
  %v265 = vunpack.c.l.b16 %v72
  %v266 = vunpack.c.l.b16 %v73
  %v267 = vunpack.c.l.b16 %v74
  %v268 = vunpack.c.l.b16 %v75
  %v269 = vunpack.c.l.b16 %v76
  %v270 = vunpack.c.l.b16 %v77
  %v271 = vunpack.c.l.b16 %v78
  %v272 = vunpack.c.l.b16 %v79
  %v273 = vunpack.c.l.b16 %v80
  %v274 = vunpack.c.l.b16 %v81
  %v275 = vunpack.c.l.b16 %v82
  %v276 = vunpack.c.l.b16 %v83
  %v277 = vunpack.c.l.b16 %v84
  %v278 = vunpack.c.l.b16 %v85
  %v279 = vunpack.c.l.b16 %v86
  %v280 = vunpack.c.l.b16 %v87
  %v281 = vunpack.c.l.b16 %v88
  %v282 = vunpack.c.l.b16 %v89
  %v283 = vunpack.c.l.b16 %v90
  %v284 = vunpack.c.l.b16 %v91
  %v285 = vunpack.c.l.b16 %v92
  %v286 = vunpack.c.l.b16 %v93
  %v287 = vunpack.c.l.b16 %v94
  %v288 = vunpack.c.l.b16 %v95
  %v289 = vpack.c.b16 %v218, %v217
  %v290 = vpack.c.b16 %v220, %v219
  %v291 = vpack.c.b16 %v222, %v221
  %v292 = vpack.c.b16 %v224, %v223
  %v293 = vpack.c.b16 %v226, %v225
  %v294 = vpack.c.b16 %v228, %v227
  %v295 = vpack.c.b16 %v230, %v229
  %v296 = vpack.c.b16 %v232, %v231
  %v297 = vpack.c.b16 %v234, %v233
  %v298 = vpack.c.b16 %v236, %v235
  %v299 = vpack.c.b16 %v238, %v237
  %v300 = vpack.c.b16 %v240, %v239
  %v301 = vpack.c.b16 %v242, %v241
  %v302 = vpack.c.b16 %v244, %v243
  %v303 = vpack.c.b16 %v246, %v245
  %v304 = vpack.c.b16 %v248, %v247
  %v305 = vpack.c.b16 %v250, %v249
  %v306 = vpack.c.b16 %v252, %v251
  %v307 = vpack.c.b16 %v254, %v253
  %v308 = vpack.c.b16 %v256, %v255
  %v309 = vpack.c.b16 %v258, %v257
  %v310 = vpack.c.b16 %v260, %v259
  %v311 = vpack.c.b16 %v262, %v261
  %v312 = vpack.c.b16 %v264, %v263
  %v313 = vpack.c.b16 %v266, %v265
  %v314 = vpack.c.b16 %v268, %v267
  %v315 = vpack.c.b16 %v270, %v269
  %v316 = vpack.c.b16 %v272, %v271
  %v317 = vpack.c.b16 %v274, %v273
  %v318 = vpack.c.b16 %v276, %v275
  %v319 = vpack.c.b16 %v278, %v277
  %v320 = vpack.c.b16 %v280, %v279
  %v321 = vpack.c.b16 %v282, %v281
  %v322 = vpack.c.b16 %v284, %v283
  %v323 = vpack.c.b16 %v286, %v285
  %v324 = vpack.c.b16 %v288, %v287
  %vm361 = vcmask 523264
  %v363 = vsel %vm361, %v131, 0
  %v366 = vsel %vm361, %v136, 0
  %368 = vmatprep.subr.bf16.mxu0 0
  %369 = vmatpush1.bf16.msra.mxu0 %v289
  %370 = vmatprep.subr.bf16.mxu0 0
  %371 = vmatpush1.bf16.msra.mxu0 %v290
  %372 = vmatprep.subr.bf16.mxu0 0
  %373 = vmatpush1.bf16.msra.mxu0 %v291
  %374 = vmatprep.subr.bf16.mxu0 0
  %375 = vmatpush1.bf16.msra.mxu0 %v292
  %376 = vmatprep.subr.bf16.mxu0 0
  %377 = vmatpush1.bf16.msra.mxu0 %v293
  %378 = vmatprep.subr.bf16.mxu0 0
  %379 = vmatpush1.bf16.msra.mxu0 %v294
  %380 = vmatprep.subr.bf16.mxu0 0
  %381 = vmatpush1.bf16.msra.mxu0 %v295
  %382 = vmatprep.subr.bf16.mxu0 0
  %383 = vmatpush1.bf16.msra.mxu0 %v296
  %384 = vmatprep.subr.bf16.mxu0 0
  %385 = vmatpush1.bf16.msra.mxu0 %v297
  %386 = vmatprep.subr.bf16.mxu0 0
  %387 = vmatpush1.bf16.msra.mxu0 %v298
  %388 = vmatprep.subr.bf16.mxu0 0
  %389 = vmatpush1.bf16.msra.mxu0 %v299
  %390 = vmatprep.subr.bf16.mxu0 0
  %391 = vmatpush1.bf16.msra.mxu0 %v300
  %392 = vmatprep.subr.bf16.mxu0 0
  %393 = vmatpush1.bf16.msra.mxu0 %v301
  %394 = vmatprep.subr.bf16.mxu0 0
  %395 = vmatpush1.bf16.msra.mxu0 %v302
  %396 = vmatprep.subr.bf16.mxu0 0
  %397 = vmatpush1.bf16.msra.mxu0 %v303
  %398 = vmatprep.subr.bf16.mxu0 0
  %399 = vmatpush1.bf16.msra.mxu0 %v304
  %400 = vmatprep.mubr.bf16.mxu0 %v128
  %401 = vmatmul.mubr.bf16.gmra.mrb[0].mxu0 %v127
  %v402 = vpop.f32.mrb[0].mxu0
  %v403 = vadd.f32 %v101, %v402
  %v404 = vpop.f32.mrb[0].mxu0
  %v405 = vpop.f32.mrb[0].mxu0
  %v406 = vadd.f32 %v101, %v405
  %v407 = vpop.f32.mrb[0].mxu0
  %408 = vmatprep.mubr.bf16.mxu0 %v133
  %409 = vmatmul.mubr.bf16.gmra.mrb[0].mxu0 %v132
  %v410 = vpop.f32.mrb[0].mxu0
  %v411 = vadd.f32 %v101, %v410
  %v412 = vpop.f32.mrb[0].mxu0
  %v413 = vpop.f32.mrb[0].mxu0
  %v414 = vpop.f32.mrb[0].mxu0
  %415 = vdwg.mxu0
  %416 = vmatprep.subr.bf16.mxu0 0
  %417 = vmatpush1.bf16.msra.mxu0 %v305
  %418 = vmatprep.subr.bf16.mxu0 0
  %419 = vmatpush1.bf16.msra.mxu0 %v306
  %420 = vmatprep.subr.bf16.mxu0 0
  %421 = vmatpush1.bf16.msra.mxu0 %v307
  %422 = vmatprep.subr.bf16.mxu0 0
  %423 = vmatpush1.bf16.msra.mxu0 %v308
  %424 = vmatprep.subr.bf16.mxu0 0
  %425 = vmatpush1.bf16.msra.mxu0 %v309
  %426 = vmatprep.subr.bf16.mxu0 0
  %427 = vmatpush1.bf16.msra.mxu0 %v310
  %428 = vmatprep.subr.bf16.mxu0 0
  %429 = vmatpush1.bf16.msra.mxu0 %v311
  %430 = vmatprep.subr.bf16.mxu0 0
  %431 = vmatpush1.bf16.msra.mxu0 %v312
  %432 = vmatprep.subr.bf16.mxu0 0
  %433 = vmatpush1.bf16.msra.mxu0 %v313
  %434 = vmatprep.subr.bf16.mxu0 0
  %435 = vmatpush1.bf16.msra.mxu0 %v314
  %436 = vmatprep.subr.bf16.mxu0 0
  %437 = vmatpush1.bf16.msra.mxu0 %v315
  %438 = vmatprep.subr.bf16.mxu0 0
  %439 = vmatpush1.bf16.msra.mxu0 %v316
  %440 = vmatprep.subr.bf16.mxu0 0
  %441 = vmatpush1.bf16.msra.mxu0 %v317
  %442 = vmatprep.subr.bf16.mxu0 0
  %443 = vmatpush1.bf16.msra.mxu0 %v318
  %444 = vmatprep.subr.bf16.mxu0 0
  %445 = vmatpush1.bf16.msra.mxu0 %v319
  %446 = vmatprep.subr.bf16.mxu0 0
  %447 = vmatpush1.bf16.msra.mxu0 %v320
  %448 = vmatprep.mubr.bf16.mxu0 %v130
  %449 = vmatmul.mubr.bf16.gmra.mrb[0].mxu0 %v129
  %v450 = vpop.f32.mrb[0].mxu0
  %v451 = vadd.f32 %v403, %v450
  %v452 = vpop.f32.mrb[0].mxu0
  %v453 = vpop.f32.mrb[0].mxu0
  %v454 = vadd.f32 %v406, %v453
  %v455 = vpop.f32.mrb[0].mxu0
  %456 = vmatprep.mubr.bf16.mxu0 %v135
  %457 = vmatmul.mubr.bf16.gmra.mrb[0].mxu0 %v134
  %v458 = vpop.f32.mrb[0].mxu0
  %v459 = vadd.f32 %v411, %v458
  %v460 = vpop.f32.mrb[0].mxu0
  %v461 = vpop.f32.mrb[0].mxu0
  %v462 = vpop.f32.mrb[0].mxu0
  %463 = vdwg.mxu0
  %464 = vmatprep.subr.bf16.mxu0 0
  %465 = vmatpush1.bf16.msra.mxu0 %v321
  %466 = vmatprep.subr.bf16.mxu0 0
  %467 = vmatpush1.bf16.msra.mxu0 %v322
  %468 = vmatprep.subr.bf16.mxu0 0
  %469 = vmatpush1.bf16.msra.mxu0 %v323
  %470 = vmatprep.subr.bf16.mxu0 0
  %471 = vmatpush1.bf16.msra.mxu0 %v324
  %472 = vmatprep.subr.bf16.mxu0 0
  %473 = vmatpush1.bf16.msra.mxu0 0
  %474 = vmatprep.subr.bf16.mxu0 0
  %475 = vmatpush1.bf16.msra.mxu0 0
  %476 = vmatprep.subr.bf16.mxu0 0
  %477 = vmatpush1.bf16.msra.mxu0 0
  %478 = vmatprep.subr.bf16.mxu0 0
  %479 = vmatpush1.bf16.msra.mxu0 0
  %480 = vmatprep.subr.bf16.mxu0 0
  %481 = vmatpush1.bf16.msra.mxu0 0
  %482 = vmatprep.subr.bf16.mxu0 0
  %483 = vmatpush1.bf16.msra.mxu0 0
  %484 = vmatprep.subr.bf16.mxu0 0
  %485 = vmatpush1.bf16.msra.mxu0 0
  %486 = vmatprep.subr.bf16.mxu0 0
  %487 = vmatpush1.bf16.msra.mxu0 0
  %488 = vmatprep.subr.bf16.mxu0 0
  %489 = vmatpush1.bf16.msra.mxu0 0
  %490 = vmatprep.subr.bf16.mxu0 0
  %491 = vmatpush1.bf16.msra.mxu0 0
  %492 = vmatprep.subr.bf16.mxu0 0
  %493 = vmatpush1.bf16.msra.mxu0 0
  %494 = vmatprep.subr.bf16.mxu0 0
  %495 = vmatpush1.bf16.msra.mxu0 0
  %496 = vmatprep.mubr.bf16.mxu0 0
  %497 = vmatmul.mubr.bf16.gmra.mrb[0].mxu0 %v363
  %v498 = vpop.f32.mrb[0].mxu0
  %v499 = vadd.f32 %v451, %v498
  %v500 = vpop.f32.mrb[0].mxu0
  %v501 = vpop.f32.mrb[0].mxu0
  %v502 = vadd.f32 %v454, %v501
  %v503 = vpop.f32.mrb[0].mxu0
  %504 = vmatprep.mubr.bf16.mxu0 0
  %505 = vmatmul.mubr.bf16.gmra.mrb[0].mxu0 %v366
  %v506 = vpop.f32.mrb[0].mxu0
  %v507 = vadd.f32 %v459, %v506
  %v508 = vpop.f32.mrb[0].mxu0
  %v509 = vpop.f32.mrb[0].mxu0
  %v510 = vpop.f32.mrb[0].mxu0
  %511 = vdwg.mxu0
  %v512 = vmax.f32 %v499, 0.0
  %v513 = vmax.f32 %v502, 0.0
  %v514 = vmax.f32 %v507, 0.0
  %v515 = vpack.c.bf16 %v513, %v512
  %v516 = vpack.c.bf16 %v514, %v514
  %v519 = vunpack.c.l.b16 %v515
  %v520 = vunpack.c.h.b16 %v515
  %v521 = vunpack.c.l.b16 %v516
  %v522 = vpack.c.b16 %v519, %v519
  %v523 = vpack.c.b16 %v520, %v520
  %v524 = vpack.c.b16 %v521, %v521
  %528 = vst [vmem:[%s3] sm:$0xf] %v522
  %529 = vst [vmem:[%s3 + $0x4] sm:$0xf] %v523
  %530 = vst [vmem:[%s3 + $0x8] sm:$0x1] %v524
  // Predicated region
  $region14: #{forward.11} parent=0 // pred_check
    _
  $region15: #{forward.11} parent=0 // pred_check_branch
    %532 = sbr.rel (0) target = $region17
  $region16: #{forward.11} parent=0 // pred_region
    _
  $region17: #{forward.11} parent=0 // pred_fallthru
    _
  // Predicated region
  $region18: #{forward.11} parent=0 // pred_check
    _
  $region19: #{forward.11} parent=0 // pred_check_branch
    %534 = sbr.rel (0) target = $region21
  $region20: #{forward.11} parent=0 // pred_region
    _
  $region21: #{forward.11} parent=0 // pred_fallthru
    _

// kernel: forward.12
$region0: #{forward.12}
  #allocation0 [shape = 'u32[]', space=smem, size = 0x4, offset = 0x4, fixed_abs, tag = 'smem constant byte address 0x4 - core index']
  #allocation1 [shape = 'u32[144,128]{1,0:T(1,128)}', space=vmem, size = 0x12000, scoped, tag = 'internal scratch']
  %s0 = inlined_call_operand.vmem [shape: bf16[2,1152], index: 0, kind: input, shape index: {}]
  %s1 = inlined_call_operand.vmem [shape: bf16[1152,256], index: 1, kind: input, shape index: {}]
  %s2 = inlined_call_operand.vmem [shape: f32[1,256], index: 2, kind: input, shape index: {}]
  %s3 = inlined_call_operand.vmem [shape: bf16[2,256], index: 3, kind: output, shape index: {}]
  %s4 = sld [smem:[#allocation0]]
  $region86: #{forward.12} parent=0
    _
  %s6 = ssub.s32 1, %s4
  %s7 = scalar_select 0, %s6, %s4
  $region1: #{forward.12} parent=0
    #allocation2 [shape = 'u8[589824]{0}', space=vmem, size = 0x90000, scoped, tag = 'input window, operand 1']
    loop: start=0, step=1, limit=4
    $region2: #{forward.12} parent=1 // loop_pre_header
      _
    $region3: #{forward.12} parent=1 // loop_header
      %s9 = sphi 0, %s13
      %p10 = scmp.ge.s32.totalorder %s9, 4
      %s16 = sphi 0, %s28
      %s17 = sphi 0, %s24
      %s18 = sphi 0, %s16
      %s19 = sphi 0, %s17
      %s20 = sphi 0, %s18
      %s21 = sphi 0, %s19
      %s31 = sphi 0, %s33
      %s34 = sphi 0, %s31
      %s35 = sphi 0, %s34
      %s51 = sphi 0, %s35
      %s57 = sphi 0, %s59
      %s60 = sphi 0, %s57
      %s61 = sphi 0, %s60
      %s77 = sphi 0, %s61
      %s83 = sphi 0, %s85
      %s86 = sphi 0, %s83
      %s87 = sphi 0, %s86
      %s103 = sphi 0, %s87
      %s111 = sphi 0, %s113
      %s114 = sphi 0, %s111
      %s115 = sphi 0, %s114
      %s131 = sphi 0, %s115
    $region4: #{forward.12} parent=1 // loop_header_branch
      %12 = sbr.rel (%p10) target = $region8
    $region5: #{forward.12} parent=1 // loop_body
      %s14 = ssub.s32 %s9, 1
      %s15 = ssub.s32 %s9, 2
      %s22 = sadd.s32 1, %s17
      %p23 = scmp.ge.s32.totalorder %s22, 2
      %s24 = scalar_select %p23, 0, %s22
      %s25 = sadd.s32 1, %s16
      %s26 = scalar_select %p23, %s25, %s16
      %p27 = scmp.ge.s32.totalorder %s26, 1
      %s28 = scalar_select %p27, 0, %s26
      %s29 = ssub.s32 %s16, %s28
      %p30 = scmp.eq.s32.totalorder %s29, 0
      %s32 = sadd.s32 %s31, 1
      %s33 = scalar_select %p30, %s31, %s32
      %p36 = pneg %p30
      %p37 = scmp.eq.s32.totalorder %s9, 1
      %p38 = por %p36, %p37
      %p39 = scmp.ne.s32.totalorder %s31, %s34
      %p40 = scmp.eq.s32.totalorder %s9, 0
      %p41 = por %p39, %p40
      %p42 = scmp.ne.s32.totalorder %s31, %s34
      %p43 = scmp.eq.s32.totalorder %s14, 1
      %p44 = por %p42, %p43
      %p45 = scmp.ne.s32.totalorder %s34, %s35
      %p46 = scmp.eq.s32.totalorder %s14, 0
      %p47 = por %p45, %p46
      %p48 = scmp.ne.s32.totalorder %s34, %s35
      %p49 = scmp.eq.s32.totalorder %s15, 1
      %p50 = por %p48, %p49
      %p52 = scmp.ne.s32.totalorder %s35, %s51
      %p53 = scmp.eq.s32.totalorder %s15, 0
      %p54 = por %p52, %p53
      %s55 = ssub.s32 %s17, %s24
      %p56 = scmp.eq.s32.totalorder %s55, 0
      %s58 = sadd.s32 %s57, 1
      %s59 = scalar_select %p56, %s57, %s58
      %p62 = pneg %p56
      %p63 = scmp.eq.s32.totalorder %s9, 1
      %p64 = por %p62, %p63
      %p65 = scmp.ne.s32.totalorder %s57, %s60
      %p66 = scmp.eq.s32.totalorder %s9, 0
      %p67 = por %p65, %p66
      %p68 = scmp.ne.s32.totalorder %s57, %s60
      %p69 = scmp.eq.s32.totalorder %s14, 1
      %p70 = por %p68, %p69
      %p71 = scmp.ne.s32.totalorder %s60, %s61
      %p72 = scmp.eq.s32.totalorder %s14, 0
      %p73 = por %p71, %p72
      %p74 = scmp.ne.s32.totalorder %s60, %s61
      %p75 = scmp.eq.s32.totalorder %s15, 1
      %p76 = por %p74, %p75
      %p78 = scmp.ne.s32.totalorder %s61, %s77
      %p79 = scmp.eq.s32.totalorder %s15, 0
      %p80 = por %p78, %p79
      %s81 = ssub.s32 %s17, %s24
      %p82 = scmp.eq.s32.totalorder %s81, 0
      %s84 = sadd.s32 %s83, 1
      %s85 = scalar_select %p82, %s83, %s84
      %p88 = pneg %p82
      %p89 = scmp.eq.s32.totalorder %s9, 1
      %p90 = por %p88, %p89
      %p91 = scmp.ne.s32.totalorder %s83, %s86
      %p92 = scmp.eq.s32.totalorder %s9, 0
      %p93 = por %p91, %p92
      %p94 = scmp.ne.s32.totalorder %s83, %s86
      %p95 = scmp.eq.s32.totalorder %s14, 1
      %p96 = por %p94, %p95
      %p97 = scmp.ne.s32.totalorder %s86, %s87
      %p98 = scmp.eq.s32.totalorder %s14, 0
      %p99 = por %p97, %p98
      %p100 = scmp.ne.s32.totalorder %s86, %s87
      %p101 = scmp.eq.s32.totalorder %s15, 1
      %p102 = por %p100, %p101
      %p104 = scmp.ne.s32.totalorder %s87, %s103
      %p105 = scmp.eq.s32.totalorder %s15, 0
      %p106 = por %p104, %p105
      %s107 = ssub.s32 %s16, %s28
      %s108 = ssub.s32 %s17, %s24
      %s109 = sor.u32 %s107, %s108
      %p110 = scmp.eq.s32.totalorder %s109, 0
      %s112 = sadd.s32 %s111, 1
      %s113 = scalar_select %p110, %s111, %s112
      %p116 = pneg %p110
      %p117 = scmp.eq.s32.totalorder %s9, 1
      %p118 = por %p116, %p117
      %p119 = scmp.ne.s32.totalorder %s111, %s114
      %p120 = scmp.eq.s32.totalorder %s9, 0
      %p121 = por %p119, %p120
      %p122 = scmp.ne.s32.totalorder %s111, %s114
      %p123 = scmp.eq.s32.totalorder %s14, 1
      %p124 = por %p122, %p123
      %p125 = scmp.ne.s32.totalorder %s114, %s115
      %p126 = scmp.eq.s32.totalorder %s14, 0
      %p127 = por %p125, %p126
      %p128 = scmp.ne.s32.totalorder %s114, %s115
      %p129 = scmp.eq.s32.totalorder %s15, 1
      %p130 = por %p128, %p129
      %p132 = scmp.ne.s32.totalorder %s115, %s131
      %p133 = scmp.eq.s32.totalorder %s15, 0
      %p134 = por %p132, %p133
      %p135 = scmp.le.s32.totalorder 1, %s9
      %p136 = scmp.lt.s32.totalorder %s9, 3
      %p137 = pnand %p135, %p136
      %p138 = pneg %p137
      // Predicated region
      $region9: #{forward.12} parent=5 // pred_check
        _
      $region10: #{forward.12} parent=5 // pred_check_branch
        %140 = sbr.rel (%p137) target = $region12
      $region11: #{forward.12} parent=5 // pred_region
        %s141 = ssub.s32 %s9, 1
        // Predicated region
        $region13: #{forward.12} parent=11 // pred_check
          %p142 = pneg %p47
        $region14: #{forward.12} parent=11 // pred_check_branch
          %144 = sbr.rel (%p142) target = $region16
        $region15: #{forward.12} parent=11 // pred_region
          %p145 = scmp.lt.s32.totalorder %s18, 0
          %s146 = scalar_select %p145, %s18, 0
          %s147 = smul.addr %s146, 9
          %s148 = scalar_lea.vmem %s0, %s147
        $region16: #{forward.12} parent=11 // pred_fallthru
          _
      $region12: #{forward.12} parent=5 // pred_fallthru
        _
      %p149 = scmp.lt.s32.totalorder %s9, 2
      // Predicated region
      $region17: #{forward.12} parent=5 // pred_check
        %p150 = pneg %p149
      $region18: #{forward.12} parent=5 // pred_check_branch
        %152 = sbr.rel (%p150) target = $region20
      $region19: #{forward.12} parent=5 // pred_region
        // Predicated region
        $region21: #{forward.12} parent=19 // pred_check
          %p153 = pneg %p67
        $region22: #{forward.12} parent=19 // pred_check_branch
          %155 = sbr.rel (%p153) target = $region24
        $region23: #{forward.12} parent=19 // pred_region
          %s156 = sand.u32 %s57, 1
          %s157 = sand.u32 %s57, 1
          %s158 = smul.addr %s157, 576
          %s159 = scalar_lea.vmem [#allocation2], %s158
          %s160 = smul.addr %s17, 4
          %s161 = scalar_lea.vmem %s1, %s160
          // Predicated region
          $region25: #{forward.12} parent=23 // pred_check
            _
          $region26: #{forward.12} parent=23 // pred_check_branch
            %163 = sbr.rel (0) target = $region28
          $region27: #{forward.12} parent=23 // pred_region
            // Predicated region
            $region29: #{forward.12} parent=27 // pred_check
              _
            $region30: #{forward.12} parent=27 // pred_check_branch
              %165 = sbr.rel target = $region32
            $region31: #{forward.12} parent=27 // pred_region
              // Predicated region
              $region44: #{forward.12} parent=31 // pred_check
                _
              $region45: #{forward.12} parent=31 // pred_check_branch
                %466 = sbr.rel (0) target = $region47
              $region46: #{forward.12} parent=31 // pred_region
                loop: start=0, step=1, limit=1
                $region48: #{forward.12} parent=46 // loop_pre_header
                  _
                $region49: #{forward.12} parent=46 // loop_header
                  %s468 = sphi 0, %s472
                  %p469 = scmp.ge.s32.totalorder %s468, 1
                  %s473 = sphi %s161, %s161
                  %s474 = sphi %s159, %s159
                $region50: #{forward.12} parent=46 // loop_header_branch
                  %471 = sbr.rel (%p469) target = $region54
                $region51: #{forward.12} parent=46 // loop_body
                  _
                $region52: #{forward.12} parent=46 // loop_footer
                  %s472 = sadd.s32 1, %s468
                $region53: #{forward.12} parent=46 // loop_footer_branch
                  %467 = sbr.rel target = $region49
                $region54: #{forward.12} parent=46 // loop_exit
                  _
                loop: start=0, step=1, limit=1
                $region55: #{forward.12} parent=46 // loop_pre_header
                  _
                $region56: #{forward.12} parent=46 // loop_header
                  %s477 = sphi 0, %s481
                  %p478 = scmp.ge.s32.totalorder %s477, 1
                  %s482 = sphi %s161, %s161
                  %s483 = sphi %s159, %s159
                $region57: #{forward.12} parent=46 // loop_header_branch
                  %480 = sbr.rel (%p478) target = $region61
                $region58: #{forward.12} parent=46 // loop_body
                  %v484 = vld [vmem:[%s482] sm:$0xf]
                  %485 = vst [vmem:[%s483] sm:$0xf] %v484
                  %v486 = vld [vmem:[%s482 + $0x8] sm:$0xf]
                  %487 = vst [vmem:[%s483 + $0x4] sm:$0xf] %v486
                  %v488 = vld [vmem:[%s482 + $0x10] sm:$0xf]
                  %489 = vst [vmem:[%s483 + $0x8] sm:$0xf] %v488
                  %v490 = vld [vmem:[%s482 + $0x18] sm:$0xf]
                  %491 = vst [vmem:[%s483 + $0xc] sm:$0xf] %v490
                  %v492 = vld [vmem:[%s482 + $0x20] sm:$0xf]
                  %493 = vst [vmem:[%s483 + $0x10] sm:$0xf] %v492
                  %v494 = vld [vmem:[%s482 + $0x28] sm:$0xf]
                  %495 = vst [vmem:[%s483 + $0x14] sm:$0xf] %v494
                  %v496 = vld [vmem:[%s482 + $0x30] sm:$0xf]
                  %497 = vst [vmem:[%s483 + $0x18] sm:$0xf] %v496
                  %v498 = vld [vmem:[%s482 + $0x38] sm:$0xf]
                  %499 = vst [vmem:[%s483 + $0x1c] sm:$0xf] %v498
                  %v500 = vld [vmem:[%s482 + $0x40] sm:$0xf]
                  %501 = vst [vmem:[%s483 + $0x20] sm:$0xf] %v500
                  %v502 = vld [vmem:[%s482 + $0x48] sm:$0xf]
                  %503 = vst [vmem:[%s483 + $0x24] sm:$0xf] %v502
                  %v504 = vld [vmem:[%s482 + $0x50] sm:$0xf]
                  %505 = vst [vmem:[%s483 + $0x28] sm:$0xf] %v504
                  %v506 = vld [vmem:[%s482 + $0x58] sm:$0xf]
                  %507 = vst [vmem:[%s483 + $0x2c] sm:$0xf] %v506
                  %v508 = vld [vmem:[%s482 + $0x60] sm:$0xf]
                  %509 = vst [vmem:[%s483 + $0x30] sm:$0xf] %v508
                  %v510 = vld [vmem:[%s482 + $0x68] sm:$0xf]
                  %511 = vst [vmem:[%s483 + $0x34] sm:$0xf] %v510
                  %v512 = vld [vmem:[%s482 + $0x70] sm:$0xf]
                  %513 = vst [vmem:[%s483 + $0x38] sm:$0xf] %v512
                  %v514 = vld [vmem:[%s482 + $0x78] sm:$0xf]
                  %515 = vst [vmem:[%s483 + $0x3c] sm:$0xf] %v514
                  %v516 = vld [vmem:[%s482 + $0x80] sm:$0xf]
                  %517 = vst [vmem:[%s483 + $0x40] sm:$0xf] %v516
                  %v518 = vld [vmem:[%s482 + $0x88] sm:$0xf]
                  %519 = vst [vmem:[%s483 + $0x44] sm:$0xf] %v518
                  %v520 = vld [vmem:[%s482 + $0x90] sm:$0xf]
                  %521 = vst [vmem:[%s483 + $0x48] sm:$0xf] %v520
                  %v522 = vld [vmem:[%s482 + $0x98] sm:$0xf]
                  %523 = vst [vmem:[%s483 + $0x4c] sm:$0xf] %v522
                  %v524 = vld [vmem:[%s482 + $0xa0] sm:$0xf]
                  %525 = vst [vmem:[%s483 + $0x50] sm:$0xf] %v524
                  %v526 = vld [vmem:[%s482 + $0xa8] sm:$0xf]
                  %527 = vst [vmem:[%s483 + $0x54] sm:$0xf] %v526
                  %v528 = vld [vmem:[%s482 + $0xb0] sm:$0xf]
                  %529 = vst [vmem:[%s483 + $0x58] sm:$0xf] %v528
                  %v530 = vld [vmem:[%s482 + $0xb8] sm:$0xf]
                  %531 = vst [vmem:[%s483 + $0x5c] sm:$0xf] %v530
                  %v532 = vld [vmem:[%s482 + $0xc0] sm:$0xf]
                  %533 = vst [vmem:[%s483 + $0x60] sm:$0xf] %v532
                  %v534 = vld [vmem:[%s482 + $0xc8] sm:$0xf]
                  %535 = vst [vmem:[%s483 + $0x64] sm:$0xf] %v534
                  %v536 = vld [vmem:[%s482 + $0xd0] sm:$0xf]
                  %537 = vst [vmem:[%s483 + $0x68] sm:$0xf] %v536
                  %v538 = vld [vmem:[%s482 + $0xd8] sm:$0xf]
                  %539 = vst [vmem:[%s483 + $0x6c] sm:$0xf] %v538
                  %v540 = vld [vmem:[%s482 + $0xe0] sm:$0xf]
                  %541 = vst [vmem:[%s483 + $0x70] sm:$0xf] %v540
                  %v542 = vld [vmem:[%s482 + $0xe8] sm:$0xf]
                  %543 = vst [vmem:[%s483 + $0x74] sm:$0xf] %v542
                  %v544 = vld [vmem:[%s482 + $0xf0] sm:$0xf]
                  %545 = vst [vmem:[%s483 + $0x78] sm:$0xf] %v544
                  %v546 = vld [vmem:[%s482 + $0xf8] sm:$0xf]
                  %547 = vst [vmem:[%s483 + $0x7c] sm:$0xf] %v546
                  %v548 = vld [vmem:[%s482 + $0x100] sm:$0xf]
                  %549 = vst [vmem:[%s483 + $0x80] sm:$0xf] %v548
                  %v550 = vld [vmem:[%s482 + $0x108] sm:$0xf]
                  %551 = vst [vmem:[%s483 + $0x84] sm:$0xf] %v550
                  %v552 = vld [vmem:[%s482 + $0x110] sm:$0xf]
                  %553 = vst [vmem:[%s483 + $0x88] sm:$0xf] %v552
                  %v554 = vld [vmem:[%s482 + $0x118] sm:$0xf]
                  %555 = vst [vmem:[%s483 + $0x8c] sm:$0xf] %v554
                  %v556 = vld [vmem:[%s482 + $0x120] sm:$0xf]
                  %557 = vst [vmem:[%s483 + $0x90] sm:$0xf] %v556
                  %v558 = vld [vmem:[%s482 + $0x128] sm:$0xf]
                  %559 = vst [vmem:[%s483 + $0x94] sm:$0xf] %v558
                  %v560 = vld [vmem:[%s482 + $0x130] sm:$0xf]
                  %561 = vst [vmem:[%s483 + $0x98] sm:$0xf] %v560
                  %v562 = vld [vmem:[%s482 + $0x138] sm:$0xf]
                  %563 = vst [vmem:[%s483 + $0x9c] sm:$0xf] %v562
                  %v564 = vld [vmem:[%s482 + $0x140] sm:$0xf]
                  %565 = vst [vmem:[%s483 + $0xa0] sm:$0xf] %v564
                  %v566 = vld [vmem:[%s482 + $0x148] sm:$0xf]
                  %567 = vst [vmem:[%s483 + $0xa4] sm:$0xf] %v566
                  %v568 = vld [vmem:[%s482 + $0x150] sm:$0xf]
                  %569 = vst [vmem:[%s483 + $0xa8] sm:$0xf] %v568
                  %v570 = vld [vmem:[%s482 + $0x158] sm:$0xf]
                  %571 = vst [vmem:[%s483 + $0xac] sm:$0xf] %v570
                  %v572 = vld [vmem:[%s482 + $0x160] sm:$0xf]
                  %573 = vst [vmem:[%s483 + $0xb0] sm:$0xf] %v572
                  %v574 = vld [vmem:[%s482 + $0x168] sm:$0xf]
                  %575 = vst [vmem:[%s483 + $0xb4] sm:$0xf] %v574
                  %v576 = vld [vmem:[%s482 + $0x170] sm:$0xf]
                  %577 = vst [vmem:[%s483 + $0xb8] sm:$0xf] %v576
                  %v578 = vld [vmem:[%s482 + $0x178] sm:$0xf]
                  %579 = vst [vmem:[%s483 + $0xbc] sm:$0xf] %v578
                  %v580 = vld [vmem:[%s482 + $0x180] sm:$0xf]
                  %581 = vst [vmem:[%s483 + $0xc0] sm:$0xf] %v580
                  %v582 = vld [vmem:[%s482 + $0x188] sm:$0xf]
                  %583 = vst [vmem:[%s483 + $0xc4] sm:$0xf] %v582
                  %v584 = vld [vmem:[%s482 + $0x190] sm:$0xf]
                  %585 = vst [vmem:[%s483 + $0xc8] sm:$0xf] %v584
                  %v586 = vld [vmem:[%s482 + $0x198] sm:$0xf]
                  %587 = vst [vmem:[%s483 + $0xcc] sm:$0xf] %v586
                  %v588 = vld [vmem:[%s482 + $0x1a0] sm:$0xf]
                  %589 = vst [vmem:[%s483 + $0xd0] sm:$0xf] %v588
                  %v590 = vld [vmem:[%s482 + $0x1a8] sm:$0xf]
                  %591 = vst [vmem:[%s483 + $0xd4] sm:$0xf] %v590
                  %v592 = vld [vmem:[%s482 + $0x1b0] sm:$0xf]
                  %593 = vst [vmem:[%s483 + $0xd8] sm:$0xf] %v592
                  %v594 = vld [vmem:[%s482 + $0x1b8] sm:$0xf]
                  %595 = vst [vmem:[%s483 + $0xdc] sm:$0xf] %v594
                  %v596 = vld [vmem:[%s482 + $0x1c0] sm:$0xf]
                  %597 = vst [vmem:[%s483 + $0xe0] sm:$0xf] %v596
                  %v598 = vld [vmem:[%s482 + $0x1c8] sm:$0xf]
                  %599 = vst [vmem:[%s483 + $0xe4] sm:$0xf] %v598
                  %v600 = vld [vmem:[%s482 + $0x1d0] sm:$0xf]
                  %601 = vst [vmem:[%s483 + $0xe8] sm:$0xf] %v600
                  %v602 = vld [vmem:[%s482 + $0x1d8] sm:$0xf]
                  %603 = vst [vmem:[%s483 + $0xec] sm:$0xf] %v602
                  %v604 = vld [vmem:[%s482 + $0x1e0] sm:$0xf]
                  %605 = vst [vmem:[%s483 + $0xf0] sm:$0xf] %v604
                  %v606 = vld [vmem:[%s482 + $0x1e8] sm:$0xf]
                  %607 = vst [vmem:[%s483 + $0xf4] sm:$0xf] %v606
                  %v608 = vld [vmem:[%s482 + $0x1f0] sm:$0xf]
                  %609 = vst [vmem:[%s483 + $0xf8] sm:$0xf] %v608
                  %v610 = vld [vmem:[%s482 + $0x1f8] sm:$0xf]
                  %611 = vst [vmem:[%s483 + $0xfc] sm:$0xf] %v610
                  %v612 = vld [vmem:[%s482 + $0x200] sm:$0xf]
                  %613 = vst [vmem:[%s483 + $0x100] sm:$0xf] %v612
                  %v614 = vld [vmem:[%s482 + $0x208] sm:$0xf]
                  %615 = vst [vmem:[%s483 + $0x104] sm:$0xf] %v614
                  %v616 = vld [vmem:[%s482 + $0x210] sm:$0xf]
                  %617 = vst [vmem:[%s483 + $0x108] sm:$0xf] %v616
                  %v618 = vld [vmem:[%s482 + $0x218] sm:$0xf]
                  %619 = vst [vmem:[%s483 + $0x10c] sm:$0xf] %v618
                  %v620 = vld [vmem:[%s482 + $0x220] sm:$0xf]
                  %621 = vst [vmem:[%s483 + $0x110] sm:$0xf] %v620
                  %v622 = vld [vmem:[%s482 + $0x228] sm:$0xf]
                  %623 = vst [vmem:[%s483 + $0x114] sm:$0xf] %v622
                  %v624 = vld [vmem:[%s482 + $0x230] sm:$0xf]
                  %625 = vst [vmem:[%s483 + $0x118] sm:$0xf] %v624
                  %v626 = vld [vmem:[%s482 + $0x238] sm:$0xf]
                  %627 = vst [vmem:[%s483 + $0x11c] sm:$0xf] %v626
                  %v628 = vld [vmem:[%s482 + $0x240] sm:$0xf]
                  %629 = vst [vmem:[%s483 + $0x120] sm:$0xf] %v628
                  %v630 = vld [vmem:[%s482 + $0x248] sm:$0xf]
                  %631 = vst [vmem:[%s483 + $0x124] sm:$0xf] %v630
                  %v632 = vld [vmem:[%s482 + $0x250] sm:$0xf]
                  %633 = vst [vmem:[%s483 + $0x128] sm:$0xf] %v632
                  %v634 = vld [vmem:[%s482 + $0x258] sm:$0xf]
                  %635 = vst [vmem:[%s483 + $0x12c] sm:$0xf] %v634
                  %v636 = vld [vmem:[%s482 + $0x260] sm:$0xf]
                  %637 = vst [vmem:[%s483 + $0x130] sm:$0xf] %v636
                  %v638 = vld [vmem:[%s482 + $0x268] sm:$0xf]
                  %639 = vst [vmem:[%s483 + $0x134] sm:$0xf] %v638
                  %v640 = vld [vmem:[%s482 + $0x270] sm:$0xf]
                  %641 = vst [vmem:[%s483 + $0x138] sm:$0xf] %v640
                  %v642 = vld [vmem:[%s482 + $0x278] sm:$0xf]
                  %643 = vst [vmem:[%s483 + $0x13c] sm:$0xf] %v642
                  %v644 = vld [vmem:[%s482 + $0x280] sm:$0xf]
                  %645 = vst [vmem:[%s483 + $0x140] sm:$0xf] %v644
                  %v646 = vld [vmem:[%s482 + $0x288] sm:$0xf]
                  %647 = vst [vmem:[%s483 + $0x144] sm:$0xf] %v646
                  %v648 = vld [vmem:[%s482 + $0x290] sm:$0xf]
                  %649 = vst [vmem:[%s483 + $0x148] sm:$0xf] %v648
                  %v650 = vld [vmem:[%s482 + $0x298] sm:$0xf]
                  %651 = vst [vmem:[%s483 + $0x14c] sm:$0xf] %v650
                  %v652 = vld [vmem:[%s482 + $0x2a0] sm:$0xf]
                  %653 = vst [vmem:[%s483 + $0x150] sm:$0xf] %v652
                  %v654 = vld [vmem:[%s482 + $0x2a8] sm:$0xf]
                  %655 = vst [vmem:[%s483 + $0x154] sm:$0xf] %v654
                  %v656 = vld [vmem:[%s482 + $0x2b0] sm:$0xf]
                  %657 = vst [vmem:[%s483 + $0x158] sm:$0xf] %v656
                  %v658 = vld [vmem:[%s482 + $0x2b8] sm:$0xf]
                  %659 = vst [vmem:[%s483 + $0x15c] sm:$0xf] %v658
                  %v660 = vld [vmem:[%s482 + $0x2c0] sm:$0xf]
                  %661 = vst [vmem:[%s483 + $0x160] sm:$0xf] %v660
                  %v662 = vld [vmem:[%s482 + $0x2c8] sm:$0xf]
                  %663 = vst [vmem:[%s483 + $0x164] sm:$0xf] %v662
                  %v664 = vld [vmem:[%s482 + $0x2d0] sm:$0xf]
                  %665 = vst [vmem:[%s483 + $0x168] sm:$0xf] %v664
                  %v666 = vld [vmem:[%s482 + $0x2d8] sm:$0xf]
                  %667 = vst [vmem:[%s483 + $0x16c] sm:$0xf] %v666
                  %v668 = vld [vmem:[%s482 + $0x2e0] sm:$0xf]
                  %669 = vst [vmem:[%s483 + $0x170] sm:$0xf] %v668
                  %v670 = vld [vmem:[%s482 + $0x2e8] sm:$0xf]
                  %671 = vst [vmem:[%s483 + $0x174] sm:$0xf] %v670
                  %v672 = vld [vmem:[%s482 + $0x2f0] sm:$0xf]
                  %673 = vst [vmem:[%s483 + $0x178] sm:$0xf] %v672
                  %v674 = vld [vmem:[%s482 + $0x2f8] sm:$0xf]
                  %675 = vst [vmem:[%s483 + $0x17c] sm:$0xf] %v674
                  %v676 = vld [vmem:[%s482 + $0x300] sm:$0xf]
                  %677 = vst [vmem:[%s483 + $0x180] sm:$0xf] %v676
                  %v678 = vld [vmem:[%s482 + $0x308] sm:$0xf]
                  %679 = vst [vmem:[%s483 + $0x184] sm:$0xf] %v678
                  %v680 = vld [vmem:[%s482 + $0x310] sm:$0xf]
                  %681 = vst [vmem:[%s483 + $0x188] sm:$0xf] %v680
                  %v682 = vld [vmem:[%s482 + $0x318] sm:$0xf]
                  %683 = vst [vmem:[%s483 + $0x18c] sm:$0xf] %v682
                  %v684 = vld [vmem:[%s482 + $0x320] sm:$0xf]
                  %685 = vst [vmem:[%s483 + $0x190] sm:$0xf] %v684
                  %v686 = vld [vmem:[%s482 + $0x328] sm:$0xf]
                  %687 = vst [vmem:[%s483 + $0x194] sm:$0xf] %v686
                  %v688 = vld [vmem:[%s482 + $0x330] sm:$0xf]
                  %689 = vst [vmem:[%s483 + $0x198] sm:$0xf] %v688
                  %v690 = vld [vmem:[%s482 + $0x338] sm:$0xf]
                  %691 = vst [vmem:[%s483 + $0x19c] sm:$0xf] %v690
                  %v692 = vld [vmem:[%s482 + $0x340] sm:$0xf]
                  %693 = vst [vmem:[%s483 + $0x1a0] sm:$0xf] %v692
                  %v694 = vld [vmem:[%s482 + $0x348] sm:$0xf]
                  %695 = vst [vmem:[%s483 + $0x1a4] sm:$0xf] %v694
                  %v696 = vld [vmem:[%s482 + $0x350] sm:$0xf]
                  %697 = vst [vmem:[%s483 + $0x1a8] sm:$0xf] %v696
                  %v698 = vld [vmem:[%s482 + $0x358] sm:$0xf]
                  %699 = vst [vmem:[%s483 + $0x1ac] sm:$0xf] %v698
                  %v700 = vld [vmem:[%s482 + $0x360] sm:$0xf]
                  %701 = vst [vmem:[%s483 + $0x1b0] sm:$0xf] %v700
                  %v702 = vld [vmem:[%s482 + $0x368] sm:$0xf]
                  %703 = vst [vmem:[%s483 + $0x1b4] sm:$0xf] %v702
                  %v704 = vld [vmem:[%s482 + $0x370] sm:$0xf]
                  %705 = vst [vmem:[%s483 + $0x1b8] sm:$0xf] %v704
                  %v706 = vld [vmem:[%s482 + $0x378] sm:$0xf]
                  %707 = vst [vmem:[%s483 + $0x1bc] sm:$0xf] %v706
                  %v708 = vld [vmem:[%s482 + $0x380] sm:$0xf]
                  %709 = vst [vmem:[%s483 + $0x1c0] sm:$0xf] %v708
                  %v710 = vld [vmem:[%s482 + $0x388] sm:$0xf]
                  %711 = vst [vmem:[%s483 + $0x1c4] sm:$0xf] %v710
                  %v712 = vld [vmem:[%s482 + $0x390] sm:$0xf]
                  %713 = vst [vmem:[%s483 + $0x1c8] sm:$0xf] %v712
                  %v714 = vld [vmem:[%s482 + $0x398] sm:$0xf]
                  %715 = vst [vmem:[%s483 + $0x1cc] sm:$0xf] %v714
                  %v716 = vld [vmem:[%s482 + $0x3a0] sm:$0xf]
                  %717 = vst [vmem:[%s483 + $0x1d0] sm:$0xf] %v716
                  %v718 = vld [vmem:[%s482 + $0x3a8] sm:$0xf]
                  %719 = vst [vmem:[%s483 + $0x1d4] sm:$0xf] %v718
                  %v720 = vld [vmem:[%s482 + $0x3b0] sm:$0xf]
                  %721 = vst [vmem:[%s483 + $0x1d8] sm:$0xf] %v720
                  %v722 = vld [vmem:[%s482 + $0x3b8] sm:$0xf]
                  %723 = vst [vmem:[%s483 + $0x1dc] sm:$0xf] %v722
                  %v724 = vld [vmem:[%s482 + $0x3c0] sm:$0xf]
                  %725 = vst [vmem:[%s483 + $0x1e0] sm:$0xf] %v724
                  %v726 = vld [vmem:[%s482 + $0x3c8] sm:$0xf]
                  %727 = vst [vmem:[%s483 + $0x1e4] sm:$0xf] %v726
                  %v728 = vld [vmem:[%s482 + $0x3d0] sm:$0xf]
                  %729 = vst [vmem:[%s483 + $0x1e8] sm:$0xf] %v728
                  %v730 = vld [vmem:[%s482 + $0x3d8] sm:$0xf]
                  %731 = vst [vmem:[%s483 + $0x1ec] sm:$0xf] %v730
                  %v732 = vld [vmem:[%s482 + $0x3e0] sm:$0xf]
                  %733 = vst [vmem:[%s483 + $0x1f0] sm:$0xf] %v732
                  %v734 = vld [vmem:[%s482 + $0x3e8] sm:$0xf]
                  %735 = vst [vmem:[%s483 + $0x1f4] sm:$0xf] %v734
                  %v736 = vld [vmem:[%s482 + $0x3f0] sm:$0xf]
                  %737 = vst [vmem:[%s483 + $0x1f8] sm:$0xf] %v736
                  %v738 = vld [vmem:[%s482 + $0x3f8] sm:$0xf]
                  %739 = vst [vmem:[%s483 + $0x1fc] sm:$0xf] %v738
                  %v740 = vld [vmem:[%s482 + $0x400] sm:$0xf]
                  %741 = vst [vmem:[%s483 + $0x200] sm:$0xf] %v740
                  %v742 = vld [vmem:[%s482 + $0x408] sm:$0xf]
                  %743 = vst [vmem:[%s483 + $0x204] sm:$0xf] %v742
                  %v744 = vld [vmem:[%s482 + $0x410] sm:$0xf]
                  %745 = vst [vmem:[%s483 + $0x208] sm:$0xf] %v744
                  %v746 = vld [vmem:[%s482 + $0x418] sm:$0xf]
                  %747 = vst [vmem:[%s483 + $0x20c] sm:$0xf] %v746
                  %v748 = vld [vmem:[%s482 + $0x420] sm:$0xf]
                  %749 = vst [vmem:[%s483 + $0x210] sm:$0xf] %v748
                  %v750 = vld [vmem:[%s482 + $0x428] sm:$0xf]
                  %751 = vst [vmem:[%s483 + $0x214] sm:$0xf] %v750
                  %v752 = vld [vmem:[%s482 + $0x430] sm:$0xf]
                  %753 = vst [vmem:[%s483 + $0x218] sm:$0xf] %v752
                  %v754 = vld [vmem:[%s482 + $0x438] sm:$0xf]
                  %755 = vst [vmem:[%s483 + $0x21c] sm:$0xf] %v754
                  %v756 = vld [vmem:[%s482 + $0x440] sm:$0xf]
                  %757 = vst [vmem:[%s483 + $0x220] sm:$0xf] %v756
                  %v758 = vld [vmem:[%s482 + $0x448] sm:$0xf]
                  %759 = vst [vmem:[%s483 + $0x224] sm:$0xf] %v758
                  %v760 = vld [vmem:[%s482 + $0x450] sm:$0xf]
                  %761 = vst [vmem:[%s483 + $0x228] sm:$0xf] %v760
                  %v762 = vld [vmem:[%s482 + $0x458] sm:$0xf]
                  %763 = vst [vmem:[%s483 + $0x22c] sm:$0xf] %v762
                  %v764 = vld [vmem:[%s482 + $0x460] sm:$0xf]
                  %765 = vst [vmem:[%s483 + $0x230] sm:$0xf] %v764
                  %v766 = vld [vmem:[%s482 + $0x468] sm:$0xf]
                  %767 = vst [vmem:[%s483 + $0x234] sm:$0xf] %v766
                  %v768 = vld [vmem:[%s482 + $0x470] sm:$0xf]
                  %769 = vst [vmem:[%s483 + $0x238] sm:$0xf] %v768
                  %v770 = vld [vmem:[%s482 + $0x478] sm:$0xf]
                  %771 = vst [vmem:[%s483 + $0x23c] sm:$0xf] %v770
                $region59: #{forward.12} parent=46 // loop_footer
                  %s481 = sadd.s32 1, %s477
                $region60: #{forward.12} parent=46 // loop_footer_branch
                  %476 = sbr.rel target = $region56
                $region61: #{forward.12} parent=46 // loop_exit
                  _
              $region47: #{forward.12} parent=31 // pred_fallthru
                _
            $region32: #{forward.12} parent=27 // pred_fallthru
              _
            // Predicated region
            $region33: #{forward.12} parent=27 // pred_check
              _
            $region34: #{forward.12} parent=27 // pred_check_branch
              %167 = sbr.rel (0) target = $region36
            $region35: #{forward.12} parent=27 // pred_region
              loop: start=0, step=1, limit=1
              $region37: #{forward.12} parent=35 // loop_pre_header
                _
              $region38: #{forward.12} parent=35 // loop_header
                %s170 = sphi 0, %s174
                %p171 = scmp.ge.s32.totalorder %s170, 1
                %s175 = sphi %s161, %s161
                %s176 = sphi %s159, %s159
              $region39: #{forward.12} parent=35 // loop_header_branch
                %173 = sbr.rel (%p171) target = $region43
              $region40: #{forward.12} parent=35 // loop_body
                %v177 = vld [vmem:[%s175] sm:$0xf]
                %178 = vst [vmem:[%s176] sm:$0xf] %v177
                %v179 = vld [vmem:[%s175 + $0x8] sm:$0xf]
                %180 = vst [vmem:[%s176 + $0x4] sm:$0xf] %v179
                %v181 = vld [vmem:[%s175 + $0x10] sm:$0xf]
                %182 = vst [vmem:[%s176 + $0x8] sm:$0xf] %v181
                %v183 = vld [vmem:[%s175 + $0x18] sm:$0xf]
                %184 = vst [vmem:[%s176 + $0xc] sm:$0xf] %v183
                %v185 = vld [vmem:[%s175 + $0x20] sm:$0xf]
                %186 = vst [vmem:[%s176 + $0x10] sm:$0xf] %v185
                %v187 = vld [vmem:[%s175 + $0x28] sm:$0xf]
                %188 = vst [vmem:[%s176 + $0x14] sm:$0xf] %v187
                %v189 = vld [vmem:[%s175 + $0x30] sm:$0xf]
                %190 = vst [vmem:[%s176 + $0x18] sm:$0xf] %v189
                %v191 = vld [vmem:[%s175 + $0x38] sm:$0xf]
                %192 = vst [vmem:[%s176 + $0x1c] sm:$0xf] %v191
                %v193 = vld [vmem:[%s175 + $0x40] sm:$0xf]
                %194 = vst [vmem:[%s176 + $0x20] sm:$0xf] %v193
                %v195 = vld [vmem:[%s175 + $0x48] sm:$0xf]
                %196 = vst [vmem:[%s176 + $0x24] sm:$0xf] %v195
                %v197 = vld [vmem:[%s175 + $0x50] sm:$0xf]
                %198 = vst [vmem:[%s176 + $0x28] sm:$0xf] %v197
                %v199 = vld [vmem:[%s175 + $0x58] sm:$0xf]
                %200 = vst [vmem:[%s176 + $0x2c] sm:$0xf] %v199
                %v201 = vld [vmem:[%s175 + $0x60] sm:$0xf]
                %202 = vst [vmem:[%s176 + $0x30] sm:$0xf] %v201
                %v203 = vld [vmem:[%s175 + $0x68] sm:$0xf]
                %204 = vst [vmem:[%s176 + $0x34] sm:$0xf] %v203
                %v205 = vld [vmem:[%s175 + $0x70] sm:$0xf]
                %206 = vst [vmem:[%s176 + $0x38] sm:$0xf] %v205
                %v207 = vld [vmem:[%s175 + $0x78] sm:$0xf]
                %208 = vst [vmem:[%s176 + $0x3c] sm:$0xf] %v207
                %v209 = vld [vmem:[%s175 + $0x80] sm:$0xf]
                %210 = vst [vmem:[%s176 + $0x40] sm:$0xf] %v209
                %v211 = vld [vmem:[%s175 + $0x88] sm:$0xf]
                %212 = vst [vmem:[%s176 + $0x44] sm:$0xf] %v211
                %v213 = vld [vmem:[%s175 + $0x90] sm:$0xf]
                %214 = vst [vmem:[%s176 + $0x48] sm:$0xf] %v213
                %v215 = vld [vmem:[%s175 + $0x98] sm:$0xf]
                %216 = vst [vmem:[%s176 + $0x4c] sm:$0xf] %v215
                %v217 = vld [vmem:[%s175 + $0xa0] sm:$0xf]
                %218 = vst [vmem:[%s176 + $0x50] sm:$0xf] %v217
                %v219 = vld [vmem:[%s175 + $0xa8] sm:$0xf]
                %220 = vst [vmem:[%s176 + $0x54] sm:$0xf] %v219
                %v221 = vld [vmem:[%s175 + $0xb0] sm:$0xf]
                %222 = vst [vmem:[%s176 + $0x58] sm:$0xf] %v221
                %v223 = vld [vmem:[%s175 + $0xb8] sm:$0xf]
                %224 = vst [vmem:[%s176 + $0x5c] sm:$0xf] %v223
                %v225 = vld [vmem:[%s175 + $0xc0] sm:$0xf]
                %226 = vst [vmem:[%s176 + $0x60] sm:$0xf] %v225
                %v227 = vld [vmem:[%s175 + $0xc8] sm:$0xf]
                %228 = vst [vmem:[%s176 + $0x64] sm:$0xf] %v227
                %v229 = vld [vmem:[%s175 + $0xd0] sm:$0xf]
                %230 = vst [vmem:[%s176 + $0x68] sm:$0xf] %v229
                %v231 = vld [vmem:[%s175 + $0xd8] sm:$0xf]
                %232 = vst [vmem:[%s176 + $0x6c] sm:$0xf] %v231
                %v233 = vld [vmem:[%s175 + $0xe0] sm:$0xf]
                %234 = vst [vmem:[%s176 + $0x70] sm:$0xf] %v233
                %v235 = vld [vmem:[%s175 + $0xe8] sm:$0xf]
                %236 = vst [vmem:[%s176 + $0x74] sm:$0xf] %v235
                %v237 = vld [vmem:[%s175 + $0xf0] sm:$0xf]
                %238 = vst [vmem:[%s176 + $0x78] sm:$0xf] %v237
                %v239 = vld [vmem:[%s175 + $0xf8] sm:$0xf]
                %240 = vst [vmem:[%s176 + $0x7c] sm:$0xf] %v239
                %v241 = vld [vmem:[%s175 + $0x100] sm:$0xf]
                %242 = vst [vmem:[%s176 + $0x80] sm:$0xf] %v241
                %v243 = vld [vmem:[%s175 + $0x108] sm:$0xf]
                %244 = vst [vmem:[%s176 + $0x84] sm:$0xf] %v243
                %v245 = vld [vmem:[%s175 + $0x110] sm:$0xf]
                %246 = vst [vmem:[%s176 + $0x88] sm:$0xf] %v245
                %v247 = vld [vmem:[%s175 + $0x118] sm:$0xf]
                %248 = vst [vmem:[%s176 + $0x8c] sm:$0xf] %v247
                %v249 = vld [vmem:[%s175 + $0x120] sm:$0xf]
                %250 = vst [vmem:[%s176 + $0x90] sm:$0xf] %v249
                %v251 = vld [vmem:[%s175 + $0x128] sm:$0xf]
                %252 = vst [vmem:[%s176 + $0x94] sm:$0xf] %v251
                %v253 = vld [vmem:[%s175 + $0x130] sm:$0xf]
                %254 = vst [vmem:[%s176 + $0x98] sm:$0xf] %v253
                %v255 = vld [vmem:[%s175 + $0x138] sm:$0xf]
                %256 = vst [vmem:[%s176 + $0x9c] sm:$0xf] %v255
                %v257 = vld [vmem:[%s175 + $0x140] sm:$0xf]
                %258 = vst [vmem:[%s176 + $0xa0] sm:$0xf] %v257
                %v259 = vld [vmem:[%s175 + $0x148] sm:$0xf]
                %260 = vst [vmem:[%s176 + $0xa4] sm:$0xf] %v259
                %v261 = vld [vmem:[%s175 + $0x150] sm:$0xf]
                %262 = vst [vmem:[%s176 + $0xa8] sm:$0xf] %v261
                %v263 = vld [vmem:[%s175 + $0x158] sm:$0xf]
                %264 = vst [vmem:[%s176 + $0xac] sm:$0xf] %v263
                %v265 = vld [vmem:[%s175 + $0x160] sm:$0xf]
                %266 = vst [vmem:[%s176 + $0xb0] sm:$0xf] %v265
                %v267 = vld [vmem:[%s175 + $0x168] sm:$0xf]
                %268 = vst [vmem:[%s176 + $0xb4] sm:$0xf] %v267
                %v269 = vld [vmem:[%s175 + $0x170] sm:$0xf]
                %270 = vst [vmem:[%s176 + $0xb8] sm:$0xf] %v269
                %v271 = vld [vmem:[%s175 + $0x178] sm:$0xf]
                %272 = vst [vmem:[%s176 + $0xbc] sm:$0xf] %v271
                %v273 = vld [vmem:[%s175 + $0x180] sm:$0xf]
                %274 = vst [vmem:[%s176 + $0xc0] sm:$0xf] %v273
                %v275 = vld [vmem:[%s175 + $0x188] sm:$0xf]
                %276 = vst [vmem:[%s176 + $0xc4] sm:$0xf] %v275
                %v277 = vld [vmem:[%s175 + $0x190] sm:$0xf]
                %278 = vst [vmem:[%s176 + $0xc8] sm:$0xf] %v277
                %v279 = vld [vmem:[%s175 + $0x198] sm:$0xf]
                %280 = vst [vmem:[%s176 + $0xcc] sm:$0xf] %v279
                %v281 = vld [vmem:[%s175 + $0x1a0] sm:$0xf]
                %282 = vst [vmem:[%s176 + $0xd0] sm:$0xf] %v281
                %v283 = vld [vmem:[%s175 + $0x1a8] sm:$0xf]
                %284 = vst [vmem:[%s176 + $0xd4] sm:$0xf] %v283
                %v285 = vld [vmem:[%s175 + $0x1b0] sm:$0xf]
                %286 = vst [vmem:[%s176 + $0xd8] sm:$0xf] %v285
                %v287 = vld [vmem:[%s175 + $0x1b8] sm:$0xf]
                %288 = vst [vmem:[%s176 + $0xdc] sm:$0xf] %v287
                %v289 = vld [vmem:[%s175 + $0x1c0] sm:$0xf]
                %290 = vst [vmem:[%s176 + $0xe0] sm:$0xf] %v289
                %v291 = vld [vmem:[%s175 + $0x1c8] sm:$0xf]
                %292 = vst [vmem:[%s176 + $0xe4] sm:$0xf] %v291
                %v293 = vld [vmem:[%s175 + $0x1d0] sm:$0xf]
                %294 = vst [vmem:[%s176 + $0xe8] sm:$0xf] %v293
                %v295 = vld [vmem:[%s175 + $0x1d8] sm:$0xf]
                %296 = vst [vmem:[%s176 + $0xec] sm:$0xf] %v295
                %v297 = vld [vmem:[%s175 + $0x1e0] sm:$0xf]
                %298 = vst [vmem:[%s176 + $0xf0] sm:$0xf] %v297
                %v299 = vld [vmem:[%s175 + $0x1e8] sm:$0xf]
                %300 = vst [vmem:[%s176 + $0xf4] sm:$0xf] %v299
                %v301 = vld [vmem:[%s175 + $0x1f0] sm:$0xf]
                %302 = vst [vmem:[%s176 + $0xf8] sm:$0xf] %v301
                %v303 = vld [vmem:[%s175 + $0x1f8] sm:$0xf]
                %304 = vst [vmem:[%s176 + $0xfc] sm:$0xf] %v303
                %v305 = vld [vmem:[%s175 + $0x200] sm:$0xf]
                %306 = vst [vmem:[%s176 + $0x100] sm:$0xf] %v305
                %v307 = vld [vmem:[%s175 + $0x208] sm:$0xf]
                %308 = vst [vmem:[%s176 + $0x104] sm:$0xf] %v307
                %v309 = vld [vmem:[%s175 + $0x210] sm:$0xf]
                %310 = vst [vmem:[%s176 + $0x108] sm:$0xf] %v309
                %v311 = vld [vmem:[%s175 + $0x218] sm:$0xf]
                %312 = vst [vmem:[%s176 + $0x10c] sm:$0xf] %v311
                %v313 = vld [vmem:[%s175 + $0x220] sm:$0xf]
                %314 = vst [vmem:[%s176 + $0x110] sm:$0xf] %v313
                %v315 = vld [vmem:[%s175 + $0x228] sm:$0xf]
                %316 = vst [vmem:[%s176 + $0x114] sm:$0xf] %v315
                %v317 = vld [vmem:[%s175 + $0x230] sm:$0xf]
                %318 = vst [vmem:[%s176 + $0x118] sm:$0xf] %v317
                %v319 = vld [vmem:[%s175 + $0x238] sm:$0xf]
                %320 = vst [vmem:[%s176 + $0x11c] sm:$0xf] %v319
                %v321 = vld [vmem:[%s175 + $0x240] sm:$0xf]
                %322 = vst [vmem:[%s176 + $0x120] sm:$0xf] %v321
                %v323 = vld [vmem:[%s175 + $0x248] sm:$0xf]
                %324 = vst [vmem:[%s176 + $0x124] sm:$0xf] %v323
                %v325 = vld [vmem:[%s175 + $0x250] sm:$0xf]
                %326 = vst [vmem:[%s176 + $0x128] sm:$0xf] %v325
                %v327 = vld [vmem:[%s175 + $0x258] sm:$0xf]
                %328 = vst [vmem:[%s176 + $0x12c] sm:$0xf] %v327
                %v329 = vld [vmem:[%s175 + $0x260] sm:$0xf]
                %330 = vst [vmem:[%s176 + $0x130] sm:$0xf] %v329
                %v331 = vld [vmem:[%s175 + $0x268] sm:$0xf]
                %332 = vst [vmem:[%s176 + $0x134] sm:$0xf] %v331
                %v333 = vld [vmem:[%s175 + $0x270] sm:$0xf]
                %334 = vst [vmem:[%s176 + $0x138] sm:$0xf] %v333
                %v335 = vld [vmem:[%s175 + $0x278] sm:$0xf]
                %336 = vst [vmem:[%s176 + $0x13c] sm:$0xf] %v335
                %v337 = vld [vmem:[%s175 + $0x280] sm:$0xf]
                %338 = vst [vmem:[%s176 + $0x140] sm:$0xf] %v337
                %v339 = vld [vmem:[%s175 + $0x288] sm:$0xf]
                %340 = vst [vmem:[%s176 + $0x144] sm:$0xf] %v339
                %v341 = vld [vmem:[%s175 + $0x290] sm:$0xf]
                %342 = vst [vmem:[%s176 + $0x148] sm:$0xf] %v341
                %v343 = vld [vmem:[%s175 + $0x298] sm:$0xf]
                %344 = vst [vmem:[%s176 + $0x14c] sm:$0xf] %v343
                %v345 = vld [vmem:[%s175 + $0x2a0] sm:$0xf]
                %346 = vst [vmem:[%s176 + $0x150] sm:$0xf] %v345
                %v347 = vld [vmem:[%s175 + $0x2a8] sm:$0xf]
                %348 = vst [vmem:[%s176 + $0x154] sm:$0xf] %v347
                %v349 = vld [vmem:[%s175 + $0x2b0] sm:$0xf]
                %350 = vst [vmem:[%s176 + $0x158] sm:$0xf] %v349
                %v351 = vld [vmem:[%s175 + $0x2b8] sm:$0xf]
                %352 = vst [vmem:[%s176 + $0x15c] sm:$0xf] %v351
                %v353 = vld [vmem:[%s175 + $0x2c0] sm:$0xf]
                %354 = vst [vmem:[%s176 + $0x160] sm:$0xf] %v353
                %v355 = vld [vmem:[%s175 + $0x2c8] sm:$0xf]
                %356 = vst [vmem:[%s176 + $0x164] sm:$0xf] %v355
                %v357 = vld [vmem:[%s175 + $0x2d0] sm:$0xf]
                %358 = vst [vmem:[%s176 + $0x168] sm:$0xf] %v357
                %v359 = vld [vmem:[%s175 + $0x2d8] sm:$0xf]
                %360 = vst [vmem:[%s176 + $0x16c] sm:$0xf] %v359
                %v361 = vld [vmem:[%s175 + $0x2e0] sm:$0xf]
                %362 = vst [vmem:[%s176 + $0x170] sm:$0xf] %v361
                %v363 = vld [vmem:[%s175 + $0x2e8] sm:$0xf]
                %364 = vst [vmem:[%s176 + $0x174] sm:$0xf] %v363
                %v365 = vld [vmem:[%s175 + $0x2f0] sm:$0xf]
                %366 = vst [vmem:[%s176 + $0x178] sm:$0xf] %v365
                %v367 = vld [vmem:[%s175 + $0x2f8] sm:$0xf]
                %368 = vst [vmem:[%s176 + $0x17c] sm:$0xf] %v367
                %v369 = vld [vmem:[%s175 + $0x300] sm:$0xf]
                %370 = vst [vmem:[%s176 + $0x180] sm:$0xf] %v369
                %v371 = vld [vmem:[%s175 + $0x308] sm:$0xf]
                %372 = vst [vmem:[%s176 + $0x184] sm:$0xf] %v371
                %v373 = vld [vmem:[%s175 + $0x310] sm:$0xf]
                %374 = vst [vmem:[%s176 + $0x188] sm:$0xf] %v373
                %v375 = vld [vmem:[%s175 + $0x318] sm:$0xf]
                %376 = vst [vmem:[%s176 + $0x18c] sm:$0xf] %v375
                %v377 = vld [vmem:[%s175 + $0x320] sm:$0xf]
                %378 = vst [vmem:[%s176 + $0x190] sm:$0xf] %v377
                %v379 = vld [vmem:[%s175 + $0x328] sm:$0xf]
                %380 = vst [vmem:[%s176 + $0x194] sm:$0xf] %v379
                %v381 = vld [vmem:[%s175 + $0x330] sm:$0xf]
                %382 = vst [vmem:[%s176 + $0x198] sm:$0xf] %v381
                %v383 = vld [vmem:[%s175 + $0x338] sm:$0xf]
                %384 = vst [vmem:[%s176 + $0x19c] sm:$0xf] %v383
                %v385 = vld [vmem:[%s175 + $0x340] sm:$0xf]
                %386 = vst [vmem:[%s176 + $0x1a0] sm:$0xf] %v385
                %v387 = vld [vmem:[%s175 + $0x348] sm:$0xf]
                %388 = vst [vmem:[%s176 + $0x1a4] sm:$0xf] %v387
                %v389 = vld [vmem:[%s175 + $0x350] sm:$0xf]
                %390 = vst [vmem:[%s176 + $0x1a8] sm:$0xf] %v389
                %v391 = vld [vmem:[%s175 + $0x358] sm:$0xf]
                %392 = vst [vmem:[%s176 + $0x1ac] sm:$0xf] %v391
                %v393 = vld [vmem:[%s175 + $0x360] sm:$0xf]
                %394 = vst [vmem:[%s176 + $0x1b0] sm:$0xf] %v393
                %v395 = vld [vmem:[%s175 + $0x368] sm:$0xf]
                %396 = vst [vmem:[%s176 + $0x1b4] sm:$0xf] %v395
                %v397 = vld [vmem:[%s175 + $0x370] sm:$0xf]
                %398 = vst [vmem:[%s176 + $0x1b8] sm:$0xf] %v397
                %v399 = vld [vmem:[%s175 + $0x378] sm:$0xf]
                %400 = vst [vmem:[%s176 + $0x1bc] sm:$0xf] %v399
                %v401 = vld [vmem:[%s175 + $0x380] sm:$0xf]
                %402 = vst [vmem:[%s176 + $0x1c0] sm:$0xf] %v401
                %v403 = vld [vmem:[%s175 + $0x388] sm:$0xf]
                %404 = vst [vmem:[%s176 + $0x1c4] sm:$0xf] %v403
                %v405 = vld [vmem:[%s175 + $0x390] sm:$0xf]
                %406 = vst [vmem:[%s176 + $0x1c8] sm:$0xf] %v405
                %v407 = vld [vmem:[%s175 + $0x398] sm:$0xf]
                %408 = vst [vmem:[%s176 + $0x1cc] sm:$0xf] %v407
                %v409 = vld [vmem:[%s175 + $0x3a0] sm:$0xf]
                %410 = vst [vmem:[%s176 + $0x1d0] sm:$0xf] %v409
                %v411 = vld [vmem:[%s175 + $0x3a8] sm:$0xf]
                %412 = vst [vmem:[%s176 + $0x1d4] sm:$0xf] %v411
                %v413 = vld [vmem:[%s175 + $0x3b0] sm:$0xf]
                %414 = vst [vmem:[%s176 + $0x1d8] sm:$0xf] %v413
                %v415 = vld [vmem:[%s175 + $0x3b8] sm:$0xf]
                %416 = vst [vmem:[%s176 + $0x1dc] sm:$0xf] %v415
                %v417 = vld [vmem:[%s175 + $0x3c0] sm:$0xf]
                %418 = vst [vmem:[%s176 + $0x1e0] sm:$0xf] %v417
                %v419 = vld [vmem:[%s175 + $0x3c8] sm:$0xf]
                %420 = vst [vmem:[%s176 + $0x1e4] sm:$0xf] %v419
                %v421 = vld [vmem:[%s175 + $0x3d0] sm:$0xf]
                %422 = vst [vmem:[%s176 + $0x1e8] sm:$0xf] %v421
                %v423 = vld [vmem:[%s175 + $0x3d8] sm:$0xf]
                %424 = vst [vmem:[%s176 + $0x1ec] sm:$0xf] %v423
                %v425 = vld [vmem:[%s175 + $0x3e0] sm:$0xf]
                %426 = vst [vmem:[%s176 + $0x1f0] sm:$0xf] %v425
                %v427 = vld [vmem:[%s175 + $0x3e8] sm:$0xf]
                %428 = vst [vmem:[%s176 + $0x1f4] sm:$0xf] %v427
                %v429 = vld [vmem:[%s175 + $0x3f0] sm:$0xf]
                %430 = vst [vmem:[%s176 + $0x1f8] sm:$0xf] %v429
                %v431 = vld [vmem:[%s175 + $0x3f8] sm:$0xf]
                %432 = vst [vmem:[%s176 + $0x1fc] sm:$0xf] %v431
                %v433 = vld [vmem:[%s175 + $0x400] sm:$0xf]
                %434 = vst [vmem:[%s176 + $0x200] sm:$0xf] %v433
                %v435 = vld [vmem:[%s175 + $0x408] sm:$0xf]
                %436 = vst [vmem:[%s176 + $0x204] sm:$0xf] %v435
                %v437 = vld [vmem:[%s175 + $0x410] sm:$0xf]
                %438 = vst [vmem:[%s176 + $0x208] sm:$0xf] %v437
                %v439 = vld [vmem:[%s175 + $0x418] sm:$0xf]
                %440 = vst [vmem:[%s176 + $0x20c] sm:$0xf] %v439
                %v441 = vld [vmem:[%s175 + $0x420] sm:$0xf]
                %442 = vst [vmem:[%s176 + $0x210] sm:$0xf] %v441
                %v443 = vld [vmem:[%s175 + $0x428] sm:$0xf]
                %444 = vst [vmem:[%s176 + $0x214] sm:$0xf] %v443
                %v445 = vld [vmem:[%s175 + $0x430] sm:$0xf]
                %446 = vst [vmem:[%s176 + $0x218] sm:$0xf] %v445
                %v447 = vld [vmem:[%s175 + $0x438] sm:$0xf]
                %448 = vst [vmem:[%s176 + $0x21c] sm:$0xf] %v447
                %v449 = vld [vmem:[%s175 + $0x440] sm:$0xf]
                %450 = vst [vmem:[%s176 + $0x220] sm:$0xf] %v449
                %v451 = vld [vmem:[%s175 + $0x448] sm:$0xf]
                %452 = vst [vmem:[%s176 + $0x224] sm:$0xf] %v451
                %v453 = vld [vmem:[%s175 + $0x450] sm:$0xf]
                %454 = vst [vmem:[%s176 + $0x228] sm:$0xf] %v453
                %v455 = vld [vmem:[%s175 + $0x458] sm:$0xf]
                %456 = vst [vmem:[%s176 + $0x22c] sm:$0xf] %v455
                %v457 = vld [vmem:[%s175 + $0x460] sm:$0xf]
                %458 = vst [vmem:[%s176 + $0x230] sm:$0xf] %v457
                %v459 = vld [vmem:[%s175 + $0x468] sm:$0xf]
                %460 = vst [vmem:[%s176 + $0x234] sm:$0xf] %v459
                %v461 = vld [vmem:[%s175 + $0x470] sm:$0xf]
                %462 = vst [vmem:[%s176 + $0x238] sm:$0xf] %v461
                %v463 = vld [vmem:[%s175 + $0x478] sm:$0xf]
                %464 = vst [vmem:[%s176 + $0x23c] sm:$0xf] %v463
              $region41: #{forward.12} parent=35 // loop_footer
                %s174 = sadd.s32 1, %s170
              $region42: #{forward.12} parent=35 // loop_footer_branch
                %169 = sbr.rel target = $region38
              $region43: #{forward.12} parent=35 // loop_exit
                _
            $region36: #{forward.12} parent=27 // pred_fallthru
              _
          $region28: #{forward.12} parent=23 // pred_fallthru
            _
          %772 = vnop
        $region24: #{forward.12} parent=19 // pred_fallthru
          _
        // Predicated region
        $region62: #{forward.12} parent=19 // pred_check
          %p773 = pneg %p93
        $region63: #{forward.12} parent=19 // pred_check_branch
          %775 = sbr.rel (%p773) target = $region65
        $region64: #{forward.12} parent=19 // pred_region
          %p776 = scmp.lt.s32.totalorder %s17, 1
          %s777 = scalar_select %p776, %s17, 1
          %s778 = scalar_lea.vmem %s2, %s777
        $region65: #{forward.12} parent=19 // pred_fallthru
          _
      $region20: #{forward.12} parent=5 // pred_fallthru
        _
      %p779 = scmp.le.s32.totalorder 1, %s9
      %p780 = scmp.lt.s32.totalorder %s9, 3
      %p781 = pnand %p779, %p780
      %p782 = pneg %p781
      // Predicated region
      $region66: #{forward.12} parent=5 // pred_check
        _
      $region67: #{forward.12} parent=5 // pred_check_branch
        %784 = sbr.rel (%p781) target = $region69
      $region68: #{forward.12} parent=5 // pred_region
        %s785 = ssub.s32 %s9, 1
        %s786 = sand.u32 %s60, 1
        %s787 = sand.u32 %s60, 1
        %s788 = smul.addr %s787, 576
        %s789 = scalar_lea.vmem [#allocation2], %s788
        // Predicated region
        $region70: #{forward.12} parent=68 // pred_check
          %p790 = pneg %p73
        $region71: #{forward.12} parent=68 // pred_check_branch
          %792 = sbr.rel (%p790) target = $region73
        $region72: #{forward.12} parent=68 // pred_region
          _
        $region73: #{forward.12} parent=68 // pred_fallthru
          _
        %p793 = scmp.lt.s32.totalorder %s18, 0
        %s794 = scalar_select %p793, %s18, 0
        %s795 = smul.addr %s794, 9
        %s796 = scalar_lea.vmem %s0, %s795
        %p797 = pneg %p47
        %p798 = pneg %p44
        %s799 = sand.u32 %s60, 1
        %s800 = sand.u32 %s60, 1
        %s801 = smul.addr %s800, 576
        %s802 = scalar_lea.vmem [#allocation2], %s801
        %p803 = pneg %p73
        %p804 = pneg %p70
        %p805 = scmp.lt.s32.totalorder %s19, 1
        %s806 = scalar_select %p805, %s19, 1
        %s807 = scalar_lea.vmem %s2, %s806
        %p808 = pneg %p99
        %p809 = pneg %p96
        %p810 = pneg %p127
        %p811 = pneg %p124
        %p812 = scmp.lt.s32.totalorder %s18, 0
        %s813 = scalar_select %p812, %s18, 0
        %p814 = scmp.lt.s32.totalorder %s19, 1
        %s815 = scalar_select %p814, %s19, 1
        %s816 = smul.addr %s813, 2
        %s817 = sadd.s32 %s815, %s816
        %s818 = scalar_lea.vmem %s3, %s817
        %p819 = scmp.lt.s32.totalorder %s18, 0
        %s820 = scalar_select %p819, %s18, 0
        %s821 = smul.addr %s820, 9
        %s822 = scalar_lea.vmem %s0, %s821
        %p823 = scmp.lt.s32.totalorder %s19, 1
        %s824 = scalar_select %p823, %s19, 1
        %s825 = scalar_lea.vmem %s2, %s824
        %p826 = scmp.lt.s32.totalorder %s18, 0
        %s827 = scalar_select %p826, %s18, 0
        %p828 = scmp.lt.s32.totalorder %s19, 1
        %s829 = scalar_select %p828, %s19, 1
        %s830 = smul.addr %s827, 2
        %s831 = sadd.s32 %s829, %s830
        %s832 = scalar_lea.vmem %s3, %s831
        %v834 = vld [vmem:[%s822] sm:$0xff]
        %v835 = vld [vmem:[%s822 + $0x8] sm:$0x1]
        %v836 = vld [vmem:[%s789] sm:$0xf]
        %v837 = vld [vmem:[%s789 + $0x4] sm:$0xf]
        %v838 = vld [vmem:[%s789 + $0x8] sm:$0xf]
        %v839 = vld [vmem:[%s789 + $0xc] sm:$0xf]
        %v840 = vld [vmem:[%s789 + $0x10] sm:$0xf]
        %v841 = vld [vmem:[%s789 + $0x14] sm:$0xf]
        %v842 = vld [vmem:[%s789 + $0x18] sm:$0xf]
        %v843 = vld [vmem:[%s789 + $0x1c] sm:$0xf]
        %v844 = vld [vmem:[%s789 + $0x20] sm:$0xf]
        %v845 = vld [vmem:[%s789 + $0x24] sm:$0xf]
        %v846 = vld [vmem:[%s789 + $0x28] sm:$0xf]
        %v847 = vld [vmem:[%s789 + $0x2c] sm:$0xf]
        %v848 = vld [vmem:[%s789 + $0x30] sm:$0xf]
        %v849 = vld [vmem:[%s789 + $0x34] sm:$0xf]
        %v850 = vld [vmem:[%s789 + $0x38] sm:$0xf]
        %v851 = vld [vmem:[%s789 + $0x3c] sm:$0xf]
        %v852 = vld [vmem:[%s789 + $0x40] sm:$0xf]
        %v853 = vld [vmem:[%s789 + $0x44] sm:$0xf]
        %v854 = vld [vmem:[%s789 + $0x48] sm:$0xf]
        %v855 = vld [vmem:[%s789 + $0x4c] sm:$0xf]
        %v856 = vld [vmem:[%s789 + $0x50] sm:$0xf]
        %v857 = vld [vmem:[%s789 + $0x54] sm:$0xf]
        %v858 = vld [vmem:[%s789 + $0x58] sm:$0xf]
        %v859 = vld [vmem:[%s789 + $0x5c] sm:$0xf]
        %v860 = vld [vmem:[%s789 + $0x60] sm:$0xf]
        %v861 = vld [vmem:[%s789 + $0x64] sm:$0xf]
        %v862 = vld [vmem:[%s789 + $0x68] sm:$0xf]
        %v863 = vld [vmem:[%s789 + $0x6c] sm:$0xf]
        %v864 = vld [vmem:[%s789 + $0x70] sm:$0xf]
        %v865 = vld [vmem:[%s789 + $0x74] sm:$0xf]
        %v866 = vld [vmem:[%s789 + $0x78] sm:$0xf]
        %v867 = vld [vmem:[%s789 + $0x7c] sm:$0xf]
        %v868 = vld [vmem:[%s789 + $0x80] sm:$0xf]
        %v869 = vld [vmem:[%s789 + $0x84] sm:$0xf]
        %v870 = vld [vmem:[%s789 + $0x88] sm:$0xf]
        %v871 = vld [vmem:[%s789 + $0x8c] sm:$0xf]
        %v872 = vld [vmem:[%s789 + $0x90] sm:$0xf]
        %v873 = vld [vmem:[%s789 + $0x94] sm:$0xf]
        %v874 = vld [vmem:[%s789 + $0x98] sm:$0xf]
        %v875 = vld [vmem:[%s789 + $0x9c] sm:$0xf]
        %v876 = vld [vmem:[%s789 + $0xa0] sm:$0xf]
        %v877 = vld [vmem:[%s789 + $0xa4] sm:$0xf]
        %v878 = vld [vmem:[%s789 + $0xa8] sm:$0xf]
        %v879 = vld [vmem:[%s789 + $0xac] sm:$0xf]
        %v880 = vld [vmem:[%s789 + $0xb0] sm:$0xf]
        %v881 = vld [vmem:[%s789 + $0xb4] sm:$0xf]
        %v882 = vld [vmem:[%s789 + $0xb8] sm:$0xf]
        %v883 = vld [vmem:[%s789 + $0xbc] sm:$0xf]
        %v884 = vld [vmem:[%s789 + $0xc0] sm:$0xf]
        %v885 = vld [vmem:[%s789 + $0xc4] sm:$0xf]
        %v886 = vld [vmem:[%s789 + $0xc8] sm:$0xf]
        %v887 = vld [vmem:[%s789 + $0xcc] sm:$0xf]
        %v888 = vld [vmem:[%s789 + $0xd0] sm:$0xf]
        %v889 = vld [vmem:[%s789 + $0xd4] sm:$0xf]
        %v890 = vld [vmem:[%s789 + $0xd8] sm:$0xf]
        %v891 = vld [vmem:[%s789 + $0xdc] sm:$0xf]
        %v892 = vld [vmem:[%s789 + $0xe0] sm:$0xf]
        %v893 = vld [vmem:[%s789 + $0xe4] sm:$0xf]
        %v894 = vld [vmem:[%s789 + $0xe8] sm:$0xf]
        %v895 = vld [vmem:[%s789 + $0xec] sm:$0xf]
        %v896 = vld [vmem:[%s789 + $0xf0] sm:$0xf]
        %v897 = vld [vmem:[%s789 + $0xf4] sm:$0xf]
        %v898 = vld [vmem:[%s789 + $0xf8] sm:$0xf]
        %v899 = vld [vmem:[%s789 + $0xfc] sm:$0xf]
        %v900 = vld [vmem:[%s789 + $0x100] sm:$0xf]
        %v901 = vld [vmem:[%s789 + $0x104] sm:$0xf]
        %v902 = vld [vmem:[%s789 + $0x108] sm:$0xf]
        %v903 = vld [vmem:[%s789 + $0x10c] sm:$0xf]
        %v904 = vld [vmem:[%s789 + $0x110] sm:$0xf]
        %v905 = vld [vmem:[%s789 + $0x114] sm:$0xf]
        %v906 = vld [vmem:[%s789 + $0x118] sm:$0xf]
        %v907 = vld [vmem:[%s789 + $0x11c] sm:$0xf]
        %v908 = vld [vmem:[%s789 + $0x120] sm:$0xf]
        %v909 = vld [vmem:[%s789 + $0x124] sm:$0xf]
        %v910 = vld [vmem:[%s789 + $0x128] sm:$0xf]
        %v911 = vld [vmem:[%s789 + $0x12c] sm:$0xf]
        %v912 = vld [vmem:[%s789 + $0x130] sm:$0xf]
        %v913 = vld [vmem:[%s789 + $0x134] sm:$0xf]
        %v914 = vld [vmem:[%s789 + $0x138] sm:$0xf]
        %v915 = vld [vmem:[%s789 + $0x13c] sm:$0xf]
        %v916 = vld [vmem:[%s789 + $0x140] sm:$0xf]
        %v917 = vld [vmem:[%s789 + $0x144] sm:$0xf]
        %v918 = vld [vmem:[%s789 + $0x148] sm:$0xf]
        %v919 = vld [vmem:[%s789 + $0x14c] sm:$0xf]
        %v920 = vld [vmem:[%s789 + $0x150] sm:$0xf]
        %v921 = vld [vmem:[%s789 + $0x154] sm:$0xf]
        %v922 = vld [vmem:[%s789 + $0x158] sm:$0xf]
        %v923 = vld [vmem:[%s789 + $0x15c] sm:$0xf]
        %v924 = vld [vmem:[%s789 + $0x160] sm:$0xf]
        %v925 = vld [vmem:[%s789 + $0x164] sm:$0xf]
        %v926 = vld [vmem:[%s789 + $0x168] sm:$0xf]
        %v927 = vld [vmem:[%s789 + $0x16c] sm:$0xf]
        %v928 = vld [vmem:[%s789 + $0x170] sm:$0xf]
        %v929 = vld [vmem:[%s789 + $0x174] sm:$0xf]
        %v930 = vld [vmem:[%s789 + $0x178] sm:$0xf]
        %v931 = vld [vmem:[%s789 + $0x17c] sm:$0xf]
        %v932 = vld [vmem:[%s789 + $0x180] sm:$0xf]
        %v933 = vld [vmem:[%s789 + $0x184] sm:$0xf]
        %v934 = vld [vmem:[%s789 + $0x188] sm:$0xf]
        %v935 = vld [vmem:[%s789 + $0x18c] sm:$0xf]
        %v936 = vld [vmem:[%s789 + $0x190] sm:$0xf]
        %v937 = vld [vmem:[%s789 + $0x194] sm:$0xf]
        %v938 = vld [vmem:[%s789 + $0x198] sm:$0xf]
        %v939 = vld [vmem:[%s789 + $0x19c] sm:$0xf]
        %v940 = vld [vmem:[%s789 + $0x1a0] sm:$0xf]
        %v941 = vld [vmem:[%s789 + $0x1a4] sm:$0xf]
        %v942 = vld [vmem:[%s789 + $0x1a8] sm:$0xf]
        %v943 = vld [vmem:[%s789 + $0x1ac] sm:$0xf]
        %v944 = vld [vmem:[%s789 + $0x1b0] sm:$0xf]
        %v945 = vld [vmem:[%s789 + $0x1b4] sm:$0xf]
        %v946 = vld [vmem:[%s789 + $0x1b8] sm:$0xf]
        %v947 = vld [vmem:[%s789 + $0x1bc] sm:$0xf]
        %v948 = vld [vmem:[%s789 + $0x1c0] sm:$0xf]
        %v949 = vld [vmem:[%s789 + $0x1c4] sm:$0xf]
        %v950 = vld [vmem:[%s789 + $0x1c8] sm:$0xf]
        %v951 = vld [vmem:[%s789 + $0x1cc] sm:$0xf]
        %v952 = vld [vmem:[%s789 + $0x1d0] sm:$0xf]
        %v953 = vld [vmem:[%s789 + $0x1d4] sm:$0xf]
        %v954 = vld [vmem:[%s789 + $0x1d8] sm:$0xf]
        %v955 = vld [vmem:[%s789 + $0x1dc] sm:$0xf]
        %v956 = vld [vmem:[%s789 + $0x1e0] sm:$0xf]
        %v957 = vld [vmem:[%s789 + $0x1e4] sm:$0xf]
        %v958 = vld [vmem:[%s789 + $0x1e8] sm:$0xf]
        %v959 = vld [vmem:[%s789 + $0x1ec] sm:$0xf]
        %v960 = vld [vmem:[%s789 + $0x1f0] sm:$0xf]
        %v961 = vld [vmem:[%s789 + $0x1f4] sm:$0xf]
        %v962 = vld [vmem:[%s789 + $0x1f8] sm:$0xf]
        %v963 = vld [vmem:[%s789 + $0x1fc] sm:$0xf]
        %v964 = vld [vmem:[%s789 + $0x200] sm:$0xf]
        %v965 = vld [vmem:[%s789 + $0x204] sm:$0xf]
        %v966 = vld [vmem:[%s789 + $0x208] sm:$0xf]
        %v967 = vld [vmem:[%s789 + $0x20c] sm:$0xf]
        %v968 = vld [vmem:[%s789 + $0x210] sm:$0xf]
        %v969 = vld [vmem:[%s789 + $0x214] sm:$0xf]
        %v970 = vld [vmem:[%s789 + $0x218] sm:$0xf]
        %v971 = vld [vmem:[%s789 + $0x21c] sm:$0xf]
        %v972 = vld [vmem:[%s789 + $0x220] sm:$0xf]
        %v973 = vld [vmem:[%s789 + $0x224] sm:$0xf]
        %v974 = vld [vmem:[%s789 + $0x228] sm:$0xf]
        %v975 = vld [vmem:[%s789 + $0x22c] sm:$0xf]
        %v976 = vld [vmem:[%s789 + $0x230] sm:$0xf]
        %v977 = vld [vmem:[%s789 + $0x234] sm:$0xf]
        %v978 = vld [vmem:[%s789 + $0x238] sm:$0xf]
        %v979 = vld [vmem:[%s789 + $0x23c] sm:$0xf]
        %v980 = vld [vmem:[%s825] sm:$0x1]
        %v982 = vlaneseq
        %v983 = vshrl.u32 %v982, 7
        %v984 = vsub.s32 0, %v983
        %v985 = vrot.slane %v980, %v984
        %v989 = vcombine.high %v834, %v834
        %v991 = vunpack.c.l.s4 1966171168
        %v992 = vunpack.c.0.s8 %v991
        %v993 = vlaneseq
        %v994 = vshrl.u32 %v993, 7
        %v995 = vsub.s32 %v992, %v994
        %v996 = vrot.slane %v834, %v995
        %v998 = vunpack.c.l.s4 1966171168
        %v999 = vunpack.c.0.s8 %v998
        %v1000 = vlaneseq
        %v1001 = vshrl.u32 %v1000, 7
        %v1002 = vsub.s32 %v999, %v1001
        %v1003 = vrot.slane %v989, %v1002
        %v1004 = vcombine.high %v996, %v996
        %v1005 = vcombine.high %v1003, %v1003
        %v1007 = vunpack.c.l.s4 1966171168
        %v1008 = vunpack.c.0.s8 %v1007
        %v1009 = vlaneseq
        %v1010 = vshrl.u32 %v1009, 7
        %v1011 = vsub.s32 %v1008, %v1010
        %v1012 = vrot.slane %v996, %v1011
        %v1014 = vunpack.c.l.s4 1966171168
        %v1015 = vunpack.c.0.s8 %v1014
        %v1016 = vlaneseq
        %v1017 = vshrl.u32 %v1016, 7
        %v1018 = vsub.s32 %v1015, %v1017
        %v1019 = vrot.slane %v1003, %v1018
        %v1021 = vunpack.c.l.s4 1966171168
        %v1022 = vunpack.c.0.s8 %v1021
        %v1023 = vlaneseq
        %v1024 = vshrl.u32 %v1023, 7
        %v1025 = vsub.s32 %v1022, %v1024
        %v1026 = vrot.slane %v1004, %v1025
        %v1028 = vunpack.c.l.s4 1966171168
        %v1029 = vunpack.c.0.s8 %v1028
        %v1030 = vlaneseq
        %v1031 = vshrl.u32 %v1030, 7
        %v1032 = vsub.s32 %v1029, %v1031
        %v1033 = vrot.slane %v1005, %v1032
        %v1034 = vcombine.high %v1012, %v1012
        %v1035 = vcombine.high %v1019, %v1019
        %v1036 = vcombine.high %v1026, %v1026
        %v1037 = vcombine.high %v1033, %v1033
        %v1039 = vunpack.c.l.s4 1966171168
        %v1040 = vunpack.c.0.s8 %v1039
        %v1041 = vlaneseq
        %v1042 = vshrl.u32 %v1041, 7
        %v1043 = vsub.s32 %v1040, %v1042
        %v1044 = vrot.slane %v835, %v1043
        %v1046 = vunpack.c.l.s4 1966171168
        %v1047 = vunpack.c.0.s8 %v1046
        %v1048 = vlaneseq
        %v1049 = vshrl.u32 %v1048, 7
        %v1050 = vsub.s32 %v1047, %v1049
        %v1051 = vrot.slane %v1044, %v1050
        %v1205 = vunpack.c.l.b16 %v836
        %v1206 = vunpack.c.l.b16 %v837
        %v1207 = vunpack.c.l.b16 %v838
        %v1208 = vunpack.c.l.b16 %v839
        %v1209 = vunpack.c.l.b16 %v840
        %v1210 = vunpack.c.l.b16 %v841
        %v1211 = vunpack.c.l.b16 %v842
        %v1212 = vunpack.c.l.b16 %v843
        %v1213 = vunpack.c.l.b16 %v844
        %v1214 = vunpack.c.l.b16 %v845
        %v1215 = vunpack.c.l.b16 %v846
        %v1216 = vunpack.c.l.b16 %v847
        %v1217 = vunpack.c.l.b16 %v848
        %v1218 = vunpack.c.l.b16 %v849
        %v1219 = vunpack.c.l.b16 %v850
        %v1220 = vunpack.c.l.b16 %v851
        %v1221 = vunpack.c.l.b16 %v852
        %v1222 = vunpack.c.l.b16 %v853
        %v1223 = vunpack.c.l.b16 %v854
        %v1224 = vunpack.c.l.b16 %v855
        %v1225 = vunpack.c.l.b16 %v856
        %v1226 = vunpack.c.l.b16 %v857
        %v1227 = vunpack.c.l.b16 %v858
        %v1228 = vunpack.c.l.b16 %v859
        %v1229 = vunpack.c.l.b16 %v860
        %v1230 = vunpack.c.l.b16 %v861
        %v1231 = vunpack.c.l.b16 %v862
        %v1232 = vunpack.c.l.b16 %v863
        %v1233 = vunpack.c.l.b16 %v864
        %v1234 = vunpack.c.l.b16 %v865
        %v1235 = vunpack.c.l.b16 %v866
        %v1236 = vunpack.c.l.b16 %v867
        %v1237 = vunpack.c.l.b16 %v868
        %v1238 = vunpack.c.l.b16 %v869
        %v1239 = vunpack.c.l.b16 %v870
        %v1240 = vunpack.c.l.b16 %v871
        %v1241 = vunpack.c.l.b16 %v872
        %v1242 = vunpack.c.l.b16 %v873
        %v1243 = vunpack.c.l.b16 %v874
        %v1244 = vunpack.c.l.b16 %v875
        %v1245 = vunpack.c.l.b16 %v876
        %v1246 = vunpack.c.l.b16 %v877
        %v1247 = vunpack.c.l.b16 %v878
        %v1248 = vunpack.c.l.b16 %v879
        %v1249 = vunpack.c.l.b16 %v880
        %v1250 = vunpack.c.l.b16 %v881
        %v1251 = vunpack.c.l.b16 %v882
        %v1252 = vunpack.c.l.b16 %v883
        %v1253 = vunpack.c.l.b16 %v884
        %v1254 = vunpack.c.l.b16 %v885
        %v1255 = vunpack.c.l.b16 %v886
        %v1256 = vunpack.c.l.b16 %v887
        %v1257 = vunpack.c.l.b16 %v888
        %v1258 = vunpack.c.l.b16 %v889
        %v1259 = vunpack.c.l.b16 %v890
        %v1260 = vunpack.c.l.b16 %v891
        %v1261 = vunpack.c.l.b16 %v892
        %v1262 = vunpack.c.l.b16 %v893
        %v1263 = vunpack.c.l.b16 %v894
        %v1264 = vunpack.c.l.b16 %v895
        %v1265 = vunpack.c.l.b16 %v896
        %v1266 = vunpack.c.l.b16 %v897
        %v1267 = vunpack.c.l.b16 %v898
        %v1268 = vunpack.c.l.b16 %v899
        %v1269 = vunpack.c.l.b16 %v900
        %v1270 = vunpack.c.l.b16 %v901
        %v1271 = vunpack.c.l.b16 %v902
        %v1272 = vunpack.c.l.b16 %v903
        %v1273 = vunpack.c.l.b16 %v904
        %v1274 = vunpack.c.l.b16 %v905
        %v1275 = vunpack.c.l.b16 %v906
        %v1276 = vunpack.c.l.b16 %v907
        %v1277 = vunpack.c.l.b16 %v908
        %v1278 = vunpack.c.l.b16 %v909
        %v1279 = vunpack.c.l.b16 %v910
        %v1280 = vunpack.c.l.b16 %v911
        %v1281 = vunpack.c.l.b16 %v912
        %v1282 = vunpack.c.l.b16 %v913
        %v1283 = vunpack.c.l.b16 %v914
        %v1284 = vunpack.c.l.b16 %v915
        %v1285 = vunpack.c.l.b16 %v916
        %v1286 = vunpack.c.l.b16 %v917
        %v1287 = vunpack.c.l.b16 %v918
        %v1288 = vunpack.c.l.b16 %v919
        %v1289 = vunpack.c.l.b16 %v920
        %v1290 = vunpack.c.l.b16 %v921
        %v1291 = vunpack.c.l.b16 %v922
        %v1292 = vunpack.c.l.b16 %v923
        %v1293 = vunpack.c.l.b16 %v924
        %v1294 = vunpack.c.l.b16 %v925
        %v1295 = vunpack.c.l.b16 %v926
        %v1296 = vunpack.c.l.b16 %v927
        %v1297 = vunpack.c.l.b16 %v928
        %v1298 = vunpack.c.l.b16 %v929
        %v1299 = vunpack.c.l.b16 %v930
        %v1300 = vunpack.c.l.b16 %v931
        %v1301 = vunpack.c.l.b16 %v932
        %v1302 = vunpack.c.l.b16 %v933
        %v1303 = vunpack.c.l.b16 %v934
        %v1304 = vunpack.c.l.b16 %v935
        %v1305 = vunpack.c.l.b16 %v936
        %v1306 = vunpack.c.l.b16 %v937
        %v1307 = vunpack.c.l.b16 %v938
        %v1308 = vunpack.c.l.b16 %v939
        %v1309 = vunpack.c.l.b16 %v940
        %v1310 = vunpack.c.l.b16 %v941
        %v1311 = vunpack.c.l.b16 %v942
        %v1312 = vunpack.c.l.b16 %v943
        %v1313 = vunpack.c.l.b16 %v944
        %v1314 = vunpack.c.l.b16 %v945
        %v1315 = vunpack.c.l.b16 %v946
        %v1316 = vunpack.c.l.b16 %v947
        %v1317 = vunpack.c.l.b16 %v948
        %v1318 = vunpack.c.l.b16 %v949
        %v1319 = vunpack.c.l.b16 %v950
        %v1320 = vunpack.c.l.b16 %v951
        %v1321 = vunpack.c.l.b16 %v952
        %v1322 = vunpack.c.l.b16 %v953
        %v1323 = vunpack.c.l.b16 %v954
        %v1324 = vunpack.c.l.b16 %v955
        %v1325 = vunpack.c.l.b16 %v956
        %v1326 = vunpack.c.l.b16 %v957
        %v1327 = vunpack.c.l.b16 %v958
        %v1328 = vunpack.c.l.b16 %v959
        %v1329 = vunpack.c.l.b16 %v960
        %v1330 = vunpack.c.l.b16 %v961
        %v1331 = vunpack.c.l.b16 %v962
        %v1332 = vunpack.c.l.b16 %v963
        %v1333 = vunpack.c.l.b16 %v964
        %v1334 = vunpack.c.l.b16 %v965
        %v1335 = vunpack.c.l.b16 %v966
        %v1336 = vunpack.c.l.b16 %v967
        %v1337 = vunpack.c.l.b16 %v968
        %v1338 = vunpack.c.l.b16 %v969
        %v1339 = vunpack.c.l.b16 %v970
        %v1340 = vunpack.c.l.b16 %v971
        %v1341 = vunpack.c.l.b16 %v972
        %v1342 = vunpack.c.l.b16 %v973
        %v1343 = vunpack.c.l.b16 %v974
        %v1344 = vunpack.c.l.b16 %v975
        %v1345 = vunpack.c.l.b16 %v976
        %v1346 = vunpack.c.l.b16 %v977
        %v1347 = vunpack.c.l.b16 %v978
        %v1348 = vunpack.c.l.b16 %v979
        %v1349 = vpack.c.b16 %v1206, %v1205
        %v1350 = vpack.c.b16 %v1208, %v1207
        %v1351 = vpack.c.b16 %v1210, %v1209
        %v1352 = vpack.c.b16 %v1212, %v1211
        %v1353 = vpack.c.b16 %v1214, %v1213
        %v1354 = vpack.c.b16 %v1216, %v1215
        %v1355 = vpack.c.b16 %v1218, %v1217
        %v1356 = vpack.c.b16 %v1220, %v1219
        %v1357 = vpack.c.b16 %v1222, %v1221
        %v1358 = vpack.c.b16 %v1224, %v1223
        %v1359 = vpack.c.b16 %v1226, %v1225
        %v1360 = vpack.c.b16 %v1228, %v1227
        %v1361 = vpack.c.b16 %v1230, %v1229
        %v1362 = vpack.c.b16 %v1232, %v1231
        %v1363 = vpack.c.b16 %v1234, %v1233
        %v1364 = vpack.c.b16 %v1236, %v1235
        %v1365 = vpack.c.b16 %v1238, %v1237
        %v1366 = vpack.c.b16 %v1240, %v1239
        %v1367 = vpack.c.b16 %v1242, %v1241
        %v1368 = vpack.c.b16 %v1244, %v1243
        %v1369 = vpack.c.b16 %v1246, %v1245
        %v1370 = vpack.c.b16 %v1248, %v1247
        %v1371 = vpack.c.b16 %v1250, %v1249
        %v1372 = vpack.c.b16 %v1252, %v1251
        %v1373 = vpack.c.b16 %v1254, %v1253
        %v1374 = vpack.c.b16 %v1256, %v1255
        %v1375 = vpack.c.b16 %v1258, %v1257
        %v1376 = vpack.c.b16 %v1260, %v1259
        %v1377 = vpack.c.b16 %v1262, %v1261
        %v1378 = vpack.c.b16 %v1264, %v1263
        %v1379 = vpack.c.b16 %v1266, %v1265
        %v1380 = vpack.c.b16 %v1268, %v1267
        %v1381 = vpack.c.b16 %v1270, %v1269
        %v1382 = vpack.c.b16 %v1272, %v1271
        %v1383 = vpack.c.b16 %v1274, %v1273
        %v1384 = vpack.c.b16 %v1276, %v1275
        %v1385 = vpack.c.b16 %v1278, %v1277
        %v1386 = vpack.c.b16 %v1280, %v1279
        %v1387 = vpack.c.b16 %v1282, %v1281
        %v1388 = vpack.c.b16 %v1284, %v1283
        %v1389 = vpack.c.b16 %v1286, %v1285
        %v1390 = vpack.c.b16 %v1288, %v1287
        %v1391 = vpack.c.b16 %v1290, %v1289
        %v1392 = vpack.c.b16 %v1292, %v1291
        %v1393 = vpack.c.b16 %v1294, %v1293
        %v1394 = vpack.c.b16 %v1296, %v1295
        %v1395 = vpack.c.b16 %v1298, %v1297
        %v1396 = vpack.c.b16 %v1300, %v1299
        %v1397 = vpack.c.b16 %v1302, %v1301
        %v1398 = vpack.c.b16 %v1304, %v1303
        %v1399 = vpack.c.b16 %v1306, %v1305
        %v1400 = vpack.c.b16 %v1308, %v1307
        %v1401 = vpack.c.b16 %v1310, %v1309
        %v1402 = vpack.c.b16 %v1312, %v1311
        %v1403 = vpack.c.b16 %v1314, %v1313
        %v1404 = vpack.c.b16 %v1316, %v1315
        %v1405 = vpack.c.b16 %v1318, %v1317
        %v1406 = vpack.c.b16 %v1320, %v1319
        %v1407 = vpack.c.b16 %v1322, %v1321
        %v1408 = vpack.c.b16 %v1324, %v1323
        %v1409 = vpack.c.b16 %v1326, %v1325
        %v1410 = vpack.c.b16 %v1328, %v1327
        %v1411 = vpack.c.b16 %v1330, %v1329
        %v1412 = vpack.c.b16 %v1332, %v1331
        %v1413 = vpack.c.b16 %v1334, %v1333
        %v1414 = vpack.c.b16 %v1336, %v1335
        %v1415 = vpack.c.b16 %v1338, %v1337
        %v1416 = vpack.c.b16 %v1340, %v1339
        %v1417 = vpack.c.b16 %v1342, %v1341
        %v1418 = vpack.c.b16 %v1344, %v1343
        %v1419 = vpack.c.b16 %v1346, %v1345
        %v1420 = vpack.c.b16 %v1348, %v1347
        %1493 = vmatprep.subr.bf16.mxu0 0
        %1494 = vmatpush1.bf16.msra.mxu0 %v1349
        %1495 = vmatprep.subr.bf16.mxu0 0
        %1496 = vmatpush1.bf16.msra.mxu0 %v1350
        %1497 = vmatprep.subr.bf16.mxu0 0
        %1498 = vmatpush1.bf16.msra.mxu0 %v1351
        %1499 = vmatprep.subr.bf16.mxu0 0
        %1500 = vmatpush1.bf16.msra.mxu0 %v1352
        %1501 = vmatprep.subr.bf16.mxu0 0
        %1502 = vmatpush1.bf16.msra.mxu0 %v1353
        %1503 = vmatprep.subr.bf16.mxu0 0
        %1504 = vmatpush1.bf16.msra.mxu0 %v1354
        %1505 = vmatprep.subr.bf16.mxu0 0
        %1506 = vmatpush1.bf16.msra.mxu0 %v1355
        %1507 = vmatprep.subr.bf16.mxu0 0
        %1508 = vmatpush1.bf16.msra.mxu0 %v1356
        %1509 = vmatprep.subr.bf16.mxu0 0
        %1510 = vmatpush1.bf16.msra.mxu0 %v1357
        %1511 = vmatprep.subr.bf16.mxu0 0
        %1512 = vmatpush1.bf16.msra.mxu0 %v1358
        %1513 = vmatprep.subr.bf16.mxu0 0
        %1514 = vmatpush1.bf16.msra.mxu0 %v1359
        %1515 = vmatprep.subr.bf16.mxu0 0
        %1516 = vmatpush1.bf16.msra.mxu0 %v1360
        %1517 = vmatprep.subr.bf16.mxu0 0
        %1518 = vmatpush1.bf16.msra.mxu0 %v1361
        %1519 = vmatprep.subr.bf16.mxu0 0
        %1520 = vmatpush1.bf16.msra.mxu0 %v1362
        %1521 = vmatprep.subr.bf16.mxu0 0
        %1522 = vmatpush1.bf16.msra.mxu0 %v1363
        %1523 = vmatprep.subr.bf16.mxu0 0
        %1524 = vmatpush1.bf16.msra.mxu0 %v1364
        %1525 = vmatprep.mubr.bf16.mxu0 %v1026
        %1526 = vmatmul.mubr.bf16.gmra.mrb[0].mxu0 %v1012
        %v1527 = vpop.f32.mrb[0].mxu0
        %v1528 = vadd.f32 %v985, %v1527
        %v1529 = vpop.f32.mrb[0].mxu0
        %v1530 = vpop.f32.mrb[0].mxu0
        %v1531 = vpop.f32.mrb[0].mxu0
        %1532 = vdwg.mxu0
        %1533 = vmatprep.subr.bf16.mxu0 0
        %1534 = vmatpush1.bf16.msra.mxu0 %v1365
        %1535 = vmatprep.subr.bf16.mxu0 0
        %1536 = vmatpush1.bf16.msra.mxu0 %v1366
        %1537 = vmatprep.subr.bf16.mxu0 0
        %1538 = vmatpush1.bf16.msra.mxu0 %v1367
        %1539 = vmatprep.subr.bf16.mxu0 0
        %1540 = vmatpush1.bf16.msra.mxu0 %v1368
        %1541 = vmatprep.subr.bf16.mxu0 0
        %1542 = vmatpush1.bf16.msra.mxu0 %v1369
        %1543 = vmatprep.subr.bf16.mxu0 0
        %1544 = vmatpush1.bf16.msra.mxu0 %v1370
        %1545 = vmatprep.subr.bf16.mxu0 0
        %1546 = vmatpush1.bf16.msra.mxu0 %v1371
        %1547 = vmatprep.subr.bf16.mxu0 0
        %1548 = vmatpush1.bf16.msra.mxu0 %v1372
        %1549 = vmatprep.subr.bf16.mxu0 0
        %1550 = vmatpush1.bf16.msra.mxu0 %v1373
        %1551 = vmatprep.subr.bf16.mxu0 0
        %1552 = vmatpush1.bf16.msra.mxu0 %v1374
        %1553 = vmatprep.subr.bf16.mxu0 0
        %1554 = vmatpush1.bf16.msra.mxu0 %v1375
        %1555 = vmatprep.subr.bf16.mxu0 0
        %1556 = vmatpush1.bf16.msra.mxu0 %v1376
        %1557 = vmatprep.subr.bf16.mxu0 0
        %1558 = vmatpush1.bf16.msra.mxu0 %v1377
        %1559 = vmatprep.subr.bf16.mxu0 0
        %1560 = vmatpush1.bf16.msra.mxu0 %v1378
        %1561 = vmatprep.subr.bf16.mxu0 0
        %1562 = vmatpush1.bf16.msra.mxu0 %v1379
        %1563 = vmatprep.subr.bf16.mxu0 0
        %1564 = vmatpush1.bf16.msra.mxu0 %v1380
        %1565 = vmatprep.mubr.bf16.mxu0 %v1036
        %1566 = vmatmul.mubr.bf16.gmra.mrb[0].mxu0 %v1034
        %v1567 = vpop.f32.mrb[0].mxu0
        %v1568 = vadd.f32 %v1528, %v1567
        %v1569 = vpop.f32.mrb[0].mxu0
        %v1570 = vpop.f32.mrb[0].mxu0
        %v1571 = vpop.f32.mrb[0].mxu0
        %1572 = vdwg.mxu0
        %1573 = vmatprep.subr.bf16.mxu0 0
        %1574 = vmatpush1.bf16.msra.mxu0 %v1381
        %1575 = vmatprep.subr.bf16.mxu0 0
        %1576 = vmatpush1.bf16.msra.mxu0 %v1382
        %1577 = vmatprep.subr.bf16.mxu0 0
        %1578 = vmatpush1.bf16.msra.mxu0 %v1383
        %1579 = vmatprep.subr.bf16.mxu0 0
        %1580 = vmatpush1.bf16.msra.mxu0 %v1384
        %1581 = vmatprep.subr.bf16.mxu0 0
        %1582 = vmatpush1.bf16.msra.mxu0 %v1385
        %1583 = vmatprep.subr.bf16.mxu0 0
        %1584 = vmatpush1.bf16.msra.mxu0 %v1386
        %1585 = vmatprep.subr.bf16.mxu0 0
        %1586 = vmatpush1.bf16.msra.mxu0 %v1387
        %1587 = vmatprep.subr.bf16.mxu0 0
        %1588 = vmatpush1.bf16.msra.mxu0 %v1388
        %1589 = vmatprep.subr.bf16.mxu0 0
        %1590 = vmatpush1.bf16.msra.mxu0 %v1389
        %1591 = vmatprep.subr.bf16.mxu0 0
        %1592 = vmatpush1.bf16.msra.mxu0 %v1390
        %1593 = vmatprep.subr.bf16.mxu0 0
        %1594 = vmatpush1.bf16.msra.mxu0 %v1391
        %1595 = vmatprep.subr.bf16.mxu0 0
        %1596 = vmatpush1.bf16.msra.mxu0 %v1392
        %1597 = vmatprep.subr.bf16.mxu0 0
        %1598 = vmatpush1.bf16.msra.mxu0 %v1393
        %1599 = vmatprep.subr.bf16.mxu0 0
        %1600 = vmatpush1.bf16.msra.mxu0 %v1394
        %1601 = vmatprep.subr.bf16.mxu0 0
        %1602 = vmatpush1.bf16.msra.mxu0 %v1395
        %1603 = vmatprep.subr.bf16.mxu0 0
        %1604 = vmatpush1.bf16.msra.mxu0 %v1396
        %1605 = vmatprep.mubr.bf16.mxu0 %v1033
        %1606 = vmatmul.mubr.bf16.gmra.mrb[0].mxu0 %v1019
        %v1607 = vpop.f32.mrb[0].mxu0
        %v1608 = vadd.f32 %v1568, %v1607
        %v1609 = vpop.f32.mrb[0].mxu0
        %v1610 = vpop.f32.mrb[0].mxu0
        %v1611 = vpop.f32.mrb[0].mxu0
        %1612 = vdwg.mxu0
        %1613 = vmatprep.subr.bf16.mxu0 0
        %1614 = vmatpush1.bf16.msra.mxu0 %v1397
        %1615 = vmatprep.subr.bf16.mxu0 0
        %1616 = vmatpush1.bf16.msra.mxu0 %v1398
        %1617 = vmatprep.subr.bf16.mxu0 0
        %1618 = vmatpush1.bf16.msra.mxu0 %v1399
        %1619 = vmatprep.subr.bf16.mxu0 0
        %1620 = vmatpush1.bf16.msra.mxu0 %v1400
        %1621 = vmatprep.subr.bf16.mxu0 0
        %1622 = vmatpush1.bf16.msra.mxu0 %v1401
        %1623 = vmatprep.subr.bf16.mxu0 0
        %1624 = vmatpush1.bf16.msra.mxu0 %v1402
        %1625 = vmatprep.subr.bf16.mxu0 0
        %1626 = vmatpush1.bf16.msra.mxu0 %v1403
        %1627 = vmatprep.subr.bf16.mxu0 0
        %1628 = vmatpush1.bf16.msra.mxu0 %v1404
        %1629 = vmatprep.subr.bf16.mxu0 0
        %1630 = vmatpush1.bf16.msra.mxu0 %v1405
        %1631 = vmatprep.subr.bf16.mxu0 0
        %1632 = vmatpush1.bf16.msra.mxu0 %v1406
        %1633 = vmatprep.subr.bf16.mxu0 0
        %1634 = vmatpush1.bf16.msra.mxu0 %v1407
        %1635 = vmatprep.subr.bf16.mxu0 0
        %1636 = vmatpush1.bf16.msra.mxu0 %v1408
        %1637 = vmatprep.subr.bf16.mxu0 0
        %1638 = vmatpush1.bf16.msra.mxu0 %v1409
        %1639 = vmatprep.subr.bf16.mxu0 0
        %1640 = vmatpush1.bf16.msra.mxu0 %v1410
        %1641 = vmatprep.subr.bf16.mxu0 0
        %1642 = vmatpush1.bf16.msra.mxu0 %v1411
        %1643 = vmatprep.subr.bf16.mxu0 0
        %1644 = vmatpush1.bf16.msra.mxu0 %v1412
        %1645 = vmatprep.mubr.bf16.mxu0 %v1037
        %1646 = vmatmul.mubr.bf16.gmra.mrb[0].mxu0 %v1035
        %v1647 = vpop.f32.mrb[0].mxu0
        %v1648 = vadd.f32 %v1608, %v1647
        %v1649 = vpop.f32.mrb[0].mxu0
        %v1650 = vpop.f32.mrb[0].mxu0
        %v1651 = vpop.f32.mrb[0].mxu0
        %1652 = vdwg.mxu0
        %1653 = vmatprep.subr.bf16.mxu0 0
        %1654 = vmatpush1.bf16.msra.mxu0 %v1413
        %1655 = vmatprep.subr.bf16.mxu0 0
        %1656 = vmatpush1.bf16.msra.mxu0 %v1414
        %1657 = vmatprep.subr.bf16.mxu0 0
        %1658 = vmatpush1.bf16.msra.mxu0 %v1415
        %1659 = vmatprep.subr.bf16.mxu0 0
        %1660 = vmatpush1.bf16.msra.mxu0 %v1416
        %1661 = vmatprep.subr.bf16.mxu0 0
        %1662 = vmatpush1.bf16.msra.mxu0 %v1417
        %1663 = vmatprep.subr.bf16.mxu0 0
        %1664 = vmatpush1.bf16.msra.mxu0 %v1418
        %1665 = vmatprep.subr.bf16.mxu0 0
        %1666 = vmatpush1.bf16.msra.mxu0 %v1419
        %1667 = vmatprep.subr.bf16.mxu0 0
        %1668 = vmatpush1.bf16.msra.mxu0 %v1420
        %1669 = vmatprep.subr.bf16.mxu0 0
        %1670 = vmatpush1.bf16.msra.mxu0 0
        %1671 = vmatprep.subr.bf16.mxu0 0
        %1672 = vmatpush1.bf16.msra.mxu0 0
        %1673 = vmatprep.subr.bf16.mxu0 0
        %1674 = vmatpush1.bf16.msra.mxu0 0
        %1675 = vmatprep.subr.bf16.mxu0 0
        %1676 = vmatpush1.bf16.msra.mxu0 0
        %1677 = vmatprep.subr.bf16.mxu0 0
        %1678 = vmatpush1.bf16.msra.mxu0 0
        %1679 = vmatprep.subr.bf16.mxu0 0
        %1680 = vmatpush1.bf16.msra.mxu0 0
        %1681 = vmatprep.subr.bf16.mxu0 0
        %1682 = vmatpush1.bf16.msra.mxu0 0
        %1683 = vmatprep.subr.bf16.mxu0 0
        %1684 = vmatpush1.bf16.msra.mxu0 0
        %1685 = vmatprep.mubr.bf16.mxu0 0
        %1686 = vmatmul.mubr.bf16.gmra.mrb[0].mxu0 %v1051
        %v1687 = vpop.f32.mrb[0].mxu0
        %v1688 = vadd.f32 %v1648, %v1687
        %v1689 = vpop.f32.mrb[0].mxu0
        %v1690 = vpop.f32.mrb[0].mxu0
        %v1691 = vpop.f32.mrb[0].mxu0
        %1692 = vdwg.mxu0
        %v1693 = vmax.f32 %v1688, 0.0
        %v1694 = vpack.c.bf16 %v1693, %v1693
        %1695 = vst [vmem:[%s832] sm:$0x1] %v1694
        %p1696 = scmp.lt.s32.totalorder %s18, 0
        %s1697 = scalar_select %p1696, %s18, 0
        %p1698 = scmp.lt.s32.totalorder %s19, 1
        %s1699 = scalar_select %p1698, %s19, 1
        %s1700 = smul.addr %s1697, 2
        %s1701 = sadd.s32 %s1699, %s1700
        %s1702 = scalar_lea.vmem %s3, %s1701
        // Predicated region
        $region74: #{forward.12} parent=68 // pred_check
          %p1703 = pneg %p124
        $region75: #{forward.12} parent=68 // pred_check_branch
          %1705 = sbr.rel (%p1703) target = $region77
        $region76: #{forward.12} parent=68 // pred_region
          _
        $region77: #{forward.12} parent=68 // pred_fallthru
          _
      $region69: #{forward.12} parent=5 // pred_fallthru
        _
      %p1706 = scmp.le.s32.totalorder 2, %s9
      // Predicated region
      $region78: #{forward.12} parent=5 // pred_check
        %p1707 = pneg %p1706
      $region79: #{forward.12} parent=5 // pred_check_branch
        %1709 = sbr.rel (%p1707) target = $region81
      $region80: #{forward.12} parent=5 // pred_region
        %s1710 = ssub.s32 %s9, 2
        // Predicated region
        $region82: #{forward.12} parent=80 // pred_check
          %p1711 = pneg %p130
        $region83: #{forward.12} parent=80 // pred_check_branch
          %1713 = sbr.rel (%p1711) target = $region85
        $region84: #{forward.12} parent=80 // pred_region
          %p1714 = scmp.lt.s32.totalorder %s20, 0
          %s1715 = scalar_select %p1714, %s20, 0
          %p1716 = scmp.lt.s32.totalorder %s21, 1
          %s1717 = scalar_select %p1716, %s21, 1
          %s1718 = smul.addr %s1715, 2
          %s1719 = sadd.s32 %s1717, %s1718
          %s1720 = scalar_lea.vmem %s3, %s1719
        $region85: #{forward.12} parent=80 // pred_fallthru
          _
      $region81: #{forward.12} parent=5 // pred_fallthru
        _
    $region6: #{forward.12} parent=1 // loop_footer
      %s13 = sadd.s32 1, %s9
    $region7: #{forward.12} parent=1 // loop_footer_branch
      %8 = sbr.rel target = $region3
    $region8: #{forward.12} parent=1 // loop_exit
      _

// kernel: forward.13
$region0: #{forward.13}
  #allocation0 [shape = 'u32[]', space=smem, size = 0x4, offset = 0x4, fixed_abs, tag = 'smem constant byte address 0x4 - core index']
  #allocation1 [shape = 'u32[144,128]{1,0:T(1,128)}', space=vmem, size = 0x12000, scoped, tag = 'internal scratch']
  #allocation2 [shape = 'f32[1,1]{1,0:T(1,128)S(1)}', space=vmem, size = 0x200, scoped, tag = 'scoped memory for forward.13']
  %s0 = inlined_call_operand.vmem [shape: bf16[2,256], index: 0, kind: input, shape index: {}]
  %s1 = inlined_call_operand.vmem [shape: bf16[256,128], index: 1, kind: input, shape index: {}]
  %s2 = inlined_call_operand.vmem [shape: f32[1,128], index: 2, kind: input, shape index: {}]
  %s3 = inlined_call_operand.vmem [shape: bf16[256,128], index: 3, kind: input, shape index: {}]
  %s4 = inlined_call_operand.vmem [shape: f32[1,128], index: 4, kind: input, shape index: {}]
  %s5 = inlined_call_operand.vmem [shape: bf16[128,128], index: 5, kind: input, shape index: {}]
  %s6 = inlined_call_operand.vmem [shape: f32[1,128], index: 6, kind: input, shape index: {}]
  %s7 = inlined_call_operand.vmem [shape: bf16[128,128], index: 7, kind: input, shape index: {}]
  %s8 = inlined_call_operand.vmem [shape: f32[1,128], index: 8, kind: input, shape index: {}]
  %s9 = inlined_call_operand.vmem [shape: f32[1,128], index: 9, kind: input, shape index: {}]
  %s10 = inlined_call_operand.<no memory space> [shape: f32[1,1], index: 10, kind: input, shape index: {}]
  %s11 = inlined_call_operand.hbm [shape: f32[2,128], index: 11, kind: output, shape index: {0}]
  %s12 = inlined_call_operand.hbm [shape: f32[2,128], index: 12, kind: output, shape index: {1}]
  %s13 = inlined_call_operand.vmem [shape: f32[2,1], index: 13, kind: output, shape index: {2}]
  %14 = xla_tuple %s11, %s12, %s13
  %s15 = sld [smem:[#allocation0]]
  $region70: #{forward.13} parent=0
    _
  %s17 = ssub.s32 1, %s15
  %s18 = scalar_select 0, %s17, %s15
  %v19 = vstv %s10
  %20 = vst [vmem:[#allocation2] sm:$0x1] %v19
  $region1: #{forward.13} parent=0
    #allocation3 [shape = 'u8[1024]{0}', space=vmem, size = 0x400, scoped, tag = 'output window, operand 0, single buffered']
    #allocation4 [shape = 's32[1]{0}', space=sflag, size = 0x4, scoped, tag = 'scoped memory for forward.13']
    #allocation5 [shape = 'u8[1024]{0}', space=vmem, size = 0x400, scoped, tag = 'output window, operand 1, single buffered']
    #allocation6 [shape = 's32[1]{0}', space=sflag, size = 0x4, scoped, tag = 'scoped memory for forward.13']
    %21 = vsyncpa [#allocation4], 0
    %22 = vsyncpa [#allocation6], 0
    // Predicated region
    $region2: #{forward.13} parent=1 // pred_check
      _
    $region3: #{forward.13} parent=1 // pred_check_branch
      %24 = sbr.rel (0) target = $region5
    $region4: #{forward.13} parent=1 // pred_region
      _
    $region5: #{forward.13} parent=1 // pred_fallthru
      _
    // Predicated region
    $region6: #{forward.13} parent=1 // pred_check
      _
    $region7: #{forward.13} parent=1 // pred_check_branch
      %26 = sbr.rel (0) target = $region9
    $region8: #{forward.13} parent=1 // pred_region
      _
    $region9: #{forward.13} parent=1 // pred_fallthru
      _
    // Predicated region
    $region10: #{forward.13} parent=1 // pred_check
      _
    $region11: #{forward.13} parent=1 // pred_check_branch
      %28 = sbr.rel (0) target = $region13
    $region12: #{forward.13} parent=1 // pred_region
      _
    $region13: #{forward.13} parent=1 // pred_fallthru
      _
    // Predicated region
    $region14: #{forward.13} parent=1 // pred_check
      _
    $region15: #{forward.13} parent=1 // pred_check_branch
      %30 = sbr.rel (0) target = $region17
    $region16: #{forward.13} parent=1 // pred_region
      _
    $region17: #{forward.13} parent=1 // pred_fallthru
      _
    // Predicated region
    $region18: #{forward.13} parent=1 // pred_check
      _
    $region19: #{forward.13} parent=1 // pred_check_branch
      %32 = sbr.rel (0) target = $region21
    $region20: #{forward.13} parent=1 // pred_region
      _
    $region21: #{forward.13} parent=1 // pred_fallthru
      _
    // Predicated region
    $region22: #{forward.13} parent=1 // pred_check
      _
    $region23: #{forward.13} parent=1 // pred_check_branch
      %34 = sbr.rel (0) target = $region25
    $region24: #{forward.13} parent=1 // pred_region
      _
    $region25: #{forward.13} parent=1 // pred_fallthru
      _
    // Predicated region
    $region26: #{forward.13} parent=1 // pred_check
      _
    $region27: #{forward.13} parent=1 // pred_check_branch
      %36 = sbr.rel (0) target = $region29
    $region28: #{forward.13} parent=1 // pred_region
      _
    $region29: #{forward.13} parent=1 // pred_fallthru
      _
    // Predicated region
    $region30: #{forward.13} parent=1 // pred_check
      _
    $region31: #{forward.13} parent=1 // pred_check_branch
      %38 = sbr.rel (0) target = $region33
    $region32: #{forward.13} parent=1 // pred_region
      _
    $region33: #{forward.13} parent=1 // pred_fallthru
      _
    // Predicated region
    $region34: #{forward.13} parent=1 // pred_check
      _
    $region35: #{forward.13} parent=1 // pred_check_branch
      %40 = sbr.rel (0) target = $region37
    $region36: #{forward.13} parent=1 // pred_region
      _
    $region37: #{forward.13} parent=1 // pred_fallthru
      _
    // Predicated region
    $region38: #{forward.13} parent=1 // pred_check
      _
    $region39: #{forward.13} parent=1 // pred_check_branch
      %42 = sbr.rel (0) target = $region41
    $region40: #{forward.13} parent=1 // pred_region
      _
    $region41: #{forward.13} parent=1 // pred_fallthru
      _
    // Predicated region
    $region42: #{forward.13} parent=1 // pred_check
      _
    $region43: #{forward.13} parent=1 // pred_check_branch
      %44 = sbr.rel (0) target = $region45
    $region44: #{forward.13} parent=1 // pred_region
      _
    $region45: #{forward.13} parent=1 // pred_fallthru
      _
    %v46 = vld [vmem:[%s0] sm:$0x3]
    %v47 = vld [vmem:[%s1] sm:$0xf]
    %v48 = vld [vmem:[%s1 + $0x4] sm:$0xf]
    %v49 = vld [vmem:[%s1 + $0x8] sm:$0xf]
    %v50 = vld [vmem:[%s1 + $0xc] sm:$0xf]
    %v51 = vld [vmem:[%s1 + $0x10] sm:$0xf]
    %v52 = vld [vmem:[%s1 + $0x14] sm:$0xf]
    %v53 = vld [vmem:[%s1 + $0x18] sm:$0xf]
    %v54 = vld [vmem:[%s1 + $0x1c] sm:$0xf]
    %v55 = vld [vmem:[%s1 + $0x20] sm:$0xf]
    %v56 = vld [vmem:[%s1 + $0x24] sm:$0xf]
    %v57 = vld [vmem:[%s1 + $0x28] sm:$0xf]
    %v58 = vld [vmem:[%s1 + $0x2c] sm:$0xf]
    %v59 = vld [vmem:[%s1 + $0x30] sm:$0xf]
    %v60 = vld [vmem:[%s1 + $0x34] sm:$0xf]
    %v61 = vld [vmem:[%s1 + $0x38] sm:$0xf]
    %v62 = vld [vmem:[%s1 + $0x3c] sm:$0xf]
    %v63 = vld [vmem:[%s1 + $0x40] sm:$0xf]
    %v64 = vld [vmem:[%s1 + $0x44] sm:$0xf]
    %v65 = vld [vmem:[%s1 + $0x48] sm:$0xf]
    %v66 = vld [vmem:[%s1 + $0x4c] sm:$0xf]
    %v67 = vld [vmem:[%s1 + $0x50] sm:$0xf]
    %v68 = vld [vmem:[%s1 + $0x54] sm:$0xf]
    %v69 = vld [vmem:[%s1 + $0x58] sm:$0xf]
    %v70 = vld [vmem:[%s1 + $0x5c] sm:$0xf]
    %v71 = vld [vmem:[%s1 + $0x60] sm:$0xf]
    %v72 = vld [vmem:[%s1 + $0x64] sm:$0xf]
    %v73 = vld [vmem:[%s1 + $0x68] sm:$0xf]
    %v74 = vld [vmem:[%s1 + $0x6c] sm:$0xf]
    %v75 = vld [vmem:[%s1 + $0x70] sm:$0xf]
    %v76 = vld [vmem:[%s1 + $0x74] sm:$0xf]
    %v77 = vld [vmem:[%s1 + $0x78] sm:$0xf]
    %v78 = vld [vmem:[%s1 + $0x7c] sm:$0xf]
    %v79 = vld [vmem:[%s2] sm:$0x1]
    %v81 = vlaneseq
    %v82 = vshrl.u32 %v81, 7
    %v83 = vsub.s32 0, %v82
    %v84 = vrot.slane %v79, %v83
    %v88 = vunpack.c.l.s4 1966171168
    %v89 = vunpack.c.0.s8 %v88
    %v90 = vlaneseq
    %v91 = vshrl.u32 %v90, 7
    %v92 = vsub.s32 %v89, %v91
    %v93 = vrot.slane %v46, %v92
    %v94 = vcombine.high %v93, %v93
    %v96 = vunpack.c.l.s4 1966171168
    %v97 = vunpack.c.0.s8 %v96
    %v98 = vlaneseq
    %v99 = vshrl.u32 %v98, 7
    %v100 = vsub.s32 %v97, %v99
    %v101 = vrot.slane %v93, %v100
    %v103 = vunpack.c.l.s4 1966171168
    %v104 = vunpack.c.0.s8 %v103
    %v105 = vlaneseq
    %v106 = vshrl.u32 %v105, 7
    %v107 = vsub.s32 %v104, %v106
    %v108 = vrot.slane %v94, %v107
    %v143 = vunpack.c.l.b16 %v47
    %v144 = vunpack.c.l.b16 %v48
    %v145 = vunpack.c.l.b16 %v49
    %v146 = vunpack.c.l.b16 %v50
    %v147 = vunpack.c.l.b16 %v51
    %v148 = vunpack.c.l.b16 %v52
    %v149 = vunpack.c.l.b16 %v53
    %v150 = vunpack.c.l.b16 %v54
    %v151 = vunpack.c.l.b16 %v55
    %v152 = vunpack.c.l.b16 %v56
    %v153 = vunpack.c.l.b16 %v57
    %v154 = vunpack.c.l.b16 %v58
    %v155 = vunpack.c.l.b16 %v59
    %v156 = vunpack.c.l.b16 %v60
    %v157 = vunpack.c.l.b16 %v61
    %v158 = vunpack.c.l.b16 %v62
    %v159 = vunpack.c.l.b16 %v63
    %v160 = vunpack.c.l.b16 %v64
    %v161 = vunpack.c.l.b16 %v65
    %v162 = vunpack.c.l.b16 %v66
    %v163 = vunpack.c.l.b16 %v67
    %v164 = vunpack.c.l.b16 %v68
    %v165 = vunpack.c.l.b16 %v69
    %v166 = vunpack.c.l.b16 %v70
    %v167 = vunpack.c.l.b16 %v71
    %v168 = vunpack.c.l.b16 %v72
    %v169 = vunpack.c.l.b16 %v73
    %v170 = vunpack.c.l.b16 %v74
    %v171 = vunpack.c.l.b16 %v75
    %v172 = vunpack.c.l.b16 %v76
    %v173 = vunpack.c.l.b16 %v77
    %v174 = vunpack.c.l.b16 %v78
    %v175 = vpack.c.b16 %v144, %v143
    %v176 = vpack.c.b16 %v146, %v145
    %v177 = vpack.c.b16 %v148, %v147
    %v178 = vpack.c.b16 %v150, %v149
    %v179 = vpack.c.b16 %v152, %v151
    %v180 = vpack.c.b16 %v154, %v153
    %v181 = vpack.c.b16 %v156, %v155
    %v182 = vpack.c.b16 %v158, %v157
    %v183 = vpack.c.b16 %v160, %v159
    %v184 = vpack.c.b16 %v162, %v161
    %v185 = vpack.c.b16 %v164, %v163
    %v186 = vpack.c.b16 %v166, %v165
    %v187 = vpack.c.b16 %v168, %v167
    %v188 = vpack.c.b16 %v170, %v169
    %v189 = vpack.c.b16 %v172, %v171
    %v190 = vpack.c.b16 %v174, %v173
    %207 = vmatprep.subr.bf16.mxu0 0
    %208 = vmatpush1.bf16.msra.mxu0 %v175
    %209 = vmatprep.subr.bf16.mxu0 0
    %210 = vmatpush1.bf16.msra.mxu0 %v176
    %211 = vmatprep.subr.bf16.mxu0 0
    %212 = vmatpush1.bf16.msra.mxu0 %v177
    %213 = vmatprep.subr.bf16.mxu0 0
    %214 = vmatpush1.bf16.msra.mxu0 %v178
    %215 = vmatprep.subr.bf16.mxu0 0
    %216 = vmatpush1.bf16.msra.mxu0 %v179
    %217 = vmatprep.subr.bf16.mxu0 0
    %218 = vmatpush1.bf16.msra.mxu0 %v180
    %219 = vmatprep.subr.bf16.mxu0 0
    %220 = vmatpush1.bf16.msra.mxu0 %v181
    %221 = vmatprep.subr.bf16.mxu0 0
    %222 = vmatpush1.bf16.msra.mxu0 %v182
    %223 = vmatprep.subr.bf16.mxu0 0
    %224 = vmatpush1.bf16.msra.mxu0 %v183
    %225 = vmatprep.subr.bf16.mxu0 0
    %226 = vmatpush1.bf16.msra.mxu0 %v184
    %227 = vmatprep.subr.bf16.mxu0 0
    %228 = vmatpush1.bf16.msra.mxu0 %v185
    %229 = vmatprep.subr.bf16.mxu0 0
    %230 = vmatpush1.bf16.msra.mxu0 %v186
    %231 = vmatprep.subr.bf16.mxu0 0
    %232 = vmatpush1.bf16.msra.mxu0 %v187
    %233 = vmatprep.subr.bf16.mxu0 0
    %234 = vmatpush1.bf16.msra.mxu0 %v188
    %235 = vmatprep.subr.bf16.mxu0 0
    %236 = vmatpush1.bf16.msra.mxu0 %v189
    %237 = vmatprep.subr.bf16.mxu0 0
    %238 = vmatpush1.bf16.msra.mxu0 %v190
    %239 = vmatprep.mubr.bf16.mxu0 %v108
    %240 = vmatmul.mubr.bf16.gmra.mrb[0].mxu0 %v101
    %v241 = vpop.f32.mrb[0].mxu0
    %v242 = vadd.f32 %v84, %v241
    %v243 = vpop.f32.mrb[0].mxu0
    %v244 = vpop.f32.mrb[0].mxu0
    %v245 = vpop.f32.mrb[0].mxu0
    %246 = vdwg.mxu0
    %v247 = vmax.f32 %v242, 0.0
    %v248 = vld [vmem:[%s9] sm:$0x1]
    %v250 = vlaneseq
    %v251 = vshrl.u32 %v250, 7
    %v252 = vsub.s32 0, %v251
    %v253 = vrot.slane %v248, %v252
    %v255 = vmul.f32 %v247, %v253
    %vm256 = vcmask 1041408
    %v257 = vsel %vm256, %v255, 0.0
    %258 = vadd.xlane.f32.xlu0 %v257
    %v259 = vpop.xlane.xlu0 %258
    %v260 = vld [vmem:[#allocation2] sm:$0x1]
    %v262 = vlaneseq
    %v263 = vshrl.u32 %v262, 7
    %v264 = vsub.s32 0, %v263
    %v265 = vrot.slane %v260, %v264
    %v267 = vadd.f32 %v259, %v265
    %vm268 = vcmask 1024
    %269 = vst.msk [vmem:[%s13] sm:$0x3] %vm268, %v267
    %v270 = vld [vmem:[%s3] sm:$0xf]
    %v271 = vld [vmem:[%s3 + $0x4] sm:$0xf]
    %v272 = vld [vmem:[%s3 + $0x8] sm:$0xf]
    %v273 = vld [vmem:[%s3 + $0xc] sm:$0xf]
    %v274 = vld [vmem:[%s3 + $0x10] sm:$0xf]
    %v275 = vld [vmem:[%s3 + $0x14] sm:$0xf]
    %v276 = vld [vmem:[%s3 + $0x18] sm:$0xf]
    %v277 = vld [vmem:[%s3 + $0x1c] sm:$0xf]
    %v278 = vld [vmem:[%s3 + $0x20] sm:$0xf]
    %v279 = vld [vmem:[%s3 + $0x24] sm:$0xf]
    %v280 = vld [vmem:[%s3 + $0x28] sm:$0xf]
    %v281 = vld [vmem:[%s3 + $0x2c] sm:$0xf]
    %v282 = vld [vmem:[%s3 + $0x30] sm:$0xf]
    %v283 = vld [vmem:[%s3 + $0x34] sm:$0xf]
    %v284 = vld [vmem:[%s3 + $0x38] sm:$0xf]
    %v285 = vld [vmem:[%s3 + $0x3c] sm:$0xf]
    %v286 = vld [vmem:[%s3 + $0x40] sm:$0xf]
    %v287 = vld [vmem:[%s3 + $0x44] sm:$0xf]
    %v288 = vld [vmem:[%s3 + $0x48] sm:$0xf]
    %v289 = vld [vmem:[%s3 + $0x4c] sm:$0xf]
    %v290 = vld [vmem:[%s3 + $0x50] sm:$0xf]
    %v291 = vld [vmem:[%s3 + $0x54] sm:$0xf]
    %v292 = vld [vmem:[%s3 + $0x58] sm:$0xf]
    %v293 = vld [vmem:[%s3 + $0x5c] sm:$0xf]
    %v294 = vld [vmem:[%s3 + $0x60] sm:$0xf]
    %v295 = vld [vmem:[%s3 + $0x64] sm:$0xf]
    %v296 = vld [vmem:[%s3 + $0x68] sm:$0xf]
    %v297 = vld [vmem:[%s3 + $0x6c] sm:$0xf]
    %v298 = vld [vmem:[%s3 + $0x70] sm:$0xf]
    %v299 = vld [vmem:[%s3 + $0x74] sm:$0xf]
    %v300 = vld [vmem:[%s3 + $0x78] sm:$0xf]
    %v301 = vld [vmem:[%s3 + $0x7c] sm:$0xf]
    %v302 = vld [vmem:[%s4] sm:$0x1]
    %v304 = vlaneseq
    %v305 = vshrl.u32 %v304, 7
    %v306 = vsub.s32 0, %v305
    %v307 = vrot.slane %v302, %v306
    %v341 = vunpack.c.l.b16 %v270
    %v342 = vunpack.c.l.b16 %v271
    %v343 = vunpack.c.l.b16 %v272
    %v344 = vunpack.c.l.b16 %v273
    %v345 = vunpack.c.l.b16 %v274
    %v346 = vunpack.c.l.b16 %v275
    %v347 = vunpack.c.l.b16 %v276
    %v348 = vunpack.c.l.b16 %v277
    %v349 = vunpack.c.l.b16 %v278
    %v350 = vunpack.c.l.b16 %v279
    %v351 = vunpack.c.l.b16 %v280
    %v352 = vunpack.c.l.b16 %v281
    %v353 = vunpack.c.l.b16 %v282
    %v354 = vunpack.c.l.b16 %v283
    %v355 = vunpack.c.l.b16 %v284
    %v356 = vunpack.c.l.b16 %v285
    %v357 = vunpack.c.l.b16 %v286
    %v358 = vunpack.c.l.b16 %v287
    %v359 = vunpack.c.l.b16 %v288
    %v360 = vunpack.c.l.b16 %v289
    %v361 = vunpack.c.l.b16 %v290
    %v362 = vunpack.c.l.b16 %v291
    %v363 = vunpack.c.l.b16 %v292
    %v364 = vunpack.c.l.b16 %v293
    %v365 = vunpack.c.l.b16 %v294
    %v366 = vunpack.c.l.b16 %v295
    %v367 = vunpack.c.l.b16 %v296
    %v368 = vunpack.c.l.b16 %v297
    %v369 = vunpack.c.l.b16 %v298
    %v370 = vunpack.c.l.b16 %v299
    %v371 = vunpack.c.l.b16 %v300
    %v372 = vunpack.c.l.b16 %v301
    %v373 = vpack.c.b16 %v342, %v341
    %v374 = vpack.c.b16 %v344, %v343
    %v375 = vpack.c.b16 %v346, %v345
    %v376 = vpack.c.b16 %v348, %v347
    %v377 = vpack.c.b16 %v350, %v349
    %v378 = vpack.c.b16 %v352, %v351
    %v379 = vpack.c.b16 %v354, %v353
    %v380 = vpack.c.b16 %v356, %v355
    %v381 = vpack.c.b16 %v358, %v357
    %v382 = vpack.c.b16 %v360, %v359
    %v383 = vpack.c.b16 %v362, %v361
    %v384 = vpack.c.b16 %v364, %v363
    %v385 = vpack.c.b16 %v366, %v365
    %v386 = vpack.c.b16 %v368, %v367
    %v387 = vpack.c.b16 %v370, %v369
    %v388 = vpack.c.b16 %v372, %v371
    %405 = vmatprep.subr.bf16.mxu0 0
    %406 = vmatpush1.bf16.msra.mxu0 %v373
    %407 = vmatprep.subr.bf16.mxu0 0
    %408 = vmatpush1.bf16.msra.mxu0 %v374
    %409 = vmatprep.subr.bf16.mxu0 0
    %410 = vmatpush1.bf16.msra.mxu0 %v375
    %411 = vmatprep.subr.bf16.mxu0 0
    %412 = vmatpush1.bf16.msra.mxu0 %v376
    %413 = vmatprep.subr.bf16.mxu0 0
    %414 = vmatpush1.bf16.msra.mxu0 %v377
    %415 = vmatprep.subr.bf16.mxu0 0
    %416 = vmatpush1.bf16.msra.mxu0 %v378
    %417 = vmatprep.subr.bf16.mxu0 0
    %418 = vmatpush1.bf16.msra.mxu0 %v379
    %419 = vmatprep.subr.bf16.mxu0 0
    %420 = vmatpush1.bf16.msra.mxu0 %v380
    %421 = vmatprep.subr.bf16.mxu0 0
    %422 = vmatpush1.bf16.msra.mxu0 %v381
    %423 = vmatprep.subr.bf16.mxu0 0
    %424 = vmatpush1.bf16.msra.mxu0 %v382
    %425 = vmatprep.subr.bf16.mxu0 0
    %426 = vmatpush1.bf16.msra.mxu0 %v383
    %427 = vmatprep.subr.bf16.mxu0 0
    %428 = vmatpush1.bf16.msra.mxu0 %v384
    %429 = vmatprep.subr.bf16.mxu0 0
    %430 = vmatpush1.bf16.msra.mxu0 %v385
    %431 = vmatprep.subr.bf16.mxu0 0
    %432 = vmatpush1.bf16.msra.mxu0 %v386
    %433 = vmatprep.subr.bf16.mxu0 0
    %434 = vmatpush1.bf16.msra.mxu0 %v387
    %435 = vmatprep.subr.bf16.mxu0 0
    %436 = vmatpush1.bf16.msra.mxu0 %v388
    %437 = vmatprep.mubr.bf16.mxu0 %v108
    %438 = vmatmul.mubr.bf16.gmra.mrb[0].mxu0 %v101
    %v439 = vpop.f32.mrb[0].mxu0
    %v440 = vadd.f32 %v307, %v439
    %v441 = vpop.f32.mrb[0].mxu0
    %v442 = vpop.f32.mrb[0].mxu0
    %v443 = vpop.f32.mrb[0].mxu0
    %444 = vdwg.mxu0
    %v445 = vmax.f32 %v440, 0.0
    %v446 = vpack.c.bf16 %v445, %v445
    %v447 = vld [vmem:[%s5] sm:$0xf]
    %v448 = vld [vmem:[%s5 + $0x4] sm:$0xf]
    %v449 = vld [vmem:[%s5 + $0x8] sm:$0xf]
    %v450 = vld [vmem:[%s5 + $0xc] sm:$0xf]
    %v451 = vld [vmem:[%s5 + $0x10] sm:$0xf]
    %v452 = vld [vmem:[%s5 + $0x14] sm:$0xf]
    %v453 = vld [vmem:[%s5 + $0x18] sm:$0xf]
    %v454 = vld [vmem:[%s5 + $0x1c] sm:$0xf]
    %v455 = vld [vmem:[%s5 + $0x20] sm:$0xf]
    %v456 = vld [vmem:[%s5 + $0x24] sm:$0xf]
    %v457 = vld [vmem:[%s5 + $0x28] sm:$0xf]
    %v458 = vld [vmem:[%s5 + $0x2c] sm:$0xf]
    %v459 = vld [vmem:[%s5 + $0x30] sm:$0xf]
    %v460 = vld [vmem:[%s5 + $0x34] sm:$0xf]
    %v461 = vld [vmem:[%s5 + $0x38] sm:$0xf]
    %v462 = vld [vmem:[%s5 + $0x3c] sm:$0xf]
    %v463 = vld [vmem:[%s6] sm:$0x1]
    %v465 = vlaneseq
    %v466 = vshrl.u32 %v465, 7
    %v467 = vsub.s32 0, %v466
    %v468 = vrot.slane %v463, %v467
    %v486 = vunpack.c.l.b16 %v447
    %v487 = vunpack.c.l.b16 %v448
    %v488 = vunpack.c.l.b16 %v449
    %v489 = vunpack.c.l.b16 %v450
    %v490 = vunpack.c.l.b16 %v451
    %v491 = vunpack.c.l.b16 %v452
    %v492 = vunpack.c.l.b16 %v453
    %v493 = vunpack.c.l.b16 %v454
    %v494 = vunpack.c.l.b16 %v455
    %v495 = vunpack.c.l.b16 %v456
    %v496 = vunpack.c.l.b16 %v457
    %v497 = vunpack.c.l.b16 %v458
    %v498 = vunpack.c.l.b16 %v459
    %v499 = vunpack.c.l.b16 %v460
    %v500 = vunpack.c.l.b16 %v461
    %v501 = vunpack.c.l.b16 %v462
    %v502 = vpack.c.b16 %v487, %v486
    %v503 = vpack.c.b16 %v489, %v488
    %v504 = vpack.c.b16 %v491, %v490
    %v505 = vpack.c.b16 %v493, %v492
    %v506 = vpack.c.b16 %v495, %v494
    %v507 = vpack.c.b16 %v497, %v496
    %v508 = vpack.c.b16 %v499, %v498
    %v509 = vpack.c.b16 %v501, %v500
    %518 = vmatprep.subr.bf16.mxu0 0
    %519 = vmatpush1.bf16.msra.mxu0 %v502
    %520 = vmatprep.subr.bf16.mxu0 0
    %521 = vmatpush1.bf16.msra.mxu0 %v503
    %522 = vmatprep.subr.bf16.mxu0 0
    %523 = vmatpush1.bf16.msra.mxu0 %v504
    %524 = vmatprep.subr.bf16.mxu0 0
    %525 = vmatpush1.bf16.msra.mxu0 %v505
    %526 = vmatprep.subr.bf16.mxu0 0
    %527 = vmatpush1.bf16.msra.mxu0 %v506
    %528 = vmatprep.subr.bf16.mxu0 0
    %529 = vmatpush1.bf16.msra.mxu0 %v507
    %530 = vmatprep.subr.bf16.mxu0 0
    %531 = vmatpush1.bf16.msra.mxu0 %v508
    %532 = vmatprep.subr.bf16.mxu0 0
    %533 = vmatpush1.bf16.msra.mxu0 %v509
    %534 = vmatprep.subr.bf16.mxu0 0
    %535 = vmatpush1.bf16.msra.mxu0 0
    %536 = vmatprep.subr.bf16.mxu0 0
    %537 = vmatpush1.bf16.msra.mxu0 0
    %538 = vmatprep.subr.bf16.mxu0 0
    %539 = vmatpush1.bf16.msra.mxu0 0
    %540 = vmatprep.subr.bf16.mxu0 0
    %541 = vmatpush1.bf16.msra.mxu0 0
    %542 = vmatprep.subr.bf16.mxu0 0
    %543 = vmatpush1.bf16.msra.mxu0 0
    %544 = vmatprep.subr.bf16.mxu0 0
    %545 = vmatpush1.bf16.msra.mxu0 0
    %546 = vmatprep.subr.bf16.mxu0 0
    %547 = vmatpush1.bf16.msra.mxu0 0
    %548 = vmatprep.subr.bf16.mxu0 0
    %549 = vmatpush1.bf16.msra.mxu0 0
    %550 = vmatprep.mubr.bf16.mxu0 0
    %551 = vmatmul.mubr.bf16.gmra.mrb[0].mxu0 %v446
    %v552 = vpop.f32.mrb[0].mxu0
    %v553 = vadd.f32 %v468, %v552
    %v554 = vpop.f32.mrb[0].mxu0
    %v555 = vpop.f32.mrb[0].mxu0
    %v556 = vpop.f32.mrb[0].mxu0
    %557 = vdwg.mxu0
    %vm558 = vcmp.gt.f32.partialorder %v553, 20.0
    %v559 = vmin.f32 %v553, 20.0
    %v560 = vmul.f32 %v559, 1.442695
    %v561 = vpow.pop %v560
    %v562 = vadd.f32 %v561, 1.0
    %v563 = vlog2.pop %v562
    %v564 = vmul.f32 %v563, 0.6931472
    %v565 = vmul.f32 -0.5, %v561
    %v566 = vadd.f32 %v565, 1.0
    %v567 = vmul.f32 %v566, %v561
    %v568 = vand.u32 2147483647, %v561
    %vm569 = vcmp.lt.f32.partialorder %v568, 0.0004427343
    %v570 = vsel %vm569, %v567, %v564
    %v571 = vsel %vm558, %v553, %v570
    %v572 = vadd.f32 %v571, 1.0
    %573 = vst [vmem:[#allocation3] sm:$0x3] %v572
    %v574 = vld [vmem:[%s7] sm:$0xf]
    %v575 = vld [vmem:[%s7 + $0x4] sm:$0xf]
    %v576 = vld [vmem:[%s7 + $0x8] sm:$0xf]
    %v577 = vld [vmem:[%s7 + $0xc] sm:$0xf]
    %v578 = vld [vmem:[%s7 + $0x10] sm:$0xf]
    %v579 = vld [vmem:[%s7 + $0x14] sm:$0xf]
    %v580 = vld [vmem:[%s7 + $0x18] sm:$0xf]
    %v581 = vld [vmem:[%s7 + $0x1c] sm:$0xf]
    %v582 = vld [vmem:[%s7 + $0x20] sm:$0xf]
    %v583 = vld [vmem:[%s7 + $0x24] sm:$0xf]
    %v584 = vld [vmem:[%s7 + $0x28] sm:$0xf]
    %v585 = vld [vmem:[%s7 + $0x2c] sm:$0xf]
    %v586 = vld [vmem:[%s7 + $0x30] sm:$0xf]
    %v587 = vld [vmem:[%s7 + $0x34] sm:$0xf]
    %v588 = vld [vmem:[%s7 + $0x38] sm:$0xf]
    %v589 = vld [vmem:[%s7 + $0x3c] sm:$0xf]
    %v590 = vld [vmem:[%s8] sm:$0x1]
    %v592 = vlaneseq
    %v593 = vshrl.u32 %v592, 7
    %v594 = vsub.s32 0, %v593
    %v595 = vrot.slane %v590, %v594
    %v613 = vunpack.c.l.b16 %v574
    %v614 = vunpack.c.l.b16 %v575
    %v615 = vunpack.c.l.b16 %v576
    %v616 = vunpack.c.l.b16 %v577
    %v617 = vunpack.c.l.b16 %v578
    %v618 = vunpack.c.l.b16 %v579
    %v619 = vunpack.c.l.b16 %v580
    %v620 = vunpack.c.l.b16 %v581
    %v621 = vunpack.c.l.b16 %v582
    %v622 = vunpack.c.l.b16 %v583
    %v623 = vunpack.c.l.b16 %v584
    %v624 = vunpack.c.l.b16 %v585
    %v625 = vunpack.c.l.b16 %v586
    %v626 = vunpack.c.l.b16 %v587
    %v627 = vunpack.c.l.b16 %v588
    %v628 = vunpack.c.l.b16 %v589
    %v629 = vpack.c.b16 %v614, %v613
    %v630 = vpack.c.b16 %v616, %v615
    %v631 = vpack.c.b16 %v618, %v617
    %v632 = vpack.c.b16 %v620, %v619
    %v633 = vpack.c.b16 %v622, %v621
    %v634 = vpack.c.b16 %v624, %v623
    %v635 = vpack.c.b16 %v626, %v625
    %v636 = vpack.c.b16 %v628, %v627
    %645 = vmatprep.subr.bf16.mxu0 0
    %646 = vmatpush1.bf16.msra.mxu0 %v629
    %647 = vmatprep.subr.bf16.mxu0 0
    %648 = vmatpush1.bf16.msra.mxu0 %v630
    %649 = vmatprep.subr.bf16.mxu0 0
    %650 = vmatpush1.bf16.msra.mxu0 %v631
    %651 = vmatprep.subr.bf16.mxu0 0
    %652 = vmatpush1.bf16.msra.mxu0 %v632
    %653 = vmatprep.subr.bf16.mxu0 0
    %654 = vmatpush1.bf16.msra.mxu0 %v633
    %655 = vmatprep.subr.bf16.mxu0 0
    %656 = vmatpush1.bf16.msra.mxu0 %v634
    %657 = vmatprep.subr.bf16.mxu0 0
    %658 = vmatpush1.bf16.msra.mxu0 %v635
    %659 = vmatprep.subr.bf16.mxu0 0
    %660 = vmatpush1.bf16.msra.mxu0 %v636
    %661 = vmatprep.subr.bf16.mxu0 0
    %662 = vmatpush1.bf16.msra.mxu0 0
    %663 = vmatprep.subr.bf16.mxu0 0
    %664 = vmatpush1.bf16.msra.mxu0 0
    %665 = vmatprep.subr.bf16.mxu0 0
    %666 = vmatpush1.bf16.msra.mxu0 0
    %667 = vmatprep.subr.bf16.mxu0 0
    %668 = vmatpush1.bf16.msra.mxu0 0
    %669 = vmatprep.subr.bf16.mxu0 0
    %670 = vmatpush1.bf16.msra.mxu0 0
    %671 = vmatprep.subr.bf16.mxu0 0
    %672 = vmatpush1.bf16.msra.mxu0 0
    %673 = vmatprep.subr.bf16.mxu0 0
    %674 = vmatpush1.bf16.msra.mxu0 0
    %675 = vmatprep.subr.bf16.mxu0 0
    %676 = vmatpush1.bf16.msra.mxu0 0
    %677 = vmatprep.mubr.bf16.mxu0 0
    %678 = vmatmul.mubr.bf16.gmra.mrb[0].mxu0 %v446
    %v679 = vpop.f32.mrb[0].mxu0
    %v680 = vadd.f32 %v595, %v679
    %v681 = vpop.f32.mrb[0].mxu0
    %v682 = vpop.f32.mrb[0].mxu0
    %v683 = vpop.f32.mrb[0].mxu0
    %684 = vdwg.mxu0
    %vm685 = vcmp.gt.f32.partialorder %v680, 20.0
    %v686 = vmin.f32 %v680, 20.0
    %v687 = vmul.f32 %v686, 1.442695
    %v688 = vpow.pop %v687
    %v689 = vadd.f32 %v688, 1.0
    %v690 = vlog2.pop %v689
    %v691 = vmul.f32 %v690, 0.6931472
    %v692 = vmul.f32 -0.5, %v688
    %v693 = vadd.f32 %v692, 1.0
    %v694 = vmul.f32 %v693, %v688
    %v695 = vand.u32 2147483647, %v688
    %vm696 = vcmp.lt.f32.partialorder %v695, 0.0004427343
    %v697 = vsel %vm696, %v694, %v691
    %v698 = vsel %vm685, %v680, %v697
    %v699 = vadd.f32 %v698, 1.0
    %700 = vst [vmem:[#allocation5] sm:$0x3] %v699
    // Predicated region
    $region46: #{forward.13} parent=1 // pred_check
      _
    $region47: #{forward.13} parent=1 // pred_check_branch
      %702 = sbr.rel (0) target = $region49
    $region48: #{forward.13} parent=1 // pred_region
      %s704 = ssub.s32 32, 32
      %705 = vsyncadd [#allocation4], %s704
      %s707 = sshll.u32 [#allocation3], 4
      %s708 = int_to_ptr.vmem [resolvable:$true] %s707
      %710 = dma.vmem_to_hbm [thread:$0]  %s708, 32, %s11, [#allocation4]
    $region49: #{forward.13} parent=1 // pred_fallthru
      _
    // Predicated region
    $region50: #{forward.13} parent=1 // pred_check
      _
    $region51: #{forward.13} parent=1 // pred_check_branch
      %712 = sbr.rel (0) target = $region53
    $region52: #{forward.13} parent=1 // pred_region
      %s714 = ssub.s32 32, 32
      %715 = vsyncadd [#allocation6], %s714
      %s717 = sshll.u32 [#allocation5], 4
      %s718 = int_to_ptr.vmem [resolvable:$true] %s717
      %720 = dma.vmem_to_hbm [thread:$0]  %s718, 32, %s12, [#allocation6]
    $region53: #{forward.13} parent=1 // pred_fallthru
      _
    // Predicated region
    $region54: #{forward.13} parent=1 // pred_check
      _
    $region55: #{forward.13} parent=1 // pred_check_branch
      %722 = sbr.rel (0) target = $region57
    $region56: #{forward.13} parent=1 // pred_region
      _
    $region57: #{forward.13} parent=1 // pred_fallthru
      _
    // Predicated region
    $region58: #{forward.13} parent=1 // pred_check
      _
    $region59: #{forward.13} parent=1 // pred_check_branch
      %724 = sbr.rel (0) target = $region61
    $region60: #{forward.13} parent=1 // pred_region
      %725 = dma.done [#allocation4], 32
    $region61: #{forward.13} parent=1 // pred_fallthru
      _
    // Predicated region
    $region62: #{forward.13} parent=1 // pred_check
      _
    $region63: #{forward.13} parent=1 // pred_check_branch
      %727 = sbr.rel (0) target = $region65
    $region64: #{forward.13} parent=1 // pred_region
      %728 = dma.done [#allocation6], 32
    $region65: #{forward.13} parent=1 // pred_fallthru
      _
    // Predicated region
    $region66: #{forward.13} parent=1 // pred_check
      _
    $region67: #{forward.13} parent=1 // pred_check_branch
      %730 = sbr.rel (0) target = $region69
    $region68: #{forward.13} parent=1 // pred_region
      _
    $region69: #{forward.13} parent=1 // pred_fallthru
      _
    %731 = vsyncpa [#allocation4], 1
    %732 = vsyncpa [#allocation6], 1

</llo_original>
